<compile_context>
chip_gen: v7x
topology: tpu7x:2x2x1
jax: 0.10.0
libtpu: 0.0.40
codegen_flags: <defaults>
</compile_context>

<pallas_src>
import functools

import jax
import jax.numpy as jnp
from jax import lax
from jax.experimental import pallas as pl
from jax.experimental.pallas import tpu as pltpu

LANE = 128
COUT1_PAD = 128          # conv1 output channels padded 32 -> 128 (lane-dense)


def _pick_rows(rows, target=256):
    """Largest tile <= target that divides `rows` and satisfies the sublane rule."""
    t = min(target, rows)
    while t >= 8:
        if rows % t == 0:
            return t
        t //= 2
    return rows          # small arrays: use the full extent (always legal)


# ---------------------------------------------------------------------------
# Fused conv block: conv3x3(pad=1) + BatchNorm(eval) + ReLU + maxpool(2, 2)
# Kernel body: 4 tap-packed MXU dots (one per pooling phase) + f32 epilogue.
# ---------------------------------------------------------------------------

def _make_conv_kernel(tm, chunk):
    n_chunks = tm // chunk

    def kernel(p0_ref, p1_ref, p2_ref, p3_ref, w_ref, scale_ref, shift_ref, o_ref):
        w = w_ref[...]              # (9*Cin, Cout) bf16, tap-major rows
        scale = scale_ref[...]      # (1, Cout) f32   gamma / sqrt(var + eps)
        shift = shift_ref[...]      # (1, Cout) f32   beta - mean*scale + conv_bias*scale

        def body(c, carry):
            r = pl.multiple_of(c * chunk, chunk)
            best = None
            for p_ref in (p0_ref, p1_ref, p2_ref, p3_ref):
                z = jnp.dot(p_ref[pl.ds(r, chunk), :], w,
                            preferred_element_type=jnp.float32) * scale + shift
                best = z if best is None else jnp.maximum(best, z)   # 2x2 max pool
            o_ref[pl.ds(r, chunk), :] = jnp.maximum(best, 0.0).astype(o_ref.dtype)
            return carry

        lax.fori_loop(0, n_chunks, body, 0, unroll=True)

    return kernel


def conv_bn_relu_pool(x_nhwc, w_packed, scale, shift, cin_pad):
    """(B, H, W, Cin) -> pooled (B, H//2, W//2, Cout) in one pallas_call."""
    B, H, W, Cin = x_nhwc.shape
    H2, W2 = H // 2, W // 2
    K, Cout = w_packed.shape
    assert K == 9 * cin_pad
    R = B * H2 * W2

    # Wrapper-side prep (cheap XLA ops, no in-kernel relayouts): zero-pad spatially, pad
    # channels to cin_pad, and for each pooling phase (py, px) concatenate the 9 shifted
    # strided views along the channel axis -> tap-packed operand (R, 9*cin_pad) bf16.
    xp = jnp.pad(x_nhwc.astype(jnp.bfloat16),
                 ((0, 0), (1, 1), (1, 1), (0, cin_pad - Cin)))
    phases = []
    for py in (0, 1):
        for px in (0, 1):
            taps = [xp[:, py + dy: py + dy + 2 * H2: 2,
                       px + dx: px + dx + 2 * W2: 2, :]
                    for dy in range(3) for dx in range(3)]
            phases.append(jnp.concatenate(taps, axis=-1).reshape(R, K))

    tm = _pick_rows(R, 256)          # rows per grid step (M of the MXU dots)
    chunk = min(128, tm)             # epilogue chunk -> bounded vreg pressure
    phase_spec = pl.BlockSpec((tm, K), lambda m: (m, 0))
    const2 = lambda m: (0, 0)

    out = pl.pallas_call(
        _make_conv_kernel(tm, chunk),
        out_shape=jax.ShapeDtypeStruct((R, Cout), jnp.bfloat16),
        grid=(R // tm,),
        in_specs=[phase_spec, phase_spec, phase_spec, phase_spec,
                  pl.BlockSpec((K, Cout), const2),
                  pl.BlockSpec((1, Cout), const2),
                  pl.BlockSpec((1, Cout), const2)],
        out_specs=pl.BlockSpec((tm, Cout), lambda m: (m, 0)),
        compiler_params=pltpu.CompilerParams(dimension_semantics=("parallel",)),
    )(*phases, w_packed, scale, shift)
    return out.reshape(B, H2, W2, Cout)


# ---------------------------------------------------------------------------
# Fused FC head: fc1 + ReLU + (eval dropout = identity) + fc2, lane-dense output
# ---------------------------------------------------------------------------

def _fc_head_kernel(x_ref, w1_ref, b1_ref, w2_ref, b2_ref, o_ref):
    h = jnp.dot(x_ref[...], w1_ref[...], preferred_element_type=jnp.float32) + b1_ref[...]
    h = jnp.maximum(h, 0.0).astype(w2_ref.dtype)
    # TODO(synk): Dropout(p=0.3) is train-time only; eval-mode forward is identity here.
    o_ref[...] = (jnp.dot(h, w2_ref[...], preferred_element_type=jnp.float32) + b2_ref[...])


def fc_head(feat, w1, b1, w2p, b2p):
    B, K = feat.shape
    Nh = w1.shape[1]
    Np = w2p.shape[1]                # padded to a multiple of 128 lanes
    bt = _pick_rows(B, 256)          # batch-row tile; >1 grid step engages both v7x cores
    const2 = lambda m: (0, 0)
    return pl.pallas_call(
        _fc_head_kernel,
        out_shape=jax.ShapeDtypeStruct((B, Np), jnp.float32),
        grid=(B // bt,),
        in_specs=[pl.BlockSpec((bt, K), lambda m: (m, 0)),
                  pl.BlockSpec((K, Nh), const2),
                  pl.BlockSpec((1, Nh), const2),
                  pl.BlockSpec((Nh, Np), const2),
                  pl.BlockSpec((1, Np), const2)],
        out_specs=pl.BlockSpec((bt, Np), lambda m: (m, 0)),
        compiler_params=pltpu.CompilerParams(dimension_semantics=("parallel",)),
    )(feat, w1, b1, w2p, b2p)


# ---------------------------------------------------------------------------
# Parameters: PyTorch-layout init + kernel-side preparation (BN fold, packing, bf16)
# ---------------------------------------------------------------------------

def init_params(num_classes=10):
    key = jax.random.PRNGKey(0)
    ks = jax.random.split(key, 16)
    p = {}
    p["conv1_w"] = 0.1 * jax.random.normal(ks[0], (32, 3, 3, 3), jnp.float32)
    p["conv1_b"] = 0.1 * jax.random.normal(ks[1], (32,), jnp.float32)
    p["bn1_gamma"] = 1.0 + 0.1 * jax.random.normal(ks[2], (32,), jnp.float32)
    p["bn1_beta"] = 0.1 * jax.random.normal(ks[3], (32,), jnp.float32)
    p["bn1_mean"] = 0.1 * jax.random.normal(ks[4], (32,), jnp.float32)
    p["bn1_var"] = jax.random.uniform(ks[5], (32,), jnp.float32, 0.5, 1.5)
    p["conv2_w"] = 0.05 * jax.random.normal(ks[6], (64, 32, 3, 3), jnp.float32)
    p["conv2_b"] = 0.1 * jax.random.normal(ks[7], (64,), jnp.float32)
    p["bn2_gamma"] = 1.0 + 0.1 * jax.random.normal(ks[8], (64,), jnp.float32)
    p["bn2_beta"] = 0.1 * jax.random.normal(ks[9], (64,), jnp.float32)
    p["bn2_mean"] = 0.1 * jax.random.normal(ks[10], (64,), jnp.float32)
    p["bn2_var"] = jax.random.uniform(ks[11], (64,), jnp.float32, 0.5, 1.5)
    p["fc1_w"] = 0.02 * jax.random.normal(ks[12], (64 * 8 * 8, 256), jnp.float32)
    p["fc1_b"] = 0.1 * jax.random.normal(ks[13], (256,), jnp.float32)
    p["fc2_w"] = 0.05 * jax.random.normal(ks[14], (256, num_classes), jnp.float32)
    p["fc2_b"] = 0.1 * jax.random.normal(ks[15], (num_classes,), jnp.float32)
    return p


def bn_fold(gamma, beta, mean, var, conv_bias, eps=1e-5):
    scale = gamma / jnp.sqrt(var + eps)
    shift = beta - mean * scale + conv_bias * scale
    return (scale.reshape(1, -1).astype(jnp.float32),
            shift.reshape(1, -1).astype(jnp.float32))


def conv_weight_packed(w_oihw, cin_pad, cout_pad):
    # PyTorch (Cout, Cin, kh, kw) -> (9*cin_pad, cout_pad), rows tap-major (kh, kw) with
    # channel fastest, matching the wrapper's per-phase tap concatenation; bf16 for the MXU.
    cout, cin, kh, kw = w_oihw.shape
    w = jnp.transpose(w_oihw, (2, 3, 1, 0))                     # (kh, kw, cin, cout)
    w = jnp.pad(w, ((0, 0), (0, 0), (0, cin_pad - cin), (0, cout_pad - cout)))
    return w.reshape(kh * kw * cin_pad, cout_pad).astype(jnp.bfloat16)


def prepare_params(p, num_classes=10):
    q = {}
    # conv1: Cout padded 32 -> 128 (lane-dense output; padded channels are exactly zero
    # because their scale/shift are zero and ReLU(0) = 0).
    q["w1"] = conv_weight_packed(p["conv1_w"], cin_pad=3, cout_pad=COUT1_PAD)   # (27, 128)
    s1, t1 = bn_fold(p["bn1_gamma"], p["bn1_beta"], p["bn1_mean"], p["bn1_var"], p["conv1_b"])
    q["s1"] = jnp.pad(s1, ((0, 0), (0, COUT1_PAD - 32)))
    q["t1"] = jnp.pad(t1, ((0, 0), (0, COUT1_PAD - 32)))
    # conv2: Cin padded 32 -> 128 to match conv1's padded output (zero weights there),
    # Cout stays 64.
    q["w2"] = conv_weight_packed(p["conv2_w"], cin_pad=COUT1_PAD, cout_pad=64)  # (1152, 64)
    q["s2"], q["t2"] = bn_fold(p["bn2_gamma"], p["bn2_beta"], p["bn2_mean"],
                               p["bn2_var"], p["conv2_b"])
    # fc1 rows follow the PyTorch NCHW flatten order (c, h, w); permute to the kernels'
    # pooled-NHWC (h, w, c) order so the activation feeds fc1 via a free HBM reshape.
    fc1 = p["fc1_w"].reshape(64, 8, 8, -1).transpose(1, 2, 0, 3).reshape(64 * 8 * 8, -1)
    q["fc1_w"] = fc1.astype(jnp.bfloat16)
    q["fc1_b"] = p["fc1_b"].reshape(1, -1).astype(jnp.float32)
    npad = pl.cdiv(num_classes, LANE) * LANE        # lane-dense fc2 output (>= 128 wide)
    q["fc2_w"] = jnp.pad(p["fc2_w"], ((0, 0), (0, npad - num_classes))).astype(jnp.bfloat16)
    q["fc2_b"] = jnp.pad(p["fc2_b"], (0, npad - num_classes)).reshape(1, -1).astype(jnp.float32)
    return q


# ---------------------------------------------------------------------------
# Forward pass (matches CustomCNN.forward, eval mode)
# ---------------------------------------------------------------------------

@functools.partial(jax.jit, static_argnames=("num_classes",))
def custom_cnn_forward(x_nchw, params, num_classes=10):
    x = jnp.transpose(x_nchw, (0, 2, 3, 1))                                   # NCHW -> NHWC
    y = conv_bn_relu_pool(x, params["w1"], params["s1"], params["t1"],
                          cin_pad=3)                                          # (B, 16, 16, 128)
    y = conv_bn_relu_pool(y, params["w2"], params["s2"], params["t2"],
                          cin_pad=COUT1_PAD)                                  # (B,  8,  8,  64)
    feat = y.reshape(y.shape[0], -1)      # (B, 4096) bf16, (h, w, c) order -- free HBM reshape
    logits = fc_head(feat, params["fc1_w"], params["fc1_b"],
                     params["fc2_w"], params["fc2_b"])                        # (B, 128) f32
    return logits[:, :num_classes]


if __name__ == "__main__":
    num_classes = 10
    params = prepare_params(init_params(num_classes), num_classes=num_classes)
    # fc1 expects 64*8*8 features -> input spatial size must be 32x32 (CIFAR-like).
    x = jax.random.normal(jax.random.PRNGKey(0), (2, 3, 32, 32), jnp.float32)
    logits = custom_cnn_forward(x, params)
    jax.block_until_ready(logits)
    assert logits.shape == (2, num_classes)
    print("KERNEL_OK")
</pallas_src>

<mosaic_0001>
module attributes {stable_mosaic.version = 11 : i64} {
  func.func @kernel(%arg0: i32, %arg1: memref<256x27xbf16, #tpu.memory_space<vmem>>, %arg2: memref<256x27xbf16, #tpu.memory_space<vmem>>, %arg3: memref<256x27xbf16, #tpu.memory_space<vmem>>, %arg4: memref<256x27xbf16, #tpu.memory_space<vmem>>, %arg5: memref<27x128xbf16, #tpu.memory_space<vmem>>, %arg6: memref<1x128xf32, #tpu.memory_space<vmem>>, %arg7: memref<1x128xf32, #tpu.memory_space<vmem>>, %arg8: memref<256x128xbf16, #tpu.memory_space<vmem>>) attributes {dimension_semantics = [#tpu.dimension_semantics<parallel>], iteration_bounds = array<i64: 2>, scalar_prefetch = 0 : i64, scratch_operands = 0 : i64, tpu.core_type = #tpu.core_type<tc>, window_params = [{transform_indices = @transform_0, window_bounds = array<i64: 256, 27>}, {transform_indices = @transform_1, window_bounds = array<i64: 256, 27>}, {transform_indices = @transform_2, window_bounds = array<i64: 256, 27>}, {transform_indices = @transform_3, window_bounds = array<i64: 256, 27>}, {pipeline_mode = #tpu.pipeline_mode<synchronous>, transform_indices = @transform_4, window_bounds = array<i64: 27, 128>}, {pipeline_mode = #tpu.pipeline_mode<synchronous>, transform_indices = @transform_5, window_bounds = array<i64: 1, 128>}, {pipeline_mode = #tpu.pipeline_mode<synchronous>, transform_indices = @transform_6, window_bounds = array<i64: 1, 128>}, {transform_indices = @transform_7, window_bounds = array<i64: 256, 128>}]} {
    %c0 = arith.constant 0 : index
    %c0_0 = arith.constant 0 : index
    %0 = vector.load %arg5[%c0, %c0_0] : memref<27x128xbf16, #tpu.memory_space<vmem>>, vector<27x128xbf16>
    %c0_1 = arith.constant 0 : index
    %c0_2 = arith.constant 0 : index
    %1 = vector.load %arg6[%c0_1, %c0_2] : memref<1x128xf32, #tpu.memory_space<vmem>>, vector<1x128xf32>
    %c0_3 = arith.constant 0 : index
    %c0_4 = arith.constant 0 : index
    %2 = vector.load %arg7[%c0_3, %c0_4] : memref<1x128xf32, #tpu.memory_space<vmem>>, vector<1x128xf32>
    %c0_i32 = arith.constant 0 : i32
    %c128_i32 = arith.constant 128 : i32
    %3 = arith.muli %c0_i32, %c128_i32 : i32
    %4 = tpu.assume_multiple %3, 128 : i32
    %5 = arith.index_cast %4 : i32 to index
    %c0_5 = arith.constant 0 : index
    %6 = vector.load %arg1[%5, %c0_5] : memref<256x27xbf16, #tpu.memory_space<vmem>>, vector<128x27xbf16>
    %cst = arith.constant dense<0.000000e+00> : vector<128x128xf32>
    %7 = tpu.matmul %6, %0, %cst {dimension_numbers = #tpu.dot_dimension_numbers<[1], [0], [0], [1], [0, 0, 1, 1], [], []>} : vector<128x27xbf16>, vector<27x128xbf16>, vector<128x128xf32> -> vector<128x128xf32>
    %8 = vector.broadcast %1 : vector<1x128xf32> to vector<128x128xf32>
    %9 = arith.mulf %7, %8 : vector<128x128xf32>
    %10 = vector.broadcast %2 : vector<1x128xf32> to vector<128x128xf32>
    %11 = arith.addf %9, %10 : vector<128x128xf32>
    %12 = arith.index_cast %4 : i32 to index
    %c0_6 = arith.constant 0 : index
    %13 = vector.load %arg2[%12, %c0_6] : memref<256x27xbf16, #tpu.memory_space<vmem>>, vector<128x27xbf16>
    %cst_7 = arith.constant dense<0.000000e+00> : vector<128x128xf32>
    %14 = tpu.matmul %13, %0, %cst_7 {dimension_numbers = #tpu.dot_dimension_numbers<[1], [0], [0], [1], [0, 0, 1, 1], [], []>} : vector<128x27xbf16>, vector<27x128xbf16>, vector<128x128xf32> -> vector<128x128xf32>
    %15 = vector.broadcast %1 : vector<1x128xf32> to vector<128x128xf32>
    %16 = arith.mulf %14, %15 : vector<128x128xf32>
    %17 = vector.broadcast %2 : vector<1x128xf32> to vector<128x128xf32>
    %18 = arith.addf %16, %17 : vector<128x128xf32>
    %19 = arith.maximumf %11, %18 : vector<128x128xf32>
    %20 = arith.index_cast %4 : i32 to index
    %c0_8 = arith.constant 0 : index
    %21 = vector.load %arg3[%20, %c0_8] : memref<256x27xbf16, #tpu.memory_space<vmem>>, vector<128x27xbf16>
    %cst_9 = arith.constant dense<0.000000e+00> : vector<128x128xf32>
    %22 = tpu.matmul %21, %0, %cst_9 {dimension_numbers = #tpu.dot_dimension_numbers<[1], [0], [0], [1], [0, 0, 1, 1], [], []>} : vector<128x27xbf16>, vector<27x128xbf16>, vector<128x128xf32> -> vector<128x128xf32>
    %23 = vector.broadcast %1 : vector<1x128xf32> to vector<128x128xf32>
    %24 = arith.mulf %22, %23 : vector<128x128xf32>
    %25 = vector.broadcast %2 : vector<1x128xf32> to vector<128x128xf32>
    %26 = arith.addf %24, %25 : vector<128x128xf32>
    %27 = arith.maximumf %19, %26 : vector<128x128xf32>
    %28 = arith.index_cast %4 : i32 to index
    %c0_10 = arith.constant 0 : index
    %29 = vector.load %arg4[%28, %c0_10] : memref<256x27xbf16, #tpu.memory_space<vmem>>, vector<128x27xbf16>
    %cst_11 = arith.constant dense<0.000000e+00> : vector<128x128xf32>
    %30 = tpu.matmul %29, %0, %cst_11 {dimension_numbers = #tpu.dot_dimension_numbers<[1], [0], [0], [1], [0, 0, 1, 1], [], []>} : vector<128x27xbf16>, vector<27x128xbf16>, vector<128x128xf32> -> vector<128x128xf32>
    %31 = vector.broadcast %1 : vector<1x128xf32> to vector<128x128xf32>
    %32 = arith.mulf %30, %31 : vector<128x128xf32>
    %33 = vector.broadcast %2 : vector<1x128xf32> to vector<128x128xf32>
    %34 = arith.addf %32, %33 : vector<128x128xf32>
    %35 = arith.maximumf %27, %34 : vector<128x128xf32>
    %cst_12 = arith.constant 0.000000e+00 : f32
    %36 = vector.broadcast %cst_12 : f32 to vector<128x128xf32>
    %37 = arith.maximumf %35, %36 : vector<128x128xf32>
    %38 = arith.truncf %37 : vector<128x128xf32> to vector<128x128xbf16>
    %39 = arith.index_cast %4 : i32 to index
    %c0_13 = arith.constant 0 : index
    %40 = vector.load %arg8[%39, %c0_13] : memref<256x128xbf16, #tpu.memory_space<vmem>>, vector<128x128xbf16>
    tpu.vector_store %arg8[%39, %c0_13], %38 {strides = array<i32>} : memref<256x128xbf16, #tpu.memory_space<vmem>>, vector<128x128xbf16>,
    %c1_i32 = arith.constant 1 : i32
    %c128_i32_14 = arith.constant 128 : i32
    %41 = arith.muli %c1_i32, %c128_i32_14 : i32
    %42 = tpu.assume_multiple %41, 128 : i32
    %43 = arith.index_cast %42 : i32 to index
    %c0_15 = arith.constant 0 : index
    %44 = vector.load %arg1[%43, %c0_15] : memref<256x27xbf16, #tpu.memory_space<vmem>>, vector<128x27xbf16>
    %cst_16 = arith.constant dense<0.000000e+00> : vector<128x128xf32>
    %45 = tpu.matmul %44, %0, %cst_16 {dimension_numbers = #tpu.dot_dimension_numbers<[1], [0], [0], [1], [0, 0, 1, 1], [], []>} : vector<128x27xbf16>, vector<27x128xbf16>, vector<128x128xf32> -> vector<128x128xf32>
    %46 = vector.broadcast %1 : vector<1x128xf32> to vector<128x128xf32>
    %47 = arith.mulf %45, %46 : vector<128x128xf32>
    %48 = vector.broadcast %2 : vector<1x128xf32> to vector<128x128xf32>
    %49 = arith.addf %47, %48 : vector<128x128xf32>
    %50 = arith.index_cast %42 : i32 to index
    %c0_17 = arith.constant 0 : index
    %51 = vector.load %arg2[%50, %c0_17] : memref<256x27xbf16, #tpu.memory_space<vmem>>, vector<128x27xbf16>
    %cst_18 = arith.constant dense<0.000000e+00> : vector<128x128xf32>
    %52 = tpu.matmul %51, %0, %cst_18 {dimension_numbers = #tpu.dot_dimension_numbers<[1], [0], [0], [1], [0, 0, 1, 1], [], []>} : vector<128x27xbf16>, vector<27x128xbf16>, vector<128x128xf32> -> vector<128x128xf32>
    %53 = vector.broadcast %1 : vector<1x128xf32> to vector<128x128xf32>
    %54 = arith.mulf %52, %53 : vector<128x128xf32>
    %55 = vector.broadcast %2 : vector<1x128xf32> to vector<128x128xf32>
    %56 = arith.addf %54, %55 : vector<128x128xf32>
    %57 = arith.maximumf %49, %56 : vector<128x128xf32>
    %58 = arith.index_cast %42 : i32 to index
    %c0_19 = arith.constant 0 : index
    %59 = vector.load %arg3[%58, %c0_19] : memref<256x27xbf16, #tpu.memory_space<vmem>>, vector<128x27xbf16>
    %cst_20 = arith.constant dense<0.000000e+00> : vector<128x128xf32>
    %60 = tpu.matmul %59, %0, %cst_20 {dimension_numbers = #tpu.dot_dimension_numbers<[1], [0], [0], [1], [0, 0, 1, 1], [], []>} : vector<128x27xbf16>, vector<27x128xbf16>, vector<128x128xf32> -> vector<128x128xf32>
    %61 = vector.broadcast %1 : vector<1x128xf32> to vector<128x128xf32>
    %62 = arith.mulf %60, %61 : vector<128x128xf32>
    %63 = vector.broadcast %2 : vector<1x128xf32> to vector<128x128xf32>
    %64 = arith.addf %62, %63 : vector<128x128xf32>
    %65 = arith.maximumf %57, %64 : vector<128x128xf32>
    %66 = arith.index_cast %42 : i32 to index
    %c0_21 = arith.constant 0 : index
    %67 = vector.load %arg4[%66, %c0_21] : memref<256x27xbf16, #tpu.memory_space<vmem>>, vector<128x27xbf16>
    %cst_22 = arith.constant dense<0.000000e+00> : vector<128x128xf32>
    %68 = tpu.matmul %67, %0, %cst_22 {dimension_numbers = #tpu.dot_dimension_numbers<[1], [0], [0], [1], [0, 0, 1, 1], [], []>} : vector<128x27xbf16>, vector<27x128xbf16>, vector<128x128xf32> -> vector<128x128xf32>
    %69 = vector.broadcast %1 : vector<1x128xf32> to vector<128x128xf32>
    %70 = arith.mulf %68, %69 : vector<128x128xf32>
    %71 = vector.broadcast %2 : vector<1x128xf32> to vector<128x128xf32>
    %72 = arith.addf %70, %71 : vector<128x128xf32>
    %73 = arith.maximumf %65, %72 : vector<128x128xf32>
    %cst_23 = arith.constant 0.000000e+00 : f32
    %74 = vector.broadcast %cst_23 : f32 to vector<128x128xf32>
    %75 = arith.maximumf %73, %74 : vector<128x128xf32>
    %76 = arith.truncf %75 : vector<128x128xf32> to vector<128x128xbf16>
    %77 = arith.index_cast %42 : i32 to index
    %c0_24 = arith.constant 0 : index
    %78 = vector.load %arg8[%77, %c0_24] : memref<256x128xbf16, #tpu.memory_space<vmem>>, vector<128x128xbf16>
    tpu.vector_store %arg8[%77, %c0_24], %76 {strides = array<i32>} : memref<256x128xbf16, #tpu.memory_space<vmem>>, vector<128x128xbf16>,
    %c2_i32 = arith.constant 2 : i32
    return
  }
  func.func @transform_0(%arg0: i32) -> (i32, i32) {
    %c0_i32 = arith.constant 0 : i32
    %c0_i32_0 = arith.constant 0 : i32
    return %arg0, %c0_i32 : i32, i32
  }
  func.func @transform_1(%arg0: i32) -> (i32, i32) {
    %c0_i32 = arith.constant 0 : i32
    %c0_i32_0 = arith.constant 0 : i32
    return %arg0, %c0_i32 : i32, i32
  }
  func.func @transform_2(%arg0: i32) -> (i32, i32) {
    %c0_i32 = arith.constant 0 : i32
    %c0_i32_0 = arith.constant 0 : i32
    return %arg0, %c0_i32 : i32, i32
  }
  func.func @transform_3(%arg0: i32) -> (i32, i32) {
    %c0_i32 = arith.constant 0 : i32
    %c0_i32_0 = arith.constant 0 : i32
    return %arg0, %c0_i32 : i32, i32
  }
  func.func @transform_4(%arg0: i32) -> (i32, i32) {
    %c0_i32 = arith.constant 0 : i32
    %c0_i32_0 = arith.constant 0 : i32
    %c0_i32_1 = arith.constant 0 : i32
    return %c0_i32, %c0_i32_0 : i32, i32
  }
  func.func @transform_5(%arg0: i32) -> (i32, i32) {
    %c0_i32 = arith.constant 0 : i32
    %c0_i32_0 = arith.constant 0 : i32
    %c0_i32_1 = arith.constant 0 : i32
    return %c0_i32, %c0_i32_0 : i32, i32
  }
  func.func @transform_6(%arg0: i32) -> (i32, i32) {
    %c0_i32 = arith.constant 0 : i32
    %c0_i32_0 = arith.constant 0 : i32
    %c0_i32_1 = arith.constant 0 : i32
    return %c0_i32, %c0_i32_0 : i32, i32
  }
  func.func @transform_7(%arg0: i32) -> (i32, i32) {
    %c0_i32 = arith.constant 0 : i32
    %c0_i32_0 = arith.constant 0 : i32
    return %arg0, %c0_i32 : i32, i32
  }
}

module attributes {stable_mosaic.version = 11 : i64} {
  func.func @kernel(%arg0: i32, %arg1: memref<128x1152xbf16, #tpu.memory_space<vmem>>, %arg2: memref<128x1152xbf16, #tpu.memory_space<vmem>>, %arg3: memref<128x1152xbf16, #tpu.memory_space<vmem>>, %arg4: memref<128x1152xbf16, #tpu.memory_space<vmem>>, %arg5: memref<1152x64xbf16, #tpu.memory_space<vmem>>, %arg6: memref<1x64xf32, #tpu.memory_space<vmem>>, %arg7: memref<1x64xf32, #tpu.memory_space<vmem>>, %arg8: memref<128x64xbf16, #tpu.memory_space<vmem>>) attributes {dimension_semantics = [#tpu.dimension_semantics<parallel>], iteration_bounds = array<i64: 1>, scalar_prefetch = 0 : i64, scratch_operands = 0 : i64, tpu.core_type = #tpu.core_type<tc>, window_params = [{transform_indices = @transform_0, window_bounds = array<i64: 128, 1152>}, {transform_indices = @transform_1, window_bounds = array<i64: 128, 1152>}, {transform_indices = @transform_2, window_bounds = array<i64: 128, 1152>}, {transform_indices = @transform_3, window_bounds = array<i64: 128, 1152>}, {pipeline_mode = #tpu.pipeline_mode<synchronous>, transform_indices = @transform_4, window_bounds = array<i64: 1152, 64>}, {pipeline_mode = #tpu.pipeline_mode<synchronous>, transform_indices = @transform_5, window_bounds = array<i64: 1, 64>}, {pipeline_mode = #tpu.pipeline_mode<synchronous>, transform_indices = @transform_6, window_bounds = array<i64: 1, 64>}, {transform_indices = @transform_7, window_bounds = array<i64: 128, 64>}]} {
    %c0 = arith.constant 0 : index
    %c0_0 = arith.constant 0 : index
    %0 = vector.load %arg5[%c0, %c0_0] : memref<1152x64xbf16, #tpu.memory_space<vmem>>, vector<1152x64xbf16>
    %c0_1 = arith.constant 0 : index
    %c0_2 = arith.constant 0 : index
    %1 = vector.load %arg6[%c0_1, %c0_2] : memref<1x64xf32, #tpu.memory_space<vmem>>, vector<1x64xf32>
    %c0_3 = arith.constant 0 : index
    %c0_4 = arith.constant 0 : index
    %2 = vector.load %arg7[%c0_3, %c0_4] : memref<1x64xf32, #tpu.memory_space<vmem>>, vector<1x64xf32>
    %c0_i32 = arith.constant 0 : i32
    %c128_i32 = arith.constant 128 : i32
    %3 = arith.muli %c0_i32, %c128_i32 : i32
    %4 = tpu.assume_multiple %3, 128 : i32
    %5 = arith.index_cast %4 : i32 to index
    %c0_5 = arith.constant 0 : index
    %6 = vector.load %arg1[%5, %c0_5] : memref<128x1152xbf16, #tpu.memory_space<vmem>>, vector<128x1152xbf16>
    %cst = arith.constant dense<0.000000e+00> : vector<128x64xf32>
    %7 = tpu.matmul %6, %0, %cst {dimension_numbers = #tpu.dot_dimension_numbers<[1], [0], [0], [1], [0, 0, 1, 1], [], []>} : vector<128x1152xbf16>, vector<1152x64xbf16>, vector<128x64xf32> -> vector<128x64xf32>
    %8 = vector.broadcast %1 : vector<1x64xf32> to vector<128x64xf32>
    %9 = arith.mulf %7, %8 : vector<128x64xf32>
    %10 = vector.broadcast %2 : vector<1x64xf32> to vector<128x64xf32>
    %11 = arith.addf %9, %10 : vector<128x64xf32>
    %12 = arith.index_cast %4 : i32 to index
    %c0_6 = arith.constant 0 : index
    %13 = vector.load %arg2[%12, %c0_6] : memref<128x1152xbf16, #tpu.memory_space<vmem>>, vector<128x1152xbf16>
    %cst_7 = arith.constant dense<0.000000e+00> : vector<128x64xf32>
    %14 = tpu.matmul %13, %0, %cst_7 {dimension_numbers = #tpu.dot_dimension_numbers<[1], [0], [0], [1], [0, 0, 1, 1], [], []>} : vector<128x1152xbf16>, vector<1152x64xbf16>, vector<128x64xf32> -> vector<128x64xf32>
    %15 = vector.broadcast %1 : vector<1x64xf32> to vector<128x64xf32>
    %16 = arith.mulf %14, %15 : vector<128x64xf32>
    %17 = vector.broadcast %2 : vector<1x64xf32> to vector<128x64xf32>
    %18 = arith.addf %16, %17 : vector<128x64xf32>
    %19 = arith.maximumf %11, %18 : vector<128x64xf32>
    %20 = arith.index_cast %4 : i32 to index
    %c0_8 = arith.constant 0 : index
    %21 = vector.load %arg3[%20, %c0_8] : memref<128x1152xbf16, #tpu.memory_space<vmem>>, vector<128x1152xbf16>
    %cst_9 = arith.constant dense<0.000000e+00> : vector<128x64xf32>
    %22 = tpu.matmul %21, %0, %cst_9 {dimension_numbers = #tpu.dot_dimension_numbers<[1], [0], [0], [1], [0, 0, 1, 1], [], []>} : vector<128x1152xbf16>, vector<1152x64xbf16>, vector<128x64xf32> -> vector<128x64xf32>
    %23 = vector.broadcast %1 : vector<1x64xf32> to vector<128x64xf32>
    %24 = arith.mulf %22, %23 : vector<128x64xf32>
    %25 = vector.broadcast %2 : vector<1x64xf32> to vector<128x64xf32>
    %26 = arith.addf %24, %25 : vector<128x64xf32>
    %27 = arith.maximumf %19, %26 : vector<128x64xf32>
    %28 = arith.index_cast %4 : i32 to index
    %c0_10 = arith.constant 0 : index
    %29 = vector.load %arg4[%28, %c0_10] : memref<128x1152xbf16, #tpu.memory_space<vmem>>, vector<128x1152xbf16>
    %cst_11 = arith.constant dense<0.000000e+00> : vector<128x64xf32>
    %30 = tpu.matmul %29, %0, %cst_11 {dimension_numbers = #tpu.dot_dimension_numbers<[1], [0], [0], [1], [0, 0, 1, 1], [], []>} : vector<128x1152xbf16>, vector<1152x64xbf16>, vector<128x64xf32> -> vector<128x64xf32>
    %31 = vector.broadcast %1 : vector<1x64xf32> to vector<128x64xf32>
    %32 = arith.mulf %30, %31 : vector<128x64xf32>
    %33 = vector.broadcast %2 : vector<1x64xf32> to vector<128x64xf32>
    %34 = arith.addf %32, %33 : vector<128x64xf32>
    %35 = arith.maximumf %27, %34 : vector<128x64xf32>
    %cst_12 = arith.constant 0.000000e+00 : f32
    %36 = vector.broadcast %cst_12 : f32 to vector<128x64xf32>
    %37 = arith.maximumf %35, %36 : vector<128x64xf32>
    %38 = arith.truncf %37 : vector<128x64xf32> to vector<128x64xbf16>
    %39 = arith.index_cast %4 : i32 to index
    %c0_13 = arith.constant 0 : index
    %40 = vector.load %arg8[%39, %c0_13] : memref<128x64xbf16, #tpu.memory_space<vmem>>, vector<128x64xbf16>
    tpu.vector_store %arg8[%39, %c0_13], %38 {strides = array<i32>} : memref<128x64xbf16, #tpu.memory_space<vmem>>, vector<128x64xbf16>,
    %c1_i32 = arith.constant 1 : i32
    return
  }
  func.func @transform_0(%arg0: i32) -> (i32, i32) {
    %c0_i32 = arith.constant 0 : i32
    %c0_i32_0 = arith.constant 0 : i32
    return %arg0, %c0_i32 : i32, i32
  }
  func.func @transform_1(%arg0: i32) -> (i32, i32) {
    %c0_i32 = arith.constant 0 : i32
    %c0_i32_0 = arith.constant 0 : i32
    return %arg0, %c0_i32 : i32, i32
  }
  func.func @transform_2(%arg0: i32) -> (i32, i32) {
    %c0_i32 = arith.constant 0 : i32
    %c0_i32_0 = arith.constant 0 : i32
    return %arg0, %c0_i32 : i32, i32
  }
  func.func @transform_3(%arg0: i32) -> (i32, i32) {
    %c0_i32 = arith.constant 0 : i32
    %c0_i32_0 = arith.constant 0 : i32
    return %arg0, %c0_i32 : i32, i32
  }
  func.func @transform_4(%arg0: i32) -> (i32, i32) {
    %c0_i32 = arith.constant 0 : i32
    %c0_i32_0 = arith.constant 0 : i32
    %c0_i32_1 = arith.constant 0 : i32
    return %c0_i32, %c0_i32_0 : i32, i32
  }
  func.func @transform_5(%arg0: i32) -> (i32, i32) {
    %c0_i32 = arith.constant 0 : i32
    %c0_i32_0 = arith.constant 0 : i32
    %c0_i32_1 = arith.constant 0 : i32
    return %c0_i32, %c0_i32_0 : i32, i32
  }
  func.func @transform_6(%arg0: i32) -> (i32, i32) {
    %c0_i32 = arith.constant 0 : i32
    %c0_i32_0 = arith.constant 0 : i32
    %c0_i32_1 = arith.constant 0 : i32
    return %c0_i32, %c0_i32_0 : i32, i32
  }
  func.func @transform_7(%arg0: i32) -> (i32, i32) {
    %c0_i32 = arith.constant 0 : i32
    %c0_i32_0 = arith.constant 0 : i32
    return %arg0, %c0_i32 : i32, i32
  }
}

module attributes {stable_mosaic.version = 11 : i64} {
  func.func @_fc_head_kernel(%arg0: i32, %arg1: memref<2x4096xbf16, #tpu.memory_space<vmem>>, %arg2: memref<4096x256xbf16, #tpu.memory_space<vmem>>, %arg3: memref<1x256xf32, #tpu.memory_space<vmem>>, %arg4: memref<256x128xbf16, #tpu.memory_space<vmem>>, %arg5: memref<1x128xf32, #tpu.memory_space<vmem>>, %arg6: memref<2x128xf32, #tpu.memory_space<vmem>>) attributes {dimension_semantics = [#tpu.dimension_semantics<parallel>], iteration_bounds = array<i64: 1>, scalar_prefetch = 0 : i64, scratch_operands = 0 : i64, tpu.core_type = #tpu.core_type<tc>, window_params = [{transform_indices = @transform_0, window_bounds = array<i64: 2, 4096>}, {pipeline_mode = #tpu.pipeline_mode<synchronous>, transform_indices = @transform_1, window_bounds = array<i64: 4096, 256>}, {pipeline_mode = #tpu.pipeline_mode<synchronous>, transform_indices = @transform_2, window_bounds = array<i64: 1, 256>}, {pipeline_mode = #tpu.pipeline_mode<synchronous>, transform_indices = @transform_3, window_bounds = array<i64: 256, 128>}, {pipeline_mode = #tpu.pipeline_mode<synchronous>, transform_indices = @transform_4, window_bounds = array<i64: 1, 128>}, {transform_indices = @transform_5, window_bounds = array<i64: 2, 128>}]} {
    %c0 = arith.constant 0 : index
    %c0_0 = arith.constant 0 : index
    %0 = vector.load %arg1[%c0, %c0_0] : memref<2x4096xbf16, #tpu.memory_space<vmem>>, vector<2x4096xbf16>
    %c0_1 = arith.constant 0 : index
    %c0_2 = arith.constant 0 : index
    %1 = vector.load %arg2[%c0_1, %c0_2] : memref<4096x256xbf16, #tpu.memory_space<vmem>>, vector<4096x256xbf16>
    %cst = arith.constant dense<0.000000e+00> : vector<2x256xf32>
    %2 = tpu.matmul %0, %1, %cst {dimension_numbers = #tpu.dot_dimension_numbers<[1], [0], [0], [1], [0, 0, 1, 1], [], []>} : vector<2x4096xbf16>, vector<4096x256xbf16>, vector<2x256xf32> -> vector<2x256xf32>
    %c0_3 = arith.constant 0 : index
    %c0_4 = arith.constant 0 : index
    %3 = vector.load %arg3[%c0_3, %c0_4] : memref<1x256xf32, #tpu.memory_space<vmem>>, vector<1x256xf32>
    %4 = vector.broadcast %3 : vector<1x256xf32> to vector<2x256xf32>
    %5 = arith.addf %2, %4 : vector<2x256xf32>
    %cst_5 = arith.constant 0.000000e+00 : f32
    %6 = vector.broadcast %cst_5 : f32 to vector<2x256xf32>
    %7 = arith.maximumf %5, %6 : vector<2x256xf32>
    %8 = arith.truncf %7 : vector<2x256xf32> to vector<2x256xbf16>
    %c0_6 = arith.constant 0 : index
    %c0_7 = arith.constant 0 : index
    %9 = vector.load %arg4[%c0_6, %c0_7] : memref<256x128xbf16, #tpu.memory_space<vmem>>, vector<256x128xbf16>
    %cst_8 = arith.constant dense<0.000000e+00> : vector<2x128xf32>
    %10 = tpu.matmul %8, %9, %cst_8 {dimension_numbers = #tpu.dot_dimension_numbers<[1], [0], [0], [1], [0, 0, 1, 1], [], []>} : vector<2x256xbf16>, vector<256x128xbf16>, vector<2x128xf32> -> vector<2x128xf32>
    %c0_9 = arith.constant 0 : index
    %c0_10 = arith.constant 0 : index
    %11 = vector.load %arg5[%c0_9, %c0_10] : memref<1x128xf32, #tpu.memory_space<vmem>>, vector<1x128xf32>
    %12 = vector.broadcast %11 : vector<1x128xf32> to vector<2x128xf32>
    %13 = arith.addf %10, %12 : vector<2x128xf32>
    %c0_11 = arith.constant 0 : index
    %c0_12 = arith.constant 0 : index
    %14 = vector.load %arg6[%c0_11, %c0_12] : memref<2x128xf32, #tpu.memory_space<vmem>>, vector<2x128xf32>
    tpu.vector_store %arg6[%c0_11, %c0_12], %13 {strides = array<i32>} : memref<2x128xf32, #tpu.memory_space<vmem>>, vector<2x128xf32>,
    return
  }
  func.func @transform_0(%arg0: i32) -> (i32, i32) {
    %c0_i32 = arith.constant 0 : i32
    %c0_i32_0 = arith.constant 0 : i32
    return %arg0, %c0_i32 : i32, i32
  }
  func.func @transform_1(%arg0: i32) -> (i32, i32) {
    %c0_i32 = arith.constant 0 : i32
    %c0_i32_0 = arith.constant 0 : i32
    %c0_i32_1 = arith.constant 0 : i32
    return %c0_i32, %c0_i32_0 : i32, i32
  }
  func.func @transform_2(%arg0: i32) -> (i32, i32) {
    %c0_i32 = arith.constant 0 : i32
    %c0_i32_0 = arith.constant 0 : i32
    %c0_i32_1 = arith.constant 0 : i32
    return %c0_i32, %c0_i32_0 : i32, i32
  }
  func.func @transform_3(%arg0: i32) -> (i32, i32) {
    %c0_i32 = arith.constant 0 : i32
    %c0_i32_0 = arith.constant 0 : i32
    %c0_i32_1 = arith.constant 0 : i32
    return %c0_i32, %c0_i32_0 : i32, i32
  }
  func.func @transform_4(%arg0: i32) -> (i32, i32) {
    %c0_i32 = arith.constant 0 : i32
    %c0_i32_0 = arith.constant 0 : i32
    %c0_i32_1 = arith.constant 0 : i32
    return %c0_i32, %c0_i32_0 : i32, i32
  }
  func.func @transform_5(%arg0: i32) -> (i32, i32) {
    %c0_i32 = arith.constant 0 : i32
    %c0_i32_0 = arith.constant 0 : i32
    return %arg0, %c0_i32 : i32, i32
  }
}

</mosaic_0001>

<llo_original>
// kernel: custom_cnn_forward.3
$region0: #{custom_cnn_forward.3}
  #allocation0 [shape = 'u32[]', space=smem, size = 0x4, offset = 0x4, fixed_abs, tag = 'smem constant byte address 0x4 - core index']
  #allocation1 [shape = 'u32[144,128]{1,0:T(1,128)}', space=vmem, size = 0x12000, scoped, tag = 'internal scratch']
  %s0 = inlined_call_operand.vmem [shape: bf16[512,27], index: 0, kind: input, shape index: {}]
  %s1 = inlined_call_operand.vmem [shape: bf16[512,27], index: 1, kind: input, shape index: {}]
  %s2 = inlined_call_operand.vmem [shape: bf16[512,27], index: 2, kind: input, shape index: {}]
  %s3 = inlined_call_operand.vmem [shape: bf16[512,27], index: 3, kind: input, shape index: {}]
  %s4 = inlined_call_operand.vmem [shape: bf16[27,128], index: 4, kind: input, shape index: {}]
  %s5 = inlined_call_operand.vmem [shape: f32[1,128], index: 5, kind: input, shape index: {}]
  %s6 = inlined_call_operand.vmem [shape: f32[1,128], index: 6, kind: input, shape index: {}]
  %s7 = inlined_call_operand.vmem [shape: bf16[512,128], index: 7, kind: output, shape index: {}]
  %s8 = sld [smem:[#allocation0]]
  $region61: #{custom_cnn_forward.3} parent=0
    _
  %s10 = ssub.s32 1, %s8
  %s11 = scalar_select 0, %s10, %s8
  loop: start=0, step=1, limit=4
  $region2: #{custom_cnn_forward.3} parent=0 // loop_pre_header
    _
  $region3: #{custom_cnn_forward.3} parent=0 // loop_header
    %s13 = sphi 0, %s17
    %p14 = scmp.ge.s32.totalorder %s13, 4
    %s23 = sphi 0, %s25
    %s26 = sphi 0, %s23
    %s27 = sphi 0, %s26
    %s43 = sphi 0, %s27
    %s49 = sphi 0, %s51
    %s52 = sphi 0, %s49
    %s53 = sphi 0, %s52
    %s69 = sphi 0, %s53
    %s75 = sphi 0, %s77
    %s78 = sphi 0, %s75
    %s79 = sphi 0, %s78
    %s95 = sphi 0, %s79
    %s101 = sphi 0, %s103
    %s104 = sphi 0, %s101
    %s105 = sphi 0, %s104
    %s121 = sphi 0, %s105
    %s125 = sphi 0, %s125
    %s127 = sphi 0, %s125
    %s128 = sphi 0, %s127
    %s142 = sphi 0, %s128
    %s146 = sphi 0, %s146
    %s148 = sphi 0, %s146
    %s149 = sphi 0, %s148
    %s163 = sphi 0, %s149
    %s167 = sphi 0, %s167
    %s169 = sphi 0, %s167
    %s170 = sphi 0, %s169
    %s184 = sphi 0, %s170
    %s190 = sphi 0, %s192
    %s193 = sphi 0, %s190
    %s194 = sphi 0, %s193
    %s210 = sphi 0, %s194
  $region4: #{custom_cnn_forward.3} parent=0 // loop_header_branch
    %16 = sbr.rel (%p14) target = $region8
  $region5: #{custom_cnn_forward.3} parent=0 // loop_body
    %s18 = ssub.s32 %s13, 1
    %s19 = ssub.s32 %s13, 2
    %s20 = sadd.s32 %s13, 1
    %s21 = ssub.s32 %s13, %s20
    %p22 = scmp.eq.s32.totalorder %s21, 0
    %s24 = sadd.s32 %s23, 1
    %s25 = scalar_select %p22, %s23, %s24
    %p28 = pneg %p22
    %p29 = scmp.eq.s32.totalorder %s13, 1
    %p30 = por %p28, %p29
    %p31 = scmp.ne.s32.totalorder %s23, %s26
    %p32 = scmp.eq.s32.totalorder %s13, 0
    %p33 = por %p31, %p32
    %p34 = scmp.ne.s32.totalorder %s23, %s26
    %p35 = scmp.eq.s32.totalorder %s18, 1
    %p36 = por %p34, %p35
    %p37 = scmp.ne.s32.totalorder %s26, %s27
    %p38 = scmp.eq.s32.totalorder %s18, 0
    %p39 = por %p37, %p38
    %p40 = scmp.ne.s32.totalorder %s26, %s27
    %p41 = scmp.eq.s32.totalorder %s19, 1
    %p42 = por %p40, %p41
    %p44 = scmp.ne.s32.totalorder %s27, %s43
    %p45 = scmp.eq.s32.totalorder %s19, 0
    %p46 = por %p44, %p45
    %s47 = ssub.s32 %s13, %s20
    %p48 = scmp.eq.s32.totalorder %s47, 0
    %s50 = sadd.s32 %s49, 1
    %s51 = scalar_select %p48, %s49, %s50
    %p54 = pneg %p48
    %p55 = scmp.eq.s32.totalorder %s13, 1
    %p56 = por %p54, %p55
    %p57 = scmp.ne.s32.totalorder %s49, %s52
    %p58 = scmp.eq.s32.totalorder %s13, 0
    %p59 = por %p57, %p58
    %p60 = scmp.ne.s32.totalorder %s49, %s52
    %p61 = scmp.eq.s32.totalorder %s18, 1
    %p62 = por %p60, %p61
    %p63 = scmp.ne.s32.totalorder %s52, %s53
    %p64 = scmp.eq.s32.totalorder %s18, 0
    %p65 = por %p63, %p64
    %p66 = scmp.ne.s32.totalorder %s52, %s53
    %p67 = scmp.eq.s32.totalorder %s19, 1
    %p68 = por %p66, %p67
    %p70 = scmp.ne.s32.totalorder %s53, %s69
    %p71 = scmp.eq.s32.totalorder %s19, 0
    %p72 = por %p70, %p71
    %s73 = ssub.s32 %s13, %s20
    %p74 = scmp.eq.s32.totalorder %s73, 0
    %s76 = sadd.s32 %s75, 1
    %s77 = scalar_select %p74, %s75, %s76
    %p80 = pneg %p74
    %p81 = scmp.eq.s32.totalorder %s13, 1
    %p82 = por %p80, %p81
    %p83 = scmp.ne.s32.totalorder %s75, %s78
    %p84 = scmp.eq.s32.totalorder %s13, 0
    %p85 = por %p83, %p84
    %p86 = scmp.ne.s32.totalorder %s75, %s78
    %p87 = scmp.eq.s32.totalorder %s18, 1
    %p88 = por %p86, %p87
    %p89 = scmp.ne.s32.totalorder %s78, %s79
    %p90 = scmp.eq.s32.totalorder %s18, 0
    %p91 = por %p89, %p90
    %p92 = scmp.ne.s32.totalorder %s78, %s79
    %p93 = scmp.eq.s32.totalorder %s19, 1
    %p94 = por %p92, %p93
    %p96 = scmp.ne.s32.totalorder %s79, %s95
    %p97 = scmp.eq.s32.totalorder %s19, 0
    %p98 = por %p96, %p97
    %s99 = ssub.s32 %s13, %s20
    %p100 = scmp.eq.s32.totalorder %s99, 0
    %s102 = sadd.s32 %s101, 1
    %s103 = scalar_select %p100, %s101, %s102
    %p106 = pneg %p100
    %p107 = scmp.eq.s32.totalorder %s13, 1
    %p108 = por %p106, %p107
    %p109 = scmp.ne.s32.totalorder %s101, %s104
    %p110 = scmp.eq.s32.totalorder %s13, 0
    %p111 = por %p109, %p110
    %p112 = scmp.ne.s32.totalorder %s101, %s104
    %p113 = scmp.eq.s32.totalorder %s18, 1
    %p114 = por %p112, %p113
    %p115 = scmp.ne.s32.totalorder %s104, %s105
    %p116 = scmp.eq.s32.totalorder %s18, 0
    %p117 = por %p115, %p116
    %p118 = scmp.ne.s32.totalorder %s104, %s105
    %p119 = scmp.eq.s32.totalorder %s19, 1
    %p120 = por %p118, %p119
    %p122 = scmp.ne.s32.totalorder %s105, %s121
    %p123 = scmp.eq.s32.totalorder %s19, 0
    %p124 = por %p122, %p123
    %s126 = sadd.s32 %s125, 1
    %p129 = scmp.eq.s32.totalorder %s13, 1
    %p130 = scmp.ne.s32.totalorder %s125, %s127
    %p131 = scmp.eq.s32.totalorder %s13, 0
    %p132 = por %p130, %p131
    %p133 = scmp.ne.s32.totalorder %s125, %s127
    %p134 = scmp.eq.s32.totalorder %s18, 1
    %p135 = por %p133, %p134
    %p136 = scmp.ne.s32.totalorder %s127, %s128
    %p137 = scmp.eq.s32.totalorder %s18, 0
    %p138 = por %p136, %p137
    %p139 = scmp.ne.s32.totalorder %s127, %s128
    %p140 = scmp.eq.s32.totalorder %s19, 1
    %p141 = por %p139, %p140
    %p143 = scmp.ne.s32.totalorder %s128, %s142
    %p144 = scmp.eq.s32.totalorder %s19, 0
    %p145 = por %p143, %p144
    %s147 = sadd.s32 %s146, 1
    %p150 = scmp.eq.s32.totalorder %s13, 1
    %p151 = scmp.ne.s32.totalorder %s146, %s148
    %p152 = scmp.eq.s32.totalorder %s13, 0
    %p153 = por %p151, %p152
    %p154 = scmp.ne.s32.totalorder %s146, %s148
    %p155 = scmp.eq.s32.totalorder %s18, 1
    %p156 = por %p154, %p155
    %p157 = scmp.ne.s32.totalorder %s148, %s149
    %p158 = scmp.eq.s32.totalorder %s18, 0
    %p159 = por %p157, %p158
    %p160 = scmp.ne.s32.totalorder %s148, %s149
    %p161 = scmp.eq.s32.totalorder %s19, 1
    %p162 = por %p160, %p161
    %p164 = scmp.ne.s32.totalorder %s149, %s163
    %p165 = scmp.eq.s32.totalorder %s19, 0
    %p166 = por %p164, %p165
    %s168 = sadd.s32 %s167, 1
    %p171 = scmp.eq.s32.totalorder %s13, 1
    %p172 = scmp.ne.s32.totalorder %s167, %s169
    %p173 = scmp.eq.s32.totalorder %s13, 0
    %p174 = por %p172, %p173
    %p175 = scmp.ne.s32.totalorder %s167, %s169
    %p176 = scmp.eq.s32.totalorder %s18, 1
    %p177 = por %p175, %p176
    %p178 = scmp.ne.s32.totalorder %s169, %s170
    %p179 = scmp.eq.s32.totalorder %s18, 0
    %p180 = por %p178, %p179
    %p181 = scmp.ne.s32.totalorder %s169, %s170
    %p182 = scmp.eq.s32.totalorder %s19, 1
    %p183 = por %p181, %p182
    %p185 = scmp.ne.s32.totalorder %s170, %s184
    %p186 = scmp.eq.s32.totalorder %s19, 0
    %p187 = por %p185, %p186
    %s188 = ssub.s32 %s13, %s20
    %p189 = scmp.eq.s32.totalorder %s188, 0
    %s191 = sadd.s32 %s190, 1
    %s192 = scalar_select %p189, %s190, %s191
    %p195 = pneg %p189
    %p196 = scmp.eq.s32.totalorder %s13, 1
    %p197 = por %p195, %p196
    %p198 = scmp.ne.s32.totalorder %s190, %s193
    %p199 = scmp.eq.s32.totalorder %s13, 0
    %p200 = por %p198, %p199
    %p201 = scmp.ne.s32.totalorder %s190, %s193
    %p202 = scmp.eq.s32.totalorder %s18, 1
    %p203 = por %p201, %p202
    %p204 = scmp.ne.s32.totalorder %s193, %s194
    %p205 = scmp.eq.s32.totalorder %s18, 0
    %p206 = por %p204, %p205
    %p207 = scmp.ne.s32.totalorder %s193, %s194
    %p208 = scmp.eq.s32.totalorder %s19, 1
    %p209 = por %p207, %p208
    %p211 = scmp.ne.s32.totalorder %s194, %s210
    %p212 = scmp.eq.s32.totalorder %s19, 0
    %p213 = por %p211, %p212
    %p214 = scmp.le.s32.totalorder 1, %s13
    %p215 = scmp.lt.s32.totalorder %s13, 3
    %p216 = pnand %p214, %p215
    %p217 = pneg %p216
    // Predicated region
    $region9: #{custom_cnn_forward.3} parent=5 // pred_check
      _
    $region10: #{custom_cnn_forward.3} parent=5 // pred_check_branch
      %219 = sbr.rel (%p216) target = $region12
    $region11: #{custom_cnn_forward.3} parent=5 // pred_region
      %s220 = ssub.s32 %s13, 1
      // Predicated region
      $region13: #{custom_cnn_forward.3} parent=11 // pred_check
        %p221 = pneg %p138
      $region14: #{custom_cnn_forward.3} parent=11 // pred_check_branch
        %223 = sbr.rel (%p221) target = $region16
      $region15: #{custom_cnn_forward.3} parent=11 // pred_region
        _
      $region16: #{custom_cnn_forward.3} parent=11 // pred_fallthru
        _
      // Predicated region
      $region17: #{custom_cnn_forward.3} parent=11 // pred_check
        %p224 = pneg %p159
      $region18: #{custom_cnn_forward.3} parent=11 // pred_check_branch
        %226 = sbr.rel (%p224) target = $region20
      $region19: #{custom_cnn_forward.3} parent=11 // pred_region
        _
      $region20: #{custom_cnn_forward.3} parent=11 // pred_fallthru
        _
      // Predicated region
      $region21: #{custom_cnn_forward.3} parent=11 // pred_check
        %p227 = pneg %p180
      $region22: #{custom_cnn_forward.3} parent=11 // pred_check_branch
        %229 = sbr.rel (%p227) target = $region24
      $region23: #{custom_cnn_forward.3} parent=11 // pred_region
        _
      $region24: #{custom_cnn_forward.3} parent=11 // pred_fallthru
        _
    $region12: #{custom_cnn_forward.3} parent=5 // pred_fallthru
      _
    %p230 = scmp.lt.s32.totalorder %s13, 2
    // Predicated region
    $region25: #{custom_cnn_forward.3} parent=5 // pred_check
      %p231 = pneg %p230
    $region26: #{custom_cnn_forward.3} parent=5 // pred_check_branch
      %233 = sbr.rel (%p231) target = $region28
    $region27: #{custom_cnn_forward.3} parent=5 // pred_region
      // Predicated region
      $region29: #{custom_cnn_forward.3} parent=27 // pred_check
        %p234 = pneg %p33
      $region30: #{custom_cnn_forward.3} parent=27 // pred_check_branch
        %236 = sbr.rel (%p234) target = $region32
      $region31: #{custom_cnn_forward.3} parent=27 // pred_region
        %s237 = smul.u32 32, %s13
        %p238 = scmp.lt.s32.totalorder %s237, 63
        %s239 = scalar_select %p238, %s237, 63
        %s240 = smul.addr %s239, 4
        %s241 = scalar_lea.vmem %s0, %s240
        %s242 = smul.u32 32, %s13
      $region32: #{custom_cnn_forward.3} parent=27 // pred_fallthru
        _
      // Predicated region
      $region33: #{custom_cnn_forward.3} parent=27 // pred_check
        %p243 = pneg %p59
      $region34: #{custom_cnn_forward.3} parent=27 // pred_check_branch
        %245 = sbr.rel (%p243) target = $region36
      $region35: #{custom_cnn_forward.3} parent=27 // pred_region
        %s246 = smul.u32 32, %s13
        %p247 = scmp.lt.s32.totalorder %s246, 63
        %s248 = scalar_select %p247, %s246, 63
        %s249 = smul.addr %s248, 4
        %s250 = scalar_lea.vmem %s1, %s249
        %s251 = smul.u32 32, %s13
      $region36: #{custom_cnn_forward.3} parent=27 // pred_fallthru
        _
      // Predicated region
      $region37: #{custom_cnn_forward.3} parent=27 // pred_check
        %p252 = pneg %p85
      $region38: #{custom_cnn_forward.3} parent=27 // pred_check_branch
        %254 = sbr.rel (%p252) target = $region40
      $region39: #{custom_cnn_forward.3} parent=27 // pred_region
        %s255 = smul.u32 32, %s13
        %p256 = scmp.lt.s32.totalorder %s255, 63
        %s257 = scalar_select %p256, %s255, 63
        %s258 = smul.addr %s257, 4
        %s259 = scalar_lea.vmem %s2, %s258
        %s260 = smul.u32 32, %s13
      $region40: #{custom_cnn_forward.3} parent=27 // pred_fallthru
        _
      // Predicated region
      $region41: #{custom_cnn_forward.3} parent=27 // pred_check
        %p261 = pneg %p111
      $region42: #{custom_cnn_forward.3} parent=27 // pred_check_branch
        %263 = sbr.rel (%p261) target = $region44
      $region43: #{custom_cnn_forward.3} parent=27 // pred_region
        %s264 = smul.u32 32, %s13
        %p265 = scmp.lt.s32.totalorder %s264, 63
        %s266 = scalar_select %p265, %s264, 63
        %s267 = smul.addr %s266, 4
        %s268 = scalar_lea.vmem %s3, %s267
        %s269 = smul.u32 32, %s13
      $region44: #{custom_cnn_forward.3} parent=27 // pred_fallthru
        _
    $region28: #{custom_cnn_forward.3} parent=5 // pred_fallthru
      _
    %p270 = scmp.le.s32.totalorder 1, %s13
    %p271 = scmp.lt.s32.totalorder %s13, 3
    %p272 = pnand %p270, %p271
    %p273 = pneg %p272
    // Predicated region
    $region45: #{custom_cnn_forward.3} parent=5 // pred_check
      _
    $region46: #{custom_cnn_forward.3} parent=5 // pred_check_branch
      %275 = sbr.rel (%p272) target = $region48
    $region47: #{custom_cnn_forward.3} parent=5 // pred_region
      %s276 = ssub.s32 %s13, 1
      %s277 = smul.u32 32, %s18
      %p278 = scmp.lt.s32.totalorder %s277, 63
      %s279 = scalar_select %p278, %s277, 63
      %s280 = smul.addr %s279, 4
      %s281 = scalar_lea.vmem %s0, %s280
      %p282 = pneg %p39
      %p283 = pneg %p36
      %s284 = smul.u32 32, %s18
      %p285 = scmp.lt.s32.totalorder %s284, 63
      %s286 = scalar_select %p285, %s284, 63
      %s287 = smul.addr %s286, 4
      %s288 = scalar_lea.vmem %s1, %s287
      %p289 = pneg %p65
      %p290 = pneg %p62
      %s291 = smul.u32 32, %s18
      %p292 = scmp.lt.s32.totalorder %s291, 63
      %s293 = scalar_select %p292, %s291, 63
      %s294 = smul.addr %s293, 4
      %s295 = scalar_lea.vmem %s2, %s294
      %p296 = pneg %p91
      %p297 = pneg %p88
      %s298 = smul.u32 32, %s18
      %p299 = scmp.lt.s32.totalorder %s298, 63
      %s300 = scalar_select %p299, %s298, 63
      %s301 = smul.addr %s300, 4
      %s302 = scalar_lea.vmem %s3, %s301
      %p303 = pneg %p117
      %p304 = pneg %p114
      %p305 = pneg %p138
      %p306 = pneg %p135
      %p307 = pneg %p159
      %p308 = pneg %p156
      %p309 = pneg %p180
      %p310 = pneg %p177
      %p311 = pneg %p206
      %p312 = pneg %p203
      %s313 = smul.u32 32, %s18
      %p314 = scmp.lt.s32.totalorder %s313, 63
      %s315 = scalar_select %p314, %s313, 63
      %s316 = smul.addr %s315, 4
      %s317 = scalar_lea.vmem %s7, %s316
      %s318 = smul.u32 32, %s18
      %p319 = scmp.lt.s32.totalorder %s318, 63
      %s320 = scalar_select %p319, %s318, 63
      %s321 = smul.addr %s320, 4
      %s322 = scalar_lea.vmem %s0, %s321
      %s323 = smul.u32 32, %s18
      %s324 = smul.u32 32, %s18
      %p325 = scmp.lt.s32.totalorder %s324, 63
      %s326 = scalar_select %p325, %s324, 63
      %s327 = smul.addr %s326, 4
      %s328 = scalar_lea.vmem %s1, %s327
      %s329 = smul.u32 32, %s18
      %s330 = smul.u32 32, %s18
      %p331 = scmp.lt.s32.totalorder %s330, 63
      %s332 = scalar_select %p331, %s330, 63
      %s333 = smul.addr %s332, 4
      %s334 = scalar_lea.vmem %s2, %s333
      %s335 = smul.u32 32, %s18
      %s336 = smul.u32 32, %s18
      %p337 = scmp.lt.s32.totalorder %s336, 63
      %s338 = scalar_select %p337, %s336, 63
      %s339 = smul.addr %s338, 4
      %s340 = scalar_lea.vmem %s3, %s339
      %s341 = smul.u32 32, %s18
      %s342 = smul.u32 32, %s18
      %p343 = scmp.lt.s32.totalorder %s342, 63
      %s344 = scalar_select %p343, %s342, 63
      %s345 = smul.addr %s344, 4
      %s346 = scalar_lea.vmem %s7, %s345
      %s347 = smul.u32 32, %s18
      %v349 = vld [vmem:[%s4] sm:$0xf]
      %v350 = vld [vmem:[%s4 + $0x4] sm:$0xf]
      %v351 = vld [vmem:[%s4 + $0x8] sm:$0xf]
      %v352 = vld [vmem:[%s4 + $0xc] sm:$0x3]
      %v353 = vld [vmem:[%s5] sm:$0x1]
      %v354 = vld [vmem:[%s6] sm:$0x1]
      %v355 = vld [vmem:[%s322] sm:$0xf]
      %v356 = vld [vmem:[%s322 + $0x4] sm:$0xf]
      %v357 = vld [vmem:[%s322 + $0x8] sm:$0xf]
      %v358 = vld [vmem:[%s322 + $0xc] sm:$0xf]
      %v359 = vld [vmem:[%s322 + $0x10] sm:$0xf]
      %v360 = vld [vmem:[%s322 + $0x14] sm:$0xf]
      %v361 = vld [vmem:[%s322 + $0x18] sm:$0xf]
      %v362 = vld [vmem:[%s322 + $0x1c] sm:$0xf]
      %v363 = vld [vmem:[%s322 + $0x20] sm:$0xf]
      %v364 = vld [vmem:[%s322 + $0x24] sm:$0xf]
      %v365 = vld [vmem:[%s322 + $0x28] sm:$0xf]
      %v366 = vld [vmem:[%s322 + $0x2c] sm:$0xf]
      %v367 = vld [vmem:[%s322 + $0x30] sm:$0xf]
      %v368 = vld [vmem:[%s322 + $0x34] sm:$0xf]
      %v369 = vld [vmem:[%s322 + $0x38] sm:$0xf]
      %v370 = vld [vmem:[%s322 + $0x3c] sm:$0xf]
      %v387 = vunpack.c.l.b16 %v355
      %v388 = vunpack.c.l.b16 %v356
      %v389 = vunpack.c.l.b16 %v357
      %v390 = vunpack.c.l.b16 %v358
      %v391 = vunpack.c.l.b16 %v359
      %v392 = vunpack.c.l.b16 %v360
      %v393 = vunpack.c.l.b16 %v361
      %v394 = vunpack.c.l.b16 %v362
      %v395 = vunpack.c.l.b16 %v363
      %v396 = vunpack.c.l.b16 %v364
      %v397 = vunpack.c.l.b16 %v365
      %v398 = vunpack.c.l.b16 %v366
      %v399 = vunpack.c.l.b16 %v367
      %v400 = vunpack.c.l.b16 %v368
      %v401 = vunpack.c.l.b16 %v369
      %v402 = vunpack.c.l.b16 %v370
      %v403 = vpack.c.b16 %v388, %v387
      %v404 = vpack.c.b16 %v390, %v389
      %v405 = vpack.c.b16 %v392, %v391
      %v406 = vpack.c.b16 %v394, %v393
      %v407 = vpack.c.b16 %v396, %v395
      %v408 = vpack.c.b16 %v398, %v397
      %v409 = vpack.c.b16 %v400, %v399
      %v410 = vpack.c.b16 %v402, %v401
      %v415 = vunpack.c.l.b16 %v349
      %v416 = vunpack.c.l.b16 %v350
      %v417 = vunpack.c.l.b16 %v351
      %v418 = vunpack.c.l.b16 %v352
      %v419 = vpack.c.b16 %v416, %v415
      %v420 = vpack.c.b16 %v418, %v417
      %vm422 = vcmask 220160
      %v424 = vsel %vm422, %v403, 0
      %v427 = vsel %vm422, %v404, 0
      %v430 = vsel %vm422, %v405, 0
      %v433 = vsel %vm422, %v406, 0
      %v436 = vsel %vm422, %v407, 0
      %v439 = vsel %vm422, %v408, 0
      %v442 = vsel %vm422, %v409, 0
      %v445 = vsel %vm422, %v410, 0
      %vm447 = vcmask 1044480
      %vm448 = vcmask 1045504
      %v449 = vsel %vm447, 4294967295, 65535
      %v450 = vsel %vm448, %v449, 0
      %v452 = vand.u32 %v420, %v450
      %454 = vmatprep.subr.bf16.mxu0 0
      %455 = vmatpush1.bf16.msra.mxu0 %v419
      %456 = vmatprep.subr.bf16.mxu0 0
      %457 = vmatpush1.bf16.msra.mxu0 %v452
      %458 = vmatprep.subr.bf16.mxu0 0
      %459 = vmatpush1.bf16.msra.mxu0 0
      %460 = vmatprep.subr.bf16.mxu0 0
      %461 = vmatpush1.bf16.msra.mxu0 0
      %462 = vmatprep.subr.bf16.mxu0 0
      %463 = vmatpush1.bf16.msra.mxu0 0
      %464 = vmatprep.subr.bf16.mxu0 0
      %465 = vmatpush1.bf16.msra.mxu0 0
      %466 = vmatprep.subr.bf16.mxu0 0
      %467 = vmatpush1.bf16.msra.mxu0 0
      %468 = vmatprep.subr.bf16.mxu0 0
      %469 = vmatpush1.bf16.msra.mxu0 0
      %470 = vmatprep.subr.bf16.mxu0 0
      %471 = vmatpush1.bf16.msra.mxu0 0
      %472 = vmatprep.subr.bf16.mxu0 0
      %473 = vmatpush1.bf16.msra.mxu0 0
      %474 = vmatprep.subr.bf16.mxu0 0
      %475 = vmatpush1.bf16.msra.mxu0 0
      %476 = vmatprep.subr.bf16.mxu0 0
      %477 = vmatpush1.bf16.msra.mxu0 0
      %478 = vmatprep.subr.bf16.mxu0 0
      %479 = vmatpush1.bf16.msra.mxu0 0
      %480 = vmatprep.subr.bf16.mxu0 0
      %481 = vmatpush1.bf16.msra.mxu0 0
      %482 = vmatprep.subr.bf16.mxu0 0
      %483 = vmatpush1.bf16.msra.mxu0 0
      %484 = vmatprep.subr.bf16.mxu0 0
      %485 = vmatpush1.bf16.msra.mxu0 0
      %486 = vmatprep.mubr.bf16.mxu0 0
      %487 = vmatmul.mubr.bf16.gmra.mrb[0].mxu0 %v424
      %v488 = vpop.f32.mrb[0].mxu0
      %v489 = vadd.f32 0.0, %v488
      %v490 = vpop.f32.mrb[0].mxu0
      %v491 = vpop.f32.mrb[0].mxu0
      %v492 = vadd.f32 0.0, %v491
      %v493 = vpop.f32.mrb[0].mxu0
      %494 = vmatprep.mubr.bf16.mxu0 0
      %495 = vmatmul.mubr.bf16.gmra.mrb[0].mxu0 %v427
      %v496 = vpop.f32.mrb[0].mxu0
      %v497 = vadd.f32 0.0, %v496
      %v498 = vpop.f32.mrb[0].mxu0
      %v499 = vpop.f32.mrb[0].mxu0
      %v500 = vadd.f32 0.0, %v499
      %v501 = vpop.f32.mrb[0].mxu0
      %502 = vmatprep.mubr.bf16.mxu0 0
      %503 = vmatmul.mubr.bf16.gmra.mrb[0].mxu0 %v430
      %v504 = vpop.f32.mrb[0].mxu0
      %v505 = vadd.f32 0.0, %v504
      %v506 = vpop.f32.mrb[0].mxu0
      %v507 = vpop.f32.mrb[0].mxu0
      %v508 = vadd.f32 0.0, %v507
      %v509 = vpop.f32.mrb[0].mxu0
      %510 = vmatprep.mubr.bf16.mxu0 0
      %511 = vmatmul.mubr.bf16.gmra.mrb[0].mxu0 %v433
      %v512 = vpop.f32.mrb[0].mxu0
      %v513 = vadd.f32 0.0, %v512
      %v514 = vpop.f32.mrb[0].mxu0
      %v515 = vpop.f32.mrb[0].mxu0
      %v516 = vadd.f32 0.0, %v515
      %v517 = vpop.f32.mrb[0].mxu0
      %518 = vmatprep.mubr.bf16.mxu0 0
      %519 = vmatmul.mubr.bf16.gmra.mrb[0].mxu0 %v436
      %v520 = vpop.f32.mrb[0].mxu0
      %v521 = vadd.f32 0.0, %v520
      %v522 = vpop.f32.mrb[0].mxu0
      %v523 = vpop.f32.mrb[0].mxu0
      %v524 = vadd.f32 0.0, %v523
      %v525 = vpop.f32.mrb[0].mxu0
      %526 = vmatprep.mubr.bf16.mxu0 0
      %527 = vmatmul.mubr.bf16.gmra.mrb[0].mxu0 %v439
      %v528 = vpop.f32.mrb[0].mxu0
      %v529 = vadd.f32 0.0, %v528
      %v530 = vpop.f32.mrb[0].mxu0
      %v531 = vpop.f32.mrb[0].mxu0
      %v532 = vadd.f32 0.0, %v531
      %v533 = vpop.f32.mrb[0].mxu0
      %534 = vmatprep.mubr.bf16.mxu0 0
      %535 = vmatmul.mubr.bf16.gmra.mrb[0].mxu0 %v442
      %v536 = vpop.f32.mrb[0].mxu0
      %v537 = vadd.f32 0.0, %v536
      %v538 = vpop.f32.mrb[0].mxu0
      %v539 = vpop.f32.mrb[0].mxu0
      %v540 = vadd.f32 0.0, %v539
      %v541 = vpop.f32.mrb[0].mxu0
      %542 = vmatprep.mubr.bf16.mxu0 0
      %543 = vmatmul.mubr.bf16.gmra.mrb[0].mxu0 %v445
      %v544 = vpop.f32.mrb[0].mxu0
      %v545 = vadd.f32 0.0, %v544
      %v546 = vpop.f32.mrb[0].mxu0
      %v547 = vpop.f32.mrb[0].mxu0
      %v548 = vadd.f32 0.0, %v547
      %v549 = vpop.f32.mrb[0].mxu0
      %550 = vdwg.mxu0
      %v552 = vlaneseq
      %v553 = vshrl.u32 %v552, 7
      %v554 = vsub.s32 0, %v553
      %v555 = vrot.slane %v353, %v554
      %v557 = vmul.f32 %v489, %v555
      %v558 = vmul.f32 %v492, %v555
      %v559 = vmul.f32 %v497, %v555
      %v560 = vmul.f32 %v500, %v555
      %v561 = vmul.f32 %v505, %v555
      %v562 = vmul.f32 %v508, %v555
      %v563 = vmul.f32 %v513, %v555
      %v564 = vmul.f32 %v516, %v555
      %v565 = vmul.f32 %v521, %v555
      %v566 = vmul.f32 %v524, %v555
      %v567 = vmul.f32 %v529, %v555
      %v568 = vmul.f32 %v532, %v555
      %v569 = vmul.f32 %v537, %v555
      %v570 = vmul.f32 %v540, %v555
      %v571 = vmul.f32 %v545, %v555
      %v572 = vmul.f32 %v548, %v555
      %v574 = vlaneseq
      %v575 = vshrl.u32 %v574, 7
      %v576 = vsub.s32 0, %v575
      %v577 = vrot.slane %v354, %v576
      %v579 = vadd.f32 %v557, %v577
      %v580 = vadd.f32 %v558, %v577
      %v581 = vadd.f32 %v559, %v577
      %v582 = vadd.f32 %v560, %v577
      %v583 = vadd.f32 %v561, %v577
      %v584 = vadd.f32 %v562, %v577
      %v585 = vadd.f32 %v563, %v577
      %v586 = vadd.f32 %v564, %v577
      %v587 = vadd.f32 %v565, %v577
      %v588 = vadd.f32 %v566, %v577
      %v589 = vadd.f32 %v567, %v577
      %v590 = vadd.f32 %v568, %v577
      %v591 = vadd.f32 %v569, %v577
      %v592 = vadd.f32 %v570, %v577
      %v593 = vadd.f32 %v571, %v577
      %v594 = vadd.f32 %v572, %v577
      %v595 = vld [vmem:[%s328] sm:$0xf]
      %v596 = vld [vmem:[%s328 + $0x4] sm:$0xf]
      %v597 = vld [vmem:[%s328 + $0x8] sm:$0xf]
      %v598 = vld [vmem:[%s328 + $0xc] sm:$0xf]
      %v599 = vld [vmem:[%s328 + $0x10] sm:$0xf]
      %v600 = vld [vmem:[%s328 + $0x14] sm:$0xf]
      %v601 = vld [vmem:[%s328 + $0x18] sm:$0xf]
      %v602 = vld [vmem:[%s328 + $0x1c] sm:$0xf]
      %v603 = vld [vmem:[%s328 + $0x20] sm:$0xf]
      %v604 = vld [vmem:[%s328 + $0x24] sm:$0xf]
      %v605 = vld [vmem:[%s328 + $0x28] sm:$0xf]
      %v606 = vld [vmem:[%s328 + $0x2c] sm:$0xf]
      %v607 = vld [vmem:[%s328 + $0x30] sm:$0xf]
      %v608 = vld [vmem:[%s328 + $0x34] sm:$0xf]
      %v609 = vld [vmem:[%s328 + $0x38] sm:$0xf]
      %v610 = vld [vmem:[%s328 + $0x3c] sm:$0xf]
      %v627 = vunpack.c.l.b16 %v595
      %v628 = vunpack.c.l.b16 %v596
      %v629 = vunpack.c.l.b16 %v597
      %v630 = vunpack.c.l.b16 %v598
      %v631 = vunpack.c.l.b16 %v599
      %v632 = vunpack.c.l.b16 %v600
      %v633 = vunpack.c.l.b16 %v601
      %v634 = vunpack.c.l.b16 %v602
      %v635 = vunpack.c.l.b16 %v603
      %v636 = vunpack.c.l.b16 %v604
      %v637 = vunpack.c.l.b16 %v605
      %v638 = vunpack.c.l.b16 %v606
      %v639 = vunpack.c.l.b16 %v607
      %v640 = vunpack.c.l.b16 %v608
      %v641 = vunpack.c.l.b16 %v609
      %v642 = vunpack.c.l.b16 %v610
      %v643 = vpack.c.b16 %v628, %v627
      %v644 = vpack.c.b16 %v630, %v629
      %v645 = vpack.c.b16 %v632, %v631
      %v646 = vpack.c.b16 %v634, %v633
      %v647 = vpack.c.b16 %v636, %v635
      %v648 = vpack.c.b16 %v638, %v637
      %v649 = vpack.c.b16 %v640, %v639
      %v650 = vpack.c.b16 %v642, %v641
      %v652 = vsel %vm422, %v643, 0
      %v655 = vsel %vm422, %v644, 0
      %v658 = vsel %vm422, %v645, 0
      %v661 = vsel %vm422, %v646, 0
      %v664 = vsel %vm422, %v647, 0
      %v667 = vsel %vm422, %v648, 0
      %v670 = vsel %vm422, %v649, 0
      %v673 = vsel %vm422, %v650, 0
      %675 = vmatprep.subr.bf16.mxu0 0
      %676 = vmatpush1.bf16.msra.mxu0 %v419
      %677 = vmatprep.subr.bf16.mxu0 0
      %678 = vmatpush1.bf16.msra.mxu0 %v452
      %679 = vmatprep.subr.bf16.mxu0 0
      %680 = vmatpush1.bf16.msra.mxu0 0
      %681 = vmatprep.subr.bf16.mxu0 0
      %682 = vmatpush1.bf16.msra.mxu0 0
      %683 = vmatprep.subr.bf16.mxu0 0
      %684 = vmatpush1.bf16.msra.mxu0 0
      %685 = vmatprep.subr.bf16.mxu0 0
      %686 = vmatpush1.bf16.msra.mxu0 0
      %687 = vmatprep.subr.bf16.mxu0 0
      %688 = vmatpush1.bf16.msra.mxu0 0
      %689 = vmatprep.subr.bf16.mxu0 0
      %690 = vmatpush1.bf16.msra.mxu0 0
      %691 = vmatprep.subr.bf16.mxu0 0
      %692 = vmatpush1.bf16.msra.mxu0 0
      %693 = vmatprep.subr.bf16.mxu0 0
      %694 = vmatpush1.bf16.msra.mxu0 0
      %695 = vmatprep.subr.bf16.mxu0 0
      %696 = vmatpush1.bf16.msra.mxu0 0
      %697 = vmatprep.subr.bf16.mxu0 0
      %698 = vmatpush1.bf16.msra.mxu0 0
      %699 = vmatprep.subr.bf16.mxu0 0
      %700 = vmatpush1.bf16.msra.mxu0 0
      %701 = vmatprep.subr.bf16.mxu0 0
      %702 = vmatpush1.bf16.msra.mxu0 0
      %703 = vmatprep.subr.bf16.mxu0 0
      %704 = vmatpush1.bf16.msra.mxu0 0
      %705 = vmatprep.subr.bf16.mxu0 0
      %706 = vmatpush1.bf16.msra.mxu0 0
      %707 = vmatprep.mubr.bf16.mxu0 0
      %708 = vmatmul.mubr.bf16.gmra.mrb[0].mxu0 %v652
      %v709 = vpop.f32.mrb[0].mxu0
      %v710 = vadd.f32 0.0, %v709
      %v711 = vpop.f32.mrb[0].mxu0
      %v712 = vpop.f32.mrb[0].mxu0
      %v713 = vadd.f32 0.0, %v712
      %v714 = vpop.f32.mrb[0].mxu0
      %715 = vmatprep.mubr.bf16.mxu0 0
      %716 = vmatmul.mubr.bf16.gmra.mrb[0].mxu0 %v655
      %v717 = vpop.f32.mrb[0].mxu0
      %v718 = vadd.f32 0.0, %v717
      %v719 = vpop.f32.mrb[0].mxu0
      %v720 = vpop.f32.mrb[0].mxu0
      %v721 = vadd.f32 0.0, %v720
      %v722 = vpop.f32.mrb[0].mxu0
      %723 = vmatprep.mubr.bf16.mxu0 0
      %724 = vmatmul.mubr.bf16.gmra.mrb[0].mxu0 %v658
      %v725 = vpop.f32.mrb[0].mxu0
      %v726 = vadd.f32 0.0, %v725
      %v727 = vpop.f32.mrb[0].mxu0
      %v728 = vpop.f32.mrb[0].mxu0
      %v729 = vadd.f32 0.0, %v728
      %v730 = vpop.f32.mrb[0].mxu0
      %731 = vmatprep.mubr.bf16.mxu0 0
      %732 = vmatmul.mubr.bf16.gmra.mrb[0].mxu0 %v661
      %v733 = vpop.f32.mrb[0].mxu0
      %v734 = vadd.f32 0.0, %v733
      %v735 = vpop.f32.mrb[0].mxu0
      %v736 = vpop.f32.mrb[0].mxu0
      %v737 = vadd.f32 0.0, %v736
      %v738 = vpop.f32.mrb[0].mxu0
      %739 = vmatprep.mubr.bf16.mxu0 0
      %740 = vmatmul.mubr.bf16.gmra.mrb[0].mxu0 %v664
      %v741 = vpop.f32.mrb[0].mxu0
      %v742 = vadd.f32 0.0, %v741
      %v743 = vpop.f32.mrb[0].mxu0
      %v744 = vpop.f32.mrb[0].mxu0
      %v745 = vadd.f32 0.0, %v744
      %v746 = vpop.f32.mrb[0].mxu0
      %747 = vmatprep.mubr.bf16.mxu0 0
      %748 = vmatmul.mubr.bf16.gmra.mrb[0].mxu0 %v667
      %v749 = vpop.f32.mrb[0].mxu0
      %v750 = vadd.f32 0.0, %v749
      %v751 = vpop.f32.mrb[0].mxu0
      %v752 = vpop.f32.mrb[0].mxu0
      %v753 = vadd.f32 0.0, %v752
      %v754 = vpop.f32.mrb[0].mxu0
      %755 = vmatprep.mubr.bf16.mxu0 0
      %756 = vmatmul.mubr.bf16.gmra.mrb[0].mxu0 %v670
      %v757 = vpop.f32.mrb[0].mxu0
      %v758 = vadd.f32 0.0, %v757
      %v759 = vpop.f32.mrb[0].mxu0
      %v760 = vpop.f32.mrb[0].mxu0
      %v761 = vadd.f32 0.0, %v760
      %v762 = vpop.f32.mrb[0].mxu0
      %763 = vmatprep.mubr.bf16.mxu0 0
      %764 = vmatmul.mubr.bf16.gmra.mrb[0].mxu0 %v673
      %v765 = vpop.f32.mrb[0].mxu0
      %v766 = vadd.f32 0.0, %v765
      %v767 = vpop.f32.mrb[0].mxu0
      %v768 = vpop.f32.mrb[0].mxu0
      %v769 = vadd.f32 0.0, %v768
      %v770 = vpop.f32.mrb[0].mxu0
      %771 = vdwg.mxu0
      %v772 = vmul.f32 %v710, %v555
      %v773 = vmul.f32 %v713, %v555
      %v774 = vmul.f32 %v718, %v555
      %v775 = vmul.f32 %v721, %v555
      %v776 = vmul.f32 %v726, %v555
      %v777 = vmul.f32 %v729, %v555
      %v778 = vmul.f32 %v734, %v555
      %v779 = vmul.f32 %v737, %v555
      %v780 = vmul.f32 %v742, %v555
      %v781 = vmul.f32 %v745, %v555
      %v782 = vmul.f32 %v750, %v555
      %v783 = vmul.f32 %v753, %v555
      %v784 = vmul.f32 %v758, %v555
      %v785 = vmul.f32 %v761, %v555
      %v786 = vmul.f32 %v766, %v555
      %v787 = vmul.f32 %v769, %v555
      %v788 = vadd.f32 %v772, %v577
      %v789 = vadd.f32 %v773, %v577
      %v790 = vadd.f32 %v774, %v577
      %v791 = vadd.f32 %v775, %v577
      %v792 = vadd.f32 %v776, %v577
      %v793 = vadd.f32 %v777, %v577
      %v794 = vadd.f32 %v778, %v577
      %v795 = vadd.f32 %v779, %v577
      %v796 = vadd.f32 %v780, %v577
      %v797 = vadd.f32 %v781, %v577
      %v798 = vadd.f32 %v782, %v577
      %v799 = vadd.f32 %v783, %v577
      %v800 = vadd.f32 %v784, %v577
      %v801 = vadd.f32 %v785, %v577
      %v802 = vadd.f32 %v786, %v577
      %v803 = vadd.f32 %v787, %v577
      %v804 = vmax.f32 %v579, %v788
      %v805 = vmax.f32 %v580, %v789
      %v806 = vmax.f32 %v581, %v790
      %v807 = vmax.f32 %v582, %v791
      %v808 = vmax.f32 %v583, %v792
      %v809 = vmax.f32 %v584, %v793
      %v810 = vmax.f32 %v585, %v794
      %v811 = vmax.f32 %v586, %v795
      %v812 = vmax.f32 %v587, %v796
      %v813 = vmax.f32 %v588, %v797
      %v814 = vmax.f32 %v589, %v798
      %v815 = vmax.f32 %v590, %v799
      %v816 = vmax.f32 %v591, %v800
      %v817 = vmax.f32 %v592, %v801
      %v818 = vmax.f32 %v593, %v802
      %v819 = vmax.f32 %v594, %v803
      %v820 = vld [vmem:[%s334] sm:$0xf]
      %v821 = vld [vmem:[%s334 + $0x4] sm:$0xf]
      %v822 = vld [vmem:[%s334 + $0x8] sm:$0xf]
      %v823 = vld [vmem:[%s334 + $0xc] sm:$0xf]
      %v824 = vld [vmem:[%s334 + $0x10] sm:$0xf]
      %v825 = vld [vmem:[%s334 + $0x14] sm:$0xf]
      %v826 = vld [vmem:[%s334 + $0x18] sm:$0xf]
      %v827 = vld [vmem:[%s334 + $0x1c] sm:$0xf]
      %v828 = vld [vmem:[%s334 + $0x20] sm:$0xf]
      %v829 = vld [vmem:[%s334 + $0x24] sm:$0xf]
      %v830 = vld [vmem:[%s334 + $0x28] sm:$0xf]
      %v831 = vld [vmem:[%s334 + $0x2c] sm:$0xf]
      %v832 = vld [vmem:[%s334 + $0x30] sm:$0xf]
      %v833 = vld [vmem:[%s334 + $0x34] sm:$0xf]
      %v834 = vld [vmem:[%s334 + $0x38] sm:$0xf]
      %v835 = vld [vmem:[%s334 + $0x3c] sm:$0xf]
      %v852 = vunpack.c.l.b16 %v820
      %v853 = vunpack.c.l.b16 %v821
      %v854 = vunpack.c.l.b16 %v822
      %v855 = vunpack.c.l.b16 %v823
      %v856 = vunpack.c.l.b16 %v824
      %v857 = vunpack.c.l.b16 %v825
      %v858 = vunpack.c.l.b16 %v826
      %v859 = vunpack.c.l.b16 %v827
      %v860 = vunpack.c.l.b16 %v828
      %v861 = vunpack.c.l.b16 %v829
      %v862 = vunpack.c.l.b16 %v830
      %v863 = vunpack.c.l.b16 %v831
      %v864 = vunpack.c.l.b16 %v832
      %v865 = vunpack.c.l.b16 %v833
      %v866 = vunpack.c.l.b16 %v834
      %v867 = vunpack.c.l.b16 %v835
      %v868 = vpack.c.b16 %v853, %v852
      %v869 = vpack.c.b16 %v855, %v854
      %v870 = vpack.c.b16 %v857, %v856
      %v871 = vpack.c.b16 %v859, %v858
      %v872 = vpack.c.b16 %v861, %v860
      %v873 = vpack.c.b16 %v863, %v862
      %v874 = vpack.c.b16 %v865, %v864
      %v875 = vpack.c.b16 %v867, %v866
      %v877 = vsel %vm422, %v868, 0
      %v880 = vsel %vm422, %v869, 0
      %v883 = vsel %vm422, %v870, 0
      %v886 = vsel %vm422, %v871, 0
      %v889 = vsel %vm422, %v872, 0
      %v892 = vsel %vm422, %v873, 0
      %v895 = vsel %vm422, %v874, 0
      %v898 = vsel %vm422, %v875, 0
      %900 = vmatprep.subr.bf16.mxu0 0
      %901 = vmatpush1.bf16.msra.mxu0 %v419
      %902 = vmatprep.subr.bf16.mxu0 0
      %903 = vmatpush1.bf16.msra.mxu0 %v452
      %904 = vmatprep.subr.bf16.mxu0 0
      %905 = vmatpush1.bf16.msra.mxu0 0
      %906 = vmatprep.subr.bf16.mxu0 0
      %907 = vmatpush1.bf16.msra.mxu0 0
      %908 = vmatprep.subr.bf16.mxu0 0
      %909 = vmatpush1.bf16.msra.mxu0 0
      %910 = vmatprep.subr.bf16.mxu0 0
      %911 = vmatpush1.bf16.msra.mxu0 0
      %912 = vmatprep.subr.bf16.mxu0 0
      %913 = vmatpush1.bf16.msra.mxu0 0
      %914 = vmatprep.subr.bf16.mxu0 0
      %915 = vmatpush1.bf16.msra.mxu0 0
      %916 = vmatprep.subr.bf16.mxu0 0
      %917 = vmatpush1.bf16.msra.mxu0 0
      %918 = vmatprep.subr.bf16.mxu0 0
      %919 = vmatpush1.bf16.msra.mxu0 0
      %920 = vmatprep.subr.bf16.mxu0 0
      %921 = vmatpush1.bf16.msra.mxu0 0
      %922 = vmatprep.subr.bf16.mxu0 0
      %923 = vmatpush1.bf16.msra.mxu0 0
      %924 = vmatprep.subr.bf16.mxu0 0
      %925 = vmatpush1.bf16.msra.mxu0 0
      %926 = vmatprep.subr.bf16.mxu0 0
      %927 = vmatpush1.bf16.msra.mxu0 0
      %928 = vmatprep.subr.bf16.mxu0 0
      %929 = vmatpush1.bf16.msra.mxu0 0
      %930 = vmatprep.subr.bf16.mxu0 0
      %931 = vmatpush1.bf16.msra.mxu0 0
      %932 = vmatprep.mubr.bf16.mxu0 0
      %933 = vmatmul.mubr.bf16.gmra.mrb[0].mxu0 %v877
      %v934 = vpop.f32.mrb[0].mxu0
      %v935 = vadd.f32 0.0, %v934
      %v936 = vpop.f32.mrb[0].mxu0
      %v937 = vpop.f32.mrb[0].mxu0
      %v938 = vadd.f32 0.0, %v937
      %v939 = vpop.f32.mrb[0].mxu0
      %940 = vmatprep.mubr.bf16.mxu0 0
      %941 = vmatmul.mubr.bf16.gmra.mrb[0].mxu0 %v880
      %v942 = vpop.f32.mrb[0].mxu0
      %v943 = vadd.f32 0.0, %v942
      %v944 = vpop.f32.mrb[0].mxu0
      %v945 = vpop.f32.mrb[0].mxu0
      %v946 = vadd.f32 0.0, %v945
      %v947 = vpop.f32.mrb[0].mxu0
      %948 = vmatprep.mubr.bf16.mxu0 0
      %949 = vmatmul.mubr.bf16.gmra.mrb[0].mxu0 %v883
      %v950 = vpop.f32.mrb[0].mxu0
      %v951 = vadd.f32 0.0, %v950
      %v952 = vpop.f32.mrb[0].mxu0
      %v953 = vpop.f32.mrb[0].mxu0
      %v954 = vadd.f32 0.0, %v953
      %v955 = vpop.f32.mrb[0].mxu0
      %956 = vmatprep.mubr.bf16.mxu0 0
      %957 = vmatmul.mubr.bf16.gmra.mrb[0].mxu0 %v886
      %v958 = vpop.f32.mrb[0].mxu0
      %v959 = vadd.f32 0.0, %v958
      %v960 = vpop.f32.mrb[0].mxu0
      %v961 = vpop.f32.mrb[0].mxu0
      %v962 = vadd.f32 0.0, %v961
      %v963 = vpop.f32.mrb[0].mxu0
      %964 = vmatprep.mubr.bf16.mxu0 0
      %965 = vmatmul.mubr.bf16.gmra.mrb[0].mxu0 %v889
      %v966 = vpop.f32.mrb[0].mxu0
      %v967 = vadd.f32 0.0, %v966
      %v968 = vpop.f32.mrb[0].mxu0
      %v969 = vpop.f32.mrb[0].mxu0
      %v970 = vadd.f32 0.0, %v969
      %v971 = vpop.f32.mrb[0].mxu0
      %972 = vmatprep.mubr.bf16.mxu0 0
      %973 = vmatmul.mubr.bf16.gmra.mrb[0].mxu0 %v892
      %v974 = vpop.f32.mrb[0].mxu0
      %v975 = vadd.f32 0.0, %v974
      %v976 = vpop.f32.mrb[0].mxu0
      %v977 = vpop.f32.mrb[0].mxu0
      %v978 = vadd.f32 0.0, %v977
      %v979 = vpop.f32.mrb[0].mxu0
      %980 = vmatprep.mubr.bf16.mxu0 0
      %981 = vmatmul.mubr.bf16.gmra.mrb[0].mxu0 %v895
      %v982 = vpop.f32.mrb[0].mxu0
      %v983 = vadd.f32 0.0, %v982
      %v984 = vpop.f32.mrb[0].mxu0
      %v985 = vpop.f32.mrb[0].mxu0
      %v986 = vadd.f32 0.0, %v985
      %v987 = vpop.f32.mrb[0].mxu0
      %988 = vmatprep.mubr.bf16.mxu0 0
      %989 = vmatmul.mubr.bf16.gmra.mrb[0].mxu0 %v898
      %v990 = vpop.f32.mrb[0].mxu0
      %v991 = vadd.f32 0.0, %v990
      %v992 = vpop.f32.mrb[0].mxu0
      %v993 = vpop.f32.mrb[0].mxu0
      %v994 = vadd.f32 0.0, %v993
      %v995 = vpop.f32.mrb[0].mxu0
      %996 = vdwg.mxu0
      %v997 = vmul.f32 %v935, %v555
      %v998 = vmul.f32 %v938, %v555
      %v999 = vmul.f32 %v943, %v555
      %v1000 = vmul.f32 %v946, %v555
      %v1001 = vmul.f32 %v951, %v555
      %v1002 = vmul.f32 %v954, %v555
      %v1003 = vmul.f32 %v959, %v555
      %v1004 = vmul.f32 %v962, %v555
      %v1005 = vmul.f32 %v967, %v555
      %v1006 = vmul.f32 %v970, %v555
      %v1007 = vmul.f32 %v975, %v555
      %v1008 = vmul.f32 %v978, %v555
      %v1009 = vmul.f32 %v983, %v555
      %v1010 = vmul.f32 %v986, %v555
      %v1011 = vmul.f32 %v991, %v555
      %v1012 = vmul.f32 %v994, %v555
      %v1013 = vadd.f32 %v997, %v577
      %v1014 = vadd.f32 %v998, %v577
      %v1015 = vadd.f32 %v999, %v577
      %v1016 = vadd.f32 %v1000, %v577
      %v1017 = vadd.f32 %v1001, %v577
      %v1018 = vadd.f32 %v1002, %v577
      %v1019 = vadd.f32 %v1003, %v577
      %v1020 = vadd.f32 %v1004, %v577
      %v1021 = vadd.f32 %v1005, %v577
      %v1022 = vadd.f32 %v1006, %v577
      %v1023 = vadd.f32 %v1007, %v577
      %v1024 = vadd.f32 %v1008, %v577
      %v1025 = vadd.f32 %v1009, %v577
      %v1026 = vadd.f32 %v1010, %v577
      %v1027 = vadd.f32 %v1011, %v577
      %v1028 = vadd.f32 %v1012, %v577
      %v1029 = vmax.f32 %v804, %v1013
      %v1030 = vmax.f32 %v805, %v1014
      %v1031 = vmax.f32 %v806, %v1015
      %v1032 = vmax.f32 %v807, %v1016
      %v1033 = vmax.f32 %v808, %v1017
      %v1034 = vmax.f32 %v809, %v1018
      %v1035 = vmax.f32 %v810, %v1019
      %v1036 = vmax.f32 %v811, %v1020
      %v1037 = vmax.f32 %v812, %v1021
      %v1038 = vmax.f32 %v813, %v1022
      %v1039 = vmax.f32 %v814, %v1023
      %v1040 = vmax.f32 %v815, %v1024
      %v1041 = vmax.f32 %v816, %v1025
      %v1042 = vmax.f32 %v817, %v1026
      %v1043 = vmax.f32 %v818, %v1027
      %v1044 = vmax.f32 %v819, %v1028
      %v1045 = vld [vmem:[%s340] sm:$0xf]
      %v1046 = vld [vmem:[%s340 + $0x4] sm:$0xf]
      %v1047 = vld [vmem:[%s340 + $0x8] sm:$0xf]
      %v1048 = vld [vmem:[%s340 + $0xc] sm:$0xf]
      %v1049 = vld [vmem:[%s340 + $0x10] sm:$0xf]
      %v1050 = vld [vmem:[%s340 + $0x14] sm:$0xf]
      %v1051 = vld [vmem:[%s340 + $0x18] sm:$0xf]
      %v1052 = vld [vmem:[%s340 + $0x1c] sm:$0xf]
      %v1053 = vld [vmem:[%s340 + $0x20] sm:$0xf]
      %v1054 = vld [vmem:[%s340 + $0x24] sm:$0xf]
      %v1055 = vld [vmem:[%s340 + $0x28] sm:$0xf]
      %v1056 = vld [vmem:[%s340 + $0x2c] sm:$0xf]
      %v1057 = vld [vmem:[%s340 + $0x30] sm:$0xf]
      %v1058 = vld [vmem:[%s340 + $0x34] sm:$0xf]
      %v1059 = vld [vmem:[%s340 + $0x38] sm:$0xf]
      %v1060 = vld [vmem:[%s340 + $0x3c] sm:$0xf]
      %v1077 = vunpack.c.l.b16 %v1045
      %v1078 = vunpack.c.l.b16 %v1046
      %v1079 = vunpack.c.l.b16 %v1047
      %v1080 = vunpack.c.l.b16 %v1048
      %v1081 = vunpack.c.l.b16 %v1049
      %v1082 = vunpack.c.l.b16 %v1050
      %v1083 = vunpack.c.l.b16 %v1051
      %v1084 = vunpack.c.l.b16 %v1052
      %v1085 = vunpack.c.l.b16 %v1053
      %v1086 = vunpack.c.l.b16 %v1054
      %v1087 = vunpack.c.l.b16 %v1055
      %v1088 = vunpack.c.l.b16 %v1056
      %v1089 = vunpack.c.l.b16 %v1057
      %v1090 = vunpack.c.l.b16 %v1058
      %v1091 = vunpack.c.l.b16 %v1059
      %v1092 = vunpack.c.l.b16 %v1060
      %v1093 = vpack.c.b16 %v1078, %v1077
      %v1094 = vpack.c.b16 %v1080, %v1079
      %v1095 = vpack.c.b16 %v1082, %v1081
      %v1096 = vpack.c.b16 %v1084, %v1083
      %v1097 = vpack.c.b16 %v1086, %v1085
      %v1098 = vpack.c.b16 %v1088, %v1087
      %v1099 = vpack.c.b16 %v1090, %v1089
      %v1100 = vpack.c.b16 %v1092, %v1091
      %v1102 = vsel %vm422, %v1093, 0
      %v1105 = vsel %vm422, %v1094, 0
      %v1108 = vsel %vm422, %v1095, 0
      %v1111 = vsel %vm422, %v1096, 0
      %v1114 = vsel %vm422, %v1097, 0
      %v1117 = vsel %vm422, %v1098, 0
      %v1120 = vsel %vm422, %v1099, 0
      %v1123 = vsel %vm422, %v1100, 0
      %1125 = vmatprep.subr.bf16.mxu0 0
      %1126 = vmatpush1.bf16.msra.mxu0 %v419
      %1127 = vmatprep.subr.bf16.mxu0 0
      %1128 = vmatpush1.bf16.msra.mxu0 %v452
      %1129 = vmatprep.subr.bf16.mxu0 0
      %1130 = vmatpush1.bf16.msra.mxu0 0
      %1131 = vmatprep.subr.bf16.mxu0 0
      %1132 = vmatpush1.bf16.msra.mxu0 0
      %1133 = vmatprep.subr.bf16.mxu0 0
      %1134 = vmatpush1.bf16.msra.mxu0 0
      %1135 = vmatprep.subr.bf16.mxu0 0
      %1136 = vmatpush1.bf16.msra.mxu0 0
      %1137 = vmatprep.subr.bf16.mxu0 0
      %1138 = vmatpush1.bf16.msra.mxu0 0
      %1139 = vmatprep.subr.bf16.mxu0 0
      %1140 = vmatpush1.bf16.msra.mxu0 0
      %1141 = vmatprep.subr.bf16.mxu0 0
      %1142 = vmatpush1.bf16.msra.mxu0 0
      %1143 = vmatprep.subr.bf16.mxu0 0
      %1144 = vmatpush1.bf16.msra.mxu0 0
      %1145 = vmatprep.subr.bf16.mxu0 0
      %1146 = vmatpush1.bf16.msra.mxu0 0
      %1147 = vmatprep.subr.bf16.mxu0 0
      %1148 = vmatpush1.bf16.msra.mxu0 0
      %1149 = vmatprep.subr.bf16.mxu0 0
      %1150 = vmatpush1.bf16.msra.mxu0 0
      %1151 = vmatprep.subr.bf16.mxu0 0
      %1152 = vmatpush1.bf16.msra.mxu0 0
      %1153 = vmatprep.subr.bf16.mxu0 0
      %1154 = vmatpush1.bf16.msra.mxu0 0
      %1155 = vmatprep.subr.bf16.mxu0 0
      %1156 = vmatpush1.bf16.msra.mxu0 0
      %1157 = vmatprep.mubr.bf16.mxu0 0
      %1158 = vmatmul.mubr.bf16.gmra.mrb[0].mxu0 %v1102
      %v1159 = vpop.f32.mrb[0].mxu0
      %v1160 = vadd.f32 0.0, %v1159
      %v1161 = vpop.f32.mrb[0].mxu0
      %v1162 = vpop.f32.mrb[0].mxu0
      %v1163 = vadd.f32 0.0, %v1162
      %v1164 = vpop.f32.mrb[0].mxu0
      %1165 = vmatprep.mubr.bf16.mxu0 0
      %1166 = vmatmul.mubr.bf16.gmra.mrb[0].mxu0 %v1105
      %v1167 = vpop.f32.mrb[0].mxu0
      %v1168 = vadd.f32 0.0, %v1167
      %v1169 = vpop.f32.mrb[0].mxu0
      %v1170 = vpop.f32.mrb[0].mxu0
      %v1171 = vadd.f32 0.0, %v1170
      %v1172 = vpop.f32.mrb[0].mxu0
      %1173 = vmatprep.mubr.bf16.mxu0 0
      %1174 = vmatmul.mubr.bf16.gmra.mrb[0].mxu0 %v1108
      %v1175 = vpop.f32.mrb[0].mxu0
      %v1176 = vadd.f32 0.0, %v1175
      %v1177 = vpop.f32.mrb[0].mxu0
      %v1178 = vpop.f32.mrb[0].mxu0
      %v1179 = vadd.f32 0.0, %v1178
      %v1180 = vpop.f32.mrb[0].mxu0
      %1181 = vmatprep.mubr.bf16.mxu0 0
      %1182 = vmatmul.mubr.bf16.gmra.mrb[0].mxu0 %v1111
      %v1183 = vpop.f32.mrb[0].mxu0
      %v1184 = vadd.f32 0.0, %v1183
      %v1185 = vpop.f32.mrb[0].mxu0
      %v1186 = vpop.f32.mrb[0].mxu0
      %v1187 = vadd.f32 0.0, %v1186
      %v1188 = vpop.f32.mrb[0].mxu0
      %1189 = vmatprep.mubr.bf16.mxu0 0
      %1190 = vmatmul.mubr.bf16.gmra.mrb[0].mxu0 %v1114
      %v1191 = vpop.f32.mrb[0].mxu0
      %v1192 = vadd.f32 0.0, %v1191
      %v1193 = vpop.f32.mrb[0].mxu0
      %v1194 = vpop.f32.mrb[0].mxu0
      %v1195 = vadd.f32 0.0, %v1194
      %v1196 = vpop.f32.mrb[0].mxu0
      %1197 = vmatprep.mubr.bf16.mxu0 0
      %1198 = vmatmul.mubr.bf16.gmra.mrb[0].mxu0 %v1117
      %v1199 = vpop.f32.mrb[0].mxu0
      %v1200 = vadd.f32 0.0, %v1199
      %v1201 = vpop.f32.mrb[0].mxu0
      %v1202 = vpop.f32.mrb[0].mxu0
      %v1203 = vadd.f32 0.0, %v1202
      %v1204 = vpop.f32.mrb[0].mxu0
      %1205 = vmatprep.mubr.bf16.mxu0 0
      %1206 = vmatmul.mubr.bf16.gmra.mrb[0].mxu0 %v1120
      %v1207 = vpop.f32.mrb[0].mxu0
      %v1208 = vadd.f32 0.0, %v1207
      %v1209 = vpop.f32.mrb[0].mxu0
      %v1210 = vpop.f32.mrb[0].mxu0
      %v1211 = vadd.f32 0.0, %v1210
      %v1212 = vpop.f32.mrb[0].mxu0
      %1213 = vmatprep.mubr.bf16.mxu0 0
      %1214 = vmatmul.mubr.bf16.gmra.mrb[0].mxu0 %v1123
      %v1215 = vpop.f32.mrb[0].mxu0
      %v1216 = vadd.f32 0.0, %v1215
      %v1217 = vpop.f32.mrb[0].mxu0
      %v1218 = vpop.f32.mrb[0].mxu0
      %v1219 = vadd.f32 0.0, %v1218
      %v1220 = vpop.f32.mrb[0].mxu0
      %1221 = vdwg.mxu0
      %v1222 = vmul.f32 %v1160, %v555
      %v1223 = vmul.f32 %v1163, %v555
      %v1224 = vmul.f32 %v1168, %v555
      %v1225 = vmul.f32 %v1171, %v555
      %v1226 = vmul.f32 %v1176, %v555
      %v1227 = vmul.f32 %v1179, %v555
      %v1228 = vmul.f32 %v1184, %v555
      %v1229 = vmul.f32 %v1187, %v555
      %v1230 = vmul.f32 %v1192, %v555
      %v1231 = vmul.f32 %v1195, %v555
      %v1232 = vmul.f32 %v1200, %v555
      %v1233 = vmul.f32 %v1203, %v555
      %v1234 = vmul.f32 %v1208, %v555
      %v1235 = vmul.f32 %v1211, %v555
      %v1236 = vmul.f32 %v1216, %v555
      %v1237 = vmul.f32 %v1219, %v555
      %v1238 = vadd.f32 %v1222, %v577
      %v1239 = vadd.f32 %v1223, %v577
      %v1240 = vadd.f32 %v1224, %v577
      %v1241 = vadd.f32 %v1225, %v577
      %v1242 = vadd.f32 %v1226, %v577
      %v1243 = vadd.f32 %v1227, %v577
      %v1244 = vadd.f32 %v1228, %v577
      %v1245 = vadd.f32 %v1229, %v577
      %v1246 = vadd.f32 %v1230, %v577
      %v1247 = vadd.f32 %v1231, %v577
      %v1248 = vadd.f32 %v1232, %v577
      %v1249 = vadd.f32 %v1233, %v577
      %v1250 = vadd.f32 %v1234, %v577
      %v1251 = vadd.f32 %v1235, %v577
      %v1252 = vadd.f32 %v1236, %v577
      %v1253 = vadd.f32 %v1237, %v577
      %v1254 = vmax.f32 %v1029, %v1238
      %v1255 = vmax.f32 %v1030, %v1239
      %v1256 = vmax.f32 %v1031, %v1240
      %v1257 = vmax.f32 %v1032, %v1241
      %v1258 = vmax.f32 %v1033, %v1242
      %v1259 = vmax.f32 %v1034, %v1243
      %v1260 = vmax.f32 %v1035, %v1244
      %v1261 = vmax.f32 %v1036, %v1245
      %v1262 = vmax.f32 %v1037, %v1246
      %v1263 = vmax.f32 %v1038, %v1247
      %v1264 = vmax.f32 %v1039, %v1248
      %v1265 = vmax.f32 %v1040, %v1249
      %v1266 = vmax.f32 %v1041, %v1250
      %v1267 = vmax.f32 %v1042, %v1251
      %v1268 = vmax.f32 %v1043, %v1252
      %v1269 = vmax.f32 %v1044, %v1253
      %v1270 = vmax.f32 %v1254, 0.0
      %v1271 = vmax.f32 %v1255, 0.0
      %v1272 = vmax.f32 %v1256, 0.0
      %v1273 = vmax.f32 %v1257, 0.0
      %v1274 = vmax.f32 %v1258, 0.0
      %v1275 = vmax.f32 %v1259, 0.0
      %v1276 = vmax.f32 %v1260, 0.0
      %v1277 = vmax.f32 %v1261, 0.0
      %v1278 = vmax.f32 %v1262, 0.0
      %v1279 = vmax.f32 %v1263, 0.0
      %v1280 = vmax.f32 %v1264, 0.0
      %v1281 = vmax.f32 %v1265, 0.0
      %v1282 = vmax.f32 %v1266, 0.0
      %v1283 = vmax.f32 %v1267, 0.0
      %v1284 = vmax.f32 %v1268, 0.0
      %v1285 = vmax.f32 %v1269, 0.0
      %v1286 = vpack.c.bf16 %v1271, %v1270
      %v1287 = vpack.c.bf16 %v1273, %v1272
      %v1288 = vpack.c.bf16 %v1275, %v1274
      %v1289 = vpack.c.bf16 %v1277, %v1276
      %v1290 = vpack.c.bf16 %v1279, %v1278
      %v1291 = vpack.c.bf16 %v1281, %v1280
      %v1292 = vpack.c.bf16 %v1283, %v1282
      %v1293 = vpack.c.bf16 %v1285, %v1284
      %v1302 = vunpack.c.l.b16 %v1286
      %v1303 = vunpack.c.h.b16 %v1286
      %v1304 = vunpack.c.l.b16 %v1287
      %v1305 = vunpack.c.h.b16 %v1287
      %v1306 = vunpack.c.l.b16 %v1288
      %v1307 = vunpack.c.h.b16 %v1288
      %v1308 = vunpack.c.l.b16 %v1289
      %v1309 = vunpack.c.h.b16 %v1289
      %v1310 = vunpack.c.l.b16 %v1290
      %v1311 = vunpack.c.h.b16 %v1290
      %v1312 = vunpack.c.l.b16 %v1291
      %v1313 = vunpack.c.h.b16 %v1291
      %v1314 = vunpack.c.l.b16 %v1292
      %v1315 = vunpack.c.h.b16 %v1292
      %v1316 = vunpack.c.l.b16 %v1293
      %v1317 = vunpack.c.h.b16 %v1293
      %v1318 = vpack.c.b16 %v1302, %v1302
      %v1319 = vpack.c.b16 %v1303, %v1303
      %v1320 = vpack.c.b16 %v1304, %v1304
      %v1321 = vpack.c.b16 %v1305, %v1305
      %v1322 = vpack.c.b16 %v1306, %v1306
      %v1323 = vpack.c.b16 %v1307, %v1307
      %v1324 = vpack.c.b16 %v1308, %v1308
      %v1325 = vpack.c.b16 %v1309, %v1309
      %v1326 = vpack.c.b16 %v1310, %v1310
      %v1327 = vpack.c.b16 %v1311, %v1311
      %v1328 = vpack.c.b16 %v1312, %v1312
      %v1329 = vpack.c.b16 %v1313, %v1313
      %v1330 = vpack.c.b16 %v1314, %v1314
      %v1331 = vpack.c.b16 %v1315, %v1315
      %v1332 = vpack.c.b16 %v1316, %v1316
      %v1333 = vpack.c.b16 %v1317, %v1317
      %1350 = vst [vmem:[%s346] sm:$0xf] %v1318
      %1351 = vst [vmem:[%s346 + $0x4] sm:$0xf] %v1319
      %1352 = vst [vmem:[%s346 + $0x8] sm:$0xf] %v1320
      %1353 = vst [vmem:[%s346 + $0xc] sm:$0xf] %v1321
      %1354 = vst [vmem:[%s346 + $0x10] sm:$0xf] %v1322
      %1355 = vst [vmem:[%s346 + $0x14] sm:$0xf] %v1323
      %1356 = vst [vmem:[%s346 + $0x18] sm:$0xf] %v1324
      %1357 = vst [vmem:[%s346 + $0x1c] sm:$0xf] %v1325
      %1358 = vst [vmem:[%s346 + $0x20] sm:$0xf] %v1326
      %1359 = vst [vmem:[%s346 + $0x24] sm:$0xf] %v1327
      %1360 = vst [vmem:[%s346 + $0x28] sm:$0xf] %v1328
      %1361 = vst [vmem:[%s346 + $0x2c] sm:$0xf] %v1329
      %1362 = vst [vmem:[%s346 + $0x30] sm:$0xf] %v1330
      %1363 = vst [vmem:[%s346 + $0x34] sm:$0xf] %v1331
      %1364 = vst [vmem:[%s346 + $0x38] sm:$0xf] %v1332
      %1365 = vst [vmem:[%s346 + $0x3c] sm:$0xf] %v1333
      %s1366 = scalar_lea.vmem %s322, 64
      %v1367 = vld [vmem:[%s1366] sm:$0xf]
      %v1368 = vld [vmem:[%s1366 + $0x4] sm:$0xf]
      %v1369 = vld [vmem:[%s1366 + $0x8] sm:$0xf]
      %v1370 = vld [vmem:[%s1366 + $0xc] sm:$0xf]
      %v1371 = vld [vmem:[%s1366 + $0x10] sm:$0xf]
      %v1372 = vld [vmem:[%s1366 + $0x14] sm:$0xf]
      %v1373 = vld [vmem:[%s1366 + $0x18] sm:$0xf]
      %v1374 = vld [vmem:[%s1366 + $0x1c] sm:$0xf]
      %v1375 = vld [vmem:[%s1366 + $0x20] sm:$0xf]
      %v1376 = vld [vmem:[%s1366 + $0x24] sm:$0xf]
      %v1377 = vld [vmem:[%s1366 + $0x28] sm:$0xf]
      %v1378 = vld [vmem:[%s1366 + $0x2c] sm:$0xf]
      %v1379 = vld [vmem:[%s1366 + $0x30] sm:$0xf]
      %v1380 = vld [vmem:[%s1366 + $0x34] sm:$0xf]
      %v1381 = vld [vmem:[%s1366 + $0x38] sm:$0xf]
      %v1382 = vld [vmem:[%s1366 + $0x3c] sm:$0xf]
      %v1399 = vunpack.c.l.b16 %v1367
      %v1400 = vunpack.c.l.b16 %v1368
      %v1401 = vunpack.c.l.b16 %v1369
      %v1402 = vunpack.c.l.b16 %v1370
      %v1403 = vunpack.c.l.b16 %v1371
      %v1404 = vunpack.c.l.b16 %v1372
      %v1405 = vunpack.c.l.b16 %v1373
      %v1406 = vunpack.c.l.b16 %v1374
      %v1407 = vunpack.c.l.b16 %v1375
      %v1408 = vunpack.c.l.b16 %v1376
      %v1409 = vunpack.c.l.b16 %v1377
      %v1410 = vunpack.c.l.b16 %v1378
      %v1411 = vunpack.c.l.b16 %v1379
      %v1412 = vunpack.c.l.b16 %v1380
      %v1413 = vunpack.c.l.b16 %v1381
      %v1414 = vunpack.c.l.b16 %v1382
      %v1415 = vpack.c.b16 %v1400, %v1399
      %v1416 = vpack.c.b16 %v1402, %v1401
      %v1417 = vpack.c.b16 %v1404, %v1403
      %v1418 = vpack.c.b16 %v1406, %v1405
      %v1419 = vpack.c.b16 %v1408, %v1407
      %v1420 = vpack.c.b16 %v1410, %v1409
      %v1421 = vpack.c.b16 %v1412, %v1411
      %v1422 = vpack.c.b16 %v1414, %v1413
      %v1424 = vsel %vm422, %v1415, 0
      %v1427 = vsel %vm422, %v1416, 0
      %v1430 = vsel %vm422, %v1417, 0
      %v1433 = vsel %vm422, %v1418, 0
      %v1436 = vsel %vm422, %v1419, 0
      %v1439 = vsel %vm422, %v1420, 0
      %v1442 = vsel %vm422, %v1421, 0
      %v1445 = vsel %vm422, %v1422, 0
      %1447 = vmatprep.subr.bf16.mxu0 0
      %1448 = vmatpush1.bf16.msra.mxu0 %v419
      %1449 = vmatprep.subr.bf16.mxu0 0
      %1450 = vmatpush1.bf16.msra.mxu0 %v452
      %1451 = vmatprep.subr.bf16.mxu0 0
      %1452 = vmatpush1.bf16.msra.mxu0 0
      %1453 = vmatprep.subr.bf16.mxu0 0
      %1454 = vmatpush1.bf16.msra.mxu0 0
      %1455 = vmatprep.subr.bf16.mxu0 0
      %1456 = vmatpush1.bf16.msra.mxu0 0
      %1457 = vmatprep.subr.bf16.mxu0 0
      %1458 = vmatpush1.bf16.msra.mxu0 0
      %1459 = vmatprep.subr.bf16.mxu0 0
      %1460 = vmatpush1.bf16.msra.mxu0 0
      %1461 = vmatprep.subr.bf16.mxu0 0
      %1462 = vmatpush1.bf16.msra.mxu0 0
      %1463 = vmatprep.subr.bf16.mxu0 0
      %1464 = vmatpush1.bf16.msra.mxu0 0
      %1465 = vmatprep.subr.bf16.mxu0 0
      %1466 = vmatpush1.bf16.msra.mxu0 0
      %1467 = vmatprep.subr.bf16.mxu0 0
      %1468 = vmatpush1.bf16.msra.mxu0 0
      %1469 = vmatprep.subr.bf16.mxu0 0
      %1470 = vmatpush1.bf16.msra.mxu0 0
      %1471 = vmatprep.subr.bf16.mxu0 0
      %1472 = vmatpush1.bf16.msra.mxu0 0
      %1473 = vmatprep.subr.bf16.mxu0 0
      %1474 = vmatpush1.bf16.msra.mxu0 0
      %1475 = vmatprep.subr.bf16.mxu0 0
      %1476 = vmatpush1.bf16.msra.mxu0 0
      %1477 = vmatprep.subr.bf16.mxu0 0
      %1478 = vmatpush1.bf16.msra.mxu0 0
      %1479 = vmatprep.mubr.bf16.mxu0 0
      %1480 = vmatmul.mubr.bf16.gmra.mrb[0].mxu0 %v1424
      %v1481 = vpop.f32.mrb[0].mxu0
      %v1482 = vadd.f32 0.0, %v1481
      %v1483 = vpop.f32.mrb[0].mxu0
      %v1484 = vpop.f32.mrb[0].mxu0
      %v1485 = vadd.f32 0.0, %v1484
      %v1486 = vpop.f32.mrb[0].mxu0
      %1487 = vmatprep.mubr.bf16.mxu0 0
      %1488 = vmatmul.mubr.bf16.gmra.mrb[0].mxu0 %v1427
      %v1489 = vpop.f32.mrb[0].mxu0
      %v1490 = vadd.f32 0.0, %v1489
      %v1491 = vpop.f32.mrb[0].mxu0
      %v1492 = vpop.f32.mrb[0].mxu0
      %v1493 = vadd.f32 0.0, %v1492
      %v1494 = vpop.f32.mrb[0].mxu0
      %1495 = vmatprep.mubr.bf16.mxu0 0
      %1496 = vmatmul.mubr.bf16.gmra.mrb[0].mxu0 %v1430
      %v1497 = vpop.f32.mrb[0].mxu0
      %v1498 = vadd.f32 0.0, %v1497
      %v1499 = vpop.f32.mrb[0].mxu0
      %v1500 = vpop.f32.mrb[0].mxu0
      %v1501 = vadd.f32 0.0, %v1500
      %v1502 = vpop.f32.mrb[0].mxu0
      %1503 = vmatprep.mubr.bf16.mxu0 0
      %1504 = vmatmul.mubr.bf16.gmra.mrb[0].mxu0 %v1433
      %v1505 = vpop.f32.mrb[0].mxu0
      %v1506 = vadd.f32 0.0, %v1505
      %v1507 = vpop.f32.mrb[0].mxu0
      %v1508 = vpop.f32.mrb[0].mxu0
      %v1509 = vadd.f32 0.0, %v1508
      %v1510 = vpop.f32.mrb[0].mxu0
      %1511 = vmatprep.mubr.bf16.mxu0 0
      %1512 = vmatmul.mubr.bf16.gmra.mrb[0].mxu0 %v1436
      %v1513 = vpop.f32.mrb[0].mxu0
      %v1514 = vadd.f32 0.0, %v1513
      %v1515 = vpop.f32.mrb[0].mxu0
      %v1516 = vpop.f32.mrb[0].mxu0
      %v1517 = vadd.f32 0.0, %v1516
      %v1518 = vpop.f32.mrb[0].mxu0
      %1519 = vmatprep.mubr.bf16.mxu0 0
      %1520 = vmatmul.mubr.bf16.gmra.mrb[0].mxu0 %v1439
      %v1521 = vpop.f32.mrb[0].mxu0
      %v1522 = vadd.f32 0.0, %v1521
      %v1523 = vpop.f32.mrb[0].mxu0
      %v1524 = vpop.f32.mrb[0].mxu0
      %v1525 = vadd.f32 0.0, %v1524
      %v1526 = vpop.f32.mrb[0].mxu0
      %1527 = vmatprep.mubr.bf16.mxu0 0
      %1528 = vmatmul.mubr.bf16.gmra.mrb[0].mxu0 %v1442
      %v1529 = vpop.f32.mrb[0].mxu0
      %v1530 = vadd.f32 0.0, %v1529
      %v1531 = vpop.f32.mrb[0].mxu0
      %v1532 = vpop.f32.mrb[0].mxu0
      %v1533 = vadd.f32 0.0, %v1532
      %v1534 = vpop.f32.mrb[0].mxu0
      %1535 = vmatprep.mubr.bf16.mxu0 0
      %1536 = vmatmul.mubr.bf16.gmra.mrb[0].mxu0 %v1445
      %v1537 = vpop.f32.mrb[0].mxu0
      %v1538 = vadd.f32 0.0, %v1537
      %v1539 = vpop.f32.mrb[0].mxu0
      %v1540 = vpop.f32.mrb[0].mxu0
      %v1541 = vadd.f32 0.0, %v1540
      %v1542 = vpop.f32.mrb[0].mxu0
      %1543 = vdwg.mxu0
      %v1544 = vmul.f32 %v1482, %v555
      %v1545 = vmul.f32 %v1485, %v555
      %v1546 = vmul.f32 %v1490, %v555
      %v1547 = vmul.f32 %v1493, %v555
      %v1548 = vmul.f32 %v1498, %v555
      %v1549 = vmul.f32 %v1501, %v555
      %v1550 = vmul.f32 %v1506, %v555
      %v1551 = vmul.f32 %v1509, %v555
      %v1552 = vmul.f32 %v1514, %v555
      %v1553 = vmul.f32 %v1517, %v555
      %v1554 = vmul.f32 %v1522, %v555
      %v1555 = vmul.f32 %v1525, %v555
      %v1556 = vmul.f32 %v1530, %v555
      %v1557 = vmul.f32 %v1533, %v555
      %v1558 = vmul.f32 %v1538, %v555
      %v1559 = vmul.f32 %v1541, %v555
      %v1560 = vadd.f32 %v1544, %v577
      %v1561 = vadd.f32 %v1545, %v577
      %v1562 = vadd.f32 %v1546, %v577
      %v1563 = vadd.f32 %v1547, %v577
      %v1564 = vadd.f32 %v1548, %v577
      %v1565 = vadd.f32 %v1549, %v577
      %v1566 = vadd.f32 %v1550, %v577
      %v1567 = vadd.f32 %v1551, %v577
      %v1568 = vadd.f32 %v1552, %v577
      %v1569 = vadd.f32 %v1553, %v577
      %v1570 = vadd.f32 %v1554, %v577
      %v1571 = vadd.f32 %v1555, %v577
      %v1572 = vadd.f32 %v1556, %v577
      %v1573 = vadd.f32 %v1557, %v577
      %v1574 = vadd.f32 %v1558, %v577
      %v1575 = vadd.f32 %v1559, %v577
      %s1576 = scalar_lea.vmem %s328, 64
      %v1577 = vld [vmem:[%s1576] sm:$0xf]
      %v1578 = vld [vmem:[%s1576 + $0x4] sm:$0xf]
      %v1579 = vld [vmem:[%s1576 + $0x8] sm:$0xf]
      %v1580 = vld [vmem:[%s1576 + $0xc] sm:$0xf]
      %v1581 = vld [vmem:[%s1576 + $0x10] sm:$0xf]
      %v1582 = vld [vmem:[%s1576 + $0x14] sm:$0xf]
      %v1583 = vld [vmem:[%s1576 + $0x18] sm:$0xf]
      %v1584 = vld [vmem:[%s1576 + $0x1c] sm:$0xf]
      %v1585 = vld [vmem:[%s1576 + $0x20] sm:$0xf]
      %v1586 = vld [vmem:[%s1576 + $0x24] sm:$0xf]
      %v1587 = vld [vmem:[%s1576 + $0x28] sm:$0xf]
      %v1588 = vld [vmem:[%s1576 + $0x2c] sm:$0xf]
      %v1589 = vld [vmem:[%s1576 + $0x30] sm:$0xf]
      %v1590 = vld [vmem:[%s1576 + $0x34] sm:$0xf]
      %v1591 = vld [vmem:[%s1576 + $0x38] sm:$0xf]
      %v1592 = vld [vmem:[%s1576 + $0x3c] sm:$0xf]
      %v1609 = vunpack.c.l.b16 %v1577
      %v1610 = vunpack.c.l.b16 %v1578
      %v1611 = vunpack.c.l.b16 %v1579
      %v1612 = vunpack.c.l.b16 %v1580
      %v1613 = vunpack.c.l.b16 %v1581
      %v1614 = vunpack.c.l.b16 %v1582
      %v1615 = vunpack.c.l.b16 %v1583
      %v1616 = vunpack.c.l.b16 %v1584
      %v1617 = vunpack.c.l.b16 %v1585
      %v1618 = vunpack.c.l.b16 %v1586
      %v1619 = vunpack.c.l.b16 %v1587
      %v1620 = vunpack.c.l.b16 %v1588
      %v1621 = vunpack.c.l.b16 %v1589
      %v1622 = vunpack.c.l.b16 %v1590
      %v1623 = vunpack.c.l.b16 %v1591
      %v1624 = vunpack.c.l.b16 %v1592
      %v1625 = vpack.c.b16 %v1610, %v1609
      %v1626 = vpack.c.b16 %v1612, %v1611
      %v1627 = vpack.c.b16 %v1614, %v1613
      %v1628 = vpack.c.b16 %v1616, %v1615
      %v1629 = vpack.c.b16 %v1618, %v1617
      %v1630 = vpack.c.b16 %v1620, %v1619
      %v1631 = vpack.c.b16 %v1622, %v1621
      %v1632 = vpack.c.b16 %v1624, %v1623
      %v1634 = vsel %vm422, %v1625, 0
      %v1637 = vsel %vm422, %v1626, 0
      %v1640 = vsel %vm422, %v1627, 0
      %v1643 = vsel %vm422, %v1628, 0
      %v1646 = vsel %vm422, %v1629, 0
      %v1649 = vsel %vm422, %v1630, 0
      %v1652 = vsel %vm422, %v1631, 0
      %v1655 = vsel %vm422, %v1632, 0
      %1657 = vmatprep.subr.bf16.mxu0 0
      %1658 = vmatpush1.bf16.msra.mxu0 %v419
      %1659 = vmatprep.subr.bf16.mxu0 0
      %1660 = vmatpush1.bf16.msra.mxu0 %v452
      %1661 = vmatprep.subr.bf16.mxu0 0
      %1662 = vmatpush1.bf16.msra.mxu0 0
      %1663 = vmatprep.subr.bf16.mxu0 0
      %1664 = vmatpush1.bf16.msra.mxu0 0
      %1665 = vmatprep.subr.bf16.mxu0 0
      %1666 = vmatpush1.bf16.msra.mxu0 0
      %1667 = vmatprep.subr.bf16.mxu0 0
      %1668 = vmatpush1.bf16.msra.mxu0 0
      %1669 = vmatprep.subr.bf16.mxu0 0
      %1670 = vmatpush1.bf16.msra.mxu0 0
      %1671 = vmatprep.subr.bf16.mxu0 0
      %1672 = vmatpush1.bf16.msra.mxu0 0
      %1673 = vmatprep.subr.bf16.mxu0 0
      %1674 = vmatpush1.bf16.msra.mxu0 0
      %1675 = vmatprep.subr.bf16.mxu0 0
      %1676 = vmatpush1.bf16.msra.mxu0 0
      %1677 = vmatprep.subr.bf16.mxu0 0
      %1678 = vmatpush1.bf16.msra.mxu0 0
      %1679 = vmatprep.subr.bf16.mxu0 0
      %1680 = vmatpush1.bf16.msra.mxu0 0
      %1681 = vmatprep.subr.bf16.mxu0 0
      %1682 = vmatpush1.bf16.msra.mxu0 0
      %1683 = vmatprep.subr.bf16.mxu0 0
      %1684 = vmatpush1.bf16.msra.mxu0 0
      %1685 = vmatprep.subr.bf16.mxu0 0
      %1686 = vmatpush1.bf16.msra.mxu0 0
      %1687 = vmatprep.subr.bf16.mxu0 0
      %1688 = vmatpush1.bf16.msra.mxu0 0
      %1689 = vmatprep.mubr.bf16.mxu0 0
      %1690 = vmatmul.mubr.bf16.gmra.mrb[0].mxu0 %v1634
      %v1691 = vpop.f32.mrb[0].mxu0
      %v1692 = vadd.f32 0.0, %v1691
      %v1693 = vpop.f32.mrb[0].mxu0
      %v1694 = vpop.f32.mrb[0].mxu0
      %v1695 = vadd.f32 0.0, %v1694
      %v1696 = vpop.f32.mrb[0].mxu0
      %1697 = vmatprep.mubr.bf16.mxu0 0
      %1698 = vmatmul.mubr.bf16.gmra.mrb[0].mxu0 %v1637
      %v1699 = vpop.f32.mrb[0].mxu0
      %v1700 = vadd.f32 0.0, %v1699
      %v1701 = vpop.f32.mrb[0].mxu0
      %v1702 = vpop.f32.mrb[0].mxu0
      %v1703 = vadd.f32 0.0, %v1702
      %v1704 = vpop.f32.mrb[0].mxu0
      %1705 = vmatprep.mubr.bf16.mxu0 0
      %1706 = vmatmul.mubr.bf16.gmra.mrb[0].mxu0 %v1640
      %v1707 = vpop.f32.mrb[0].mxu0
      %v1708 = vadd.f32 0.0, %v1707
      %v1709 = vpop.f32.mrb[0].mxu0
      %v1710 = vpop.f32.mrb[0].mxu0
      %v1711 = vadd.f32 0.0, %v1710
      %v1712 = vpop.f32.mrb[0].mxu0
      %1713 = vmatprep.mubr.bf16.mxu0 0
      %1714 = vmatmul.mubr.bf16.gmra.mrb[0].mxu0 %v1643
      %v1715 = vpop.f32.mrb[0].mxu0
      %v1716 = vadd.f32 0.0, %v1715
      %v1717 = vpop.f32.mrb[0].mxu0
      %v1718 = vpop.f32.mrb[0].mxu0
      %v1719 = vadd.f32 0.0, %v1718
      %v1720 = vpop.f32.mrb[0].mxu0
      %1721 = vmatprep.mubr.bf16.mxu0 0
      %1722 = vmatmul.mubr.bf16.gmra.mrb[0].mxu0 %v1646
      %v1723 = vpop.f32.mrb[0].mxu0
      %v1724 = vadd.f32 0.0, %v1723
      %v1725 = vpop.f32.mrb[0].mxu0
      %v1726 = vpop.f32.mrb[0].mxu0
      %v1727 = vadd.f32 0.0, %v1726
      %v1728 = vpop.f32.mrb[0].mxu0
      %1729 = vmatprep.mubr.bf16.mxu0 0
      %1730 = vmatmul.mubr.bf16.gmra.mrb[0].mxu0 %v1649
      %v1731 = vpop.f32.mrb[0].mxu0
      %v1732 = vadd.f32 0.0, %v1731
      %v1733 = vpop.f32.mrb[0].mxu0
      %v1734 = vpop.f32.mrb[0].mxu0
      %v1735 = vadd.f32 0.0, %v1734
      %v1736 = vpop.f32.mrb[0].mxu0
      %1737 = vmatprep.mubr.bf16.mxu0 0
      %1738 = vmatmul.mubr.bf16.gmra.mrb[0].mxu0 %v1652
      %v1739 = vpop.f32.mrb[0].mxu0
      %v1740 = vadd.f32 0.0, %v1739
      %v1741 = vpop.f32.mrb[0].mxu0
      %v1742 = vpop.f32.mrb[0].mxu0
      %v1743 = vadd.f32 0.0, %v1742
      %v1744 = vpop.f32.mrb[0].mxu0
      %1745 = vmatprep.mubr.bf16.mxu0 0
      %1746 = vmatmul.mubr.bf16.gmra.mrb[0].mxu0 %v1655
      %v1747 = vpop.f32.mrb[0].mxu0
      %v1748 = vadd.f32 0.0, %v1747
      %v1749 = vpop.f32.mrb[0].mxu0
      %v1750 = vpop.f32.mrb[0].mxu0
      %v1751 = vadd.f32 0.0, %v1750
      %v1752 = vpop.f32.mrb[0].mxu0
      %1753 = vdwg.mxu0
      %v1754 = vmul.f32 %v1692, %v555
      %v1755 = vmul.f32 %v1695, %v555
      %v1756 = vmul.f32 %v1700, %v555
      %v1757 = vmul.f32 %v1703, %v555
      %v1758 = vmul.f32 %v1708, %v555
      %v1759 = vmul.f32 %v1711, %v555
      %v1760 = vmul.f32 %v1716, %v555
      %v1761 = vmul.f32 %v1719, %v555
      %v1762 = vmul.f32 %v1724, %v555
      %v1763 = vmul.f32 %v1727, %v555
      %v1764 = vmul.f32 %v1732, %v555
      %v1765 = vmul.f32 %v1735, %v555
      %v1766 = vmul.f32 %v1740, %v555
      %v1767 = vmul.f32 %v1743, %v555
      %v1768 = vmul.f32 %v1748, %v555
      %v1769 = vmul.f32 %v1751, %v555
      %v1770 = vadd.f32 %v1754, %v577
      %v1771 = vadd.f32 %v1755, %v577
      %v1772 = vadd.f32 %v1756, %v577
      %v1773 = vadd.f32 %v1757, %v577
      %v1774 = vadd.f32 %v1758, %v577
      %v1775 = vadd.f32 %v1759, %v577
      %v1776 = vadd.f32 %v1760, %v577
      %v1777 = vadd.f32 %v1761, %v577
      %v1778 = vadd.f32 %v1762, %v577
      %v1779 = vadd.f32 %v1763, %v577
      %v1780 = vadd.f32 %v1764, %v577
      %v1781 = vadd.f32 %v1765, %v577
      %v1782 = vadd.f32 %v1766, %v577
      %v1783 = vadd.f32 %v1767, %v577
      %v1784 = vadd.f32 %v1768, %v577
      %v1785 = vadd.f32 %v1769, %v577
      %v1786 = vmax.f32 %v1560, %v1770
      %v1787 = vmax.f32 %v1561, %v1771
      %v1788 = vmax.f32 %v1562, %v1772
      %v1789 = vmax.f32 %v1563, %v1773
      %v1790 = vmax.f32 %v1564, %v1774
      %v1791 = vmax.f32 %v1565, %v1775
      %v1792 = vmax.f32 %v1566, %v1776
      %v1793 = vmax.f32 %v1567, %v1777
      %v1794 = vmax.f32 %v1568, %v1778
      %v1795 = vmax.f32 %v1569, %v1779
      %v1796 = vmax.f32 %v1570, %v1780
      %v1797 = vmax.f32 %v1571, %v1781
      %v1798 = vmax.f32 %v1572, %v1782
      %v1799 = vmax.f32 %v1573, %v1783
      %v1800 = vmax.f32 %v1574, %v1784
      %v1801 = vmax.f32 %v1575, %v1785
      %s1802 = scalar_lea.vmem %s334, 64
      %v1803 = vld [vmem:[%s1802] sm:$0xf]
      %v1804 = vld [vmem:[%s1802 + $0x4] sm:$0xf]
      %v1805 = vld [vmem:[%s1802 + $0x8] sm:$0xf]
      %v1806 = vld [vmem:[%s1802 + $0xc] sm:$0xf]
      %v1807 = vld [vmem:[%s1802 + $0x10] sm:$0xf]
      %v1808 = vld [vmem:[%s1802 + $0x14] sm:$0xf]
      %v1809 = vld [vmem:[%s1802 + $0x18] sm:$0xf]
      %v1810 = vld [vmem:[%s1802 + $0x1c] sm:$0xf]
      %v1811 = vld [vmem:[%s1802 + $0x20] sm:$0xf]
      %v1812 = vld [vmem:[%s1802 + $0x24] sm:$0xf]
      %v1813 = vld [vmem:[%s1802 + $0x28] sm:$0xf]
      %v1814 = vld [vmem:[%s1802 + $0x2c] sm:$0xf]
      %v1815 = vld [vmem:[%s1802 + $0x30] sm:$0xf]
      %v1816 = vld [vmem:[%s1802 + $0x34] sm:$0xf]
      %v1817 = vld [vmem:[%s1802 + $0x38] sm:$0xf]
      %v1818 = vld [vmem:[%s1802 + $0x3c] sm:$0xf]
      %v1835 = vunpack.c.l.b16 %v1803
      %v1836 = vunpack.c.l.b16 %v1804
      %v1837 = vunpack.c.l.b16 %v1805
      %v1838 = vunpack.c.l.b16 %v1806
      %v1839 = vunpack.c.l.b16 %v1807
      %v1840 = vunpack.c.l.b16 %v1808
      %v1841 = vunpack.c.l.b16 %v1809
      %v1842 = vunpack.c.l.b16 %v1810
      %v1843 = vunpack.c.l.b16 %v1811
      %v1844 = vunpack.c.l.b16 %v1812
      %v1845 = vunpack.c.l.b16 %v1813
      %v1846 = vunpack.c.l.b16 %v1814
      %v1847 = vunpack.c.l.b16 %v1815
      %v1848 = vunpack.c.l.b16 %v1816
      %v1849 = vunpack.c.l.b16 %v1817
      %v1850 = vunpack.c.l.b16 %v1818
      %v1851 = vpack.c.b16 %v1836, %v1835
      %v1852 = vpack.c.b16 %v1838, %v1837
      %v1853 = vpack.c.b16 %v1840, %v1839
      %v1854 = vpack.c.b16 %v1842, %v1841
      %v1855 = vpack.c.b16 %v1844, %v1843
      %v1856 = vpack.c.b16 %v1846, %v1845
      %v1857 = vpack.c.b16 %v1848, %v1847
      %v1858 = vpack.c.b16 %v1850, %v1849
      %v1860 = vsel %vm422, %v1851, 0
      %v1863 = vsel %vm422, %v1852, 0
      %v1866 = vsel %vm422, %v1853, 0
      %v1869 = vsel %vm422, %v1854, 0
      %v1872 = vsel %vm422, %v1855, 0
      %v1875 = vsel %vm422, %v1856, 0
      %v1878 = vsel %vm422, %v1857, 0
      %v1881 = vsel %vm422, %v1858, 0
      %1883 = vmatprep.subr.bf16.mxu0 0
      %1884 = vmatpush1.bf16.msra.mxu0 %v419
      %1885 = vmatprep.subr.bf16.mxu0 0
      %1886 = vmatpush1.bf16.msra.mxu0 %v452
      %1887 = vmatprep.subr.bf16.mxu0 0
      %1888 = vmatpush1.bf16.msra.mxu0 0
      %1889 = vmatprep.subr.bf16.mxu0 0
      %1890 = vmatpush1.bf16.msra.mxu0 0
      %1891 = vmatprep.subr.bf16.mxu0 0
      %1892 = vmatpush1.bf16.msra.mxu0 0
      %1893 = vmatprep.subr.bf16.mxu0 0
      %1894 = vmatpush1.bf16.msra.mxu0 0
      %1895 = vmatprep.subr.bf16.mxu0 0
      %1896 = vmatpush1.bf16.msra.mxu0 0
      %1897 = vmatprep.subr.bf16.mxu0 0
      %1898 = vmatpush1.bf16.msra.mxu0 0
      %1899 = vmatprep.subr.bf16.mxu0 0
      %1900 = vmatpush1.bf16.msra.mxu0 0
      %1901 = vmatprep.subr.bf16.mxu0 0
      %1902 = vmatpush1.bf16.msra.mxu0 0
      %1903 = vmatprep.subr.bf16.mxu0 0
      %1904 = vmatpush1.bf16.msra.mxu0 0
      %1905 = vmatprep.subr.bf16.mxu0 0
      %1906 = vmatpush1.bf16.msra.mxu0 0
      %1907 = vmatprep.subr.bf16.mxu0 0
      %1908 = vmatpush1.bf16.msra.mxu0 0
      %1909 = vmatprep.subr.bf16.mxu0 0
      %1910 = vmatpush1.bf16.msra.mxu0 0
      %1911 = vmatprep.subr.bf16.mxu0 0
      %1912 = vmatpush1.bf16.msra.mxu0 0
      %1913 = vmatprep.subr.bf16.mxu0 0
      %1914 = vmatpush1.bf16.msra.mxu0 0
      %1915 = vmatprep.mubr.bf16.mxu0 0
      %1916 = vmatmul.mubr.bf16.gmra.mrb[0].mxu0 %v1860
      %v1917 = vpop.f32.mrb[0].mxu0
      %v1918 = vadd.f32 0.0, %v1917
      %v1919 = vpop.f32.mrb[0].mxu0
      %v1920 = vpop.f32.mrb[0].mxu0
      %v1921 = vadd.f32 0.0, %v1920
      %v1922 = vpop.f32.mrb[0].mxu0
      %1923 = vmatprep.mubr.bf16.mxu0 0
      %1924 = vmatmul.mubr.bf16.gmra.mrb[0].mxu0 %v1863
      %v1925 = vpop.f32.mrb[0].mxu0
      %v1926 = vadd.f32 0.0, %v1925
      %v1927 = vpop.f32.mrb[0].mxu0
      %v1928 = vpop.f32.mrb[0].mxu0
      %v1929 = vadd.f32 0.0, %v1928
      %v1930 = vpop.f32.mrb[0].mxu0
      %1931 = vmatprep.mubr.bf16.mxu0 0
      %1932 = vmatmul.mubr.bf16.gmra.mrb[0].mxu0 %v1866
      %v1933 = vpop.f32.mrb[0].mxu0
      %v1934 = vadd.f32 0.0, %v1933
      %v1935 = vpop.f32.mrb[0].mxu0
      %v1936 = vpop.f32.mrb[0].mxu0
      %v1937 = vadd.f32 0.0, %v1936
      %v1938 = vpop.f32.mrb[0].mxu0
      %1939 = vmatprep.mubr.bf16.mxu0 0
      %1940 = vmatmul.mubr.bf16.gmra.mrb[0].mxu0 %v1869
      %v1941 = vpop.f32.mrb[0].mxu0
      %v1942 = vadd.f32 0.0, %v1941
      %v1943 = vpop.f32.mrb[0].mxu0
      %v1944 = vpop.f32.mrb[0].mxu0
      %v1945 = vadd.f32 0.0, %v1944
      %v1946 = vpop.f32.mrb[0].mxu0
      %1947 = vmatprep.mubr.bf16.mxu0 0
      %1948 = vmatmul.mubr.bf16.gmra.mrb[0].mxu0 %v1872
      %v1949 = vpop.f32.mrb[0].mxu0
      %v1950 = vadd.f32 0.0, %v1949
      %v1951 = vpop.f32.mrb[0].mxu0
      %v1952 = vpop.f32.mrb[0].mxu0
      %v1953 = vadd.f32 0.0, %v1952
      %v1954 = vpop.f32.mrb[0].mxu0
      %1955 = vmatprep.mubr.bf16.mxu0 0
      %1956 = vmatmul.mubr.bf16.gmra.mrb[0].mxu0 %v1875
      %v1957 = vpop.f32.mrb[0].mxu0
      %v1958 = vadd.f32 0.0, %v1957
      %v1959 = vpop.f32.mrb[0].mxu0
      %v1960 = vpop.f32.mrb[0].mxu0
      %v1961 = vadd.f32 0.0, %v1960
      %v1962 = vpop.f32.mrb[0].mxu0
      %1963 = vmatprep.mubr.bf16.mxu0 0
      %1964 = vmatmul.mubr.bf16.gmra.mrb[0].mxu0 %v1878
      %v1965 = vpop.f32.mrb[0].mxu0
      %v1966 = vadd.f32 0.0, %v1965
      %v1967 = vpop.f32.mrb[0].mxu0
      %v1968 = vpop.f32.mrb[0].mxu0
      %v1969 = vadd.f32 0.0, %v1968
      %v1970 = vpop.f32.mrb[0].mxu0
      %1971 = vmatprep.mubr.bf16.mxu0 0
      %1972 = vmatmul.mubr.bf16.gmra.mrb[0].mxu0 %v1881
      %v1973 = vpop.f32.mrb[0].mxu0
      %v1974 = vadd.f32 0.0, %v1973
      %v1975 = vpop.f32.mrb[0].mxu0
      %v1976 = vpop.f32.mrb[0].mxu0
      %v1977 = vadd.f32 0.0, %v1976
      %v1978 = vpop.f32.mrb[0].mxu0
      %1979 = vdwg.mxu0
      %v1980 = vmul.f32 %v1918, %v555
      %v1981 = vmul.f32 %v1921, %v555
      %v1982 = vmul.f32 %v1926, %v555
      %v1983 = vmul.f32 %v1929, %v555
      %v1984 = vmul.f32 %v1934, %v555
      %v1985 = vmul.f32 %v1937, %v555
      %v1986 = vmul.f32 %v1942, %v555
      %v1987 = vmul.f32 %v1945, %v555
      %v1988 = vmul.f32 %v1950, %v555
      %v1989 = vmul.f32 %v1953, %v555
      %v1990 = vmul.f32 %v1958, %v555
      %v1991 = vmul.f32 %v1961, %v555
      %v1992 = vmul.f32 %v1966, %v555
      %v1993 = vmul.f32 %v1969, %v555
      %v1994 = vmul.f32 %v1974, %v555
      %v1995 = vmul.f32 %v1977, %v555
      %v1996 = vadd.f32 %v1980, %v577
      %v1997 = vadd.f32 %v1981, %v577
      %v1998 = vadd.f32 %v1982, %v577
      %v1999 = vadd.f32 %v1983, %v577
      %v2000 = vadd.f32 %v1984, %v577
      %v2001 = vadd.f32 %v1985, %v577
      %v2002 = vadd.f32 %v1986, %v577
      %v2003 = vadd.f32 %v1987, %v577
      %v2004 = vadd.f32 %v1988, %v577
      %v2005 = vadd.f32 %v1989, %v577
      %v2006 = vadd.f32 %v1990, %v577
      %v2007 = vadd.f32 %v1991, %v577
      %v2008 = vadd.f32 %v1992, %v577
      %v2009 = vadd.f32 %v1993, %v577
      %v2010 = vadd.f32 %v1994, %v577
      %v2011 = vadd.f32 %v1995, %v577
      %v2012 = vmax.f32 %v1786, %v1996
      %v2013 = vmax.f32 %v1787, %v1997
      %v2014 = vmax.f32 %v1788, %v1998
      %v2015 = vmax.f32 %v1789, %v1999
      %v2016 = vmax.f32 %v1790, %v2000
      %v2017 = vmax.f32 %v1791, %v2001
      %v2018 = vmax.f32 %v1792, %v2002
      %v2019 = vmax.f32 %v1793, %v2003
      %v2020 = vmax.f32 %v1794, %v2004
      %v2021 = vmax.f32 %v1795, %v2005
      %v2022 = vmax.f32 %v1796, %v2006
      %v2023 = vmax.f32 %v1797, %v2007
      %v2024 = vmax.f32 %v1798, %v2008
      %v2025 = vmax.f32 %v1799, %v2009
      %v2026 = vmax.f32 %v1800, %v2010
      %v2027 = vmax.f32 %v1801, %v2011
      %s2028 = scalar_lea.vmem %s340, 64
      %v2029 = vld [vmem:[%s2028] sm:$0xf]
      %v2030 = vld [vmem:[%s2028 + $0x4] sm:$0xf]
      %v2031 = vld [vmem:[%s2028 + $0x8] sm:$0xf]
      %v2032 = vld [vmem:[%s2028 + $0xc] sm:$0xf]
      %v2033 = vld [vmem:[%s2028 + $0x10] sm:$0xf]
      %v2034 = vld [vmem:[%s2028 + $0x14] sm:$0xf]
      %v2035 = vld [vmem:[%s2028 + $0x18] sm:$0xf]
      %v2036 = vld [vmem:[%s2028 + $0x1c] sm:$0xf]
      %v2037 = vld [vmem:[%s2028 + $0x20] sm:$0xf]
      %v2038 = vld [vmem:[%s2028 + $0x24] sm:$0xf]
      %v2039 = vld [vmem:[%s2028 + $0x28] sm:$0xf]
      %v2040 = vld [vmem:[%s2028 + $0x2c] sm:$0xf]
      %v2041 = vld [vmem:[%s2028 + $0x30] sm:$0xf]
      %v2042 = vld [vmem:[%s2028 + $0x34] sm:$0xf]
      %v2043 = vld [vmem:[%s2028 + $0x38] sm:$0xf]
      %v2044 = vld [vmem:[%s2028 + $0x3c] sm:$0xf]
      %v2061 = vunpack.c.l.b16 %v2029
      %v2062 = vunpack.c.l.b16 %v2030
      %v2063 = vunpack.c.l.b16 %v2031
      %v2064 = vunpack.c.l.b16 %v2032
      %v2065 = vunpack.c.l.b16 %v2033
      %v2066 = vunpack.c.l.b16 %v2034
      %v2067 = vunpack.c.l.b16 %v2035
      %v2068 = vunpack.c.l.b16 %v2036
      %v2069 = vunpack.c.l.b16 %v2037
      %v2070 = vunpack.c.l.b16 %v2038
      %v2071 = vunpack.c.l.b16 %v2039
      %v2072 = vunpack.c.l.b16 %v2040
      %v2073 = vunpack.c.l.b16 %v2041
      %v2074 = vunpack.c.l.b16 %v2042
      %v2075 = vunpack.c.l.b16 %v2043
      %v2076 = vunpack.c.l.b16 %v2044
      %v2077 = vpack.c.b16 %v2062, %v2061
      %v2078 = vpack.c.b16 %v2064, %v2063
      %v2079 = vpack.c.b16 %v2066, %v2065
      %v2080 = vpack.c.b16 %v2068, %v2067
      %v2081 = vpack.c.b16 %v2070, %v2069
      %v2082 = vpack.c.b16 %v2072, %v2071
      %v2083 = vpack.c.b16 %v2074, %v2073
      %v2084 = vpack.c.b16 %v2076, %v2075
      %v2086 = vsel %vm422, %v2077, 0
      %v2089 = vsel %vm422, %v2078, 0
      %v2092 = vsel %vm422, %v2079, 0
      %v2095 = vsel %vm422, %v2080, 0
      %v2098 = vsel %vm422, %v2081, 0
      %v2101 = vsel %vm422, %v2082, 0
      %v2104 = vsel %vm422, %v2083, 0
      %v2107 = vsel %vm422, %v2084, 0
      %2109 = vmatprep.subr.bf16.mxu0 0
      %2110 = vmatpush1.bf16.msra.mxu0 %v419
      %2111 = vmatprep.subr.bf16.mxu0 0
      %2112 = vmatpush1.bf16.msra.mxu0 %v452
      %2113 = vmatprep.subr.bf16.mxu0 0
      %2114 = vmatpush1.bf16.msra.mxu0 0
      %2115 = vmatprep.subr.bf16.mxu0 0
      %2116 = vmatpush1.bf16.msra.mxu0 0
      %2117 = vmatprep.subr.bf16.mxu0 0
      %2118 = vmatpush1.bf16.msra.mxu0 0
      %2119 = vmatprep.subr.bf16.mxu0 0
      %2120 = vmatpush1.bf16.msra.mxu0 0
      %2121 = vmatprep.subr.bf16.mxu0 0
      %2122 = vmatpush1.bf16.msra.mxu0 0
      %2123 = vmatprep.subr.bf16.mxu0 0
      %2124 = vmatpush1.bf16.msra.mxu0 0
      %2125 = vmatprep.subr.bf16.mxu0 0
      %2126 = vmatpush1.bf16.msra.mxu0 0
      %2127 = vmatprep.subr.bf16.mxu0 0
      %2128 = vmatpush1.bf16.msra.mxu0 0
      %2129 = vmatprep.subr.bf16.mxu0 0
      %2130 = vmatpush1.bf16.msra.mxu0 0
      %2131 = vmatprep.subr.bf16.mxu0 0
      %2132 = vmatpush1.bf16.msra.mxu0 0
      %2133 = vmatprep.subr.bf16.mxu0 0
      %2134 = vmatpush1.bf16.msra.mxu0 0
      %2135 = vmatprep.subr.bf16.mxu0 0
      %2136 = vmatpush1.bf16.msra.mxu0 0
      %2137 = vmatprep.subr.bf16.mxu0 0
      %2138 = vmatpush1.bf16.msra.mxu0 0
      %2139 = vmatprep.subr.bf16.mxu0 0
      %2140 = vmatpush1.bf16.msra.mxu0 0
      %2141 = vmatprep.mubr.bf16.mxu0 0
      %2142 = vmatmul.mubr.bf16.gmra.mrb[0].mxu0 %v2086
      %v2143 = vpop.f32.mrb[0].mxu0
      %v2144 = vadd.f32 0.0, %v2143
      %v2145 = vpop.f32.mrb[0].mxu0
      %v2146 = vpop.f32.mrb[0].mxu0
      %v2147 = vadd.f32 0.0, %v2146
      %v2148 = vpop.f32.mrb[0].mxu0
      %2149 = vmatprep.mubr.bf16.mxu0 0
      %2150 = vmatmul.mubr.bf16.gmra.mrb[0].mxu0 %v2089
      %v2151 = vpop.f32.mrb[0].mxu0
      %v2152 = vadd.f32 0.0, %v2151
      %v2153 = vpop.f32.mrb[0].mxu0
      %v2154 = vpop.f32.mrb[0].mxu0
      %v2155 = vadd.f32 0.0, %v2154
      %v2156 = vpop.f32.mrb[0].mxu0
      %2157 = vmatprep.mubr.bf16.mxu0 0
      %2158 = vmatmul.mubr.bf16.gmra.mrb[0].mxu0 %v2092
      %v2159 = vpop.f32.mrb[0].mxu0
      %v2160 = vadd.f32 0.0, %v2159
      %v2161 = vpop.f32.mrb[0].mxu0
      %v2162 = vpop.f32.mrb[0].mxu0
      %v2163 = vadd.f32 0.0, %v2162
      %v2164 = vpop.f32.mrb[0].mxu0
      %2165 = vmatprep.mubr.bf16.mxu0 0
      %2166 = vmatmul.mubr.bf16.gmra.mrb[0].mxu0 %v2095
      %v2167 = vpop.f32.mrb[0].mxu0
      %v2168 = vadd.f32 0.0, %v2167
      %v2169 = vpop.f32.mrb[0].mxu0
      %v2170 = vpop.f32.mrb[0].mxu0
      %v2171 = vadd.f32 0.0, %v2170
      %v2172 = vpop.f32.mrb[0].mxu0
      %2173 = vmatprep.mubr.bf16.mxu0 0
      %2174 = vmatmul.mubr.bf16.gmra.mrb[0].mxu0 %v2098
      %v2175 = vpop.f32.mrb[0].mxu0
      %v2176 = vadd.f32 0.0, %v2175
      %v2177 = vpop.f32.mrb[0].mxu0
      %v2178 = vpop.f32.mrb[0].mxu0
      %v2179 = vadd.f32 0.0, %v2178
      %v2180 = vpop.f32.mrb[0].mxu0
      %2181 = vmatprep.mubr.bf16.mxu0 0
      %2182 = vmatmul.mubr.bf16.gmra.mrb[0].mxu0 %v2101
      %v2183 = vpop.f32.mrb[0].mxu0
      %v2184 = vadd.f32 0.0, %v2183
      %v2185 = vpop.f32.mrb[0].mxu0
      %v2186 = vpop.f32.mrb[0].mxu0
      %v2187 = vadd.f32 0.0, %v2186
      %v2188 = vpop.f32.mrb[0].mxu0
      %2189 = vmatprep.mubr.bf16.mxu0 0
      %2190 = vmatmul.mubr.bf16.gmra.mrb[0].mxu0 %v2104
      %v2191 = vpop.f32.mrb[0].mxu0
      %v2192 = vadd.f32 0.0, %v2191
      %v2193 = vpop.f32.mrb[0].mxu0
      %v2194 = vpop.f32.mrb[0].mxu0
      %v2195 = vadd.f32 0.0, %v2194
      %v2196 = vpop.f32.mrb[0].mxu0
      %2197 = vmatprep.mubr.bf16.mxu0 0
      %2198 = vmatmul.mubr.bf16.gmra.mrb[0].mxu0 %v2107
      %v2199 = vpop.f32.mrb[0].mxu0
      %v2200 = vadd.f32 0.0, %v2199
      %v2201 = vpop.f32.mrb[0].mxu0
      %v2202 = vpop.f32.mrb[0].mxu0
      %v2203 = vadd.f32 0.0, %v2202
      %v2204 = vpop.f32.mrb[0].mxu0
      %2205 = vdwg.mxu0
      %v2206 = vmul.f32 %v2144, %v555
      %v2207 = vmul.f32 %v2147, %v555
      %v2208 = vmul.f32 %v2152, %v555
      %v2209 = vmul.f32 %v2155, %v555
      %v2210 = vmul.f32 %v2160, %v555
      %v2211 = vmul.f32 %v2163, %v555
      %v2212 = vmul.f32 %v2168, %v555
      %v2213 = vmul.f32 %v2171, %v555
      %v2214 = vmul.f32 %v2176, %v555
      %v2215 = vmul.f32 %v2179, %v555
      %v2216 = vmul.f32 %v2184, %v555
      %v2217 = vmul.f32 %v2187, %v555
      %v2218 = vmul.f32 %v2192, %v555
      %v2219 = vmul.f32 %v2195, %v555
      %v2220 = vmul.f32 %v2200, %v555
      %v2221 = vmul.f32 %v2203, %v555
      %v2222 = vadd.f32 %v2206, %v577
      %v2223 = vadd.f32 %v2207, %v577
      %v2224 = vadd.f32 %v2208, %v577
      %v2225 = vadd.f32 %v2209, %v577
      %v2226 = vadd.f32 %v2210, %v577
      %v2227 = vadd.f32 %v2211, %v577
      %v2228 = vadd.f32 %v2212, %v577
      %v2229 = vadd.f32 %v2213, %v577
      %v2230 = vadd.f32 %v2214, %v577
      %v2231 = vadd.f32 %v2215, %v577
      %v2232 = vadd.f32 %v2216, %v577
      %v2233 = vadd.f32 %v2217, %v577
      %v2234 = vadd.f32 %v2218, %v577
      %v2235 = vadd.f32 %v2219, %v577
      %v2236 = vadd.f32 %v2220, %v577
      %v2237 = vadd.f32 %v2221, %v577
      %v2238 = vmax.f32 %v2012, %v2222
      %v2239 = vmax.f32 %v2013, %v2223
      %v2240 = vmax.f32 %v2014, %v2224
      %v2241 = vmax.f32 %v2015, %v2225
      %v2242 = vmax.f32 %v2016, %v2226
      %v2243 = vmax.f32 %v2017, %v2227
      %v2244 = vmax.f32 %v2018, %v2228
      %v2245 = vmax.f32 %v2019, %v2229
      %v2246 = vmax.f32 %v2020, %v2230
      %v2247 = vmax.f32 %v2021, %v2231
      %v2248 = vmax.f32 %v2022, %v2232
      %v2249 = vmax.f32 %v2023, %v2233
      %v2250 = vmax.f32 %v2024, %v2234
      %v2251 = vmax.f32 %v2025, %v2235
      %v2252 = vmax.f32 %v2026, %v2236
      %v2253 = vmax.f32 %v2027, %v2237
      %v2254 = vmax.f32 %v2238, 0.0
      %v2255 = vmax.f32 %v2239, 0.0
      %v2256 = vmax.f32 %v2240, 0.0
      %v2257 = vmax.f32 %v2241, 0.0
      %v2258 = vmax.f32 %v2242, 0.0
      %v2259 = vmax.f32 %v2243, 0.0
      %v2260 = vmax.f32 %v2244, 0.0
      %v2261 = vmax.f32 %v2245, 0.0
      %v2262 = vmax.f32 %v2246, 0.0
      %v2263 = vmax.f32 %v2247, 0.0
      %v2264 = vmax.f32 %v2248, 0.0
      %v2265 = vmax.f32 %v2249, 0.0
      %v2266 = vmax.f32 %v2250, 0.0
      %v2267 = vmax.f32 %v2251, 0.0
      %v2268 = vmax.f32 %v2252, 0.0
      %v2269 = vmax.f32 %v2253, 0.0
      %v2270 = vpack.c.bf16 %v2255, %v2254
      %v2271 = vpack.c.bf16 %v2257, %v2256
      %v2272 = vpack.c.bf16 %v2259, %v2258
      %v2273 = vpack.c.bf16 %v2261, %v2260
      %v2274 = vpack.c.bf16 %v2263, %v2262
      %v2275 = vpack.c.bf16 %v2265, %v2264
      %v2276 = vpack.c.bf16 %v2267, %v2266
      %v2277 = vpack.c.bf16 %v2269, %v2268
      %v2286 = vunpack.c.l.b16 %v2270
      %v2287 = vunpack.c.h.b16 %v2270
      %v2288 = vunpack.c.l.b16 %v2271
      %v2289 = vunpack.c.h.b16 %v2271
      %v2290 = vunpack.c.l.b16 %v2272
      %v2291 = vunpack.c.h.b16 %v2272
      %v2292 = vunpack.c.l.b16 %v2273
      %v2293 = vunpack.c.h.b16 %v2273
      %v2294 = vunpack.c.l.b16 %v2274
      %v2295 = vunpack.c.h.b16 %v2274
      %v2296 = vunpack.c.l.b16 %v2275
      %v2297 = vunpack.c.h.b16 %v2275
      %v2298 = vunpack.c.l.b16 %v2276
      %v2299 = vunpack.c.h.b16 %v2276
      %v2300 = vunpack.c.l.b16 %v2277
      %v2301 = vunpack.c.h.b16 %v2277
      %v2302 = vpack.c.b16 %v2286, %v2286
      %v2303 = vpack.c.b16 %v2287, %v2287
      %v2304 = vpack.c.b16 %v2288, %v2288
      %v2305 = vpack.c.b16 %v2289, %v2289
      %v2306 = vpack.c.b16 %v2290, %v2290
      %v2307 = vpack.c.b16 %v2291, %v2291
      %v2308 = vpack.c.b16 %v2292, %v2292
      %v2309 = vpack.c.b16 %v2293, %v2293
      %v2310 = vpack.c.b16 %v2294, %v2294
      %v2311 = vpack.c.b16 %v2295, %v2295
      %v2312 = vpack.c.b16 %v2296, %v2296
      %v2313 = vpack.c.b16 %v2297, %v2297
      %v2314 = vpack.c.b16 %v2298, %v2298
      %v2315 = vpack.c.b16 %v2299, %v2299
      %v2316 = vpack.c.b16 %v2300, %v2300
      %v2317 = vpack.c.b16 %v2301, %v2301
      %s2334 = scalar_lea.vmem %s346, 64
      %2335 = vst [vmem:[%s2334] sm:$0xf] %v2302
      %2336 = vst [vmem:[%s2334 + $0x4] sm:$0xf] %v2303
      %2337 = vst [vmem:[%s2334 + $0x8] sm:$0xf] %v2304
      %2338 = vst [vmem:[%s2334 + $0xc] sm:$0xf] %v2305
      %2339 = vst [vmem:[%s2334 + $0x10] sm:$0xf] %v2306
      %2340 = vst [vmem:[%s2334 + $0x14] sm:$0xf] %v2307
      %2341 = vst [vmem:[%s2334 + $0x18] sm:$0xf] %v2308
      %2342 = vst [vmem:[%s2334 + $0x1c] sm:$0xf] %v2309
      %2343 = vst [vmem:[%s2334 + $0x20] sm:$0xf] %v2310
      %2344 = vst [vmem:[%s2334 + $0x24] sm:$0xf] %v2311
      %2345 = vst [vmem:[%s2334 + $0x28] sm:$0xf] %v2312
      %2346 = vst [vmem:[%s2334 + $0x2c] sm:$0xf] %v2313
      %2347 = vst [vmem:[%s2334 + $0x30] sm:$0xf] %v2314
      %2348 = vst [vmem:[%s2334 + $0x34] sm:$0xf] %v2315
      %2349 = vst [vmem:[%s2334 + $0x38] sm:$0xf] %v2316
      %2350 = vst [vmem:[%s2334 + $0x3c] sm:$0xf] %v2317
      %s2351 = smul.u32 32, %s18
      %p2352 = scmp.lt.s32.totalorder %s2351, 63
      %s2353 = scalar_select %p2352, %s2351, 63
      %s2354 = smul.addr %s2353, 4
      %s2355 = scalar_lea.vmem %s7, %s2354
      // Predicated region
      $region49: #{custom_cnn_forward.3} parent=47 // pred_check
        %p2356 = pneg %p203
      $region50: #{custom_cnn_forward.3} parent=47 // pred_check_branch
        %2358 = sbr.rel (%p2356) target = $region52
      $region51: #{custom_cnn_forward.3} parent=47 // pred_region
        %s2359 = smul.u32 32, %s18
      $region52: #{custom_cnn_forward.3} parent=47 // pred_fallthru
        _
    $region48: #{custom_cnn_forward.3} parent=5 // pred_fallthru
      _
    %p2360 = scmp.le.s32.totalorder 2, %s13
    // Predicated region
    $region53: #{custom_cnn_forward.3} parent=5 // pred_check
      %p2361 = pneg %p2360
    $region54: #{custom_cnn_forward.3} parent=5 // pred_check_branch
      %2363 = sbr.rel (%p2361) target = $region56
    $region55: #{custom_cnn_forward.3} parent=5 // pred_region
      %s2364 = ssub.s32 %s13, 2
      // Predicated region
      $region57: #{custom_cnn_forward.3} parent=55 // pred_check
        %p2365 = pneg %p209
      $region58: #{custom_cnn_forward.3} parent=55 // pred_check_branch
        %2367 = sbr.rel (%p2365) target = $region60
      $region59: #{custom_cnn_forward.3} parent=55 // pred_region
        %s2368 = smul.u32 32, %s19
        %p2369 = scmp.lt.s32.totalorder %s2368, 63
        %s2370 = scalar_select %p2369, %s2368, 63
        %s2371 = smul.addr %s2370, 4
        %s2372 = scalar_lea.vmem %s7, %s2371
      $region60: #{custom_cnn_forward.3} parent=55 // pred_fallthru
        _
    $region56: #{custom_cnn_forward.3} parent=5 // pred_fallthru
      _
  $region6: #{custom_cnn_forward.3} parent=0 // loop_footer
    %s17 = sadd.s32 1, %s13
  $region7: #{custom_cnn_forward.3} parent=0 // loop_footer_branch
    %12 = sbr.rel target = $region3
  $region8: #{custom_cnn_forward.3} parent=0 // loop_exit
    _

// kernel: custom_cnn_forward.5
$region0: #{custom_cnn_forward.5}
  #allocation0 [shape = 'u32[]', space=smem, size = 0x4, offset = 0x4, fixed_abs, tag = 'smem constant byte address 0x4 - core index']
  #allocation1 [shape = 'u32[144,128]{1,0:T(1,128)}', space=vmem, size = 0x12000, scoped, tag = 'internal scratch']
  %s0 = inlined_call_operand.vmem [shape: bf16[2,4096], index: 0, kind: input, shape index: {}]
  %s1 = inlined_call_operand.vmem [shape: bf16[4096,256], index: 1, kind: input, shape index: {}]
  %s2 = inlined_call_operand.vmem [shape: f32[1,256], index: 2, kind: input, shape index: {}]
  %s3 = inlined_call_operand.vmem [shape: bf16[256,128], index: 3, kind: input, shape index: {}]
  %s4 = inlined_call_operand.vmem [shape: f32[1,128], index: 4, kind: input, shape index: {}]
  %s5 = inlined_call_operand.hbm [shape: f32[2,128], index: 5, kind: output, shape index: {}]
  %s6 = sld [smem:[#allocation0]]
  $region30: #{custom_cnn_forward.5} parent=0
    _
  %s8 = ssub.s32 1, %s6
  %s9 = scalar_select 0, %s8, %s6
  $region1: #{custom_cnn_forward.5} parent=0
    #allocation2 [shape = 'u8[1024]{0}', space=vmem, size = 0x400, scoped, tag = 'output window, operand 0, single buffered']
    #allocation3 [shape = 's32[1]{0}', space=sflag, size = 0x4, scoped, tag = 'scoped memory for custom_cnn_forward.5']
    %10 = vsyncpa [#allocation3], 0
    // Predicated region
    $region2: #{custom_cnn_forward.5} parent=1 // pred_check
      _
    $region3: #{custom_cnn_forward.5} parent=1 // pred_check_branch
      %12 = sbr.rel (0) target = $region5
    $region4: #{custom_cnn_forward.5} parent=1 // pred_region
      _
    $region5: #{custom_cnn_forward.5} parent=1 // pred_fallthru
      _
    // Predicated region
    $region6: #{custom_cnn_forward.5} parent=1 // pred_check
      _
    $region7: #{custom_cnn_forward.5} parent=1 // pred_check_branch
      %14 = sbr.rel (0) target = $region9
    $region8: #{custom_cnn_forward.5} parent=1 // pred_region
      _
    $region9: #{custom_cnn_forward.5} parent=1 // pred_fallthru
      _
    // Predicated region
    $region10: #{custom_cnn_forward.5} parent=1 // pred_check
      _
    $region11: #{custom_cnn_forward.5} parent=1 // pred_check_branch
      %16 = sbr.rel (0) target = $region13
    $region12: #{custom_cnn_forward.5} parent=1 // pred_region
      _
    $region13: #{custom_cnn_forward.5} parent=1 // pred_fallthru
      _
    // Predicated region
    $region14: #{custom_cnn_forward.5} parent=1 // pred_check
      _
    $region15: #{custom_cnn_forward.5} parent=1 // pred_check_branch
      %18 = sbr.rel (0) target = $region17
    $region16: #{custom_cnn_forward.5} parent=1 // pred_region
      _
    $region17: #{custom_cnn_forward.5} parent=1 // pred_fallthru
      _
    // Predicated region
    $region18: #{custom_cnn_forward.5} parent=1 // pred_check
      _
    $region19: #{custom_cnn_forward.5} parent=1 // pred_check_branch
      %20 = sbr.rel (0) target = $region21
    $region20: #{custom_cnn_forward.5} parent=1 // pred_region
      _
    $region21: #{custom_cnn_forward.5} parent=1 // pred_fallthru
      _
    %v22 = vld [vmem:[%s0] sm:$0xff]
    %v23 = vld [vmem:[%s0 + $0x8] sm:$0xff]
    %v24 = vld [vmem:[%s0 + $0x10] sm:$0xff]
    %v25 = vld [vmem:[%s0 + $0x18] sm:$0xff]
    %v26 = vld [vmem:[%s1] sm:$0xff]
    %v27 = vld [vmem:[%s1 + $0x8] sm:$0xff]
    %v28 = vld [vmem:[%s1 + $0x10] sm:$0xff]
    %v29 = vld [vmem:[%s1 + $0x18] sm:$0xff]
    %v30 = vld [vmem:[%s1 + $0x20] sm:$0xff]
    %v31 = vld [vmem:[%s1 + $0x28] sm:$0xff]
    %v32 = vld [vmem:[%s1 + $0x30] sm:$0xff]
    %v33 = vld [vmem:[%s1 + $0x38] sm:$0xff]
    %v34 = vld [vmem:[%s1 + $0x40] sm:$0xff]
    %v35 = vld [vmem:[%s1 + $0x48] sm:$0xff]
    %v36 = vld [vmem:[%s1 + $0x50] sm:$0xff]
    %v37 = vld [vmem:[%s1 + $0x58] sm:$0xff]
    %v38 = vld [vmem:[%s1 + $0x60] sm:$0xff]
    %v39 = vld [vmem:[%s1 + $0x68] sm:$0xff]
    %v40 = vld [vmem:[%s1 + $0x70] sm:$0xff]
    %v41 = vld [vmem:[%s1 + $0x78] sm:$0xff]
    %v42 = vld [vmem:[%s1 + $0x80] sm:$0xff]
    %v43 = vld [vmem:[%s1 + $0x88] sm:$0xff]
    %v44 = vld [vmem:[%s1 + $0x90] sm:$0xff]
    %v45 = vld [vmem:[%s1 + $0x98] sm:$0xff]
    %v46 = vld [vmem:[%s1 + $0xa0] sm:$0xff]
    %v47 = vld [vmem:[%s1 + $0xa8] sm:$0xff]
    %v48 = vld [vmem:[%s1 + $0xb0] sm:$0xff]
    %v49 = vld [vmem:[%s1 + $0xb8] sm:$0xff]
    %v50 = vld [vmem:[%s1 + $0xc0] sm:$0xff]
    %v51 = vld [vmem:[%s1 + $0xc8] sm:$0xff]
    %v52 = vld [vmem:[%s1 + $0xd0] sm:$0xff]
    %v53 = vld [vmem:[%s1 + $0xd8] sm:$0xff]
    %v54 = vld [vmem:[%s1 + $0xe0] sm:$0xff]
    %v55 = vld [vmem:[%s1 + $0xe8] sm:$0xff]
    %v56 = vld [vmem:[%s1 + $0xf0] sm:$0xff]
    %v57 = vld [vmem:[%s1 + $0xf8] sm:$0xff]
    %v58 = vld [vmem:[%s1 + $0x100] sm:$0xff]
    %v59 = vld [vmem:[%s1 + $0x108] sm:$0xff]
    %v60 = vld [vmem:[%s1 + $0x110] sm:$0xff]
    %v61 = vld [vmem:[%s1 + $0x118] sm:$0xff]
    %v62 = vld [vmem:[%s1 + $0x120] sm:$0xff]
    %v63 = vld [vmem:[%s1 + $0x128] sm:$0xff]
    %v64 = vld [vmem:[%s1 + $0x130] sm:$0xff]
    %v65 = vld [vmem:[%s1 + $0x138] sm:$0xff]
    %v66 = vld [vmem:[%s1 + $0x140] sm:$0xff]
    %v67 = vld [vmem:[%s1 + $0x148] sm:$0xff]
    %v68 = vld [vmem:[%s1 + $0x150] sm:$0xff]
    %v69 = vld [vmem:[%s1 + $0x158] sm:$0xff]
    %v70 = vld [vmem:[%s1 + $0x160] sm:$0xff]
    %v71 = vld [vmem:[%s1 + $0x168] sm:$0xff]
    %v72 = vld [vmem:[%s1 + $0x170] sm:$0xff]
    %v73 = vld [vmem:[%s1 + $0x178] sm:$0xff]
    %v74 = vld [vmem:[%s1 + $0x180] sm:$0xff]
    %v75 = vld [vmem:[%s1 + $0x188] sm:$0xff]
    %v76 = vld [vmem:[%s1 + $0x190] sm:$0xff]
    %v77 = vld [vmem:[%s1 + $0x198] sm:$0xff]
    %v78 = vld [vmem:[%s1 + $0x1a0] sm:$0xff]
    %v79 = vld [vmem:[%s1 + $0x1a8] sm:$0xff]
    %v80 = vld [vmem:[%s1 + $0x1b0] sm:$0xff]
    %v81 = vld [vmem:[%s1 + $0x1b8] sm:$0xff]
    %v82 = vld [vmem:[%s1 + $0x1c0] sm:$0xff]
    %v83 = vld [vmem:[%s1 + $0x1c8] sm:$0xff]
    %v84 = vld [vmem:[%s1 + $0x1d0] sm:$0xff]
    %v85 = vld [vmem:[%s1 + $0x1d8] sm:$0xff]
    %v86 = vld [vmem:[%s1 + $0x1e0] sm:$0xff]
    %v87 = vld [vmem:[%s1 + $0x1e8] sm:$0xff]
    %v88 = vld [vmem:[%s1 + $0x1f0] sm:$0xff]
    %v89 = vld [vmem:[%s1 + $0x1f8] sm:$0xff]
    %v90 = vld [vmem:[%s1 + $0x200] sm:$0xff]
    %v91 = vld [vmem:[%s1 + $0x208] sm:$0xff]
    %v92 = vld [vmem:[%s1 + $0x210] sm:$0xff]
    %v93 = vld [vmem:[%s1 + $0x218] sm:$0xff]
    %v94 = vld [vmem:[%s1 + $0x220] sm:$0xff]
    %v95 = vld [vmem:[%s1 + $0x228] sm:$0xff]
    %v96 = vld [vmem:[%s1 + $0x230] sm:$0xff]
    %v97 = vld [vmem:[%s1 + $0x238] sm:$0xff]
    %v98 = vld [vmem:[%s1 + $0x240] sm:$0xff]
    %v99 = vld [vmem:[%s1 + $0x248] sm:$0xff]
    %v100 = vld [vmem:[%s1 + $0x250] sm:$0xff]
    %v101 = vld [vmem:[%s1 + $0x258] sm:$0xff]
    %v102 = vld [vmem:[%s1 + $0x260] sm:$0xff]
    %v103 = vld [vmem:[%s1 + $0x268] sm:$0xff]
    %v104 = vld [vmem:[%s1 + $0x270] sm:$0xff]
    %v105 = vld [vmem:[%s1 + $0x278] sm:$0xff]
    %v106 = vld [vmem:[%s1 + $0x280] sm:$0xff]
    %v107 = vld [vmem:[%s1 + $0x288] sm:$0xff]
    %v108 = vld [vmem:[%s1 + $0x290] sm:$0xff]
    %v109 = vld [vmem:[%s1 + $0x298] sm:$0xff]
    %v110 = vld [vmem:[%s1 + $0x2a0] sm:$0xff]
    %v111 = vld [vmem:[%s1 + $0x2a8] sm:$0xff]
    %v112 = vld [vmem:[%s1 + $0x2b0] sm:$0xff]
    %v113 = vld [vmem:[%s1 + $0x2b8] sm:$0xff]
    %v114 = vld [vmem:[%s1 + $0x2c0] sm:$0xff]
    %v115 = vld [vmem:[%s1 + $0x2c8] sm:$0xff]
    %v116 = vld [vmem:[%s1 + $0x2d0] sm:$0xff]
    %v117 = vld [vmem:[%s1 + $0x2d8] sm:$0xff]
    %v118 = vld [vmem:[%s1 + $0x2e0] sm:$0xff]
    %v119 = vld [vmem:[%s1 + $0x2e8] sm:$0xff]
    %v120 = vld [vmem:[%s1 + $0x2f0] sm:$0xff]
    %v121 = vld [vmem:[%s1 + $0x2f8] sm:$0xff]
    %v122 = vld [vmem:[%s1 + $0x300] sm:$0xff]
    %v123 = vld [vmem:[%s1 + $0x308] sm:$0xff]
    %v124 = vld [vmem:[%s1 + $0x310] sm:$0xff]
    %v125 = vld [vmem:[%s1 + $0x318] sm:$0xff]
    %v126 = vld [vmem:[%s1 + $0x320] sm:$0xff]
    %v127 = vld [vmem:[%s1 + $0x328] sm:$0xff]
    %v128 = vld [vmem:[%s1 + $0x330] sm:$0xff]
    %v129 = vld [vmem:[%s1 + $0x338] sm:$0xff]
    %v130 = vld [vmem:[%s1 + $0x340] sm:$0xff]
    %v131 = vld [vmem:[%s1 + $0x348] sm:$0xff]
    %v132 = vld [vmem:[%s1 + $0x350] sm:$0xff]
    %v133 = vld [vmem:[%s1 + $0x358] sm:$0xff]
    %v134 = vld [vmem:[%s1 + $0x360] sm:$0xff]
    %v135 = vld [vmem:[%s1 + $0x368] sm:$0xff]
    %v136 = vld [vmem:[%s1 + $0x370] sm:$0xff]
    %v137 = vld [vmem:[%s1 + $0x378] sm:$0xff]
    %v138 = vld [vmem:[%s1 + $0x380] sm:$0xff]
    %v139 = vld [vmem:[%s1 + $0x388] sm:$0xff]
    %v140 = vld [vmem:[%s1 + $0x390] sm:$0xff]
    %v141 = vld [vmem:[%s1 + $0x398] sm:$0xff]
    %v142 = vld [vmem:[%s1 + $0x3a0] sm:$0xff]
    %v143 = vld [vmem:[%s1 + $0x3a8] sm:$0xff]
    %v144 = vld [vmem:[%s1 + $0x3b0] sm:$0xff]
    %v145 = vld [vmem:[%s1 + $0x3b8] sm:$0xff]
    %v146 = vld [vmem:[%s1 + $0x3c0] sm:$0xff]
    %v147 = vld [vmem:[%s1 + $0x3c8] sm:$0xff]
    %v148 = vld [vmem:[%s1 + $0x3d0] sm:$0xff]
    %v149 = vld [vmem:[%s1 + $0x3d8] sm:$0xff]
    %v150 = vld [vmem:[%s1 + $0x3e0] sm:$0xff]
    %v151 = vld [vmem:[%s1 + $0x3e8] sm:$0xff]
    %v152 = vld [vmem:[%s1 + $0x3f0] sm:$0xff]
    %v153 = vld [vmem:[%s1 + $0x3f8] sm:$0xff]
    %v154 = vld [vmem:[%s1 + $0x400] sm:$0xff]
    %v155 = vld [vmem:[%s1 + $0x408] sm:$0xff]
    %v156 = vld [vmem:[%s1 + $0x410] sm:$0xff]
    %v157 = vld [vmem:[%s1 + $0x418] sm:$0xff]
    %v158 = vld [vmem:[%s1 + $0x420] sm:$0xff]
    %v159 = vld [vmem:[%s1 + $0x428] sm:$0xff]
    %v160 = vld [vmem:[%s1 + $0x430] sm:$0xff]
    %v161 = vld [vmem:[%s1 + $0x438] sm:$0xff]
    %v162 = vld [vmem:[%s1 + $0x440] sm:$0xff]
    %v163 = vld [vmem:[%s1 + $0x448] sm:$0xff]
    %v164 = vld [vmem:[%s1 + $0x450] sm:$0xff]
    %v165 = vld [vmem:[%s1 + $0x458] sm:$0xff]
    %v166 = vld [vmem:[%s1 + $0x460] sm:$0xff]
    %v167 = vld [vmem:[%s1 + $0x468] sm:$0xff]
    %v168 = vld [vmem:[%s1 + $0x470] sm:$0xff]
    %v169 = vld [vmem:[%s1 + $0x478] sm:$0xff]
    %v170 = vld [vmem:[%s1 + $0x480] sm:$0xff]
    %v171 = vld [vmem:[%s1 + $0x488] sm:$0xff]
    %v172 = vld [vmem:[%s1 + $0x490] sm:$0xff]
    %v173 = vld [vmem:[%s1 + $0x498] sm:$0xff]
    %v174 = vld [vmem:[%s1 + $0x4a0] sm:$0xff]
    %v175 = vld [vmem:[%s1 + $0x4a8] sm:$0xff]
    %v176 = vld [vmem:[%s1 + $0x4b0] sm:$0xff]
    %v177 = vld [vmem:[%s1 + $0x4b8] sm:$0xff]
    %v178 = vld [vmem:[%s1 + $0x4c0] sm:$0xff]
    %v179 = vld [vmem:[%s1 + $0x4c8] sm:$0xff]
    %v180 = vld [vmem:[%s1 + $0x4d0] sm:$0xff]
    %v181 = vld [vmem:[%s1 + $0x4d8] sm:$0xff]
    %v182 = vld [vmem:[%s1 + $0x4e0] sm:$0xff]
    %v183 = vld [vmem:[%s1 + $0x4e8] sm:$0xff]
    %v184 = vld [vmem:[%s1 + $0x4f0] sm:$0xff]
    %v185 = vld [vmem:[%s1 + $0x4f8] sm:$0xff]
    %v186 = vld [vmem:[%s1 + $0x500] sm:$0xff]
    %v187 = vld [vmem:[%s1 + $0x508] sm:$0xff]
    %v188 = vld [vmem:[%s1 + $0x510] sm:$0xff]
    %v189 = vld [vmem:[%s1 + $0x518] sm:$0xff]
    %v190 = vld [vmem:[%s1 + $0x520] sm:$0xff]
    %v191 = vld [vmem:[%s1 + $0x528] sm:$0xff]
    %v192 = vld [vmem:[%s1 + $0x530] sm:$0xff]
    %v193 = vld [vmem:[%s1 + $0x538] sm:$0xff]
    %v194 = vld [vmem:[%s1 + $0x540] sm:$0xff]
    %v195 = vld [vmem:[%s1 + $0x548] sm:$0xff]
    %v196 = vld [vmem:[%s1 + $0x550] sm:$0xff]
    %v197 = vld [vmem:[%s1 + $0x558] sm:$0xff]
    %v198 = vld [vmem:[%s1 + $0x560] sm:$0xff]
    %v199 = vld [vmem:[%s1 + $0x568] sm:$0xff]
    %v200 = vld [vmem:[%s1 + $0x570] sm:$0xff]
    %v201 = vld [vmem:[%s1 + $0x578] sm:$0xff]
    %v202 = vld [vmem:[%s1 + $0x580] sm:$0xff]
    %v203 = vld [vmem:[%s1 + $0x588] sm:$0xff]
    %v204 = vld [vmem:[%s1 + $0x590] sm:$0xff]
    %v205 = vld [vmem:[%s1 + $0x598] sm:$0xff]
    %v206 = vld [vmem:[%s1 + $0x5a0] sm:$0xff]
    %v207 = vld [vmem:[%s1 + $0x5a8] sm:$0xff]
    %v208 = vld [vmem:[%s1 + $0x5b0] sm:$0xff]
    %v209 = vld [vmem:[%s1 + $0x5b8] sm:$0xff]
    %v210 = vld [vmem:[%s1 + $0x5c0] sm:$0xff]
    %v211 = vld [vmem:[%s1 + $0x5c8] sm:$0xff]
    %v212 = vld [vmem:[%s1 + $0x5d0] sm:$0xff]
    %v213 = vld [vmem:[%s1 + $0x5d8] sm:$0xff]
    %v214 = vld [vmem:[%s1 + $0x5e0] sm:$0xff]
    %v215 = vld [vmem:[%s1 + $0x5e8] sm:$0xff]
    %v216 = vld [vmem:[%s1 + $0x5f0] sm:$0xff]
    %v217 = vld [vmem:[%s1 + $0x5f8] sm:$0xff]
    %v218 = vld [vmem:[%s1 + $0x600] sm:$0xff]
    %v219 = vld [vmem:[%s1 + $0x608] sm:$0xff]
    %v220 = vld [vmem:[%s1 + $0x610] sm:$0xff]
    %v221 = vld [vmem:[%s1 + $0x618] sm:$0xff]
    %v222 = vld [vmem:[%s1 + $0x620] sm:$0xff]
    %v223 = vld [vmem:[%s1 + $0x628] sm:$0xff]
    %v224 = vld [vmem:[%s1 + $0x630] sm:$0xff]
    %v225 = vld [vmem:[%s1 + $0x638] sm:$0xff]
    %v226 = vld [vmem:[%s1 + $0x640] sm:$0xff]
    %v227 = vld [vmem:[%s1 + $0x648] sm:$0xff]
    %v228 = vld [vmem:[%s1 + $0x650] sm:$0xff]
    %v229 = vld [vmem:[%s1 + $0x658] sm:$0xff]
    %v230 = vld [vmem:[%s1 + $0x660] sm:$0xff]
    %v231 = vld [vmem:[%s1 + $0x668] sm:$0xff]
    %v232 = vld [vmem:[%s1 + $0x670] sm:$0xff]
    %v233 = vld [vmem:[%s1 + $0x678] sm:$0xff]
    %v234 = vld [vmem:[%s1 + $0x680] sm:$0xff]
    %v235 = vld [vmem:[%s1 + $0x688] sm:$0xff]
    %v236 = vld [vmem:[%s1 + $0x690] sm:$0xff]
    %v237 = vld [vmem:[%s1 + $0x698] sm:$0xff]
    %v238 = vld [vmem:[%s1 + $0x6a0] sm:$0xff]
    %v239 = vld [vmem:[%s1 + $0x6a8] sm:$0xff]
    %v240 = vld [vmem:[%s1 + $0x6b0] sm:$0xff]
    %v241 = vld [vmem:[%s1 + $0x6b8] sm:$0xff]
    %v242 = vld [vmem:[%s1 + $0x6c0] sm:$0xff]
    %v243 = vld [vmem:[%s1 + $0x6c8] sm:$0xff]
    %v244 = vld [vmem:[%s1 + $0x6d0] sm:$0xff]
    %v245 = vld [vmem:[%s1 + $0x6d8] sm:$0xff]
    %v246 = vld [vmem:[%s1 + $0x6e0] sm:$0xff]
    %v247 = vld [vmem:[%s1 + $0x6e8] sm:$0xff]
    %v248 = vld [vmem:[%s1 + $0x6f0] sm:$0xff]
    %v249 = vld [vmem:[%s1 + $0x6f8] sm:$0xff]
    %v250 = vld [vmem:[%s1 + $0x700] sm:$0xff]
    %v251 = vld [vmem:[%s1 + $0x708] sm:$0xff]
    %v252 = vld [vmem:[%s1 + $0x710] sm:$0xff]
    %v253 = vld [vmem:[%s1 + $0x718] sm:$0xff]
    %v254 = vld [vmem:[%s1 + $0x720] sm:$0xff]
    %v255 = vld [vmem:[%s1 + $0x728] sm:$0xff]
    %v256 = vld [vmem:[%s1 + $0x730] sm:$0xff]
    %v257 = vld [vmem:[%s1 + $0x738] sm:$0xff]
    %v258 = vld [vmem:[%s1 + $0x740] sm:$0xff]
    %v259 = vld [vmem:[%s1 + $0x748] sm:$0xff]
    %v260 = vld [vmem:[%s1 + $0x750] sm:$0xff]
    %v261 = vld [vmem:[%s1 + $0x758] sm:$0xff]
    %v262 = vld [vmem:[%s1 + $0x760] sm:$0xff]
    %v263 = vld [vmem:[%s1 + $0x768] sm:$0xff]
    %v264 = vld [vmem:[%s1 + $0x770] sm:$0xff]
    %v265 = vld [vmem:[%s1 + $0x778] sm:$0xff]
    %v266 = vld [vmem:[%s1 + $0x780] sm:$0xff]
    %v267 = vld [vmem:[%s1 + $0x788] sm:$0xff]
    %v268 = vld [vmem:[%s1 + $0x790] sm:$0xff]
    %v269 = vld [vmem:[%s1 + $0x798] sm:$0xff]
    %v270 = vld [vmem:[%s1 + $0x7a0] sm:$0xff]
    %v271 = vld [vmem:[%s1 + $0x7a8] sm:$0xff]
    %v272 = vld [vmem:[%s1 + $0x7b0] sm:$0xff]
    %v273 = vld [vmem:[%s1 + $0x7b8] sm:$0xff]
    %v274 = vld [vmem:[%s1 + $0x7c0] sm:$0xff]
    %v275 = vld [vmem:[%s1 + $0x7c8] sm:$0xff]
    %v276 = vld [vmem:[%s1 + $0x7d0] sm:$0xff]
    %v277 = vld [vmem:[%s1 + $0x7d8] sm:$0xff]
    %v278 = vld [vmem:[%s1 + $0x7e0] sm:$0xff]
    %v279 = vld [vmem:[%s1 + $0x7e8] sm:$0xff]
    %v280 = vld [vmem:[%s1 + $0x7f0] sm:$0xff]
    %v281 = vld [vmem:[%s1 + $0x7f8] sm:$0xff]
    %v282 = vld [vmem:[%s1 + $0x800] sm:$0xff]
    %v283 = vld [vmem:[%s1 + $0x808] sm:$0xff]
    %v284 = vld [vmem:[%s1 + $0x810] sm:$0xff]
    %v285 = vld [vmem:[%s1 + $0x818] sm:$0xff]
    %v286 = vld [vmem:[%s1 + $0x820] sm:$0xff]
    %v287 = vld [vmem:[%s1 + $0x828] sm:$0xff]
    %v288 = vld [vmem:[%s1 + $0x830] sm:$0xff]
    %v289 = vld [vmem:[%s1 + $0x838] sm:$0xff]
    %v290 = vld [vmem:[%s1 + $0x840] sm:$0xff]
    %v291 = vld [vmem:[%s1 + $0x848] sm:$0xff]
    %v292 = vld [vmem:[%s1 + $0x850] sm:$0xff]
    %v293 = vld [vmem:[%s1 + $0x858] sm:$0xff]
    %v294 = vld [vmem:[%s1 + $0x860] sm:$0xff]
    %v295 = vld [vmem:[%s1 + $0x868] sm:$0xff]
    %v296 = vld [vmem:[%s1 + $0x870] sm:$0xff]
    %v297 = vld [vmem:[%s1 + $0x878] sm:$0xff]
    %v298 = vld [vmem:[%s1 + $0x880] sm:$0xff]
    %v299 = vld [vmem:[%s1 + $0x888] sm:$0xff]
    %v300 = vld [vmem:[%s1 + $0x890] sm:$0xff]
    %v301 = vld [vmem:[%s1 + $0x898] sm:$0xff]
    %v302 = vld [vmem:[%s1 + $0x8a0] sm:$0xff]
    %v303 = vld [vmem:[%s1 + $0x8a8] sm:$0xff]
    %v304 = vld [vmem:[%s1 + $0x8b0] sm:$0xff]
    %v305 = vld [vmem:[%s1 + $0x8b8] sm:$0xff]
    %v306 = vld [vmem:[%s1 + $0x8c0] sm:$0xff]
    %v307 = vld [vmem:[%s1 + $0x8c8] sm:$0xff]
    %v308 = vld [vmem:[%s1 + $0x8d0] sm:$0xff]
    %v309 = vld [vmem:[%s1 + $0x8d8] sm:$0xff]
    %v310 = vld [vmem:[%s1 + $0x8e0] sm:$0xff]
    %v311 = vld [vmem:[%s1 + $0x8e8] sm:$0xff]
    %v312 = vld [vmem:[%s1 + $0x8f0] sm:$0xff]
    %v313 = vld [vmem:[%s1 + $0x8f8] sm:$0xff]
    %v314 = vld [vmem:[%s1 + $0x900] sm:$0xff]
    %v315 = vld [vmem:[%s1 + $0x908] sm:$0xff]
    %v316 = vld [vmem:[%s1 + $0x910] sm:$0xff]
    %v317 = vld [vmem:[%s1 + $0x918] sm:$0xff]
    %v318 = vld [vmem:[%s1 + $0x920] sm:$0xff]
    %v319 = vld [vmem:[%s1 + $0x928] sm:$0xff]
    %v320 = vld [vmem:[%s1 + $0x930] sm:$0xff]
    %v321 = vld [vmem:[%s1 + $0x938] sm:$0xff]
    %v322 = vld [vmem:[%s1 + $0x940] sm:$0xff]
    %v323 = vld [vmem:[%s1 + $0x948] sm:$0xff]
    %v324 = vld [vmem:[%s1 + $0x950] sm:$0xff]
    %v325 = vld [vmem:[%s1 + $0x958] sm:$0xff]
    %v326 = vld [vmem:[%s1 + $0x960] sm:$0xff]
    %v327 = vld [vmem:[%s1 + $0x968] sm:$0xff]
    %v328 = vld [vmem:[%s1 + $0x970] sm:$0xff]
    %v329 = vld [vmem:[%s1 + $0x978] sm:$0xff]
    %v330 = vld [vmem:[%s1 + $0x980] sm:$0xff]
    %v331 = vld [vmem:[%s1 + $0x988] sm:$0xff]
    %v332 = vld [vmem:[%s1 + $0x990] sm:$0xff]
    %v333 = vld [vmem:[%s1 + $0x998] sm:$0xff]
    %v334 = vld [vmem:[%s1 + $0x9a0] sm:$0xff]
    %v335 = vld [vmem:[%s1 + $0x9a8] sm:$0xff]
    %v336 = vld [vmem:[%s1 + $0x9b0] sm:$0xff]
    %v337 = vld [vmem:[%s1 + $0x9b8] sm:$0xff]
    %v338 = vld [vmem:[%s1 + $0x9c0] sm:$0xff]
    %v339 = vld [vmem:[%s1 + $0x9c8] sm:$0xff]
    %v340 = vld [vmem:[%s1 + $0x9d0] sm:$0xff]
    %v341 = vld [vmem:[%s1 + $0x9d8] sm:$0xff]
    %v342 = vld [vmem:[%s1 + $0x9e0] sm:$0xff]
    %v343 = vld [vmem:[%s1 + $0x9e8] sm:$0xff]
    %v344 = vld [vmem:[%s1 + $0x9f0] sm:$0xff]
    %v345 = vld [vmem:[%s1 + $0x9f8] sm:$0xff]
    %v346 = vld [vmem:[%s1 + $0xa00] sm:$0xff]
    %v347 = vld [vmem:[%s1 + $0xa08] sm:$0xff]
    %v348 = vld [vmem:[%s1 + $0xa10] sm:$0xff]
    %v349 = vld [vmem:[%s1 + $0xa18] sm:$0xff]
    %v350 = vld [vmem:[%s1 + $0xa20] sm:$0xff]
    %v351 = vld [vmem:[%s1 + $0xa28] sm:$0xff]
    %v352 = vld [vmem:[%s1 + $0xa30] sm:$0xff]
    %v353 = vld [vmem:[%s1 + $0xa38] sm:$0xff]
    %v354 = vld [vmem:[%s1 + $0xa40] sm:$0xff]
    %v355 = vld [vmem:[%s1 + $0xa48] sm:$0xff]
    %v356 = vld [vmem:[%s1 + $0xa50] sm:$0xff]
    %v357 = vld [vmem:[%s1 + $0xa58] sm:$0xff]
    %v358 = vld [vmem:[%s1 + $0xa60] sm:$0xff]
    %v359 = vld [vmem:[%s1 + $0xa68] sm:$0xff]
    %v360 = vld [vmem:[%s1 + $0xa70] sm:$0xff]
    %v361 = vld [vmem:[%s1 + $0xa78] sm:$0xff]
    %v362 = vld [vmem:[%s1 + $0xa80] sm:$0xff]
    %v363 = vld [vmem:[%s1 + $0xa88] sm:$0xff]
    %v364 = vld [vmem:[%s1 + $0xa90] sm:$0xff]
    %v365 = vld [vmem:[%s1 + $0xa98] sm:$0xff]
    %v366 = vld [vmem:[%s1 + $0xaa0] sm:$0xff]
    %v367 = vld [vmem:[%s1 + $0xaa8] sm:$0xff]
    %v368 = vld [vmem:[%s1 + $0xab0] sm:$0xff]
    %v369 = vld [vmem:[%s1 + $0xab8] sm:$0xff]
    %v370 = vld [vmem:[%s1 + $0xac0] sm:$0xff]
    %v371 = vld [vmem:[%s1 + $0xac8] sm:$0xff]
    %v372 = vld [vmem:[%s1 + $0xad0] sm:$0xff]
    %v373 = vld [vmem:[%s1 + $0xad8] sm:$0xff]
    %v374 = vld [vmem:[%s1 + $0xae0] sm:$0xff]
    %v375 = vld [vmem:[%s1 + $0xae8] sm:$0xff]
    %v376 = vld [vmem:[%s1 + $0xaf0] sm:$0xff]
    %v377 = vld [vmem:[%s1 + $0xaf8] sm:$0xff]
    %v378 = vld [vmem:[%s1 + $0xb00] sm:$0xff]
    %v379 = vld [vmem:[%s1 + $0xb08] sm:$0xff]
    %v380 = vld [vmem:[%s1 + $0xb10] sm:$0xff]
    %v381 = vld [vmem:[%s1 + $0xb18] sm:$0xff]
    %v382 = vld [vmem:[%s1 + $0xb20] sm:$0xff]
    %v383 = vld [vmem:[%s1 + $0xb28] sm:$0xff]
    %v384 = vld [vmem:[%s1 + $0xb30] sm:$0xff]
    %v385 = vld [vmem:[%s1 + $0xb38] sm:$0xff]
    %v386 = vld [vmem:[%s1 + $0xb40] sm:$0xff]
    %v387 = vld [vmem:[%s1 + $0xb48] sm:$0xff]
    %v388 = vld [vmem:[%s1 + $0xb50] sm:$0xff]
    %v389 = vld [vmem:[%s1 + $0xb58] sm:$0xff]
    %v390 = vld [vmem:[%s1 + $0xb60] sm:$0xff]
    %v391 = vld [vmem:[%s1 + $0xb68] sm:$0xff]
    %v392 = vld [vmem:[%s1 + $0xb70] sm:$0xff]
    %v393 = vld [vmem:[%s1 + $0xb78] sm:$0xff]
    %v394 = vld [vmem:[%s1 + $0xb80] sm:$0xff]
    %v395 = vld [vmem:[%s1 + $0xb88] sm:$0xff]
    %v396 = vld [vmem:[%s1 + $0xb90] sm:$0xff]
    %v397 = vld [vmem:[%s1 + $0xb98] sm:$0xff]
    %v398 = vld [vmem:[%s1 + $0xba0] sm:$0xff]
    %v399 = vld [vmem:[%s1 + $0xba8] sm:$0xff]
    %v400 = vld [vmem:[%s1 + $0xbb0] sm:$0xff]
    %v401 = vld [vmem:[%s1 + $0xbb8] sm:$0xff]
    %v402 = vld [vmem:[%s1 + $0xbc0] sm:$0xff]
    %v403 = vld [vmem:[%s1 + $0xbc8] sm:$0xff]
    %v404 = vld [vmem:[%s1 + $0xbd0] sm:$0xff]
    %v405 = vld [vmem:[%s1 + $0xbd8] sm:$0xff]
    %v406 = vld [vmem:[%s1 + $0xbe0] sm:$0xff]
    %v407 = vld [vmem:[%s1 + $0xbe8] sm:$0xff]
    %v408 = vld [vmem:[%s1 + $0xbf0] sm:$0xff]
    %v409 = vld [vmem:[%s1 + $0xbf8] sm:$0xff]
    %v410 = vld [vmem:[%s1 + $0xc00] sm:$0xff]
    %v411 = vld [vmem:[%s1 + $0xc08] sm:$0xff]
    %v412 = vld [vmem:[%s1 + $0xc10] sm:$0xff]
    %v413 = vld [vmem:[%s1 + $0xc18] sm:$0xff]
    %v414 = vld [vmem:[%s1 + $0xc20] sm:$0xff]
    %v415 = vld [vmem:[%s1 + $0xc28] sm:$0xff]
    %v416 = vld [vmem:[%s1 + $0xc30] sm:$0xff]
    %v417 = vld [vmem:[%s1 + $0xc38] sm:$0xff]
    %v418 = vld [vmem:[%s1 + $0xc40] sm:$0xff]
    %v419 = vld [vmem:[%s1 + $0xc48] sm:$0xff]
    %v420 = vld [vmem:[%s1 + $0xc50] sm:$0xff]
    %v421 = vld [vmem:[%s1 + $0xc58] sm:$0xff]
    %v422 = vld [vmem:[%s1 + $0xc60] sm:$0xff]
    %v423 = vld [vmem:[%s1 + $0xc68] sm:$0xff]
    %v424 = vld [vmem:[%s1 + $0xc70] sm:$0xff]
    %v425 = vld [vmem:[%s1 + $0xc78] sm:$0xff]
    %v426 = vld [vmem:[%s1 + $0xc80] sm:$0xff]
    %v427 = vld [vmem:[%s1 + $0xc88] sm:$0xff]
    %v428 = vld [vmem:[%s1 + $0xc90] sm:$0xff]
    %v429 = vld [vmem:[%s1 + $0xc98] sm:$0xff]
    %v430 = vld [vmem:[%s1 + $0xca0] sm:$0xff]
    %v431 = vld [vmem:[%s1 + $0xca8] sm:$0xff]
    %v432 = vld [vmem:[%s1 + $0xcb0] sm:$0xff]
    %v433 = vld [vmem:[%s1 + $0xcb8] sm:$0xff]
    %v434 = vld [vmem:[%s1 + $0xcc0] sm:$0xff]
    %v435 = vld [vmem:[%s1 + $0xcc8] sm:$0xff]
    %v436 = vld [vmem:[%s1 + $0xcd0] sm:$0xff]
    %v437 = vld [vmem:[%s1 + $0xcd8] sm:$0xff]
    %v438 = vld [vmem:[%s1 + $0xce0] sm:$0xff]
    %v439 = vld [vmem:[%s1 + $0xce8] sm:$0xff]
    %v440 = vld [vmem:[%s1 + $0xcf0] sm:$0xff]
    %v441 = vld [vmem:[%s1 + $0xcf8] sm:$0xff]
    %v442 = vld [vmem:[%s1 + $0xd00] sm:$0xff]
    %v443 = vld [vmem:[%s1 + $0xd08] sm:$0xff]
    %v444 = vld [vmem:[%s1 + $0xd10] sm:$0xff]
    %v445 = vld [vmem:[%s1 + $0xd18] sm:$0xff]
    %v446 = vld [vmem:[%s1 + $0xd20] sm:$0xff]
    %v447 = vld [vmem:[%s1 + $0xd28] sm:$0xff]
    %v448 = vld [vmem:[%s1 + $0xd30] sm:$0xff]
    %v449 = vld [vmem:[%s1 + $0xd38] sm:$0xff]
    %v450 = vld [vmem:[%s1 + $0xd40] sm:$0xff]
    %v451 = vld [vmem:[%s1 + $0xd48] sm:$0xff]
    %v452 = vld [vmem:[%s1 + $0xd50] sm:$0xff]
    %v453 = vld [vmem:[%s1 + $0xd58] sm:$0xff]
    %v454 = vld [vmem:[%s1 + $0xd60] sm:$0xff]
    %v455 = vld [vmem:[%s1 + $0xd68] sm:$0xff]
    %v456 = vld [vmem:[%s1 + $0xd70] sm:$0xff]
    %v457 = vld [vmem:[%s1 + $0xd78] sm:$0xff]
    %v458 = vld [vmem:[%s1 + $0xd80] sm:$0xff]
    %v459 = vld [vmem:[%s1 + $0xd88] sm:$0xff]
    %v460 = vld [vmem:[%s1 + $0xd90] sm:$0xff]
    %v461 = vld [vmem:[%s1 + $0xd98] sm:$0xff]
    %v462 = vld [vmem:[%s1 + $0xda0] sm:$0xff]
    %v463 = vld [vmem:[%s1 + $0xda8] sm:$0xff]
    %v464 = vld [vmem:[%s1 + $0xdb0] sm:$0xff]
    %v465 = vld [vmem:[%s1 + $0xdb8] sm:$0xff]
    %v466 = vld [vmem:[%s1 + $0xdc0] sm:$0xff]
    %v467 = vld [vmem:[%s1 + $0xdc8] sm:$0xff]
    %v468 = vld [vmem:[%s1 + $0xdd0] sm:$0xff]
    %v469 = vld [vmem:[%s1 + $0xdd8] sm:$0xff]
    %v470 = vld [vmem:[%s1 + $0xde0] sm:$0xff]
    %v471 = vld [vmem:[%s1 + $0xde8] sm:$0xff]
    %v472 = vld [vmem:[%s1 + $0xdf0] sm:$0xff]
    %v473 = vld [vmem:[%s1 + $0xdf8] sm:$0xff]
    %v474 = vld [vmem:[%s1 + $0xe00] sm:$0xff]
    %v475 = vld [vmem:[%s1 + $0xe08] sm:$0xff]
    %v476 = vld [vmem:[%s1 + $0xe10] sm:$0xff]
    %v477 = vld [vmem:[%s1 + $0xe18] sm:$0xff]
    %v478 = vld [vmem:[%s1 + $0xe20] sm:$0xff]
    %v479 = vld [vmem:[%s1 + $0xe28] sm:$0xff]
    %v480 = vld [vmem:[%s1 + $0xe30] sm:$0xff]
    %v481 = vld [vmem:[%s1 + $0xe38] sm:$0xff]
    %v482 = vld [vmem:[%s1 + $0xe40] sm:$0xff]
    %v483 = vld [vmem:[%s1 + $0xe48] sm:$0xff]
    %v484 = vld [vmem:[%s1 + $0xe50] sm:$0xff]
    %v485 = vld [vmem:[%s1 + $0xe58] sm:$0xff]
    %v486 = vld [vmem:[%s1 + $0xe60] sm:$0xff]
    %v487 = vld [vmem:[%s1 + $0xe68] sm:$0xff]
    %v488 = vld [vmem:[%s1 + $0xe70] sm:$0xff]
    %v489 = vld [vmem:[%s1 + $0xe78] sm:$0xff]
    %v490 = vld [vmem:[%s1 + $0xe80] sm:$0xff]
    %v491 = vld [vmem:[%s1 + $0xe88] sm:$0xff]
    %v492 = vld [vmem:[%s1 + $0xe90] sm:$0xff]
    %v493 = vld [vmem:[%s1 + $0xe98] sm:$0xff]
    %v494 = vld [vmem:[%s1 + $0xea0] sm:$0xff]
    %v495 = vld [vmem:[%s1 + $0xea8] sm:$0xff]
    %v496 = vld [vmem:[%s1 + $0xeb0] sm:$0xff]
    %v497 = vld [vmem:[%s1 + $0xeb8] sm:$0xff]
    %v498 = vld [vmem:[%s1 + $0xec0] sm:$0xff]
    %v499 = vld [vmem:[%s1 + $0xec8] sm:$0xff]
    %v500 = vld [vmem:[%s1 + $0xed0] sm:$0xff]
    %v501 = vld [vmem:[%s1 + $0xed8] sm:$0xff]
    %v502 = vld [vmem:[%s1 + $0xee0] sm:$0xff]
    %v503 = vld [vmem:[%s1 + $0xee8] sm:$0xff]
    %v504 = vld [vmem:[%s1 + $0xef0] sm:$0xff]
    %v505 = vld [vmem:[%s1 + $0xef8] sm:$0xff]
    %v506 = vld [vmem:[%s1 + $0xf00] sm:$0xff]
    %v507 = vld [vmem:[%s1 + $0xf08] sm:$0xff]
    %v508 = vld [vmem:[%s1 + $0xf10] sm:$0xff]
    %v509 = vld [vmem:[%s1 + $0xf18] sm:$0xff]
    %v510 = vld [vmem:[%s1 + $0xf20] sm:$0xff]
    %v511 = vld [vmem:[%s1 + $0xf28] sm:$0xff]
    %v512 = vld [vmem:[%s1 + $0xf30] sm:$0xff]
    %v513 = vld [vmem:[%s1 + $0xf38] sm:$0xff]
    %v514 = vld [vmem:[%s1 + $0xf40] sm:$0xff]
    %v515 = vld [vmem:[%s1 + $0xf48] sm:$0xff]
    %v516 = vld [vmem:[%s1 + $0xf50] sm:$0xff]
    %v517 = vld [vmem:[%s1 + $0xf58] sm:$0xff]
    %v518 = vld [vmem:[%s1 + $0xf60] sm:$0xff]
    %v519 = vld [vmem:[%s1 + $0xf68] sm:$0xff]
    %v520 = vld [vmem:[%s1 + $0xf70] sm:$0xff]
    %v521 = vld [vmem:[%s1 + $0xf78] sm:$0xff]
    %v522 = vld [vmem:[%s1 + $0xf80] sm:$0xff]
    %v523 = vld [vmem:[%s1 + $0xf88] sm:$0xff]
    %v524 = vld [vmem:[%s1 + $0xf90] sm:$0xff]
    %v525 = vld [vmem:[%s1 + $0xf98] sm:$0xff]
    %v526 = vld [vmem:[%s1 + $0xfa0] sm:$0xff]
    %v527 = vld [vmem:[%s1 + $0xfa8] sm:$0xff]
    %v528 = vld [vmem:[%s1 + $0xfb0] sm:$0xff]
    %v529 = vld [vmem:[%s1 + $0xfb8] sm:$0xff]
    %v530 = vld [vmem:[%s1 + $0xfc0] sm:$0xff]
    %v531 = vld [vmem:[%s1 + $0xfc8] sm:$0xff]
    %v532 = vld [vmem:[%s1 + $0xfd0] sm:$0xff]
    %v533 = vld [vmem:[%s1 + $0xfd8] sm:$0xff]
    %v534 = vld [vmem:[%s1 + $0xfe0] sm:$0xff]
    %v535 = vld [vmem:[%s1 + $0xfe8] sm:$0xff]
    %v536 = vld [vmem:[%s1 + $0xff0] sm:$0xff]
    %v537 = vld [vmem:[%s1 + $0xff8] sm:$0xff]
    %v538 = vld [vmem:[%s2] sm:$0x3]
    %v540 = vlaneseq
    %v541 = vshrl.u32 %v540, 7
    %v542 = vsub.s32 0, %v541
    %v543 = vrot.slane %v538, %v542
    %v544 = vlaneseq
    %v545 = vshrl.u32 %v544, 7
    %v546 = vsub.s32 1, %v545
    %v547 = vrot.slane %v538, %v546
    %v554 = vcombine.high %v22, %v22
    %v556 = vunpack.c.l.s4 1966171168
    %v557 = vunpack.c.0.s8 %v556
    %v558 = vlaneseq
    %v559 = vshrl.u32 %v558, 7
    %v560 = vsub.s32 %v557, %v559
    %v561 = vrot.slane %v22, %v560
    %v563 = vunpack.c.l.s4 1966171168
    %v564 = vunpack.c.0.s8 %v563
    %v565 = vlaneseq
    %v566 = vshrl.u32 %v565, 7
    %v567 = vsub.s32 %v564, %v566
    %v568 = vrot.slane %v554, %v567
    %v569 = vcombine.high %v561, %v561
    %v570 = vcombine.high %v568, %v568
    %v572 = vunpack.c.l.s4 1966171168
    %v573 = vunpack.c.0.s8 %v572
    %v574 = vlaneseq
    %v575 = vshrl.u32 %v574, 7
    %v576 = vsub.s32 %v573, %v575
    %v577 = vrot.slane %v561, %v576
    %v579 = vunpack.c.l.s4 1966171168
    %v580 = vunpack.c.0.s8 %v579
    %v581 = vlaneseq
    %v582 = vshrl.u32 %v581, 7
    %v583 = vsub.s32 %v580, %v582
    %v584 = vrot.slane %v568, %v583
    %v586 = vunpack.c.l.s4 1966171168
    %v587 = vunpack.c.0.s8 %v586
    %v588 = vlaneseq
    %v589 = vshrl.u32 %v588, 7
    %v590 = vsub.s32 %v587, %v589
    %v591 = vrot.slane %v569, %v590
    %v593 = vunpack.c.l.s4 1966171168
    %v594 = vunpack.c.0.s8 %v593
    %v595 = vlaneseq
    %v596 = vshrl.u32 %v595, 7
    %v597 = vsub.s32 %v594, %v596
    %v598 = vrot.slane %v570, %v597
    %v599 = vcombine.high %v577, %v577
    %v600 = vcombine.high %v584, %v584
    %v601 = vcombine.high %v591, %v591
    %v602 = vcombine.high %v598, %v598
    %v603 = vcombine.high %v23, %v23
    %v605 = vunpack.c.l.s4 1966171168
    %v606 = vunpack.c.0.s8 %v605
    %v607 = vlaneseq
    %v608 = vshrl.u32 %v607, 7
    %v609 = vsub.s32 %v606, %v608
    %v610 = vrot.slane %v23, %v609
    %v612 = vunpack.c.l.s4 1966171168
    %v613 = vunpack.c.0.s8 %v612
    %v614 = vlaneseq
    %v615 = vshrl.u32 %v614, 7
    %v616 = vsub.s32 %v613, %v615
    %v617 = vrot.slane %v603, %v616
    %v618 = vcombine.high %v610, %v610
    %v619 = vcombine.high %v617, %v617
    %v621 = vunpack.c.l.s4 1966171168
    %v622 = vunpack.c.0.s8 %v621
    %v623 = vlaneseq
    %v624 = vshrl.u32 %v623, 7
    %v625 = vsub.s32 %v622, %v624
    %v626 = vrot.slane %v610, %v625
    %v628 = vunpack.c.l.s4 1966171168
    %v629 = vunpack.c.0.s8 %v628
    %v630 = vlaneseq
    %v631 = vshrl.u32 %v630, 7
    %v632 = vsub.s32 %v629, %v631
    %v633 = vrot.slane %v617, %v632
    %v635 = vunpack.c.l.s4 1966171168
    %v636 = vunpack.c.0.s8 %v635
    %v637 = vlaneseq
    %v638 = vshrl.u32 %v637, 7
    %v639 = vsub.s32 %v636, %v638
    %v640 = vrot.slane %v618, %v639
    %v642 = vunpack.c.l.s4 1966171168
    %v643 = vunpack.c.0.s8 %v642
    %v644 = vlaneseq
    %v645 = vshrl.u32 %v644, 7
    %v646 = vsub.s32 %v643, %v645
    %v647 = vrot.slane %v619, %v646
    %v648 = vcombine.high %v626, %v626
    %v649 = vcombine.high %v633, %v633
    %v650 = vcombine.high %v640, %v640
    %v651 = vcombine.high %v647, %v647
    %v652 = vcombine.high %v24, %v24
    %v654 = vunpack.c.l.s4 1966171168
    %v655 = vunpack.c.0.s8 %v654
    %v656 = vlaneseq
    %v657 = vshrl.u32 %v656, 7
    %v658 = vsub.s32 %v655, %v657
    %v659 = vrot.slane %v24, %v658
    %v661 = vunpack.c.l.s4 1966171168
    %v662 = vunpack.c.0.s8 %v661
    %v663 = vlaneseq
    %v664 = vshrl.u32 %v663, 7
    %v665 = vsub.s32 %v662, %v664
    %v666 = vrot.slane %v652, %v665
    %v667 = vcombine.high %v659, %v659
    %v668 = vcombine.high %v666, %v666
    %v670 = vunpack.c.l.s4 1966171168
    %v671 = vunpack.c.0.s8 %v670
    %v672 = vlaneseq
    %v673 = vshrl.u32 %v672, 7
    %v674 = vsub.s32 %v671, %v673
    %v675 = vrot.slane %v659, %v674
    %v677 = vunpack.c.l.s4 1966171168
    %v678 = vunpack.c.0.s8 %v677
    %v679 = vlaneseq
    %v680 = vshrl.u32 %v679, 7
    %v681 = vsub.s32 %v678, %v680
    %v682 = vrot.slane %v666, %v681
    %v684 = vunpack.c.l.s4 1966171168
    %v685 = vunpack.c.0.s8 %v684
    %v686 = vlaneseq
    %v687 = vshrl.u32 %v686, 7
    %v688 = vsub.s32 %v685, %v687
    %v689 = vrot.slane %v667, %v688
    %v691 = vunpack.c.l.s4 1966171168
    %v692 = vunpack.c.0.s8 %v691
    %v693 = vlaneseq
    %v694 = vshrl.u32 %v693, 7
    %v695 = vsub.s32 %v692, %v694
    %v696 = vrot.slane %v668, %v695
    %v697 = vcombine.high %v675, %v675
    %v698 = vcombine.high %v682, %v682
    %v699 = vcombine.high %v689, %v689
    %v700 = vcombine.high %v696, %v696
    %v701 = vcombine.high %v25, %v25
    %v703 = vunpack.c.l.s4 1966171168
    %v704 = vunpack.c.0.s8 %v703
    %v705 = vlaneseq
    %v706 = vshrl.u32 %v705, 7
    %v707 = vsub.s32 %v704, %v706
    %v708 = vrot.slane %v25, %v707
    %v710 = vunpack.c.l.s4 1966171168
    %v711 = vunpack.c.0.s8 %v710
    %v712 = vlaneseq
    %v713 = vshrl.u32 %v712, 7
    %v714 = vsub.s32 %v711, %v713
    %v715 = vrot.slane %v701, %v714
    %v716 = vcombine.high %v708, %v708
    %v717 = vcombine.high %v715, %v715
    %v719 = vunpack.c.l.s4 1966171168
    %v720 = vunpack.c.0.s8 %v719
    %v721 = vlaneseq
    %v722 = vshrl.u32 %v721, 7
    %v723 = vsub.s32 %v720, %v722
    %v724 = vrot.slane %v708, %v723
    %v726 = vunpack.c.l.s4 1966171168
    %v727 = vunpack.c.0.s8 %v726
    %v728 = vlaneseq
    %v729 = vshrl.u32 %v728, 7
    %v730 = vsub.s32 %v727, %v729
    %v731 = vrot.slane %v715, %v730
    %v733 = vunpack.c.l.s4 1966171168
    %v734 = vunpack.c.0.s8 %v733
    %v735 = vlaneseq
    %v736 = vshrl.u32 %v735, 7
    %v737 = vsub.s32 %v734, %v736
    %v738 = vrot.slane %v716, %v737
    %v740 = vunpack.c.l.s4 1966171168
    %v741 = vunpack.c.0.s8 %v740
    %v742 = vlaneseq
    %v743 = vshrl.u32 %v742, 7
    %v744 = vsub.s32 %v741, %v743
    %v745 = vrot.slane %v717, %v744
    %v746 = vcombine.high %v724, %v724
    %v747 = vcombine.high %v731, %v731
    %v748 = vcombine.high %v738, %v738
    %v749 = vcombine.high %v745, %v745
    %v1294 = vunpack.c.l.b16 %v26
    %v1295 = vunpack.c.h.b16 %v26
    %v1296 = vunpack.c.l.b16 %v27
    %v1297 = vunpack.c.h.b16 %v27
    %v1298 = vunpack.c.l.b16 %v28
    %v1299 = vunpack.c.h.b16 %v28
    %v1300 = vunpack.c.l.b16 %v29
    %v1301 = vunpack.c.h.b16 %v29
    %v1302 = vunpack.c.l.b16 %v30
    %v1303 = vunpack.c.h.b16 %v30
    %v1304 = vunpack.c.l.b16 %v31
    %v1305 = vunpack.c.h.b16 %v31
    %v1306 = vunpack.c.l.b16 %v32
    %v1307 = vunpack.c.h.b16 %v32
    %v1308 = vunpack.c.l.b16 %v33
    %v1309 = vunpack.c.h.b16 %v33
    %v1310 = vunpack.c.l.b16 %v34
    %v1311 = vunpack.c.h.b16 %v34
    %v1312 = vunpack.c.l.b16 %v35
    %v1313 = vunpack.c.h.b16 %v35
    %v1314 = vunpack.c.l.b16 %v36
    %v1315 = vunpack.c.h.b16 %v36
    %v1316 = vunpack.c.l.b16 %v37
    %v1317 = vunpack.c.h.b16 %v37
    %v1318 = vunpack.c.l.b16 %v38
    %v1319 = vunpack.c.h.b16 %v38
    %v1320 = vunpack.c.l.b16 %v39
    %v1321 = vunpack.c.h.b16 %v39
    %v1322 = vunpack.c.l.b16 %v40
    %v1323 = vunpack.c.h.b16 %v40
    %v1324 = vunpack.c.l.b16 %v41
    %v1325 = vunpack.c.h.b16 %v41
    %v1326 = vunpack.c.l.b16 %v42
    %v1327 = vunpack.c.h.b16 %v42
    %v1328 = vunpack.c.l.b16 %v43
    %v1329 = vunpack.c.h.b16 %v43
    %v1330 = vunpack.c.l.b16 %v44
    %v1331 = vunpack.c.h.b16 %v44
    %v1332 = vunpack.c.l.b16 %v45
    %v1333 = vunpack.c.h.b16 %v45
    %v1334 = vunpack.c.l.b16 %v46
    %v1335 = vunpack.c.h.b16 %v46
    %v1336 = vunpack.c.l.b16 %v47
    %v1337 = vunpack.c.h.b16 %v47
    %v1338 = vunpack.c.l.b16 %v48
    %v1339 = vunpack.c.h.b16 %v48
    %v1340 = vunpack.c.l.b16 %v49
    %v1341 = vunpack.c.h.b16 %v49
    %v1342 = vunpack.c.l.b16 %v50
    %v1343 = vunpack.c.h.b16 %v50
    %v1344 = vunpack.c.l.b16 %v51
    %v1345 = vunpack.c.h.b16 %v51
    %v1346 = vunpack.c.l.b16 %v52
    %v1347 = vunpack.c.h.b16 %v52
    %v1348 = vunpack.c.l.b16 %v53
    %v1349 = vunpack.c.h.b16 %v53
    %v1350 = vunpack.c.l.b16 %v54
    %v1351 = vunpack.c.h.b16 %v54
    %v1352 = vunpack.c.l.b16 %v55
    %v1353 = vunpack.c.h.b16 %v55
    %v1354 = vunpack.c.l.b16 %v56
    %v1355 = vunpack.c.h.b16 %v56
    %v1356 = vunpack.c.l.b16 %v57
    %v1357 = vunpack.c.h.b16 %v57
    %v1358 = vunpack.c.l.b16 %v58
    %v1359 = vunpack.c.h.b16 %v58
    %v1360 = vunpack.c.l.b16 %v59
    %v1361 = vunpack.c.h.b16 %v59
    %v1362 = vunpack.c.l.b16 %v60
    %v1363 = vunpack.c.h.b16 %v60
    %v1364 = vunpack.c.l.b16 %v61
    %v1365 = vunpack.c.h.b16 %v61
    %v1366 = vunpack.c.l.b16 %v62
    %v1367 = vunpack.c.h.b16 %v62
    %v1368 = vunpack.c.l.b16 %v63
    %v1369 = vunpack.c.h.b16 %v63
    %v1370 = vunpack.c.l.b16 %v64
    %v1371 = vunpack.c.h.b16 %v64
    %v1372 = vunpack.c.l.b16 %v65
    %v1373 = vunpack.c.h.b16 %v65
    %v1374 = vunpack.c.l.b16 %v66
    %v1375 = vunpack.c.h.b16 %v66
    %v1376 = vunpack.c.l.b16 %v67
    %v1377 = vunpack.c.h.b16 %v67
    %v1378 = vunpack.c.l.b16 %v68
    %v1379 = vunpack.c.h.b16 %v68
    %v1380 = vunpack.c.l.b16 %v69
    %v1381 = vunpack.c.h.b16 %v69
    %v1382 = vunpack.c.l.b16 %v70
    %v1383 = vunpack.c.h.b16 %v70
    %v1384 = vunpack.c.l.b16 %v71
    %v1385 = vunpack.c.h.b16 %v71
    %v1386 = vunpack.c.l.b16 %v72
    %v1387 = vunpack.c.h.b16 %v72
    %v1388 = vunpack.c.l.b16 %v73
    %v1389 = vunpack.c.h.b16 %v73
    %v1390 = vunpack.c.l.b16 %v74
    %v1391 = vunpack.c.h.b16 %v74
    %v1392 = vunpack.c.l.b16 %v75
    %v1393 = vunpack.c.h.b16 %v75
    %v1394 = vunpack.c.l.b16 %v76
    %v1395 = vunpack.c.h.b16 %v76
    %v1396 = vunpack.c.l.b16 %v77
    %v1397 = vunpack.c.h.b16 %v77
    %v1398 = vunpack.c.l.b16 %v78
    %v1399 = vunpack.c.h.b16 %v78
    %v1400 = vunpack.c.l.b16 %v79
    %v1401 = vunpack.c.h.b16 %v79
    %v1402 = vunpack.c.l.b16 %v80
    %v1403 = vunpack.c.h.b16 %v80
    %v1404 = vunpack.c.l.b16 %v81
    %v1405 = vunpack.c.h.b16 %v81
    %v1406 = vunpack.c.l.b16 %v82
    %v1407 = vunpack.c.h.b16 %v82
    %v1408 = vunpack.c.l.b16 %v83
    %v1409 = vunpack.c.h.b16 %v83
    %v1410 = vunpack.c.l.b16 %v84
    %v1411 = vunpack.c.h.b16 %v84
    %v1412 = vunpack.c.l.b16 %v85
    %v1413 = vunpack.c.h.b16 %v85
    %v1414 = vunpack.c.l.b16 %v86
    %v1415 = vunpack.c.h.b16 %v86
    %v1416 = vunpack.c.l.b16 %v87
    %v1417 = vunpack.c.h.b16 %v87
    %v1418 = vunpack.c.l.b16 %v88
    %v1419 = vunpack.c.h.b16 %v88
    %v1420 = vunpack.c.l.b16 %v89
    %v1421 = vunpack.c.h.b16 %v89
    %v1422 = vunpack.c.l.b16 %v90
    %v1423 = vunpack.c.h.b16 %v90
    %v1424 = vunpack.c.l.b16 %v91
    %v1425 = vunpack.c.h.b16 %v91
    %v1426 = vunpack.c.l.b16 %v92
    %v1427 = vunpack.c.h.b16 %v92
    %v1428 = vunpack.c.l.b16 %v93
    %v1429 = vunpack.c.h.b16 %v93
    %v1430 = vunpack.c.l.b16 %v94
    %v1431 = vunpack.c.h.b16 %v94
    %v1432 = vunpack.c.l.b16 %v95
    %v1433 = vunpack.c.h.b16 %v95
    %v1434 = vunpack.c.l.b16 %v96
    %v1435 = vunpack.c.h.b16 %v96
    %v1436 = vunpack.c.l.b16 %v97
    %v1437 = vunpack.c.h.b16 %v97
    %v1438 = vunpack.c.l.b16 %v98
    %v1439 = vunpack.c.h.b16 %v98
    %v1440 = vunpack.c.l.b16 %v99
    %v1441 = vunpack.c.h.b16 %v99
    %v1442 = vunpack.c.l.b16 %v100
    %v1443 = vunpack.c.h.b16 %v100
    %v1444 = vunpack.c.l.b16 %v101
    %v1445 = vunpack.c.h.b16 %v101
    %v1446 = vunpack.c.l.b16 %v102
    %v1447 = vunpack.c.h.b16 %v102
    %v1448 = vunpack.c.l.b16 %v103
    %v1449 = vunpack.c.h.b16 %v103
    %v1450 = vunpack.c.l.b16 %v104
    %v1451 = vunpack.c.h.b16 %v104
    %v1452 = vunpack.c.l.b16 %v105
    %v1453 = vunpack.c.h.b16 %v105
    %v1454 = vunpack.c.l.b16 %v106
    %v1455 = vunpack.c.h.b16 %v106
    %v1456 = vunpack.c.l.b16 %v107
    %v1457 = vunpack.c.h.b16 %v107
    %v1458 = vunpack.c.l.b16 %v108
    %v1459 = vunpack.c.h.b16 %v108
    %v1460 = vunpack.c.l.b16 %v109
    %v1461 = vunpack.c.h.b16 %v109
    %v1462 = vunpack.c.l.b16 %v110
    %v1463 = vunpack.c.h.b16 %v110
    %v1464 = vunpack.c.l.b16 %v111
    %v1465 = vunpack.c.h.b16 %v111
    %v1466 = vunpack.c.l.b16 %v112
    %v1467 = vunpack.c.h.b16 %v112
    %v1468 = vunpack.c.l.b16 %v113
    %v1469 = vunpack.c.h.b16 %v113
    %v1470 = vunpack.c.l.b16 %v114
    %v1471 = vunpack.c.h.b16 %v114
    %v1472 = vunpack.c.l.b16 %v115
    %v1473 = vunpack.c.h.b16 %v115
    %v1474 = vunpack.c.l.b16 %v116
    %v1475 = vunpack.c.h.b16 %v116
    %v1476 = vunpack.c.l.b16 %v117
    %v1477 = vunpack.c.h.b16 %v117
    %v1478 = vunpack.c.l.b16 %v118
    %v1479 = vunpack.c.h.b16 %v118
    %v1480 = vunpack.c.l.b16 %v119
    %v1481 = vunpack.c.h.b16 %v119
    %v1482 = vunpack.c.l.b16 %v120
    %v1483 = vunpack.c.h.b16 %v120
    %v1484 = vunpack.c.l.b16 %v121
    %v1485 = vunpack.c.h.b16 %v121
    %v1486 = vunpack.c.l.b16 %v122
    %v1487 = vunpack.c.h.b16 %v122
    %v1488 = vunpack.c.l.b16 %v123
    %v1489 = vunpack.c.h.b16 %v123
    %v1490 = vunpack.c.l.b16 %v124
    %v1491 = vunpack.c.h.b16 %v124
    %v1492 = vunpack.c.l.b16 %v125
    %v1493 = vunpack.c.h.b16 %v125
    %v1494 = vunpack.c.l.b16 %v126
    %v1495 = vunpack.c.h.b16 %v126
    %v1496 = vunpack.c.l.b16 %v127
    %v1497 = vunpack.c.h.b16 %v127
    %v1498 = vunpack.c.l.b16 %v128
    %v1499 = vunpack.c.h.b16 %v128
    %v1500 = vunpack.c.l.b16 %v129
    %v1501 = vunpack.c.h.b16 %v129
    %v1502 = vunpack.c.l.b16 %v130
    %v1503 = vunpack.c.h.b16 %v130
    %v1504 = vunpack.c.l.b16 %v131
    %v1505 = vunpack.c.h.b16 %v131
    %v1506 = vunpack.c.l.b16 %v132
    %v1507 = vunpack.c.h.b16 %v132
    %v1508 = vunpack.c.l.b16 %v133
    %v1509 = vunpack.c.h.b16 %v133
    %v1510 = vunpack.c.l.b16 %v134
    %v1511 = vunpack.c.h.b16 %v134
    %v1512 = vunpack.c.l.b16 %v135
    %v1513 = vunpack.c.h.b16 %v135
    %v1514 = vunpack.c.l.b16 %v136
    %v1515 = vunpack.c.h.b16 %v136
    %v1516 = vunpack.c.l.b16 %v137
    %v1517 = vunpack.c.h.b16 %v137
    %v1518 = vunpack.c.l.b16 %v138
    %v1519 = vunpack.c.h.b16 %v138
    %v1520 = vunpack.c.l.b16 %v139
    %v1521 = vunpack.c.h.b16 %v139
    %v1522 = vunpack.c.l.b16 %v140
    %v1523 = vunpack.c.h.b16 %v140
    %v1524 = vunpack.c.l.b16 %v141
    %v1525 = vunpack.c.h.b16 %v141
    %v1526 = vunpack.c.l.b16 %v142
    %v1527 = vunpack.c.h.b16 %v142
    %v1528 = vunpack.c.l.b16 %v143
    %v1529 = vunpack.c.h.b16 %v143
    %v1530 = vunpack.c.l.b16 %v144
    %v1531 = vunpack.c.h.b16 %v144
    %v1532 = vunpack.c.l.b16 %v145
    %v1533 = vunpack.c.h.b16 %v145
    %v1534 = vunpack.c.l.b16 %v146
    %v1535 = vunpack.c.h.b16 %v146
    %v1536 = vunpack.c.l.b16 %v147
    %v1537 = vunpack.c.h.b16 %v147
    %v1538 = vunpack.c.l.b16 %v148
    %v1539 = vunpack.c.h.b16 %v148
    %v1540 = vunpack.c.l.b16 %v149
    %v1541 = vunpack.c.h.b16 %v149
    %v1542 = vunpack.c.l.b16 %v150
    %v1543 = vunpack.c.h.b16 %v150
    %v1544 = vunpack.c.l.b16 %v151
    %v1545 = vunpack.c.h.b16 %v151
    %v1546 = vunpack.c.l.b16 %v152
    %v1547 = vunpack.c.h.b16 %v152
    %v1548 = vunpack.c.l.b16 %v153
    %v1549 = vunpack.c.h.b16 %v153
    %v1550 = vunpack.c.l.b16 %v154
    %v1551 = vunpack.c.h.b16 %v154
    %v1552 = vunpack.c.l.b16 %v155
    %v1553 = vunpack.c.h.b16 %v155
    %v1554 = vunpack.c.l.b16 %v156
    %v1555 = vunpack.c.h.b16 %v156
    %v1556 = vunpack.c.l.b16 %v157
    %v1557 = vunpack.c.h.b16 %v157
    %v1558 = vunpack.c.l.b16 %v158
    %v1559 = vunpack.c.h.b16 %v158
    %v1560 = vunpack.c.l.b16 %v159
    %v1561 = vunpack.c.h.b16 %v159
    %v1562 = vunpack.c.l.b16 %v160
    %v1563 = vunpack.c.h.b16 %v160
    %v1564 = vunpack.c.l.b16 %v161
    %v1565 = vunpack.c.h.b16 %v161
    %v1566 = vunpack.c.l.b16 %v162
    %v1567 = vunpack.c.h.b16 %v162
    %v1568 = vunpack.c.l.b16 %v163
    %v1569 = vunpack.c.h.b16 %v163
    %v1570 = vunpack.c.l.b16 %v164
    %v1571 = vunpack.c.h.b16 %v164
    %v1572 = vunpack.c.l.b16 %v165
    %v1573 = vunpack.c.h.b16 %v165
    %v1574 = vunpack.c.l.b16 %v166
    %v1575 = vunpack.c.h.b16 %v166
    %v1576 = vunpack.c.l.b16 %v167
    %v1577 = vunpack.c.h.b16 %v167
    %v1578 = vunpack.c.l.b16 %v168
    %v1579 = vunpack.c.h.b16 %v168
    %v1580 = vunpack.c.l.b16 %v169
    %v1581 = vunpack.c.h.b16 %v169
    %v1582 = vunpack.c.l.b16 %v170
    %v1583 = vunpack.c.h.b16 %v170
    %v1584 = vunpack.c.l.b16 %v171
    %v1585 = vunpack.c.h.b16 %v171
    %v1586 = vunpack.c.l.b16 %v172
    %v1587 = vunpack.c.h.b16 %v172
    %v1588 = vunpack.c.l.b16 %v173
    %v1589 = vunpack.c.h.b16 %v173
    %v1590 = vunpack.c.l.b16 %v174
    %v1591 = vunpack.c.h.b16 %v174
    %v1592 = vunpack.c.l.b16 %v175
    %v1593 = vunpack.c.h.b16 %v175
    %v1594 = vunpack.c.l.b16 %v176
    %v1595 = vunpack.c.h.b16 %v176
    %v1596 = vunpack.c.l.b16 %v177
    %v1597 = vunpack.c.h.b16 %v177
    %v1598 = vunpack.c.l.b16 %v178
    %v1599 = vunpack.c.h.b16 %v178
    %v1600 = vunpack.c.l.b16 %v179
    %v1601 = vunpack.c.h.b16 %v179
    %v1602 = vunpack.c.l.b16 %v180
    %v1603 = vunpack.c.h.b16 %v180
    %v1604 = vunpack.c.l.b16 %v181
    %v1605 = vunpack.c.h.b16 %v181
    %v1606 = vunpack.c.l.b16 %v182
    %v1607 = vunpack.c.h.b16 %v182
    %v1608 = vunpack.c.l.b16 %v183
    %v1609 = vunpack.c.h.b16 %v183
    %v1610 = vunpack.c.l.b16 %v184
    %v1611 = vunpack.c.h.b16 %v184
    %v1612 = vunpack.c.l.b16 %v185
    %v1613 = vunpack.c.h.b16 %v185
    %v1614 = vunpack.c.l.b16 %v186
    %v1615 = vunpack.c.h.b16 %v186
    %v1616 = vunpack.c.l.b16 %v187
    %v1617 = vunpack.c.h.b16 %v187
    %v1618 = vunpack.c.l.b16 %v188
    %v1619 = vunpack.c.h.b16 %v188
    %v1620 = vunpack.c.l.b16 %v189
    %v1621 = vunpack.c.h.b16 %v189
    %v1622 = vunpack.c.l.b16 %v190
    %v1623 = vunpack.c.h.b16 %v190
    %v1624 = vunpack.c.l.b16 %v191
    %v1625 = vunpack.c.h.b16 %v191
    %v1626 = vunpack.c.l.b16 %v192
    %v1627 = vunpack.c.h.b16 %v192
    %v1628 = vunpack.c.l.b16 %v193
    %v1629 = vunpack.c.h.b16 %v193
    %v1630 = vunpack.c.l.b16 %v194
    %v1631 = vunpack.c.h.b16 %v194
    %v1632 = vunpack.c.l.b16 %v195
    %v1633 = vunpack.c.h.b16 %v195
    %v1634 = vunpack.c.l.b16 %v196
    %v1635 = vunpack.c.h.b16 %v196
    %v1636 = vunpack.c.l.b16 %v197
    %v1637 = vunpack.c.h.b16 %v197
    %v1638 = vunpack.c.l.b16 %v198
    %v1639 = vunpack.c.h.b16 %v198
    %v1640 = vunpack.c.l.b16 %v199
    %v1641 = vunpack.c.h.b16 %v199
    %v1642 = vunpack.c.l.b16 %v200
    %v1643 = vunpack.c.h.b16 %v200
    %v1644 = vunpack.c.l.b16 %v201
    %v1645 = vunpack.c.h.b16 %v201
    %v1646 = vunpack.c.l.b16 %v202
    %v1647 = vunpack.c.h.b16 %v202
    %v1648 = vunpack.c.l.b16 %v203
    %v1649 = vunpack.c.h.b16 %v203
    %v1650 = vunpack.c.l.b16 %v204
    %v1651 = vunpack.c.h.b16 %v204
    %v1652 = vunpack.c.l.b16 %v205
    %v1653 = vunpack.c.h.b16 %v205
    %v1654 = vunpack.c.l.b16 %v206
    %v1655 = vunpack.c.h.b16 %v206
    %v1656 = vunpack.c.l.b16 %v207
    %v1657 = vunpack.c.h.b16 %v207
    %v1658 = vunpack.c.l.b16 %v208
    %v1659 = vunpack.c.h.b16 %v208
    %v1660 = vunpack.c.l.b16 %v209
    %v1661 = vunpack.c.h.b16 %v209
    %v1662 = vunpack.c.l.b16 %v210
    %v1663 = vunpack.c.h.b16 %v210
    %v1664 = vunpack.c.l.b16 %v211
    %v1665 = vunpack.c.h.b16 %v211
    %v1666 = vunpack.c.l.b16 %v212
    %v1667 = vunpack.c.h.b16 %v212
    %v1668 = vunpack.c.l.b16 %v213
    %v1669 = vunpack.c.h.b16 %v213
    %v1670 = vunpack.c.l.b16 %v214
    %v1671 = vunpack.c.h.b16 %v214
    %v1672 = vunpack.c.l.b16 %v215
    %v1673 = vunpack.c.h.b16 %v215
    %v1674 = vunpack.c.l.b16 %v216
    %v1675 = vunpack.c.h.b16 %v216
    %v1676 = vunpack.c.l.b16 %v217
    %v1677 = vunpack.c.h.b16 %v217
    %v1678 = vunpack.c.l.b16 %v218
    %v1679 = vunpack.c.h.b16 %v218
    %v1680 = vunpack.c.l.b16 %v219
    %v1681 = vunpack.c.h.b16 %v219
    %v1682 = vunpack.c.l.b16 %v220
    %v1683 = vunpack.c.h.b16 %v220
    %v1684 = vunpack.c.l.b16 %v221
    %v1685 = vunpack.c.h.b16 %v221
    %v1686 = vunpack.c.l.b16 %v222
    %v1687 = vunpack.c.h.b16 %v222
    %v1688 = vunpack.c.l.b16 %v223
    %v1689 = vunpack.c.h.b16 %v223
    %v1690 = vunpack.c.l.b16 %v224
    %v1691 = vunpack.c.h.b16 %v224
    %v1692 = vunpack.c.l.b16 %v225
    %v1693 = vunpack.c.h.b16 %v225
    %v1694 = vunpack.c.l.b16 %v226
    %v1695 = vunpack.c.h.b16 %v226
    %v1696 = vunpack.c.l.b16 %v227
    %v1697 = vunpack.c.h.b16 %v227
    %v1698 = vunpack.c.l.b16 %v228
    %v1699 = vunpack.c.h.b16 %v228
    %v1700 = vunpack.c.l.b16 %v229
    %v1701 = vunpack.c.h.b16 %v229
    %v1702 = vunpack.c.l.b16 %v230
    %v1703 = vunpack.c.h.b16 %v230
    %v1704 = vunpack.c.l.b16 %v231
    %v1705 = vunpack.c.h.b16 %v231
    %v1706 = vunpack.c.l.b16 %v232
    %v1707 = vunpack.c.h.b16 %v232
    %v1708 = vunpack.c.l.b16 %v233
    %v1709 = vunpack.c.h.b16 %v233
    %v1710 = vunpack.c.l.b16 %v234
    %v1711 = vunpack.c.h.b16 %v234
    %v1712 = vunpack.c.l.b16 %v235
    %v1713 = vunpack.c.h.b16 %v235
    %v1714 = vunpack.c.l.b16 %v236
    %v1715 = vunpack.c.h.b16 %v236
    %v1716 = vunpack.c.l.b16 %v237
    %v1717 = vunpack.c.h.b16 %v237
    %v1718 = vunpack.c.l.b16 %v238
    %v1719 = vunpack.c.h.b16 %v238
    %v1720 = vunpack.c.l.b16 %v239
    %v1721 = vunpack.c.h.b16 %v239
    %v1722 = vunpack.c.l.b16 %v240
    %v1723 = vunpack.c.h.b16 %v240
    %v1724 = vunpack.c.l.b16 %v241
    %v1725 = vunpack.c.h.b16 %v241
    %v1726 = vunpack.c.l.b16 %v242
    %v1727 = vunpack.c.h.b16 %v242
    %v1728 = vunpack.c.l.b16 %v243
    %v1729 = vunpack.c.h.b16 %v243
    %v1730 = vunpack.c.l.b16 %v244
    %v1731 = vunpack.c.h.b16 %v244
    %v1732 = vunpack.c.l.b16 %v245
    %v1733 = vunpack.c.h.b16 %v245
    %v1734 = vunpack.c.l.b16 %v246
    %v1735 = vunpack.c.h.b16 %v246
    %v1736 = vunpack.c.l.b16 %v247
    %v1737 = vunpack.c.h.b16 %v247
    %v1738 = vunpack.c.l.b16 %v248
    %v1739 = vunpack.c.h.b16 %v248
    %v1740 = vunpack.c.l.b16 %v249
    %v1741 = vunpack.c.h.b16 %v249
    %v1742 = vunpack.c.l.b16 %v250
    %v1743 = vunpack.c.h.b16 %v250
    %v1744 = vunpack.c.l.b16 %v251
    %v1745 = vunpack.c.h.b16 %v251
    %v1746 = vunpack.c.l.b16 %v252
    %v1747 = vunpack.c.h.b16 %v252
    %v1748 = vunpack.c.l.b16 %v253
    %v1749 = vunpack.c.h.b16 %v253
    %v1750 = vunpack.c.l.b16 %v254
    %v1751 = vunpack.c.h.b16 %v254
    %v1752 = vunpack.c.l.b16 %v255
    %v1753 = vunpack.c.h.b16 %v255
    %v1754 = vunpack.c.l.b16 %v256
    %v1755 = vunpack.c.h.b16 %v256
    %v1756 = vunpack.c.l.b16 %v257
    %v1757 = vunpack.c.h.b16 %v257
    %v1758 = vunpack.c.l.b16 %v258
    %v1759 = vunpack.c.h.b16 %v258
    %v1760 = vunpack.c.l.b16 %v259
    %v1761 = vunpack.c.h.b16 %v259
    %v1762 = vunpack.c.l.b16 %v260
    %v1763 = vunpack.c.h.b16 %v260
    %v1764 = vunpack.c.l.b16 %v261
    %v1765 = vunpack.c.h.b16 %v261
    %v1766 = vunpack.c.l.b16 %v262
    %v1767 = vunpack.c.h.b16 %v262
    %v1768 = vunpack.c.l.b16 %v263
    %v1769 = vunpack.c.h.b16 %v263
    %v1770 = vunpack.c.l.b16 %v264
    %v1771 = vunpack.c.h.b16 %v264
    %v1772 = vunpack.c.l.b16 %v265
    %v1773 = vunpack.c.h.b16 %v265
    %v1774 = vunpack.c.l.b16 %v266
    %v1775 = vunpack.c.h.b16 %v266
    %v1776 = vunpack.c.l.b16 %v267
    %v1777 = vunpack.c.h.b16 %v267
    %v1778 = vunpack.c.l.b16 %v268
    %v1779 = vunpack.c.h.b16 %v268
    %v1780 = vunpack.c.l.b16 %v269
    %v1781 = vunpack.c.h.b16 %v269
    %v1782 = vunpack.c.l.b16 %v270
    %v1783 = vunpack.c.h.b16 %v270
    %v1784 = vunpack.c.l.b16 %v271
    %v1785 = vunpack.c.h.b16 %v271
    %v1786 = vunpack.c.l.b16 %v272
    %v1787 = vunpack.c.h.b16 %v272
    %v1788 = vunpack.c.l.b16 %v273
    %v1789 = vunpack.c.h.b16 %v273
    %v1790 = vunpack.c.l.b16 %v274
    %v1791 = vunpack.c.h.b16 %v274
    %v1792 = vunpack.c.l.b16 %v275
    %v1793 = vunpack.c.h.b16 %v275
    %v1794 = vunpack.c.l.b16 %v276
    %v1795 = vunpack.c.h.b16 %v276
    %v1796 = vunpack.c.l.b16 %v277
    %v1797 = vunpack.c.h.b16 %v277
    %v1798 = vunpack.c.l.b16 %v278
    %v1799 = vunpack.c.h.b16 %v278
    %v1800 = vunpack.c.l.b16 %v279
    %v1801 = vunpack.c.h.b16 %v279
    %v1802 = vunpack.c.l.b16 %v280
    %v1803 = vunpack.c.h.b16 %v280
    %v1804 = vunpack.c.l.b16 %v281
    %v1805 = vunpack.c.h.b16 %v281
    %v1806 = vunpack.c.l.b16 %v282
    %v1807 = vunpack.c.h.b16 %v282
    %v1808 = vunpack.c.l.b16 %v283
    %v1809 = vunpack.c.h.b16 %v283
    %v1810 = vunpack.c.l.b16 %v284
    %v1811 = vunpack.c.h.b16 %v284
    %v1812 = vunpack.c.l.b16 %v285
    %v1813 = vunpack.c.h.b16 %v285
    %v1814 = vunpack.c.l.b16 %v286
    %v1815 = vunpack.c.h.b16 %v286
    %v1816 = vunpack.c.l.b16 %v287
    %v1817 = vunpack.c.h.b16 %v287
    %v1818 = vunpack.c.l.b16 %v288
    %v1819 = vunpack.c.h.b16 %v288
    %v1820 = vunpack.c.l.b16 %v289
    %v1821 = vunpack.c.h.b16 %v289
    %v1822 = vunpack.c.l.b16 %v290
    %v1823 = vunpack.c.h.b16 %v290
    %v1824 = vunpack.c.l.b16 %v291
    %v1825 = vunpack.c.h.b16 %v291
    %v1826 = vunpack.c.l.b16 %v292
    %v1827 = vunpack.c.h.b16 %v292
    %v1828 = vunpack.c.l.b16 %v293
    %v1829 = vunpack.c.h.b16 %v293
    %v1830 = vunpack.c.l.b16 %v294
    %v1831 = vunpack.c.h.b16 %v294
    %v1832 = vunpack.c.l.b16 %v295
    %v1833 = vunpack.c.h.b16 %v295
    %v1834 = vunpack.c.l.b16 %v296
    %v1835 = vunpack.c.h.b16 %v296
    %v1836 = vunpack.c.l.b16 %v297
    %v1837 = vunpack.c.h.b16 %v297
    %v1838 = vunpack.c.l.b16 %v298
    %v1839 = vunpack.c.h.b16 %v298
    %v1840 = vunpack.c.l.b16 %v299
    %v1841 = vunpack.c.h.b16 %v299
    %v1842 = vunpack.c.l.b16 %v300
    %v1843 = vunpack.c.h.b16 %v300
    %v1844 = vunpack.c.l.b16 %v301
    %v1845 = vunpack.c.h.b16 %v301
    %v1846 = vunpack.c.l.b16 %v302
    %v1847 = vunpack.c.h.b16 %v302
    %v1848 = vunpack.c.l.b16 %v303
    %v1849 = vunpack.c.h.b16 %v303
    %v1850 = vunpack.c.l.b16 %v304
    %v1851 = vunpack.c.h.b16 %v304
    %v1852 = vunpack.c.l.b16 %v305
    %v1853 = vunpack.c.h.b16 %v305
    %v1854 = vunpack.c.l.b16 %v306
    %v1855 = vunpack.c.h.b16 %v306
    %v1856 = vunpack.c.l.b16 %v307
    %v1857 = vunpack.c.h.b16 %v307
    %v1858 = vunpack.c.l.b16 %v308
    %v1859 = vunpack.c.h.b16 %v308
    %v1860 = vunpack.c.l.b16 %v309
    %v1861 = vunpack.c.h.b16 %v309
    %v1862 = vunpack.c.l.b16 %v310
    %v1863 = vunpack.c.h.b16 %v310
    %v1864 = vunpack.c.l.b16 %v311
    %v1865 = vunpack.c.h.b16 %v311
    %v1866 = vunpack.c.l.b16 %v312
    %v1867 = vunpack.c.h.b16 %v312
    %v1868 = vunpack.c.l.b16 %v313
    %v1869 = vunpack.c.h.b16 %v313
    %v1870 = vunpack.c.l.b16 %v314
    %v1871 = vunpack.c.h.b16 %v314
    %v1872 = vunpack.c.l.b16 %v315
    %v1873 = vunpack.c.h.b16 %v315
    %v1874 = vunpack.c.l.b16 %v316
    %v1875 = vunpack.c.h.b16 %v316
    %v1876 = vunpack.c.l.b16 %v317
    %v1877 = vunpack.c.h.b16 %v317
    %v1878 = vunpack.c.l.b16 %v318
    %v1879 = vunpack.c.h.b16 %v318
    %v1880 = vunpack.c.l.b16 %v319
    %v1881 = vunpack.c.h.b16 %v319
    %v1882 = vunpack.c.l.b16 %v320
    %v1883 = vunpack.c.h.b16 %v320
    %v1884 = vunpack.c.l.b16 %v321
    %v1885 = vunpack.c.h.b16 %v321
    %v1886 = vunpack.c.l.b16 %v322
    %v1887 = vunpack.c.h.b16 %v322
    %v1888 = vunpack.c.l.b16 %v323
    %v1889 = vunpack.c.h.b16 %v323
    %v1890 = vunpack.c.l.b16 %v324
    %v1891 = vunpack.c.h.b16 %v324
    %v1892 = vunpack.c.l.b16 %v325
    %v1893 = vunpack.c.h.b16 %v325
    %v1894 = vunpack.c.l.b16 %v326
    %v1895 = vunpack.c.h.b16 %v326
    %v1896 = vunpack.c.l.b16 %v327
    %v1897 = vunpack.c.h.b16 %v327
    %v1898 = vunpack.c.l.b16 %v328
    %v1899 = vunpack.c.h.b16 %v328
    %v1900 = vunpack.c.l.b16 %v329
    %v1901 = vunpack.c.h.b16 %v329
    %v1902 = vunpack.c.l.b16 %v330
    %v1903 = vunpack.c.h.b16 %v330
    %v1904 = vunpack.c.l.b16 %v331
    %v1905 = vunpack.c.h.b16 %v331
    %v1906 = vunpack.c.l.b16 %v332
    %v1907 = vunpack.c.h.b16 %v332
    %v1908 = vunpack.c.l.b16 %v333
    %v1909 = vunpack.c.h.b16 %v333
    %v1910 = vunpack.c.l.b16 %v334
    %v1911 = vunpack.c.h.b16 %v334
    %v1912 = vunpack.c.l.b16 %v335
    %v1913 = vunpack.c.h.b16 %v335
    %v1914 = vunpack.c.l.b16 %v336
    %v1915 = vunpack.c.h.b16 %v336
    %v1916 = vunpack.c.l.b16 %v337
    %v1917 = vunpack.c.h.b16 %v337
    %v1918 = vunpack.c.l.b16 %v338
    %v1919 = vunpack.c.h.b16 %v338
    %v1920 = vunpack.c.l.b16 %v339
    %v1921 = vunpack.c.h.b16 %v339
    %v1922 = vunpack.c.l.b16 %v340
    %v1923 = vunpack.c.h.b16 %v340
    %v1924 = vunpack.c.l.b16 %v341
    %v1925 = vunpack.c.h.b16 %v341
    %v1926 = vunpack.c.l.b16 %v342
    %v1927 = vunpack.c.h.b16 %v342
    %v1928 = vunpack.c.l.b16 %v343
    %v1929 = vunpack.c.h.b16 %v343
    %v1930 = vunpack.c.l.b16 %v344
    %v1931 = vunpack.c.h.b16 %v344
    %v1932 = vunpack.c.l.b16 %v345
    %v1933 = vunpack.c.h.b16 %v345
    %v1934 = vunpack.c.l.b16 %v346
    %v1935 = vunpack.c.h.b16 %v346
    %v1936 = vunpack.c.l.b16 %v347
    %v1937 = vunpack.c.h.b16 %v347
    %v1938 = vunpack.c.l.b16 %v348
    %v1939 = vunpack.c.h.b16 %v348
    %v1940 = vunpack.c.l.b16 %v349
    %v1941 = vunpack.c.h.b16 %v349
    %v1942 = vunpack.c.l.b16 %v350
    %v1943 = vunpack.c.h.b16 %v350
    %v1944 = vunpack.c.l.b16 %v351
    %v1945 = vunpack.c.h.b16 %v351
    %v1946 = vunpack.c.l.b16 %v352
    %v1947 = vunpack.c.h.b16 %v352
    %v1948 = vunpack.c.l.b16 %v353
    %v1949 = vunpack.c.h.b16 %v353
    %v1950 = vunpack.c.l.b16 %v354
    %v1951 = vunpack.c.h.b16 %v354
    %v1952 = vunpack.c.l.b16 %v355
    %v1953 = vunpack.c.h.b16 %v355
    %v1954 = vunpack.c.l.b16 %v356
    %v1955 = vunpack.c.h.b16 %v356
    %v1956 = vunpack.c.l.b16 %v357
    %v1957 = vunpack.c.h.b16 %v357
    %v1958 = vunpack.c.l.b16 %v358
    %v1959 = vunpack.c.h.b16 %v358
    %v1960 = vunpack.c.l.b16 %v359
    %v1961 = vunpack.c.h.b16 %v359
    %v1962 = vunpack.c.l.b16 %v360
    %v1963 = vunpack.c.h.b16 %v360
    %v1964 = vunpack.c.l.b16 %v361
    %v1965 = vunpack.c.h.b16 %v361
    %v1966 = vunpack.c.l.b16 %v362
    %v1967 = vunpack.c.h.b16 %v362
    %v1968 = vunpack.c.l.b16 %v363
    %v1969 = vunpack.c.h.b16 %v363
    %v1970 = vunpack.c.l.b16 %v364
    %v1971 = vunpack.c.h.b16 %v364
    %v1972 = vunpack.c.l.b16 %v365
    %v1973 = vunpack.c.h.b16 %v365
    %v1974 = vunpack.c.l.b16 %v366
    %v1975 = vunpack.c.h.b16 %v366
    %v1976 = vunpack.c.l.b16 %v367
    %v1977 = vunpack.c.h.b16 %v367
    %v1978 = vunpack.c.l.b16 %v368
    %v1979 = vunpack.c.h.b16 %v368
    %v1980 = vunpack.c.l.b16 %v369
    %v1981 = vunpack.c.h.b16 %v369
    %v1982 = vunpack.c.l.b16 %v370
    %v1983 = vunpack.c.h.b16 %v370
    %v1984 = vunpack.c.l.b16 %v371
    %v1985 = vunpack.c.h.b16 %v371
    %v1986 = vunpack.c.l.b16 %v372
    %v1987 = vunpack.c.h.b16 %v372
    %v1988 = vunpack.c.l.b16 %v373
    %v1989 = vunpack.c.h.b16 %v373
    %v1990 = vunpack.c.l.b16 %v374
    %v1991 = vunpack.c.h.b16 %v374
    %v1992 = vunpack.c.l.b16 %v375
    %v1993 = vunpack.c.h.b16 %v375
    %v1994 = vunpack.c.l.b16 %v376
    %v1995 = vunpack.c.h.b16 %v376
    %v1996 = vunpack.c.l.b16 %v377
    %v1997 = vunpack.c.h.b16 %v377
    %v1998 = vunpack.c.l.b16 %v378
    %v1999 = vunpack.c.h.b16 %v378
    %v2000 = vunpack.c.l.b16 %v379
    %v2001 = vunpack.c.h.b16 %v379
    %v2002 = vunpack.c.l.b16 %v380
    %v2003 = vunpack.c.h.b16 %v380
    %v2004 = vunpack.c.l.b16 %v381
    %v2005 = vunpack.c.h.b16 %v381
    %v2006 = vunpack.c.l.b16 %v382
    %v2007 = vunpack.c.h.b16 %v382
    %v2008 = vunpack.c.l.b16 %v383
    %v2009 = vunpack.c.h.b16 %v383
    %v2010 = vunpack.c.l.b16 %v384
    %v2011 = vunpack.c.h.b16 %v384
    %v2012 = vunpack.c.l.b16 %v385
    %v2013 = vunpack.c.h.b16 %v385
    %v2014 = vunpack.c.l.b16 %v386
    %v2015 = vunpack.c.h.b16 %v386
    %v2016 = vunpack.c.l.b16 %v387
    %v2017 = vunpack.c.h.b16 %v387
    %v2018 = vunpack.c.l.b16 %v388
    %v2019 = vunpack.c.h.b16 %v388
    %v2020 = vunpack.c.l.b16 %v389
    %v2021 = vunpack.c.h.b16 %v389
    %v2022 = vunpack.c.l.b16 %v390
    %v2023 = vunpack.c.h.b16 %v390
    %v2024 = vunpack.c.l.b16 %v391
    %v2025 = vunpack.c.h.b16 %v391
    %v2026 = vunpack.c.l.b16 %v392
    %v2027 = vunpack.c.h.b16 %v392
    %v2028 = vunpack.c.l.b16 %v393
    %v2029 = vunpack.c.h.b16 %v393
    %v2030 = vunpack.c.l.b16 %v394
    %v2031 = vunpack.c.h.b16 %v394
    %v2032 = vunpack.c.l.b16 %v395
    %v2033 = vunpack.c.h.b16 %v395
    %v2034 = vunpack.c.l.b16 %v396
    %v2035 = vunpack.c.h.b16 %v396
    %v2036 = vunpack.c.l.b16 %v397
    %v2037 = vunpack.c.h.b16 %v397
    %v2038 = vunpack.c.l.b16 %v398
    %v2039 = vunpack.c.h.b16 %v398
    %v2040 = vunpack.c.l.b16 %v399
    %v2041 = vunpack.c.h.b16 %v399
    %v2042 = vunpack.c.l.b16 %v400
    %v2043 = vunpack.c.h.b16 %v400
    %v2044 = vunpack.c.l.b16 %v401
    %v2045 = vunpack.c.h.b16 %v401
    %v2046 = vunpack.c.l.b16 %v402
    %v2047 = vunpack.c.h.b16 %v402
    %v2048 = vunpack.c.l.b16 %v403
    %v2049 = vunpack.c.h.b16 %v403
    %v2050 = vunpack.c.l.b16 %v404
    %v2051 = vunpack.c.h.b16 %v404
    %v2052 = vunpack.c.l.b16 %v405
    %v2053 = vunpack.c.h.b16 %v405
    %v2054 = vunpack.c.l.b16 %v406
    %v2055 = vunpack.c.h.b16 %v406
    %v2056 = vunpack.c.l.b16 %v407
    %v2057 = vunpack.c.h.b16 %v407
    %v2058 = vunpack.c.l.b16 %v408
    %v2059 = vunpack.c.h.b16 %v408
    %v2060 = vunpack.c.l.b16 %v409
    %v2061 = vunpack.c.h.b16 %v409
    %v2062 = vunpack.c.l.b16 %v410
    %v2063 = vunpack.c.h.b16 %v410
    %v2064 = vunpack.c.l.b16 %v411
    %v2065 = vunpack.c.h.b16 %v411
    %v2066 = vunpack.c.l.b16 %v412
    %v2067 = vunpack.c.h.b16 %v412
    %v2068 = vunpack.c.l.b16 %v413
    %v2069 = vunpack.c.h.b16 %v413
    %v2070 = vunpack.c.l.b16 %v414
    %v2071 = vunpack.c.h.b16 %v414
    %v2072 = vunpack.c.l.b16 %v415
    %v2073 = vunpack.c.h.b16 %v415
    %v2074 = vunpack.c.l.b16 %v416
    %v2075 = vunpack.c.h.b16 %v416
    %v2076 = vunpack.c.l.b16 %v417
    %v2077 = vunpack.c.h.b16 %v417
    %v2078 = vunpack.c.l.b16 %v418
    %v2079 = vunpack.c.h.b16 %v418
    %v2080 = vunpack.c.l.b16 %v419
    %v2081 = vunpack.c.h.b16 %v419
    %v2082 = vunpack.c.l.b16 %v420
    %v2083 = vunpack.c.h.b16 %v420
    %v2084 = vunpack.c.l.b16 %v421
    %v2085 = vunpack.c.h.b16 %v421
    %v2086 = vunpack.c.l.b16 %v422
    %v2087 = vunpack.c.h.b16 %v422
    %v2088 = vunpack.c.l.b16 %v423
    %v2089 = vunpack.c.h.b16 %v423
    %v2090 = vunpack.c.l.b16 %v424
    %v2091 = vunpack.c.h.b16 %v424
    %v2092 = vunpack.c.l.b16 %v425
    %v2093 = vunpack.c.h.b16 %v425
    %v2094 = vunpack.c.l.b16 %v426
    %v2095 = vunpack.c.h.b16 %v426
    %v2096 = vunpack.c.l.b16 %v427
    %v2097 = vunpack.c.h.b16 %v427
    %v2098 = vunpack.c.l.b16 %v428
    %v2099 = vunpack.c.h.b16 %v428
    %v2100 = vunpack.c.l.b16 %v429
    %v2101 = vunpack.c.h.b16 %v429
    %v2102 = vunpack.c.l.b16 %v430
    %v2103 = vunpack.c.h.b16 %v430
    %v2104 = vunpack.c.l.b16 %v431
    %v2105 = vunpack.c.h.b16 %v431
    %v2106 = vunpack.c.l.b16 %v432
    %v2107 = vunpack.c.h.b16 %v432
    %v2108 = vunpack.c.l.b16 %v433
    %v2109 = vunpack.c.h.b16 %v433
    %v2110 = vunpack.c.l.b16 %v434
    %v2111 = vunpack.c.h.b16 %v434
    %v2112 = vunpack.c.l.b16 %v435
    %v2113 = vunpack.c.h.b16 %v435
    %v2114 = vunpack.c.l.b16 %v436
    %v2115 = vunpack.c.h.b16 %v436
    %v2116 = vunpack.c.l.b16 %v437
    %v2117 = vunpack.c.h.b16 %v437
    %v2118 = vunpack.c.l.b16 %v438
    %v2119 = vunpack.c.h.b16 %v438
    %v2120 = vunpack.c.l.b16 %v439
    %v2121 = vunpack.c.h.b16 %v439
    %v2122 = vunpack.c.l.b16 %v440
    %v2123 = vunpack.c.h.b16 %v440
    %v2124 = vunpack.c.l.b16 %v441
    %v2125 = vunpack.c.h.b16 %v441
    %v2126 = vunpack.c.l.b16 %v442
    %v2127 = vunpack.c.h.b16 %v442
    %v2128 = vunpack.c.l.b16 %v443
    %v2129 = vunpack.c.h.b16 %v443
    %v2130 = vunpack.c.l.b16 %v444
    %v2131 = vunpack.c.h.b16 %v444
    %v2132 = vunpack.c.l.b16 %v445
    %v2133 = vunpack.c.h.b16 %v445
    %v2134 = vunpack.c.l.b16 %v446
    %v2135 = vunpack.c.h.b16 %v446
    %v2136 = vunpack.c.l.b16 %v447
    %v2137 = vunpack.c.h.b16 %v447
    %v2138 = vunpack.c.l.b16 %v448
    %v2139 = vunpack.c.h.b16 %v448
    %v2140 = vunpack.c.l.b16 %v449
    %v2141 = vunpack.c.h.b16 %v449
    %v2142 = vunpack.c.l.b16 %v450
    %v2143 = vunpack.c.h.b16 %v450
    %v2144 = vunpack.c.l.b16 %v451
    %v2145 = vunpack.c.h.b16 %v451
    %v2146 = vunpack.c.l.b16 %v452
    %v2147 = vunpack.c.h.b16 %v452
    %v2148 = vunpack.c.l.b16 %v453
    %v2149 = vunpack.c.h.b16 %v453
    %v2150 = vunpack.c.l.b16 %v454
    %v2151 = vunpack.c.h.b16 %v454
    %v2152 = vunpack.c.l.b16 %v455
    %v2153 = vunpack.c.h.b16 %v455
    %v2154 = vunpack.c.l.b16 %v456
    %v2155 = vunpack.c.h.b16 %v456
    %v2156 = vunpack.c.l.b16 %v457
    %v2157 = vunpack.c.h.b16 %v457
    %v2158 = vunpack.c.l.b16 %v458
    %v2159 = vunpack.c.h.b16 %v458
    %v2160 = vunpack.c.l.b16 %v459
    %v2161 = vunpack.c.h.b16 %v459
    %v2162 = vunpack.c.l.b16 %v460
    %v2163 = vunpack.c.h.b16 %v460
    %v2164 = vunpack.c.l.b16 %v461
    %v2165 = vunpack.c.h.b16 %v461
    %v2166 = vunpack.c.l.b16 %v462
    %v2167 = vunpack.c.h.b16 %v462
    %v2168 = vunpack.c.l.b16 %v463
    %v2169 = vunpack.c.h.b16 %v463
    %v2170 = vunpack.c.l.b16 %v464
    %v2171 = vunpack.c.h.b16 %v464
    %v2172 = vunpack.c.l.b16 %v465
    %v2173 = vunpack.c.h.b16 %v465
    %v2174 = vunpack.c.l.b16 %v466
    %v2175 = vunpack.c.h.b16 %v466
    %v2176 = vunpack.c.l.b16 %v467
    %v2177 = vunpack.c.h.b16 %v467
    %v2178 = vunpack.c.l.b16 %v468
    %v2179 = vunpack.c.h.b16 %v468
    %v2180 = vunpack.c.l.b16 %v469
    %v2181 = vunpack.c.h.b16 %v469
    %v2182 = vunpack.c.l.b16 %v470
    %v2183 = vunpack.c.h.b16 %v470
    %v2184 = vunpack.c.l.b16 %v471
    %v2185 = vunpack.c.h.b16 %v471
    %v2186 = vunpack.c.l.b16 %v472
    %v2187 = vunpack.c.h.b16 %v472
    %v2188 = vunpack.c.l.b16 %v473
    %v2189 = vunpack.c.h.b16 %v473
    %v2190 = vunpack.c.l.b16 %v474
    %v2191 = vunpack.c.h.b16 %v474
    %v2192 = vunpack.c.l.b16 %v475
    %v2193 = vunpack.c.h.b16 %v475
    %v2194 = vunpack.c.l.b16 %v476
    %v2195 = vunpack.c.h.b16 %v476
    %v2196 = vunpack.c.l.b16 %v477
    %v2197 = vunpack.c.h.b16 %v477
    %v2198 = vunpack.c.l.b16 %v478
    %v2199 = vunpack.c.h.b16 %v478
    %v2200 = vunpack.c.l.b16 %v479
    %v2201 = vunpack.c.h.b16 %v479
    %v2202 = vunpack.c.l.b16 %v480
    %v2203 = vunpack.c.h.b16 %v480
    %v2204 = vunpack.c.l.b16 %v481
    %v2205 = vunpack.c.h.b16 %v481
    %v2206 = vunpack.c.l.b16 %v482
    %v2207 = vunpack.c.h.b16 %v482
    %v2208 = vunpack.c.l.b16 %v483
    %v2209 = vunpack.c.h.b16 %v483
    %v2210 = vunpack.c.l.b16 %v484
    %v2211 = vunpack.c.h.b16 %v484
    %v2212 = vunpack.c.l.b16 %v485
    %v2213 = vunpack.c.h.b16 %v485
    %v2214 = vunpack.c.l.b16 %v486
    %v2215 = vunpack.c.h.b16 %v486
    %v2216 = vunpack.c.l.b16 %v487
    %v2217 = vunpack.c.h.b16 %v487
    %v2218 = vunpack.c.l.b16 %v488
    %v2219 = vunpack.c.h.b16 %v488
    %v2220 = vunpack.c.l.b16 %v489
    %v2221 = vunpack.c.h.b16 %v489
    %v2222 = vunpack.c.l.b16 %v490
    %v2223 = vunpack.c.h.b16 %v490
    %v2224 = vunpack.c.l.b16 %v491
    %v2225 = vunpack.c.h.b16 %v491
    %v2226 = vunpack.c.l.b16 %v492
    %v2227 = vunpack.c.h.b16 %v492
    %v2228 = vunpack.c.l.b16 %v493
    %v2229 = vunpack.c.h.b16 %v493
    %v2230 = vunpack.c.l.b16 %v494
    %v2231 = vunpack.c.h.b16 %v494
    %v2232 = vunpack.c.l.b16 %v495
    %v2233 = vunpack.c.h.b16 %v495
    %v2234 = vunpack.c.l.b16 %v496
    %v2235 = vunpack.c.h.b16 %v496
    %v2236 = vunpack.c.l.b16 %v497
    %v2237 = vunpack.c.h.b16 %v497
    %v2238 = vunpack.c.l.b16 %v498
    %v2239 = vunpack.c.h.b16 %v498
    %v2240 = vunpack.c.l.b16 %v499
    %v2241 = vunpack.c.h.b16 %v499
    %v2242 = vunpack.c.l.b16 %v500
    %v2243 = vunpack.c.h.b16 %v500
    %v2244 = vunpack.c.l.b16 %v501
    %v2245 = vunpack.c.h.b16 %v501
    %v2246 = vunpack.c.l.b16 %v502
    %v2247 = vunpack.c.h.b16 %v502
    %v2248 = vunpack.c.l.b16 %v503
    %v2249 = vunpack.c.h.b16 %v503
    %v2250 = vunpack.c.l.b16 %v504
    %v2251 = vunpack.c.h.b16 %v504
    %v2252 = vunpack.c.l.b16 %v505
    %v2253 = vunpack.c.h.b16 %v505
    %v2254 = vunpack.c.l.b16 %v506
    %v2255 = vunpack.c.h.b16 %v506
    %v2256 = vunpack.c.l.b16 %v507
    %v2257 = vunpack.c.h.b16 %v507
    %v2258 = vunpack.c.l.b16 %v508
    %v2259 = vunpack.c.h.b16 %v508
    %v2260 = vunpack.c.l.b16 %v509
    %v2261 = vunpack.c.h.b16 %v509
    %v2262 = vunpack.c.l.b16 %v510
    %v2263 = vunpack.c.h.b16 %v510
    %v2264 = vunpack.c.l.b16 %v511
    %v2265 = vunpack.c.h.b16 %v511
    %v2266 = vunpack.c.l.b16 %v512
    %v2267 = vunpack.c.h.b16 %v512
    %v2268 = vunpack.c.l.b16 %v513
    %v2269 = vunpack.c.h.b16 %v513
    %v2270 = vunpack.c.l.b16 %v514
    %v2271 = vunpack.c.h.b16 %v514
    %v2272 = vunpack.c.l.b16 %v515
    %v2273 = vunpack.c.h.b16 %v515
    %v2274 = vunpack.c.l.b16 %v516
    %v2275 = vunpack.c.h.b16 %v516
    %v2276 = vunpack.c.l.b16 %v517
    %v2277 = vunpack.c.h.b16 %v517
    %v2278 = vunpack.c.l.b16 %v518
    %v2279 = vunpack.c.h.b16 %v518
    %v2280 = vunpack.c.l.b16 %v519
    %v2281 = vunpack.c.h.b16 %v519
    %v2282 = vunpack.c.l.b16 %v520
    %v2283 = vunpack.c.h.b16 %v520
    %v2284 = vunpack.c.l.b16 %v521
    %v2285 = vunpack.c.h.b16 %v521
    %v2286 = vunpack.c.l.b16 %v522
    %v2287 = vunpack.c.h.b16 %v522
    %v2288 = vunpack.c.l.b16 %v523
    %v2289 = vunpack.c.h.b16 %v523
    %v2290 = vunpack.c.l.b16 %v524
    %v2291 = vunpack.c.h.b16 %v524
    %v2292 = vunpack.c.l.b16 %v525
    %v2293 = vunpack.c.h.b16 %v525
    %v2294 = vunpack.c.l.b16 %v526
    %v2295 = vunpack.c.h.b16 %v526
    %v2296 = vunpack.c.l.b16 %v527
    %v2297 = vunpack.c.h.b16 %v527
    %v2298 = vunpack.c.l.b16 %v528
    %v2299 = vunpack.c.h.b16 %v528
    %v2300 = vunpack.c.l.b16 %v529
    %v2301 = vunpack.c.h.b16 %v529
    %v2302 = vunpack.c.l.b16 %v530
    %v2303 = vunpack.c.h.b16 %v530
    %v2304 = vunpack.c.l.b16 %v531
    %v2305 = vunpack.c.h.b16 %v531
    %v2306 = vunpack.c.l.b16 %v532
    %v2307 = vunpack.c.h.b16 %v532
    %v2308 = vunpack.c.l.b16 %v533
    %v2309 = vunpack.c.h.b16 %v533
    %v2310 = vunpack.c.l.b16 %v534
    %v2311 = vunpack.c.h.b16 %v534
    %v2312 = vunpack.c.l.b16 %v535
    %v2313 = vunpack.c.h.b16 %v535
    %v2314 = vunpack.c.l.b16 %v536
    %v2315 = vunpack.c.h.b16 %v536
    %v2316 = vunpack.c.l.b16 %v537
    %v2317 = vunpack.c.h.b16 %v537
    %v2318 = vpack.c.b16 %v1296, %v1294
    %v2319 = vpack.c.b16 %v1297, %v1295
    %v2320 = vpack.c.b16 %v1300, %v1298
    %v2321 = vpack.c.b16 %v1301, %v1299
    %v2322 = vpack.c.b16 %v1304, %v1302
    %v2323 = vpack.c.b16 %v1305, %v1303
    %v2324 = vpack.c.b16 %v1308, %v1306
    %v2325 = vpack.c.b16 %v1309, %v1307
    %v2326 = vpack.c.b16 %v1312, %v1310
    %v2327 = vpack.c.b16 %v1313, %v1311
    %v2328 = vpack.c.b16 %v1316, %v1314
    %v2329 = vpack.c.b16 %v1317, %v1315
    %v2330 = vpack.c.b16 %v1320, %v1318
    %v2331 = vpack.c.b16 %v1321, %v1319
    %v2332 = vpack.c.b16 %v1324, %v1322
    %v2333 = vpack.c.b16 %v1325, %v1323
    %v2334 = vpack.c.b16 %v1328, %v1326
    %v2335 = vpack.c.b16 %v1329, %v1327
    %v2336 = vpack.c.b16 %v1332, %v1330
    %v2337 = vpack.c.b16 %v1333, %v1331
    %v2338 = vpack.c.b16 %v1336, %v1334
    %v2339 = vpack.c.b16 %v1337, %v1335
    %v2340 = vpack.c.b16 %v1340, %v1338
    %v2341 = vpack.c.b16 %v1341, %v1339
    %v2342 = vpack.c.b16 %v1344, %v1342
    %v2343 = vpack.c.b16 %v1345, %v1343
    %v2344 = vpack.c.b16 %v1348, %v1346
    %v2345 = vpack.c.b16 %v1349, %v1347
    %v2346 = vpack.c.b16 %v1352, %v1350
    %v2347 = vpack.c.b16 %v1353, %v1351
    %v2348 = vpack.c.b16 %v1356, %v1354
    %v2349 = vpack.c.b16 %v1357, %v1355
    %v2350 = vpack.c.b16 %v1360, %v1358
    %v2351 = vpack.c.b16 %v1361, %v1359
    %v2352 = vpack.c.b16 %v1364, %v1362
    %v2353 = vpack.c.b16 %v1365, %v1363
    %v2354 = vpack.c.b16 %v1368, %v1366
    %v2355 = vpack.c.b16 %v1369, %v1367
    %v2356 = vpack.c.b16 %v1372, %v1370
    %v2357 = vpack.c.b16 %v1373, %v1371
    %v2358 = vpack.c.b16 %v1376, %v1374
    %v2359 = vpack.c.b16 %v1377, %v1375
    %v2360 = vpack.c.b16 %v1380, %v1378
    %v2361 = vpack.c.b16 %v1381, %v1379
    %v2362 = vpack.c.b16 %v1384, %v1382
    %v2363 = vpack.c.b16 %v1385, %v1383
    %v2364 = vpack.c.b16 %v1388, %v1386
    %v2365 = vpack.c.b16 %v1389, %v1387
    %v2366 = vpack.c.b16 %v1392, %v1390
    %v2367 = vpack.c.b16 %v1393, %v1391
    %v2368 = vpack.c.b16 %v1396, %v1394
    %v2369 = vpack.c.b16 %v1397, %v1395
    %v2370 = vpack.c.b16 %v1400, %v1398
    %v2371 = vpack.c.b16 %v1401, %v1399
    %v2372 = vpack.c.b16 %v1404, %v1402
    %v2373 = vpack.c.b16 %v1405, %v1403
    %v2374 = vpack.c.b16 %v1408, %v1406
    %v2375 = vpack.c.b16 %v1409, %v1407
    %v2376 = vpack.c.b16 %v1412, %v1410
    %v2377 = vpack.c.b16 %v1413, %v1411
    %v2378 = vpack.c.b16 %v1416, %v1414
    %v2379 = vpack.c.b16 %v1417, %v1415
    %v2380 = vpack.c.b16 %v1420, %v1418
    %v2381 = vpack.c.b16 %v1421, %v1419
    %v2382 = vpack.c.b16 %v1424, %v1422
    %v2383 = vpack.c.b16 %v1425, %v1423
    %v2384 = vpack.c.b16 %v1428, %v1426
    %v2385 = vpack.c.b16 %v1429, %v1427
    %v2386 = vpack.c.b16 %v1432, %v1430
    %v2387 = vpack.c.b16 %v1433, %v1431
    %v2388 = vpack.c.b16 %v1436, %v1434
    %v2389 = vpack.c.b16 %v1437, %v1435
    %v2390 = vpack.c.b16 %v1440, %v1438
    %v2391 = vpack.c.b16 %v1441, %v1439
    %v2392 = vpack.c.b16 %v1444, %v1442
    %v2393 = vpack.c.b16 %v1445, %v1443
    %v2394 = vpack.c.b16 %v1448, %v1446
    %v2395 = vpack.c.b16 %v1449, %v1447
    %v2396 = vpack.c.b16 %v1452, %v1450
    %v2397 = vpack.c.b16 %v1453, %v1451
    %v2398 = vpack.c.b16 %v1456, %v1454
    %v2399 = vpack.c.b16 %v1457, %v1455
    %v2400 = vpack.c.b16 %v1460, %v1458
    %v2401 = vpack.c.b16 %v1461, %v1459
    %v2402 = vpack.c.b16 %v1464, %v1462
    %v2403 = vpack.c.b16 %v1465, %v1463
    %v2404 = vpack.c.b16 %v1468, %v1466
    %v2405 = vpack.c.b16 %v1469, %v1467
    %v2406 = vpack.c.b16 %v1472, %v1470
    %v2407 = vpack.c.b16 %v1473, %v1471
    %v2408 = vpack.c.b16 %v1476, %v1474
    %v2409 = vpack.c.b16 %v1477, %v1475
    %v2410 = vpack.c.b16 %v1480, %v1478
    %v2411 = vpack.c.b16 %v1481, %v1479
    %v2412 = vpack.c.b16 %v1484, %v1482
    %v2413 = vpack.c.b16 %v1485, %v1483
    %v2414 = vpack.c.b16 %v1488, %v1486
    %v2415 = vpack.c.b16 %v1489, %v1487
    %v2416 = vpack.c.b16 %v1492, %v1490
    %v2417 = vpack.c.b16 %v1493, %v1491
    %v2418 = vpack.c.b16 %v1496, %v1494
    %v2419 = vpack.c.b16 %v1497, %v1495
    %v2420 = vpack.c.b16 %v1500, %v1498
    %v2421 = vpack.c.b16 %v1501, %v1499
    %v2422 = vpack.c.b16 %v1504, %v1502
    %v2423 = vpack.c.b16 %v1505, %v1503
    %v2424 = vpack.c.b16 %v1508, %v1506
    %v2425 = vpack.c.b16 %v1509, %v1507
    %v2426 = vpack.c.b16 %v1512, %v1510
    %v2427 = vpack.c.b16 %v1513, %v1511
    %v2428 = vpack.c.b16 %v1516, %v1514
    %v2429 = vpack.c.b16 %v1517, %v1515
    %v2430 = vpack.c.b16 %v1520, %v1518
    %v2431 = vpack.c.b16 %v1521, %v1519
    %v2432 = vpack.c.b16 %v1524, %v1522
    %v2433 = vpack.c.b16 %v1525, %v1523
    %v2434 = vpack.c.b16 %v1528, %v1526
    %v2435 = vpack.c.b16 %v1529, %v1527
    %v2436 = vpack.c.b16 %v1532, %v1530
    %v2437 = vpack.c.b16 %v1533, %v1531
    %v2438 = vpack.c.b16 %v1536, %v1534
    %v2439 = vpack.c.b16 %v1537, %v1535
    %v2440 = vpack.c.b16 %v1540, %v1538
    %v2441 = vpack.c.b16 %v1541, %v1539
    %v2442 = vpack.c.b16 %v1544, %v1542
    %v2443 = vpack.c.b16 %v1545, %v1543
    %v2444 = vpack.c.b16 %v1548, %v1546
    %v2445 = vpack.c.b16 %v1549, %v1547
    %v2446 = vpack.c.b16 %v1552, %v1550
    %v2447 = vpack.c.b16 %v1553, %v1551
    %v2448 = vpack.c.b16 %v1556, %v1554
    %v2449 = vpack.c.b16 %v1557, %v1555
    %v2450 = vpack.c.b16 %v1560, %v1558
    %v2451 = vpack.c.b16 %v1561, %v1559
    %v2452 = vpack.c.b16 %v1564, %v1562
    %v2453 = vpack.c.b16 %v1565, %v1563
    %v2454 = vpack.c.b16 %v1568, %v1566
    %v2455 = vpack.c.b16 %v1569, %v1567
    %v2456 = vpack.c.b16 %v1572, %v1570
    %v2457 = vpack.c.b16 %v1573, %v1571
    %v2458 = vpack.c.b16 %v1576, %v1574
    %v2459 = vpack.c.b16 %v1577, %v1575
    %v2460 = vpack.c.b16 %v1580, %v1578
    %v2461 = vpack.c.b16 %v1581, %v1579
    %v2462 = vpack.c.b16 %v1584, %v1582
    %v2463 = vpack.c.b16 %v1585, %v1583
    %v2464 = vpack.c.b16 %v1588, %v1586
    %v2465 = vpack.c.b16 %v1589, %v1587
    %v2466 = vpack.c.b16 %v1592, %v1590
    %v2467 = vpack.c.b16 %v1593, %v1591
    %v2468 = vpack.c.b16 %v1596, %v1594
    %v2469 = vpack.c.b16 %v1597, %v1595
    %v2470 = vpack.c.b16 %v1600, %v1598
    %v2471 = vpack.c.b16 %v1601, %v1599
    %v2472 = vpack.c.b16 %v1604, %v1602
    %v2473 = vpack.c.b16 %v1605, %v1603
    %v2474 = vpack.c.b16 %v1608, %v1606
    %v2475 = vpack.c.b16 %v1609, %v1607
    %v2476 = vpack.c.b16 %v1612, %v1610
    %v2477 = vpack.c.b16 %v1613, %v1611
    %v2478 = vpack.c.b16 %v1616, %v1614
    %v2479 = vpack.c.b16 %v1617, %v1615
    %v2480 = vpack.c.b16 %v1620, %v1618
    %v2481 = vpack.c.b16 %v1621, %v1619
    %v2482 = vpack.c.b16 %v1624, %v1622
    %v2483 = vpack.c.b16 %v1625, %v1623
    %v2484 = vpack.c.b16 %v1628, %v1626
    %v2485 = vpack.c.b16 %v1629, %v1627
    %v2486 = vpack.c.b16 %v1632, %v1630
    %v2487 = vpack.c.b16 %v1633, %v1631
    %v2488 = vpack.c.b16 %v1636, %v1634
    %v2489 = vpack.c.b16 %v1637, %v1635
    %v2490 = vpack.c.b16 %v1640, %v1638
    %v2491 = vpack.c.b16 %v1641, %v1639
    %v2492 = vpack.c.b16 %v1644, %v1642
    %v2493 = vpack.c.b16 %v1645, %v1643
    %v2494 = vpack.c.b16 %v1648, %v1646
    %v2495 = vpack.c.b16 %v1649, %v1647
    %v2496 = vpack.c.b16 %v1652, %v1650
    %v2497 = vpack.c.b16 %v1653, %v1651
    %v2498 = vpack.c.b16 %v1656, %v1654
    %v2499 = vpack.c.b16 %v1657, %v1655
    %v2500 = vpack.c.b16 %v1660, %v1658
    %v2501 = vpack.c.b16 %v1661, %v1659
    %v2502 = vpack.c.b16 %v1664, %v1662
    %v2503 = vpack.c.b16 %v1665, %v1663
    %v2504 = vpack.c.b16 %v1668, %v1666
    %v2505 = vpack.c.b16 %v1669, %v1667
    %v2506 = vpack.c.b16 %v1672, %v1670
    %v2507 = vpack.c.b16 %v1673, %v1671
    %v2508 = vpack.c.b16 %v1676, %v1674
    %v2509 = vpack.c.b16 %v1677, %v1675
    %v2510 = vpack.c.b16 %v1680, %v1678
    %v2511 = vpack.c.b16 %v1681, %v1679
    %v2512 = vpack.c.b16 %v1684, %v1682
    %v2513 = vpack.c.b16 %v1685, %v1683
    %v2514 = vpack.c.b16 %v1688, %v1686
    %v2515 = vpack.c.b16 %v1689, %v1687
    %v2516 = vpack.c.b16 %v1692, %v1690
    %v2517 = vpack.c.b16 %v1693, %v1691
    %v2518 = vpack.c.b16 %v1696, %v1694
    %v2519 = vpack.c.b16 %v1697, %v1695
    %v2520 = vpack.c.b16 %v1700, %v1698
    %v2521 = vpack.c.b16 %v1701, %v1699
    %v2522 = vpack.c.b16 %v1704, %v1702
    %v2523 = vpack.c.b16 %v1705, %v1703
    %v2524 = vpack.c.b16 %v1708, %v1706
    %v2525 = vpack.c.b16 %v1709, %v1707
    %v2526 = vpack.c.b16 %v1712, %v1710
    %v2527 = vpack.c.b16 %v1713, %v1711
    %v2528 = vpack.c.b16 %v1716, %v1714
    %v2529 = vpack.c.b16 %v1717, %v1715
    %v2530 = vpack.c.b16 %v1720, %v1718
    %v2531 = vpack.c.b16 %v1721, %v1719
    %v2532 = vpack.c.b16 %v1724, %v1722
    %v2533 = vpack.c.b16 %v1725, %v1723
    %v2534 = vpack.c.b16 %v1728, %v1726
    %v2535 = vpack.c.b16 %v1729, %v1727
    %v2536 = vpack.c.b16 %v1732, %v1730
    %v2537 = vpack.c.b16 %v1733, %v1731
    %v2538 = vpack.c.b16 %v1736, %v1734
    %v2539 = vpack.c.b16 %v1737, %v1735
    %v2540 = vpack.c.b16 %v1740, %v1738
    %v2541 = vpack.c.b16 %v1741, %v1739
    %v2542 = vpack.c.b16 %v1744, %v1742
    %v2543 = vpack.c.b16 %v1745, %v1743
    %v2544 = vpack.c.b16 %v1748, %v1746
    %v2545 = vpack.c.b16 %v1749, %v1747
    %v2546 = vpack.c.b16 %v1752, %v1750
    %v2547 = vpack.c.b16 %v1753, %v1751
    %v2548 = vpack.c.b16 %v1756, %v1754
    %v2549 = vpack.c.b16 %v1757, %v1755
    %v2550 = vpack.c.b16 %v1760, %v1758
    %v2551 = vpack.c.b16 %v1761, %v1759
    %v2552 = vpack.c.b16 %v1764, %v1762
    %v2553 = vpack.c.b16 %v1765, %v1763
    %v2554 = vpack.c.b16 %v1768, %v1766
    %v2555 = vpack.c.b16 %v1769, %v1767
    %v2556 = vpack.c.b16 %v1772, %v1770
    %v2557 = vpack.c.b16 %v1773, %v1771
    %v2558 = vpack.c.b16 %v1776, %v1774
    %v2559 = vpack.c.b16 %v1777, %v1775
    %v2560 = vpack.c.b16 %v1780, %v1778
    %v2561 = vpack.c.b16 %v1781, %v1779
    %v2562 = vpack.c.b16 %v1784, %v1782
    %v2563 = vpack.c.b16 %v1785, %v1783
    %v2564 = vpack.c.b16 %v1788, %v1786
    %v2565 = vpack.c.b16 %v1789, %v1787
    %v2566 = vpack.c.b16 %v1792, %v1790
    %v2567 = vpack.c.b16 %v1793, %v1791
    %v2568 = vpack.c.b16 %v1796, %v1794
    %v2569 = vpack.c.b16 %v1797, %v1795
    %v2570 = vpack.c.b16 %v1800, %v1798
    %v2571 = vpack.c.b16 %v1801, %v1799
    %v2572 = vpack.c.b16 %v1804, %v1802
    %v2573 = vpack.c.b16 %v1805, %v1803
    %v2574 = vpack.c.b16 %v1808, %v1806
    %v2575 = vpack.c.b16 %v1809, %v1807
    %v2576 = vpack.c.b16 %v1812, %v1810
    %v2577 = vpack.c.b16 %v1813, %v1811
    %v2578 = vpack.c.b16 %v1816, %v1814
    %v2579 = vpack.c.b16 %v1817, %v1815
    %v2580 = vpack.c.b16 %v1820, %v1818
    %v2581 = vpack.c.b16 %v1821, %v1819
    %v2582 = vpack.c.b16 %v1824, %v1822
    %v2583 = vpack.c.b16 %v1825, %v1823
    %v2584 = vpack.c.b16 %v1828, %v1826
    %v2585 = vpack.c.b16 %v1829, %v1827
    %v2586 = vpack.c.b16 %v1832, %v1830
    %v2587 = vpack.c.b16 %v1833, %v1831
    %v2588 = vpack.c.b16 %v1836, %v1834
    %v2589 = vpack.c.b16 %v1837, %v1835
    %v2590 = vpack.c.b16 %v1840, %v1838
    %v2591 = vpack.c.b16 %v1841, %v1839
    %v2592 = vpack.c.b16 %v1844, %v1842
    %v2593 = vpack.c.b16 %v1845, %v1843
    %v2594 = vpack.c.b16 %v1848, %v1846
    %v2595 = vpack.c.b16 %v1849, %v1847
    %v2596 = vpack.c.b16 %v1852, %v1850
    %v2597 = vpack.c.b16 %v1853, %v1851
    %v2598 = vpack.c.b16 %v1856, %v1854
    %v2599 = vpack.c.b16 %v1857, %v1855
    %v2600 = vpack.c.b16 %v1860, %v1858
    %v2601 = vpack.c.b16 %v1861, %v1859
    %v2602 = vpack.c.b16 %v1864, %v1862
    %v2603 = vpack.c.b16 %v1865, %v1863
    %v2604 = vpack.c.b16 %v1868, %v1866
    %v2605 = vpack.c.b16 %v1869, %v1867
    %v2606 = vpack.c.b16 %v1872, %v1870
    %v2607 = vpack.c.b16 %v1873, %v1871
    %v2608 = vpack.c.b16 %v1876, %v1874
    %v2609 = vpack.c.b16 %v1877, %v1875
    %v2610 = vpack.c.b16 %v1880, %v1878
    %v2611 = vpack.c.b16 %v1881, %v1879
    %v2612 = vpack.c.b16 %v1884, %v1882
    %v2613 = vpack.c.b16 %v1885, %v1883
    %v2614 = vpack.c.b16 %v1888, %v1886
    %v2615 = vpack.c.b16 %v1889, %v1887
    %v2616 = vpack.c.b16 %v1892, %v1890
    %v2617 = vpack.c.b16 %v1893, %v1891
    %v2618 = vpack.c.b16 %v1896, %v1894
    %v2619 = vpack.c.b16 %v1897, %v1895
    %v2620 = vpack.c.b16 %v1900, %v1898
    %v2621 = vpack.c.b16 %v1901, %v1899
    %v2622 = vpack.c.b16 %v1904, %v1902
    %v2623 = vpack.c.b16 %v1905, %v1903
    %v2624 = vpack.c.b16 %v1908, %v1906
    %v2625 = vpack.c.b16 %v1909, %v1907
    %v2626 = vpack.c.b16 %v1912, %v1910
    %v2627 = vpack.c.b16 %v1913, %v1911
    %v2628 = vpack.c.b16 %v1916, %v1914
    %v2629 = vpack.c.b16 %v1917, %v1915
    %v2630 = vpack.c.b16 %v1920, %v1918
    %v2631 = vpack.c.b16 %v1921, %v1919
    %v2632 = vpack.c.b16 %v1924, %v1922
    %v2633 = vpack.c.b16 %v1925, %v1923
    %v2634 = vpack.c.b16 %v1928, %v1926
    %v2635 = vpack.c.b16 %v1929, %v1927
    %v2636 = vpack.c.b16 %v1932, %v1930
    %v2637 = vpack.c.b16 %v1933, %v1931
    %v2638 = vpack.c.b16 %v1936, %v1934
    %v2639 = vpack.c.b16 %v1937, %v1935
    %v2640 = vpack.c.b16 %v1940, %v1938
    %v2641 = vpack.c.b16 %v1941, %v1939
    %v2642 = vpack.c.b16 %v1944, %v1942
    %v2643 = vpack.c.b16 %v1945, %v1943
    %v2644 = vpack.c.b16 %v1948, %v1946
    %v2645 = vpack.c.b16 %v1949, %v1947
    %v2646 = vpack.c.b16 %v1952, %v1950
    %v2647 = vpack.c.b16 %v1953, %v1951
    %v2648 = vpack.c.b16 %v1956, %v1954
    %v2649 = vpack.c.b16 %v1957, %v1955
    %v2650 = vpack.c.b16 %v1960, %v1958
    %v2651 = vpack.c.b16 %v1961, %v1959
    %v2652 = vpack.c.b16 %v1964, %v1962
    %v2653 = vpack.c.b16 %v1965, %v1963
    %v2654 = vpack.c.b16 %v1968, %v1966
    %v2655 = vpack.c.b16 %v1969, %v1967
    %v2656 = vpack.c.b16 %v1972, %v1970
    %v2657 = vpack.c.b16 %v1973, %v1971
    %v2658 = vpack.c.b16 %v1976, %v1974
    %v2659 = vpack.c.b16 %v1977, %v1975
    %v2660 = vpack.c.b16 %v1980, %v1978
    %v2661 = vpack.c.b16 %v1981, %v1979
    %v2662 = vpack.c.b16 %v1984, %v1982
    %v2663 = vpack.c.b16 %v1985, %v1983
    %v2664 = vpack.c.b16 %v1988, %v1986
    %v2665 = vpack.c.b16 %v1989, %v1987
    %v2666 = vpack.c.b16 %v1992, %v1990
    %v2667 = vpack.c.b16 %v1993, %v1991
    %v2668 = vpack.c.b16 %v1996, %v1994
    %v2669 = vpack.c.b16 %v1997, %v1995
    %v2670 = vpack.c.b16 %v2000, %v1998
    %v2671 = vpack.c.b16 %v2001, %v1999
    %v2672 = vpack.c.b16 %v2004, %v2002
    %v2673 = vpack.c.b16 %v2005, %v2003
    %v2674 = vpack.c.b16 %v2008, %v2006
    %v2675 = vpack.c.b16 %v2009, %v2007
    %v2676 = vpack.c.b16 %v2012, %v2010
    %v2677 = vpack.c.b16 %v2013, %v2011
    %v2678 = vpack.c.b16 %v2016, %v2014
    %v2679 = vpack.c.b16 %v2017, %v2015
    %v2680 = vpack.c.b16 %v2020, %v2018
    %v2681 = vpack.c.b16 %v2021, %v2019
    %v2682 = vpack.c.b16 %v2024, %v2022
    %v2683 = vpack.c.b16 %v2025, %v2023
    %v2684 = vpack.c.b16 %v2028, %v2026
    %v2685 = vpack.c.b16 %v2029, %v2027
    %v2686 = vpack.c.b16 %v2032, %v2030
    %v2687 = vpack.c.b16 %v2033, %v2031
    %v2688 = vpack.c.b16 %v2036, %v2034
    %v2689 = vpack.c.b16 %v2037, %v2035
    %v2690 = vpack.c.b16 %v2040, %v2038
    %v2691 = vpack.c.b16 %v2041, %v2039
    %v2692 = vpack.c.b16 %v2044, %v2042
    %v2693 = vpack.c.b16 %v2045, %v2043
    %v2694 = vpack.c.b16 %v2048, %v2046
    %v2695 = vpack.c.b16 %v2049, %v2047
    %v2696 = vpack.c.b16 %v2052, %v2050
    %v2697 = vpack.c.b16 %v2053, %v2051
    %v2698 = vpack.c.b16 %v2056, %v2054
    %v2699 = vpack.c.b16 %v2057, %v2055
    %v2700 = vpack.c.b16 %v2060, %v2058
    %v2701 = vpack.c.b16 %v2061, %v2059
    %v2702 = vpack.c.b16 %v2064, %v2062
    %v2703 = vpack.c.b16 %v2065, %v2063
    %v2704 = vpack.c.b16 %v2068, %v2066
    %v2705 = vpack.c.b16 %v2069, %v2067
    %v2706 = vpack.c.b16 %v2072, %v2070
    %v2707 = vpack.c.b16 %v2073, %v2071
    %v2708 = vpack.c.b16 %v2076, %v2074
    %v2709 = vpack.c.b16 %v2077, %v2075
    %v2710 = vpack.c.b16 %v2080, %v2078
    %v2711 = vpack.c.b16 %v2081, %v2079
    %v2712 = vpack.c.b16 %v2084, %v2082
    %v2713 = vpack.c.b16 %v2085, %v2083
    %v2714 = vpack.c.b16 %v2088, %v2086
    %v2715 = vpack.c.b16 %v2089, %v2087
    %v2716 = vpack.c.b16 %v2092, %v2090
    %v2717 = vpack.c.b16 %v2093, %v2091
    %v2718 = vpack.c.b16 %v2096, %v2094
    %v2719 = vpack.c.b16 %v2097, %v2095
    %v2720 = vpack.c.b16 %v2100, %v2098
    %v2721 = vpack.c.b16 %v2101, %v2099
    %v2722 = vpack.c.b16 %v2104, %v2102
    %v2723 = vpack.c.b16 %v2105, %v2103
    %v2724 = vpack.c.b16 %v2108, %v2106
    %v2725 = vpack.c.b16 %v2109, %v2107
    %v2726 = vpack.c.b16 %v2112, %v2110
    %v2727 = vpack.c.b16 %v2113, %v2111
    %v2728 = vpack.c.b16 %v2116, %v2114
    %v2729 = vpack.c.b16 %v2117, %v2115
    %v2730 = vpack.c.b16 %v2120, %v2118
    %v2731 = vpack.c.b16 %v2121, %v2119
    %v2732 = vpack.c.b16 %v2124, %v2122
    %v2733 = vpack.c.b16 %v2125, %v2123
    %v2734 = vpack.c.b16 %v2128, %v2126
    %v2735 = vpack.c.b16 %v2129, %v2127
    %v2736 = vpack.c.b16 %v2132, %v2130
    %v2737 = vpack.c.b16 %v2133, %v2131
    %v2738 = vpack.c.b16 %v2136, %v2134
    %v2739 = vpack.c.b16 %v2137, %v2135
    %v2740 = vpack.c.b16 %v2140, %v2138
    %v2741 = vpack.c.b16 %v2141, %v2139
    %v2742 = vpack.c.b16 %v2144, %v2142
    %v2743 = vpack.c.b16 %v2145, %v2143
    %v2744 = vpack.c.b16 %v2148, %v2146
    %v2745 = vpack.c.b16 %v2149, %v2147
    %v2746 = vpack.c.b16 %v2152, %v2150
    %v2747 = vpack.c.b16 %v2153, %v2151
    %v2748 = vpack.c.b16 %v2156, %v2154
    %v2749 = vpack.c.b16 %v2157, %v2155
    %v2750 = vpack.c.b16 %v2160, %v2158
    %v2751 = vpack.c.b16 %v2161, %v2159
    %v2752 = vpack.c.b16 %v2164, %v2162
    %v2753 = vpack.c.b16 %v2165, %v2163
    %v2754 = vpack.c.b16 %v2168, %v2166
    %v2755 = vpack.c.b16 %v2169, %v2167
    %v2756 = vpack.c.b16 %v2172, %v2170
    %v2757 = vpack.c.b16 %v2173, %v2171
    %v2758 = vpack.c.b16 %v2176, %v2174
    %v2759 = vpack.c.b16 %v2177, %v2175
    %v2760 = vpack.c.b16 %v2180, %v2178
    %v2761 = vpack.c.b16 %v2181, %v2179
    %v2762 = vpack.c.b16 %v2184, %v2182
    %v2763 = vpack.c.b16 %v2185, %v2183
    %v2764 = vpack.c.b16 %v2188, %v2186
    %v2765 = vpack.c.b16 %v2189, %v2187
    %v2766 = vpack.c.b16 %v2192, %v2190
    %v2767 = vpack.c.b16 %v2193, %v2191
    %v2768 = vpack.c.b16 %v2196, %v2194
    %v2769 = vpack.c.b16 %v2197, %v2195
    %v2770 = vpack.c.b16 %v2200, %v2198
    %v2771 = vpack.c.b16 %v2201, %v2199
    %v2772 = vpack.c.b16 %v2204, %v2202
    %v2773 = vpack.c.b16 %v2205, %v2203
    %v2774 = vpack.c.b16 %v2208, %v2206
    %v2775 = vpack.c.b16 %v2209, %v2207
    %v2776 = vpack.c.b16 %v2212, %v2210
    %v2777 = vpack.c.b16 %v2213, %v2211
    %v2778 = vpack.c.b16 %v2216, %v2214
    %v2779 = vpack.c.b16 %v2217, %v2215
    %v2780 = vpack.c.b16 %v2220, %v2218
    %v2781 = vpack.c.b16 %v2221, %v2219
    %v2782 = vpack.c.b16 %v2224, %v2222
    %v2783 = vpack.c.b16 %v2225, %v2223
    %v2784 = vpack.c.b16 %v2228, %v2226
    %v2785 = vpack.c.b16 %v2229, %v2227
    %v2786 = vpack.c.b16 %v2232, %v2230
    %v2787 = vpack.c.b16 %v2233, %v2231
    %v2788 = vpack.c.b16 %v2236, %v2234
    %v2789 = vpack.c.b16 %v2237, %v2235
    %v2790 = vpack.c.b16 %v2240, %v2238
    %v2791 = vpack.c.b16 %v2241, %v2239
    %v2792 = vpack.c.b16 %v2244, %v2242
    %v2793 = vpack.c.b16 %v2245, %v2243
    %v2794 = vpack.c.b16 %v2248, %v2246
    %v2795 = vpack.c.b16 %v2249, %v2247
    %v2796 = vpack.c.b16 %v2252, %v2250
    %v2797 = vpack.c.b16 %v2253, %v2251
    %v2798 = vpack.c.b16 %v2256, %v2254
    %v2799 = vpack.c.b16 %v2257, %v2255
    %v2800 = vpack.c.b16 %v2260, %v2258
    %v2801 = vpack.c.b16 %v2261, %v2259
    %v2802 = vpack.c.b16 %v2264, %v2262
    %v2803 = vpack.c.b16 %v2265, %v2263
    %v2804 = vpack.c.b16 %v2268, %v2266
    %v2805 = vpack.c.b16 %v2269, %v2267
    %v2806 = vpack.c.b16 %v2272, %v2270
    %v2807 = vpack.c.b16 %v2273, %v2271
    %v2808 = vpack.c.b16 %v2276, %v2274
    %v2809 = vpack.c.b16 %v2277, %v2275
    %v2810 = vpack.c.b16 %v2280, %v2278
    %v2811 = vpack.c.b16 %v2281, %v2279
    %v2812 = vpack.c.b16 %v2284, %v2282
    %v2813 = vpack.c.b16 %v2285, %v2283
    %v2814 = vpack.c.b16 %v2288, %v2286
    %v2815 = vpack.c.b16 %v2289, %v2287
    %v2816 = vpack.c.b16 %v2292, %v2290
    %v2817 = vpack.c.b16 %v2293, %v2291
    %v2818 = vpack.c.b16 %v2296, %v2294
    %v2819 = vpack.c.b16 %v2297, %v2295
    %v2820 = vpack.c.b16 %v2300, %v2298
    %v2821 = vpack.c.b16 %v2301, %v2299
    %v2822 = vpack.c.b16 %v2304, %v2302
    %v2823 = vpack.c.b16 %v2305, %v2303
    %v2824 = vpack.c.b16 %v2308, %v2306
    %v2825 = vpack.c.b16 %v2309, %v2307
    %v2826 = vpack.c.b16 %v2312, %v2310
    %v2827 = vpack.c.b16 %v2313, %v2311
    %v2828 = vpack.c.b16 %v2316, %v2314
    %v2829 = vpack.c.b16 %v2317, %v2315
    %3342 = vmatprep.subr.bf16.mxu0 %v2319
    %3343 = vmatpush1.bf16.msra.mxu0 %v2318
    %3344 = vmatprep.subr.bf16.mxu0 %v2321
    %3345 = vmatpush1.bf16.msra.mxu0 %v2320
    %3346 = vmatprep.subr.bf16.mxu0 %v2323
    %3347 = vmatpush1.bf16.msra.mxu0 %v2322
    %3348 = vmatprep.subr.bf16.mxu0 %v2325
    %3349 = vmatpush1.bf16.msra.mxu0 %v2324
    %3350 = vmatprep.subr.bf16.mxu0 %v2327
    %3351 = vmatpush1.bf16.msra.mxu0 %v2326
    %3352 = vmatprep.subr.bf16.mxu0 %v2329
    %3353 = vmatpush1.bf16.msra.mxu0 %v2328
    %3354 = vmatprep.subr.bf16.mxu0 %v2331
    %3355 = vmatpush1.bf16.msra.mxu0 %v2330
    %3356 = vmatprep.subr.bf16.mxu0 %v2333
    %3357 = vmatpush1.bf16.msra.mxu0 %v2332
    %3358 = vmatprep.subr.bf16.mxu0 %v2335
    %3359 = vmatpush1.bf16.msra.mxu0 %v2334
    %3360 = vmatprep.subr.bf16.mxu0 %v2337
    %3361 = vmatpush1.bf16.msra.mxu0 %v2336
    %3362 = vmatprep.subr.bf16.mxu0 %v2339
    %3363 = vmatpush1.bf16.msra.mxu0 %v2338
    %3364 = vmatprep.subr.bf16.mxu0 %v2341
    %3365 = vmatpush1.bf16.msra.mxu0 %v2340
    %3366 = vmatprep.subr.bf16.mxu0 %v2343
    %3367 = vmatpush1.bf16.msra.mxu0 %v2342
    %3368 = vmatprep.subr.bf16.mxu0 %v2345
    %3369 = vmatpush1.bf16.msra.mxu0 %v2344
    %3370 = vmatprep.subr.bf16.mxu0 %v2347
    %3371 = vmatpush1.bf16.msra.mxu0 %v2346
    %3372 = vmatprep.subr.bf16.mxu0 %v2349
    %3373 = vmatpush1.bf16.msra.mxu0 %v2348
    %3374 = vmatprep.mubr.bf16.mxu0 %v591
    %3375 = vmatmul.mubr.bf16.gmra.mrb[0].mxu0 %v577
    %v3376 = vpop.f32.mrb[0].mxu0
    %v3377 = vadd.f32 %v543, %v3376
    %v3378 = vpop.f32.mrb[0].mxu0
    %v3379 = vadd.f32 %v547, %v3378
    %v3380 = vpop.f32.mrb[0].mxu0
    %v3381 = vpop.f32.mrb[0].mxu0
    %3382 = vdwg.mxu0
    %3383 = vmatprep.subr.bf16.mxu0 %v2351
    %3384 = vmatpush1.bf16.msra.mxu0 %v2350
    %3385 = vmatprep.subr.bf16.mxu0 %v2353
    %3386 = vmatpush1.bf16.msra.mxu0 %v2352
    %3387 = vmatprep.subr.bf16.mxu0 %v2355
    %3388 = vmatpush1.bf16.msra.mxu0 %v2354
    %3389 = vmatprep.subr.bf16.mxu0 %v2357
    %3390 = vmatpush1.bf16.msra.mxu0 %v2356
    %3391 = vmatprep.subr.bf16.mxu0 %v2359
    %3392 = vmatpush1.bf16.msra.mxu0 %v2358
    %3393 = vmatprep.subr.bf16.mxu0 %v2361
    %3394 = vmatpush1.bf16.msra.mxu0 %v2360
    %3395 = vmatprep.subr.bf16.mxu0 %v2363
    %3396 = vmatpush1.bf16.msra.mxu0 %v2362
    %3397 = vmatprep.subr.bf16.mxu0 %v2365
    %3398 = vmatpush1.bf16.msra.mxu0 %v2364
    %3399 = vmatprep.subr.bf16.mxu0 %v2367
    %3400 = vmatpush1.bf16.msra.mxu0 %v2366
    %3401 = vmatprep.subr.bf16.mxu0 %v2369
    %3402 = vmatpush1.bf16.msra.mxu0 %v2368
    %3403 = vmatprep.subr.bf16.mxu0 %v2371
    %3404 = vmatpush1.bf16.msra.mxu0 %v2370
    %3405 = vmatprep.subr.bf16.mxu0 %v2373
    %3406 = vmatpush1.bf16.msra.mxu0 %v2372
    %3407 = vmatprep.subr.bf16.mxu0 %v2375
    %3408 = vmatpush1.bf16.msra.mxu0 %v2374
    %3409 = vmatprep.subr.bf16.mxu0 %v2377
    %3410 = vmatpush1.bf16.msra.mxu0 %v2376
    %3411 = vmatprep.subr.bf16.mxu0 %v2379
    %3412 = vmatpush1.bf16.msra.mxu0 %v2378
    %3413 = vmatprep.subr.bf16.mxu0 %v2381
    %3414 = vmatpush1.bf16.msra.mxu0 %v2380
    %3415 = vmatprep.mubr.bf16.mxu0 %v601
    %3416 = vmatmul.mubr.bf16.gmra.mrb[0].mxu0 %v599
    %v3417 = vpop.f32.mrb[0].mxu0
    %v3418 = vadd.f32 %v3377, %v3417
    %v3419 = vpop.f32.mrb[0].mxu0
    %v3420 = vadd.f32 %v3379, %v3419
    %v3421 = vpop.f32.mrb[0].mxu0
    %v3422 = vpop.f32.mrb[0].mxu0
    %3423 = vdwg.mxu0
    %3424 = vmatprep.subr.bf16.mxu0 %v2383
    %3425 = vmatpush1.bf16.msra.mxu0 %v2382
    %3426 = vmatprep.subr.bf16.mxu0 %v2385
    %3427 = vmatpush1.bf16.msra.mxu0 %v2384
    %3428 = vmatprep.subr.bf16.mxu0 %v2387
    %3429 = vmatpush1.bf16.msra.mxu0 %v2386
    %3430 = vmatprep.subr.bf16.mxu0 %v2389
    %3431 = vmatpush1.bf16.msra.mxu0 %v2388
    %3432 = vmatprep.subr.bf16.mxu0 %v2391
    %3433 = vmatpush1.bf16.msra.mxu0 %v2390
    %3434 = vmatprep.subr.bf16.mxu0 %v2393
    %3435 = vmatpush1.bf16.msra.mxu0 %v2392
    %3436 = vmatprep.subr.bf16.mxu0 %v2395
    %3437 = vmatpush1.bf16.msra.mxu0 %v2394
    %3438 = vmatprep.subr.bf16.mxu0 %v2397
    %3439 = vmatpush1.bf16.msra.mxu0 %v2396
    %3440 = vmatprep.subr.bf16.mxu0 %v2399
    %3441 = vmatpush1.bf16.msra.mxu0 %v2398
    %3442 = vmatprep.subr.bf16.mxu0 %v2401
    %3443 = vmatpush1.bf16.msra.mxu0 %v2400
    %3444 = vmatprep.subr.bf16.mxu0 %v2403
    %3445 = vmatpush1.bf16.msra.mxu0 %v2402
    %3446 = vmatprep.subr.bf16.mxu0 %v2405
    %3447 = vmatpush1.bf16.msra.mxu0 %v2404
    %3448 = vmatprep.subr.bf16.mxu0 %v2407
    %3449 = vmatpush1.bf16.msra.mxu0 %v2406
    %3450 = vmatprep.subr.bf16.mxu0 %v2409
    %3451 = vmatpush1.bf16.msra.mxu0 %v2408
    %3452 = vmatprep.subr.bf16.mxu0 %v2411
    %3453 = vmatpush1.bf16.msra.mxu0 %v2410
    %3454 = vmatprep.subr.bf16.mxu0 %v2413
    %3455 = vmatpush1.bf16.msra.mxu0 %v2412
    %3456 = vmatprep.mubr.bf16.mxu0 %v598
    %3457 = vmatmul.mubr.bf16.gmra.mrb[0].mxu0 %v584
    %v3458 = vpop.f32.mrb[0].mxu0
    %v3459 = vadd.f32 %v3418, %v3458
    %v3460 = vpop.f32.mrb[0].mxu0
    %v3461 = vadd.f32 %v3420, %v3460
    %v3462 = vpop.f32.mrb[0].mxu0
    %v3463 = vpop.f32.mrb[0].mxu0
    %3464 = vdwg.mxu0
    %3465 = vmatprep.subr.bf16.mxu0 %v2415
    %3466 = vmatpush1.bf16.msra.mxu0 %v2414
    %3467 = vmatprep.subr.bf16.mxu0 %v2417
    %3468 = vmatpush1.bf16.msra.mxu0 %v2416
    %3469 = vmatprep.subr.bf16.mxu0 %v2419
    %3470 = vmatpush1.bf16.msra.mxu0 %v2418
    %3471 = vmatprep.subr.bf16.mxu0 %v2421
    %3472 = vmatpush1.bf16.msra.mxu0 %v2420
    %3473 = vmatprep.subr.bf16.mxu0 %v2423
    %3474 = vmatpush1.bf16.msra.mxu0 %v2422
    %3475 = vmatprep.subr.bf16.mxu0 %v2425
    %3476 = vmatpush1.bf16.msra.mxu0 %v2424
    %3477 = vmatprep.subr.bf16.mxu0 %v2427
    %3478 = vmatpush1.bf16.msra.mxu0 %v2426
    %3479 = vmatprep.subr.bf16.mxu0 %v2429
    %3480 = vmatpush1.bf16.msra.mxu0 %v2428
    %3481 = vmatprep.subr.bf16.mxu0 %v2431
    %3482 = vmatpush1.bf16.msra.mxu0 %v2430
    %3483 = vmatprep.subr.bf16.mxu0 %v2433
    %3484 = vmatpush1.bf16.msra.mxu0 %v2432
    %3485 = vmatprep.subr.bf16.mxu0 %v2435
    %3486 = vmatpush1.bf16.msra.mxu0 %v2434
    %3487 = vmatprep.subr.bf16.mxu0 %v2437
    %3488 = vmatpush1.bf16.msra.mxu0 %v2436
    %3489 = vmatprep.subr.bf16.mxu0 %v2439
    %3490 = vmatpush1.bf16.msra.mxu0 %v2438
    %3491 = vmatprep.subr.bf16.mxu0 %v2441
    %3492 = vmatpush1.bf16.msra.mxu0 %v2440
    %3493 = vmatprep.subr.bf16.mxu0 %v2443
    %3494 = vmatpush1.bf16.msra.mxu0 %v2442
    %3495 = vmatprep.subr.bf16.mxu0 %v2445
    %3496 = vmatpush1.bf16.msra.mxu0 %v2444
    %3497 = vmatprep.mubr.bf16.mxu0 %v602
    %3498 = vmatmul.mubr.bf16.gmra.mrb[0].mxu0 %v600
    %v3499 = vpop.f32.mrb[0].mxu0
    %v3500 = vadd.f32 %v3459, %v3499
    %v3501 = vpop.f32.mrb[0].mxu0
    %v3502 = vadd.f32 %v3461, %v3501
    %v3503 = vpop.f32.mrb[0].mxu0
    %v3504 = vpop.f32.mrb[0].mxu0
    %3505 = vdwg.mxu0
    %3506 = vmatprep.subr.bf16.mxu0 %v2447
    %3507 = vmatpush1.bf16.msra.mxu0 %v2446
    %3508 = vmatprep.subr.bf16.mxu0 %v2449
    %3509 = vmatpush1.bf16.msra.mxu0 %v2448
    %3510 = vmatprep.subr.bf16.mxu0 %v2451
    %3511 = vmatpush1.bf16.msra.mxu0 %v2450
    %3512 = vmatprep.subr.bf16.mxu0 %v2453
    %3513 = vmatpush1.bf16.msra.mxu0 %v2452
    %3514 = vmatprep.subr.bf16.mxu0 %v2455
    %3515 = vmatpush1.bf16.msra.mxu0 %v2454
    %3516 = vmatprep.subr.bf16.mxu0 %v2457
    %3517 = vmatpush1.bf16.msra.mxu0 %v2456
    %3518 = vmatprep.subr.bf16.mxu0 %v2459
    %3519 = vmatpush1.bf16.msra.mxu0 %v2458
    %3520 = vmatprep.subr.bf16.mxu0 %v2461
    %3521 = vmatpush1.bf16.msra.mxu0 %v2460
    %3522 = vmatprep.subr.bf16.mxu0 %v2463
    %3523 = vmatpush1.bf16.msra.mxu0 %v2462
    %3524 = vmatprep.subr.bf16.mxu0 %v2465
    %3525 = vmatpush1.bf16.msra.mxu0 %v2464
    %3526 = vmatprep.subr.bf16.mxu0 %v2467
    %3527 = vmatpush1.bf16.msra.mxu0 %v2466
    %3528 = vmatprep.subr.bf16.mxu0 %v2469
    %3529 = vmatpush1.bf16.msra.mxu0 %v2468
    %3530 = vmatprep.subr.bf16.mxu0 %v2471
    %3531 = vmatpush1.bf16.msra.mxu0 %v2470
    %3532 = vmatprep.subr.bf16.mxu0 %v2473
    %3533 = vmatpush1.bf16.msra.mxu0 %v2472
    %3534 = vmatprep.subr.bf16.mxu0 %v2475
    %3535 = vmatpush1.bf16.msra.mxu0 %v2474
    %3536 = vmatprep.subr.bf16.mxu0 %v2477
    %3537 = vmatpush1.bf16.msra.mxu0 %v2476
    %3538 = vmatprep.mubr.bf16.mxu0 %v640
    %3539 = vmatmul.mubr.bf16.gmra.mrb[0].mxu0 %v626
    %v3540 = vpop.f32.mrb[0].mxu0
    %v3541 = vadd.f32 %v3500, %v3540
    %v3542 = vpop.f32.mrb[0].mxu0
    %v3543 = vadd.f32 %v3502, %v3542
    %v3544 = vpop.f32.mrb[0].mxu0
    %v3545 = vpop.f32.mrb[0].mxu0
    %3546 = vdwg.mxu0
    %3547 = vmatprep.subr.bf16.mxu0 %v2479
    %3548 = vmatpush1.bf16.msra.mxu0 %v2478
    %3549 = vmatprep.subr.bf16.mxu0 %v2481
    %3550 = vmatpush1.bf16.msra.mxu0 %v2480
    %3551 = vmatprep.subr.bf16.mxu0 %v2483
    %3552 = vmatpush1.bf16.msra.mxu0 %v2482
    %3553 = vmatprep.subr.bf16.mxu0 %v2485
    %3554 = vmatpush1.bf16.msra.mxu0 %v2484
    %3555 = vmatprep.subr.bf16.mxu0 %v2487
    %3556 = vmatpush1.bf16.msra.mxu0 %v2486
    %3557 = vmatprep.subr.bf16.mxu0 %v2489
    %3558 = vmatpush1.bf16.msra.mxu0 %v2488
    %3559 = vmatprep.subr.bf16.mxu0 %v2491
    %3560 = vmatpush1.bf16.msra.mxu0 %v2490
    %3561 = vmatprep.subr.bf16.mxu0 %v2493
    %3562 = vmatpush1.bf16.msra.mxu0 %v2492
    %3563 = vmatprep.subr.bf16.mxu0 %v2495
    %3564 = vmatpush1.bf16.msra.mxu0 %v2494
    %3565 = vmatprep.subr.bf16.mxu0 %v2497
    %3566 = vmatpush1.bf16.msra.mxu0 %v2496
    %3567 = vmatprep.subr.bf16.mxu0 %v2499
    %3568 = vmatpush1.bf16.msra.mxu0 %v2498
    %3569 = vmatprep.subr.bf16.mxu0 %v2501
    %3570 = vmatpush1.bf16.msra.mxu0 %v2500
    %3571 = vmatprep.subr.bf16.mxu0 %v2503
    %3572 = vmatpush1.bf16.msra.mxu0 %v2502
    %3573 = vmatprep.subr.bf16.mxu0 %v2505
    %3574 = vmatpush1.bf16.msra.mxu0 %v2504
    %3575 = vmatprep.subr.bf16.mxu0 %v2507
    %3576 = vmatpush1.bf16.msra.mxu0 %v2506
    %3577 = vmatprep.subr.bf16.mxu0 %v2509
    %3578 = vmatpush1.bf16.msra.mxu0 %v2508
    %3579 = vmatprep.mubr.bf16.mxu0 %v650
    %3580 = vmatmul.mubr.bf16.gmra.mrb[0].mxu0 %v648
    %v3581 = vpop.f32.mrb[0].mxu0
    %v3582 = vadd.f32 %v3541, %v3581
    %v3583 = vpop.f32.mrb[0].mxu0
    %v3584 = vadd.f32 %v3543, %v3583
    %v3585 = vpop.f32.mrb[0].mxu0
    %v3586 = vpop.f32.mrb[0].mxu0
    %3587 = vdwg.mxu0
    %3588 = vmatprep.subr.bf16.mxu0 %v2511
    %3589 = vmatpush1.bf16.msra.mxu0 %v2510
    %3590 = vmatprep.subr.bf16.mxu0 %v2513
    %3591 = vmatpush1.bf16.msra.mxu0 %v2512
    %3592 = vmatprep.subr.bf16.mxu0 %v2515
    %3593 = vmatpush1.bf16.msra.mxu0 %v2514
    %3594 = vmatprep.subr.bf16.mxu0 %v2517
    %3595 = vmatpush1.bf16.msra.mxu0 %v2516
    %3596 = vmatprep.subr.bf16.mxu0 %v2519
    %3597 = vmatpush1.bf16.msra.mxu0 %v2518
    %3598 = vmatprep.subr.bf16.mxu0 %v2521
    %3599 = vmatpush1.bf16.msra.mxu0 %v2520
    %3600 = vmatprep.subr.bf16.mxu0 %v2523
    %3601 = vmatpush1.bf16.msra.mxu0 %v2522
    %3602 = vmatprep.subr.bf16.mxu0 %v2525
    %3603 = vmatpush1.bf16.msra.mxu0 %v2524
    %3604 = vmatprep.subr.bf16.mxu0 %v2527
    %3605 = vmatpush1.bf16.msra.mxu0 %v2526
    %3606 = vmatprep.subr.bf16.mxu0 %v2529
    %3607 = vmatpush1.bf16.msra.mxu0 %v2528
    %3608 = vmatprep.subr.bf16.mxu0 %v2531
    %3609 = vmatpush1.bf16.msra.mxu0 %v2530
    %3610 = vmatprep.subr.bf16.mxu0 %v2533
    %3611 = vmatpush1.bf16.msra.mxu0 %v2532
    %3612 = vmatprep.subr.bf16.mxu0 %v2535
    %3613 = vmatpush1.bf16.msra.mxu0 %v2534
    %3614 = vmatprep.subr.bf16.mxu0 %v2537
    %3615 = vmatpush1.bf16.msra.mxu0 %v2536
    %3616 = vmatprep.subr.bf16.mxu0 %v2539
    %3617 = vmatpush1.bf16.msra.mxu0 %v2538
    %3618 = vmatprep.subr.bf16.mxu0 %v2541
    %3619 = vmatpush1.bf16.msra.mxu0 %v2540
    %3620 = vmatprep.mubr.bf16.mxu0 %v647
    %3621 = vmatmul.mubr.bf16.gmra.mrb[0].mxu0 %v633
    %v3622 = vpop.f32.mrb[0].mxu0
    %v3623 = vadd.f32 %v3582, %v3622
    %v3624 = vpop.f32.mrb[0].mxu0
    %v3625 = vadd.f32 %v3584, %v3624
    %v3626 = vpop.f32.mrb[0].mxu0
    %v3627 = vpop.f32.mrb[0].mxu0
    %3628 = vdwg.mxu0
    %3629 = vmatprep.subr.bf16.mxu0 %v2543
    %3630 = vmatpush1.bf16.msra.mxu0 %v2542
    %3631 = vmatprep.subr.bf16.mxu0 %v2545
    %3632 = vmatpush1.bf16.msra.mxu0 %v2544
    %3633 = vmatprep.subr.bf16.mxu0 %v2547
    %3634 = vmatpush1.bf16.msra.mxu0 %v2546
    %3635 = vmatprep.subr.bf16.mxu0 %v2549
    %3636 = vmatpush1.bf16.msra.mxu0 %v2548
    %3637 = vmatprep.subr.bf16.mxu0 %v2551
    %3638 = vmatpush1.bf16.msra.mxu0 %v2550
    %3639 = vmatprep.subr.bf16.mxu0 %v2553
    %3640 = vmatpush1.bf16.msra.mxu0 %v2552
    %3641 = vmatprep.subr.bf16.mxu0 %v2555
    %3642 = vmatpush1.bf16.msra.mxu0 %v2554
    %3643 = vmatprep.subr.bf16.mxu0 %v2557
    %3644 = vmatpush1.bf16.msra.mxu0 %v2556
    %3645 = vmatprep.subr.bf16.mxu0 %v2559
    %3646 = vmatpush1.bf16.msra.mxu0 %v2558
    %3647 = vmatprep.subr.bf16.mxu0 %v2561
    %3648 = vmatpush1.bf16.msra.mxu0 %v2560
    %3649 = vmatprep.subr.bf16.mxu0 %v2563
    %3650 = vmatpush1.bf16.msra.mxu0 %v2562
    %3651 = vmatprep.subr.bf16.mxu0 %v2565
    %3652 = vmatpush1.bf16.msra.mxu0 %v2564
    %3653 = vmatprep.subr.bf16.mxu0 %v2567
    %3654 = vmatpush1.bf16.msra.mxu0 %v2566
    %3655 = vmatprep.subr.bf16.mxu0 %v2569
    %3656 = vmatpush1.bf16.msra.mxu0 %v2568
    %3657 = vmatprep.subr.bf16.mxu0 %v2571
    %3658 = vmatpush1.bf16.msra.mxu0 %v2570
    %3659 = vmatprep.subr.bf16.mxu0 %v2573
    %3660 = vmatpush1.bf16.msra.mxu0 %v2572
    %3661 = vmatprep.mubr.bf16.mxu0 %v651
    %3662 = vmatmul.mubr.bf16.gmra.mrb[0].mxu0 %v649
    %v3663 = vpop.f32.mrb[0].mxu0
    %v3664 = vadd.f32 %v3623, %v3663
    %v3665 = vpop.f32.mrb[0].mxu0
    %v3666 = vadd.f32 %v3625, %v3665
    %v3667 = vpop.f32.mrb[0].mxu0
    %v3668 = vpop.f32.mrb[0].mxu0
    %3669 = vdwg.mxu0
    %3670 = vmatprep.subr.bf16.mxu0 %v2575
    %3671 = vmatpush1.bf16.msra.mxu0 %v2574
    %3672 = vmatprep.subr.bf16.mxu0 %v2577
    %3673 = vmatpush1.bf16.msra.mxu0 %v2576
    %3674 = vmatprep.subr.bf16.mxu0 %v2579
    %3675 = vmatpush1.bf16.msra.mxu0 %v2578
    %3676 = vmatprep.subr.bf16.mxu0 %v2581
    %3677 = vmatpush1.bf16.msra.mxu0 %v2580
    %3678 = vmatprep.subr.bf16.mxu0 %v2583
    %3679 = vmatpush1.bf16.msra.mxu0 %v2582
    %3680 = vmatprep.subr.bf16.mxu0 %v2585
    %3681 = vmatpush1.bf16.msra.mxu0 %v2584
    %3682 = vmatprep.subr.bf16.mxu0 %v2587
    %3683 = vmatpush1.bf16.msra.mxu0 %v2586
    %3684 = vmatprep.subr.bf16.mxu0 %v2589
    %3685 = vmatpush1.bf16.msra.mxu0 %v2588
    %3686 = vmatprep.subr.bf16.mxu0 %v2591
    %3687 = vmatpush1.bf16.msra.mxu0 %v2590
    %3688 = vmatprep.subr.bf16.mxu0 %v2593
    %3689 = vmatpush1.bf16.msra.mxu0 %v2592
    %3690 = vmatprep.subr.bf16.mxu0 %v2595
    %3691 = vmatpush1.bf16.msra.mxu0 %v2594
    %3692 = vmatprep.subr.bf16.mxu0 %v2597
    %3693 = vmatpush1.bf16.msra.mxu0 %v2596
    %3694 = vmatprep.subr.bf16.mxu0 %v2599
    %3695 = vmatpush1.bf16.msra.mxu0 %v2598
    %3696 = vmatprep.subr.bf16.mxu0 %v2601
    %3697 = vmatpush1.bf16.msra.mxu0 %v2600
    %3698 = vmatprep.subr.bf16.mxu0 %v2603
    %3699 = vmatpush1.bf16.msra.mxu0 %v2602
    %3700 = vmatprep.subr.bf16.mxu0 %v2605
    %3701 = vmatpush1.bf16.msra.mxu0 %v2604
    %3702 = vmatprep.mubr.bf16.mxu0 %v689
    %3703 = vmatmul.mubr.bf16.gmra.mrb[0].mxu0 %v675
    %v3704 = vpop.f32.mrb[0].mxu0
    %v3705 = vadd.f32 %v3664, %v3704
    %v3706 = vpop.f32.mrb[0].mxu0
    %v3707 = vadd.f32 %v3666, %v3706
    %v3708 = vpop.f32.mrb[0].mxu0
    %v3709 = vpop.f32.mrb[0].mxu0
    %3710 = vdwg.mxu0
    %3711 = vmatprep.subr.bf16.mxu0 %v2607
    %3712 = vmatpush1.bf16.msra.mxu0 %v2606
    %3713 = vmatprep.subr.bf16.mxu0 %v2609
    %3714 = vmatpush1.bf16.msra.mxu0 %v2608
    %3715 = vmatprep.subr.bf16.mxu0 %v2611
    %3716 = vmatpush1.bf16.msra.mxu0 %v2610
    %3717 = vmatprep.subr.bf16.mxu0 %v2613
    %3718 = vmatpush1.bf16.msra.mxu0 %v2612
    %3719 = vmatprep.subr.bf16.mxu0 %v2615
    %3720 = vmatpush1.bf16.msra.mxu0 %v2614
    %3721 = vmatprep.subr.bf16.mxu0 %v2617
    %3722 = vmatpush1.bf16.msra.mxu0 %v2616
    %3723 = vmatprep.subr.bf16.mxu0 %v2619
    %3724 = vmatpush1.bf16.msra.mxu0 %v2618
    %3725 = vmatprep.subr.bf16.mxu0 %v2621
    %3726 = vmatpush1.bf16.msra.mxu0 %v2620
    %3727 = vmatprep.subr.bf16.mxu0 %v2623
    %3728 = vmatpush1.bf16.msra.mxu0 %v2622
    %3729 = vmatprep.subr.bf16.mxu0 %v2625
    %3730 = vmatpush1.bf16.msra.mxu0 %v2624
    %3731 = vmatprep.subr.bf16.mxu0 %v2627
    %3732 = vmatpush1.bf16.msra.mxu0 %v2626
    %3733 = vmatprep.subr.bf16.mxu0 %v2629
    %3734 = vmatpush1.bf16.msra.mxu0 %v2628
    %3735 = vmatprep.subr.bf16.mxu0 %v2631
    %3736 = vmatpush1.bf16.msra.mxu0 %v2630
    %3737 = vmatprep.subr.bf16.mxu0 %v2633
    %3738 = vmatpush1.bf16.msra.mxu0 %v2632
    %3739 = vmatprep.subr.bf16.mxu0 %v2635
    %3740 = vmatpush1.bf16.msra.mxu0 %v2634
    %3741 = vmatprep.subr.bf16.mxu0 %v2637
    %3742 = vmatpush1.bf16.msra.mxu0 %v2636
    %3743 = vmatprep.mubr.bf16.mxu0 %v699
    %3744 = vmatmul.mubr.bf16.gmra.mrb[0].mxu0 %v697
    %v3745 = vpop.f32.mrb[0].mxu0
    %v3746 = vadd.f32 %v3705, %v3745
    %v3747 = vpop.f32.mrb[0].mxu0
    %v3748 = vadd.f32 %v3707, %v3747
    %v3749 = vpop.f32.mrb[0].mxu0
    %v3750 = vpop.f32.mrb[0].mxu0
    %3751 = vdwg.mxu0
    %3752 = vmatprep.subr.bf16.mxu0 %v2639
    %3753 = vmatpush1.bf16.msra.mxu0 %v2638
    %3754 = vmatprep.subr.bf16.mxu0 %v2641
    %3755 = vmatpush1.bf16.msra.mxu0 %v2640
    %3756 = vmatprep.subr.bf16.mxu0 %v2643
    %3757 = vmatpush1.bf16.msra.mxu0 %v2642
    %3758 = vmatprep.subr.bf16.mxu0 %v2645
    %3759 = vmatpush1.bf16.msra.mxu0 %v2644
    %3760 = vmatprep.subr.bf16.mxu0 %v2647
    %3761 = vmatpush1.bf16.msra.mxu0 %v2646
    %3762 = vmatprep.subr.bf16.mxu0 %v2649
    %3763 = vmatpush1.bf16.msra.mxu0 %v2648
    %3764 = vmatprep.subr.bf16.mxu0 %v2651
    %3765 = vmatpush1.bf16.msra.mxu0 %v2650
    %3766 = vmatprep.subr.bf16.mxu0 %v2653
    %3767 = vmatpush1.bf16.msra.mxu0 %v2652
    %3768 = vmatprep.subr.bf16.mxu0 %v2655
    %3769 = vmatpush1.bf16.msra.mxu0 %v2654
    %3770 = vmatprep.subr.bf16.mxu0 %v2657
    %3771 = vmatpush1.bf16.msra.mxu0 %v2656
    %3772 = vmatprep.subr.bf16.mxu0 %v2659
    %3773 = vmatpush1.bf16.msra.mxu0 %v2658
    %3774 = vmatprep.subr.bf16.mxu0 %v2661
    %3775 = vmatpush1.bf16.msra.mxu0 %v2660
    %3776 = vmatprep.subr.bf16.mxu0 %v2663
    %3777 = vmatpush1.bf16.msra.mxu0 %v2662
    %3778 = vmatprep.subr.bf16.mxu0 %v2665
    %3779 = vmatpush1.bf16.msra.mxu0 %v2664
    %3780 = vmatprep.subr.bf16.mxu0 %v2667
    %3781 = vmatpush1.bf16.msra.mxu0 %v2666
    %3782 = vmatprep.subr.bf16.mxu0 %v2669
    %3783 = vmatpush1.bf16.msra.mxu0 %v2668
    %3784 = vmatprep.mubr.bf16.mxu0 %v696
    %3785 = vmatmul.mubr.bf16.gmra.mrb[0].mxu0 %v682
    %v3786 = vpop.f32.mrb[0].mxu0
    %v3787 = vadd.f32 %v3746, %v3786
    %v3788 = vpop.f32.mrb[0].mxu0
    %v3789 = vadd.f32 %v3748, %v3788
    %v3790 = vpop.f32.mrb[0].mxu0
    %v3791 = vpop.f32.mrb[0].mxu0
    %3792 = vdwg.mxu0
    %3793 = vmatprep.subr.bf16.mxu0 %v2671
    %3794 = vmatpush1.bf16.msra.mxu0 %v2670
    %3795 = vmatprep.subr.bf16.mxu0 %v2673
    %3796 = vmatpush1.bf16.msra.mxu0 %v2672
    %3797 = vmatprep.subr.bf16.mxu0 %v2675
    %3798 = vmatpush1.bf16.msra.mxu0 %v2674
    %3799 = vmatprep.subr.bf16.mxu0 %v2677
    %3800 = vmatpush1.bf16.msra.mxu0 %v2676
    %3801 = vmatprep.subr.bf16.mxu0 %v2679
    %3802 = vmatpush1.bf16.msra.mxu0 %v2678
    %3803 = vmatprep.subr.bf16.mxu0 %v2681
    %3804 = vmatpush1.bf16.msra.mxu0 %v2680
    %3805 = vmatprep.subr.bf16.mxu0 %v2683
    %3806 = vmatpush1.bf16.msra.mxu0 %v2682
    %3807 = vmatprep.subr.bf16.mxu0 %v2685
    %3808 = vmatpush1.bf16.msra.mxu0 %v2684
    %3809 = vmatprep.subr.bf16.mxu0 %v2687
    %3810 = vmatpush1.bf16.msra.mxu0 %v2686
    %3811 = vmatprep.subr.bf16.mxu0 %v2689
    %3812 = vmatpush1.bf16.msra.mxu0 %v2688
    %3813 = vmatprep.subr.bf16.mxu0 %v2691
    %3814 = vmatpush1.bf16.msra.mxu0 %v2690
    %3815 = vmatprep.subr.bf16.mxu0 %v2693
    %3816 = vmatpush1.bf16.msra.mxu0 %v2692
    %3817 = vmatprep.subr.bf16.mxu0 %v2695
    %3818 = vmatpush1.bf16.msra.mxu0 %v2694
    %3819 = vmatprep.subr.bf16.mxu0 %v2697
    %3820 = vmatpush1.bf16.msra.mxu0 %v2696
    %3821 = vmatprep.subr.bf16.mxu0 %v2699
    %3822 = vmatpush1.bf16.msra.mxu0 %v2698
    %3823 = vmatprep.subr.bf16.mxu0 %v2701
    %3824 = vmatpush1.bf16.msra.mxu0 %v2700
    %3825 = vmatprep.mubr.bf16.mxu0 %v700
    %3826 = vmatmul.mubr.bf16.gmra.mrb[0].mxu0 %v698
    %v3827 = vpop.f32.mrb[0].mxu0
    %v3828 = vadd.f32 %v3787, %v3827
    %v3829 = vpop.f32.mrb[0].mxu0
    %v3830 = vadd.f32 %v3789, %v3829
    %v3831 = vpop.f32.mrb[0].mxu0
    %v3832 = vpop.f32.mrb[0].mxu0
    %3833 = vdwg.mxu0
    %3834 = vmatprep.subr.bf16.mxu0 %v2703
    %3835 = vmatpush1.bf16.msra.mxu0 %v2702
    %3836 = vmatprep.subr.bf16.mxu0 %v2705
    %3837 = vmatpush1.bf16.msra.mxu0 %v2704
    %3838 = vmatprep.subr.bf16.mxu0 %v2707
    %3839 = vmatpush1.bf16.msra.mxu0 %v2706
    %3840 = vmatprep.subr.bf16.mxu0 %v2709
    %3841 = vmatpush1.bf16.msra.mxu0 %v2708
    %3842 = vmatprep.subr.bf16.mxu0 %v2711
    %3843 = vmatpush1.bf16.msra.mxu0 %v2710
    %3844 = vmatprep.subr.bf16.mxu0 %v2713
    %3845 = vmatpush1.bf16.msra.mxu0 %v2712
    %3846 = vmatprep.subr.bf16.mxu0 %v2715
    %3847 = vmatpush1.bf16.msra.mxu0 %v2714
    %3848 = vmatprep.subr.bf16.mxu0 %v2717
    %3849 = vmatpush1.bf16.msra.mxu0 %v2716
    %3850 = vmatprep.subr.bf16.mxu0 %v2719
    %3851 = vmatpush1.bf16.msra.mxu0 %v2718
    %3852 = vmatprep.subr.bf16.mxu0 %v2721
    %3853 = vmatpush1.bf16.msra.mxu0 %v2720
    %3854 = vmatprep.subr.bf16.mxu0 %v2723
    %3855 = vmatpush1.bf16.msra.mxu0 %v2722
    %3856 = vmatprep.subr.bf16.mxu0 %v2725
    %3857 = vmatpush1.bf16.msra.mxu0 %v2724
    %3858 = vmatprep.subr.bf16.mxu0 %v2727
    %3859 = vmatpush1.bf16.msra.mxu0 %v2726
    %3860 = vmatprep.subr.bf16.mxu0 %v2729
    %3861 = vmatpush1.bf16.msra.mxu0 %v2728
    %3862 = vmatprep.subr.bf16.mxu0 %v2731
    %3863 = vmatpush1.bf16.msra.mxu0 %v2730
    %3864 = vmatprep.subr.bf16.mxu0 %v2733
    %3865 = vmatpush1.bf16.msra.mxu0 %v2732
    %3866 = vmatprep.mubr.bf16.mxu0 %v738
    %3867 = vmatmul.mubr.bf16.gmra.mrb[0].mxu0 %v724
    %v3868 = vpop.f32.mrb[0].mxu0
    %v3869 = vadd.f32 %v3828, %v3868
    %v3870 = vpop.f32.mrb[0].mxu0
    %v3871 = vadd.f32 %v3830, %v3870
    %v3872 = vpop.f32.mrb[0].mxu0
    %v3873 = vpop.f32.mrb[0].mxu0
    %3874 = vdwg.mxu0
    %3875 = vmatprep.subr.bf16.mxu0 %v2735
    %3876 = vmatpush1.bf16.msra.mxu0 %v2734
    %3877 = vmatprep.subr.bf16.mxu0 %v2737
    %3878 = vmatpush1.bf16.msra.mxu0 %v2736
    %3879 = vmatprep.subr.bf16.mxu0 %v2739
    %3880 = vmatpush1.bf16.msra.mxu0 %v2738
    %3881 = vmatprep.subr.bf16.mxu0 %v2741
    %3882 = vmatpush1.bf16.msra.mxu0 %v2740
    %3883 = vmatprep.subr.bf16.mxu0 %v2743
    %3884 = vmatpush1.bf16.msra.mxu0 %v2742
    %3885 = vmatprep.subr.bf16.mxu0 %v2745
    %3886 = vmatpush1.bf16.msra.mxu0 %v2744
    %3887 = vmatprep.subr.bf16.mxu0 %v2747
    %3888 = vmatpush1.bf16.msra.mxu0 %v2746
    %3889 = vmatprep.subr.bf16.mxu0 %v2749
    %3890 = vmatpush1.bf16.msra.mxu0 %v2748
    %3891 = vmatprep.subr.bf16.mxu0 %v2751
    %3892 = vmatpush1.bf16.msra.mxu0 %v2750
    %3893 = vmatprep.subr.bf16.mxu0 %v2753
    %3894 = vmatpush1.bf16.msra.mxu0 %v2752
    %3895 = vmatprep.subr.bf16.mxu0 %v2755
    %3896 = vmatpush1.bf16.msra.mxu0 %v2754
    %3897 = vmatprep.subr.bf16.mxu0 %v2757
    %3898 = vmatpush1.bf16.msra.mxu0 %v2756
    %3899 = vmatprep.subr.bf16.mxu0 %v2759
    %3900 = vmatpush1.bf16.msra.mxu0 %v2758
    %3901 = vmatprep.subr.bf16.mxu0 %v2761
    %3902 = vmatpush1.bf16.msra.mxu0 %v2760
    %3903 = vmatprep.subr.bf16.mxu0 %v2763
    %3904 = vmatpush1.bf16.msra.mxu0 %v2762
    %3905 = vmatprep.subr.bf16.mxu0 %v2765
    %3906 = vmatpush1.bf16.msra.mxu0 %v2764
    %3907 = vmatprep.mubr.bf16.mxu0 %v748
    %3908 = vmatmul.mubr.bf16.gmra.mrb[0].mxu0 %v746
    %v3909 = vpop.f32.mrb[0].mxu0
    %v3910 = vadd.f32 %v3869, %v3909
    %v3911 = vpop.f32.mrb[0].mxu0
    %v3912 = vadd.f32 %v3871, %v3911
    %v3913 = vpop.f32.mrb[0].mxu0
    %v3914 = vpop.f32.mrb[0].mxu0
    %3915 = vdwg.mxu0
    %3916 = vmatprep.subr.bf16.mxu0 %v2767
    %3917 = vmatpush1.bf16.msra.mxu0 %v2766
    %3918 = vmatprep.subr.bf16.mxu0 %v2769
    %3919 = vmatpush1.bf16.msra.mxu0 %v2768
    %3920 = vmatprep.subr.bf16.mxu0 %v2771
    %3921 = vmatpush1.bf16.msra.mxu0 %v2770
    %3922 = vmatprep.subr.bf16.mxu0 %v2773
    %3923 = vmatpush1.bf16.msra.mxu0 %v2772
    %3924 = vmatprep.subr.bf16.mxu0 %v2775
    %3925 = vmatpush1.bf16.msra.mxu0 %v2774
    %3926 = vmatprep.subr.bf16.mxu0 %v2777
    %3927 = vmatpush1.bf16.msra.mxu0 %v2776
    %3928 = vmatprep.subr.bf16.mxu0 %v2779
    %3929 = vmatpush1.bf16.msra.mxu0 %v2778
    %3930 = vmatprep.subr.bf16.mxu0 %v2781
    %3931 = vmatpush1.bf16.msra.mxu0 %v2780
    %3932 = vmatprep.subr.bf16.mxu0 %v2783
    %3933 = vmatpush1.bf16.msra.mxu0 %v2782
    %3934 = vmatprep.subr.bf16.mxu0 %v2785
    %3935 = vmatpush1.bf16.msra.mxu0 %v2784
    %3936 = vmatprep.subr.bf16.mxu0 %v2787
    %3937 = vmatpush1.bf16.msra.mxu0 %v2786
    %3938 = vmatprep.subr.bf16.mxu0 %v2789
    %3939 = vmatpush1.bf16.msra.mxu0 %v2788
    %3940 = vmatprep.subr.bf16.mxu0 %v2791
    %3941 = vmatpush1.bf16.msra.mxu0 %v2790
    %3942 = vmatprep.subr.bf16.mxu0 %v2793
    %3943 = vmatpush1.bf16.msra.mxu0 %v2792
    %3944 = vmatprep.subr.bf16.mxu0 %v2795
    %3945 = vmatpush1.bf16.msra.mxu0 %v2794
    %3946 = vmatprep.subr.bf16.mxu0 %v2797
    %3947 = vmatpush1.bf16.msra.mxu0 %v2796
    %3948 = vmatprep.mubr.bf16.mxu0 %v745
    %3949 = vmatmul.mubr.bf16.gmra.mrb[0].mxu0 %v731
    %v3950 = vpop.f32.mrb[0].mxu0
    %v3951 = vadd.f32 %v3910, %v3950
    %v3952 = vpop.f32.mrb[0].mxu0
    %v3953 = vadd.f32 %v3912, %v3952
    %v3954 = vpop.f32.mrb[0].mxu0
    %v3955 = vpop.f32.mrb[0].mxu0
    %3956 = vdwg.mxu0
    %3957 = vmatprep.subr.bf16.mxu0 %v2799
    %3958 = vmatpush1.bf16.msra.mxu0 %v2798
    %3959 = vmatprep.subr.bf16.mxu0 %v2801
    %3960 = vmatpush1.bf16.msra.mxu0 %v2800
    %3961 = vmatprep.subr.bf16.mxu0 %v2803
    %3962 = vmatpush1.bf16.msra.mxu0 %v2802
    %3963 = vmatprep.subr.bf16.mxu0 %v2805
    %3964 = vmatpush1.bf16.msra.mxu0 %v2804
    %3965 = vmatprep.subr.bf16.mxu0 %v2807
    %3966 = vmatpush1.bf16.msra.mxu0 %v2806
    %3967 = vmatprep.subr.bf16.mxu0 %v2809
    %3968 = vmatpush1.bf16.msra.mxu0 %v2808
    %3969 = vmatprep.subr.bf16.mxu0 %v2811
    %3970 = vmatpush1.bf16.msra.mxu0 %v2810
    %3971 = vmatprep.subr.bf16.mxu0 %v2813
    %3972 = vmatpush1.bf16.msra.mxu0 %v2812
    %3973 = vmatprep.subr.bf16.mxu0 %v2815
    %3974 = vmatpush1.bf16.msra.mxu0 %v2814
    %3975 = vmatprep.subr.bf16.mxu0 %v2817
    %3976 = vmatpush1.bf16.msra.mxu0 %v2816
    %3977 = vmatprep.subr.bf16.mxu0 %v2819
    %3978 = vmatpush1.bf16.msra.mxu0 %v2818
    %3979 = vmatprep.subr.bf16.mxu0 %v2821
    %3980 = vmatpush1.bf16.msra.mxu0 %v2820
    %3981 = vmatprep.subr.bf16.mxu0 %v2823
    %3982 = vmatpush1.bf16.msra.mxu0 %v2822
    %3983 = vmatprep.subr.bf16.mxu0 %v2825
    %3984 = vmatpush1.bf16.msra.mxu0 %v2824
    %3985 = vmatprep.subr.bf16.mxu0 %v2827
    %3986 = vmatpush1.bf16.msra.mxu0 %v2826
    %3987 = vmatprep.subr.bf16.mxu0 %v2829
    %3988 = vmatpush1.bf16.msra.mxu0 %v2828
    %3989 = vmatprep.mubr.bf16.mxu0 %v749
    %3990 = vmatmul.mubr.bf16.gmra.mrb[0].mxu0 %v747
    %v3991 = vpop.f32.mrb[0].mxu0
    %v3992 = vadd.f32 %v3951, %v3991
    %v3993 = vpop.f32.mrb[0].mxu0
    %v3994 = vadd.f32 %v3953, %v3993
    %v3995 = vpop.f32.mrb[0].mxu0
    %v3996 = vpop.f32.mrb[0].mxu0
    %3997 = vdwg.mxu0
    %v3998 = vmax.f32 %v3992, 0.0
    %v3999 = vmax.f32 %v3994, 0.0
    %v4000 = vpack.c.bf16 %v3998, %v3998
    %v4001 = vpack.c.bf16 %v3999, %v3999
    %v4002 = vld [vmem:[%s3] sm:$0xf]
    %v4003 = vld [vmem:[%s3 + $0x4] sm:$0xf]
    %v4004 = vld [vmem:[%s3 + $0x8] sm:$0xf]
    %v4005 = vld [vmem:[%s3 + $0xc] sm:$0xf]
    %v4006 = vld [vmem:[%s3 + $0x10] sm:$0xf]
    %v4007 = vld [vmem:[%s3 + $0x14] sm:$0xf]
    %v4008 = vld [vmem:[%s3 + $0x18] sm:$0xf]
    %v4009 = vld [vmem:[%s3 + $0x1c] sm:$0xf]
    %v4010 = vld [vmem:[%s3 + $0x20] sm:$0xf]
    %v4011 = vld [vmem:[%s3 + $0x24] sm:$0xf]
    %v4012 = vld [vmem:[%s3 + $0x28] sm:$0xf]
    %v4013 = vld [vmem:[%s3 + $0x2c] sm:$0xf]
    %v4014 = vld [vmem:[%s3 + $0x30] sm:$0xf]
    %v4015 = vld [vmem:[%s3 + $0x34] sm:$0xf]
    %v4016 = vld [vmem:[%s3 + $0x38] sm:$0xf]
    %v4017 = vld [vmem:[%s3 + $0x3c] sm:$0xf]
    %v4018 = vld [vmem:[%s3 + $0x40] sm:$0xf]
    %v4019 = vld [vmem:[%s3 + $0x44] sm:$0xf]
    %v4020 = vld [vmem:[%s3 + $0x48] sm:$0xf]
    %v4021 = vld [vmem:[%s3 + $0x4c] sm:$0xf]
    %v4022 = vld [vmem:[%s3 + $0x50] sm:$0xf]
    %v4023 = vld [vmem:[%s3 + $0x54] sm:$0xf]
    %v4024 = vld [vmem:[%s3 + $0x58] sm:$0xf]
    %v4025 = vld [vmem:[%s3 + $0x5c] sm:$0xf]
    %v4026 = vld [vmem:[%s3 + $0x60] sm:$0xf]
    %v4027 = vld [vmem:[%s3 + $0x64] sm:$0xf]
    %v4028 = vld [vmem:[%s3 + $0x68] sm:$0xf]
    %v4029 = vld [vmem:[%s3 + $0x6c] sm:$0xf]
    %v4030 = vld [vmem:[%s3 + $0x70] sm:$0xf]
    %v4031 = vld [vmem:[%s3 + $0x74] sm:$0xf]
    %v4032 = vld [vmem:[%s3 + $0x78] sm:$0xf]
    %v4033 = vld [vmem:[%s3 + $0x7c] sm:$0xf]
    %v4034 = vld [vmem:[%s4] sm:$0x1]
    %v4036 = vlaneseq
    %v4037 = vshrl.u32 %v4036, 7
    %v4038 = vsub.s32 0, %v4037
    %v4039 = vrot.slane %v4034, %v4038
    %v4073 = vunpack.c.l.b16 %v4002
    %v4074 = vunpack.c.l.b16 %v4003
    %v4075 = vunpack.c.l.b16 %v4004
    %v4076 = vunpack.c.l.b16 %v4005
    %v4077 = vunpack.c.l.b16 %v4006
    %v4078 = vunpack.c.l.b16 %v4007
    %v4079 = vunpack.c.l.b16 %v4008
    %v4080 = vunpack.c.l.b16 %v4009
    %v4081 = vunpack.c.l.b16 %v4010
    %v4082 = vunpack.c.l.b16 %v4011
    %v4083 = vunpack.c.l.b16 %v4012
    %v4084 = vunpack.c.l.b16 %v4013
    %v4085 = vunpack.c.l.b16 %v4014
    %v4086 = vunpack.c.l.b16 %v4015
    %v4087 = vunpack.c.l.b16 %v4016
    %v4088 = vunpack.c.l.b16 %v4017
    %v4089 = vunpack.c.l.b16 %v4018
    %v4090 = vunpack.c.l.b16 %v4019
    %v4091 = vunpack.c.l.b16 %v4020
    %v4092 = vunpack.c.l.b16 %v4021
    %v4093 = vunpack.c.l.b16 %v4022
    %v4094 = vunpack.c.l.b16 %v4023
    %v4095 = vunpack.c.l.b16 %v4024
    %v4096 = vunpack.c.l.b16 %v4025
    %v4097 = vunpack.c.l.b16 %v4026
    %v4098 = vunpack.c.l.b16 %v4027
    %v4099 = vunpack.c.l.b16 %v4028
    %v4100 = vunpack.c.l.b16 %v4029
    %v4101 = vunpack.c.l.b16 %v4030
    %v4102 = vunpack.c.l.b16 %v4031
    %v4103 = vunpack.c.l.b16 %v4032
    %v4104 = vunpack.c.l.b16 %v4033
    %v4105 = vpack.c.b16 %v4074, %v4073
    %v4106 = vpack.c.b16 %v4076, %v4075
    %v4107 = vpack.c.b16 %v4078, %v4077
    %v4108 = vpack.c.b16 %v4080, %v4079
    %v4109 = vpack.c.b16 %v4082, %v4081
    %v4110 = vpack.c.b16 %v4084, %v4083
    %v4111 = vpack.c.b16 %v4086, %v4085
    %v4112 = vpack.c.b16 %v4088, %v4087
    %v4113 = vpack.c.b16 %v4090, %v4089
    %v4114 = vpack.c.b16 %v4092, %v4091
    %v4115 = vpack.c.b16 %v4094, %v4093
    %v4116 = vpack.c.b16 %v4096, %v4095
    %v4117 = vpack.c.b16 %v4098, %v4097
    %v4118 = vpack.c.b16 %v4100, %v4099
    %v4119 = vpack.c.b16 %v4102, %v4101
    %v4120 = vpack.c.b16 %v4104, %v4103
    %4137 = vmatprep.subr.bf16.mxu0 0
    %4138 = vmatpush1.bf16.msra.mxu0 %v4105
    %4139 = vmatprep.subr.bf16.mxu0 0
    %4140 = vmatpush1.bf16.msra.mxu0 %v4106
    %4141 = vmatprep.subr.bf16.mxu0 0
    %4142 = vmatpush1.bf16.msra.mxu0 %v4107
    %4143 = vmatprep.subr.bf16.mxu0 0
    %4144 = vmatpush1.bf16.msra.mxu0 %v4108
    %4145 = vmatprep.subr.bf16.mxu0 0
    %4146 = vmatpush1.bf16.msra.mxu0 %v4109
    %4147 = vmatprep.subr.bf16.mxu0 0
    %4148 = vmatpush1.bf16.msra.mxu0 %v4110
    %4149 = vmatprep.subr.bf16.mxu0 0
    %4150 = vmatpush1.bf16.msra.mxu0 %v4111
    %4151 = vmatprep.subr.bf16.mxu0 0
    %4152 = vmatpush1.bf16.msra.mxu0 %v4112
    %4153 = vmatprep.subr.bf16.mxu0 0
    %4154 = vmatpush1.bf16.msra.mxu0 %v4113
    %4155 = vmatprep.subr.bf16.mxu0 0
    %4156 = vmatpush1.bf16.msra.mxu0 %v4114
    %4157 = vmatprep.subr.bf16.mxu0 0
    %4158 = vmatpush1.bf16.msra.mxu0 %v4115
    %4159 = vmatprep.subr.bf16.mxu0 0
    %4160 = vmatpush1.bf16.msra.mxu0 %v4116
    %4161 = vmatprep.subr.bf16.mxu0 0
    %4162 = vmatpush1.bf16.msra.mxu0 %v4117
    %4163 = vmatprep.subr.bf16.mxu0 0
    %4164 = vmatpush1.bf16.msra.mxu0 %v4118
    %4165 = vmatprep.subr.bf16.mxu0 0
    %4166 = vmatpush1.bf16.msra.mxu0 %v4119
    %4167 = vmatprep.subr.bf16.mxu0 0
    %4168 = vmatpush1.bf16.msra.mxu0 %v4120
    %4169 = vmatprep.mubr.bf16.mxu0 %v4001
    %4170 = vmatmul.mubr.bf16.gmra.mrb[0].mxu0 %v4000
    %v4171 = vpop.f32.mrb[0].mxu0
    %v4172 = vadd.f32 %v4039, %v4171
    %v4173 = vpop.f32.mrb[0].mxu0
    %v4174 = vpop.f32.mrb[0].mxu0
    %v4175 = vpop.f32.mrb[0].mxu0
    %4176 = vdwg.mxu0
    %4177 = vst [vmem:[#allocation2] sm:$0x3] %v4172
    // Predicated region
    $region22: #{custom_cnn_forward.5} parent=1 // pred_check
      _
    $region23: #{custom_cnn_forward.5} parent=1 // pred_check_branch
      %4179 = sbr.rel (0) target = $region25
    $region24: #{custom_cnn_forward.5} parent=1 // pred_region
      %s4181 = ssub.s32 32, 32
      %4182 = vsyncadd [#allocation3], %s4181
      %s4184 = sshll.u32 [#allocation2], 4
      %s4185 = int_to_ptr.vmem [resolvable:$true] %s4184
      %4187 = dma.vmem_to_hbm [thread:$0]  %s4185, 32, %s5, [#allocation3]
    $region25: #{custom_cnn_forward.5} parent=1 // pred_fallthru
      _
    // Predicated region
    $region26: #{custom_cnn_forward.5} parent=1 // pred_check
      _
    $region27: #{custom_cnn_forward.5} parent=1 // pred_check_branch
      %4189 = sbr.rel (0) target = $region29
    $region28: #{custom_cnn_forward.5} parent=1 // pred_region
      %4190 = dma.done [#allocation3], 32
    $region29: #{custom_cnn_forward.5} parent=1 // pred_fallthru
      _
    %4191 = vsyncpa [#allocation3], 1

// kernel: custom_cnn_forward.4
$region0: #{custom_cnn_forward.4}
  #allocation0 [shape = 'u32[]', space=smem, size = 0x4, offset = 0x4, fixed_abs, tag = 'smem constant byte address 0x4 - core index']
  #allocation1 [shape = 'u32[144,128]{1,0:T(1,128)}', space=vmem, size = 0x12000, scoped, tag = 'internal scratch']
  %s0 = inlined_call_operand.vmem [shape: bf16[128,1152], index: 0, kind: input, shape index: {}]
  %s1 = inlined_call_operand.vmem [shape: bf16[128,1152], index: 1, kind: input, shape index: {}]
  %s2 = inlined_call_operand.vmem [shape: bf16[128,1152], index: 2, kind: input, shape index: {}]
  %s3 = inlined_call_operand.vmem [shape: bf16[128,1152], index: 3, kind: input, shape index: {}]
  %s4 = inlined_call_operand.vmem [shape: bf16[1152,64], index: 4, kind: input, shape index: {}]
  %s5 = inlined_call_operand.vmem [shape: f32[1,64], index: 5, kind: input, shape index: {}]
  %s6 = inlined_call_operand.vmem [shape: f32[1,64], index: 6, kind: input, shape index: {}]
  %s7 = inlined_call_operand.vmem [shape: bf16[128,64], index: 7, kind: output, shape index: {}]
  %s8 = sld [smem:[#allocation0]]
  $region38: #{custom_cnn_forward.4} parent=0
    _
  %s10 = ssub.s32 1, %s8
  %s11 = scalar_select 0, %s10, %s8
  // Predicated region
  $region2: #{custom_cnn_forward.4} parent=0 // pred_check
    _
  $region3: #{custom_cnn_forward.4} parent=0 // pred_check_branch
    %13 = sbr.rel (0) target = $region5
  $region4: #{custom_cnn_forward.4} parent=0 // pred_region
    _
  $region5: #{custom_cnn_forward.4} parent=0 // pred_fallthru
    _
  // Predicated region
  $region6: #{custom_cnn_forward.4} parent=0 // pred_check
    _
  $region7: #{custom_cnn_forward.4} parent=0 // pred_check_branch
    %15 = sbr.rel (0) target = $region9
  $region8: #{custom_cnn_forward.4} parent=0 // pred_region
    _
  $region9: #{custom_cnn_forward.4} parent=0 // pred_fallthru
    _
  // Predicated region
  $region10: #{custom_cnn_forward.4} parent=0 // pred_check
    _
  $region11: #{custom_cnn_forward.4} parent=0 // pred_check_branch
    %17 = sbr.rel (0) target = $region13
  $region12: #{custom_cnn_forward.4} parent=0 // pred_region
    _
  $region13: #{custom_cnn_forward.4} parent=0 // pred_fallthru
    _
  // Predicated region
  $region14: #{custom_cnn_forward.4} parent=0 // pred_check
    _
  $region15: #{custom_cnn_forward.4} parent=0 // pred_check_branch
    %19 = sbr.rel (0) target = $region17
  $region16: #{custom_cnn_forward.4} parent=0 // pred_region
    _
  $region17: #{custom_cnn_forward.4} parent=0 // pred_fallthru
    _
  // Predicated region
  $region18: #{custom_cnn_forward.4} parent=0 // pred_check
    _
  $region19: #{custom_cnn_forward.4} parent=0 // pred_check_branch
    %21 = sbr.rel (0) target = $region21
  $region20: #{custom_cnn_forward.4} parent=0 // pred_region
    _
  $region21: #{custom_cnn_forward.4} parent=0 // pred_fallthru
    _
  // Predicated region
  $region22: #{custom_cnn_forward.4} parent=0 // pred_check
    _
  $region23: #{custom_cnn_forward.4} parent=0 // pred_check_branch
    %23 = sbr.rel (0) target = $region25
  $region24: #{custom_cnn_forward.4} parent=0 // pred_region
    _
  $region25: #{custom_cnn_forward.4} parent=0 // pred_fallthru
    _
  // Predicated region
  $region26: #{custom_cnn_forward.4} parent=0 // pred_check
    _
  $region27: #{custom_cnn_forward.4} parent=0 // pred_check_branch
    %25 = sbr.rel (0) target = $region29
  $region28: #{custom_cnn_forward.4} parent=0 // pred_region
    _
  $region29: #{custom_cnn_forward.4} parent=0 // pred_fallthru
    _
  %v27 = vld [vmem:[%s4] sm:$0xf]
  %v28 = vld [vmem:[%s4 + $0x4] sm:$0xf]
  %v29 = vld [vmem:[%s4 + $0x8] sm:$0xf]
  %v30 = vld [vmem:[%s4 + $0xc] sm:$0xf]
  %v31 = vld [vmem:[%s4 + $0x10] sm:$0xf]
  %v32 = vld [vmem:[%s4 + $0x14] sm:$0xf]
  %v33 = vld [vmem:[%s4 + $0x18] sm:$0xf]
  %v34 = vld [vmem:[%s4 + $0x1c] sm:$0xf]
  %v35 = vld [vmem:[%s4 + $0x20] sm:$0xf]
  %v36 = vld [vmem:[%s4 + $0x24] sm:$0xf]
  %v37 = vld [vmem:[%s4 + $0x28] sm:$0xf]
  %v38 = vld [vmem:[%s4 + $0x2c] sm:$0xf]
  %v39 = vld [vmem:[%s4 + $0x30] sm:$0xf]
  %v40 = vld [vmem:[%s4 + $0x34] sm:$0xf]
  %v41 = vld [vmem:[%s4 + $0x38] sm:$0xf]
  %v42 = vld [vmem:[%s4 + $0x3c] sm:$0xf]
  %v43 = vld [vmem:[%s4 + $0x40] sm:$0xf]
  %v44 = vld [vmem:[%s4 + $0x44] sm:$0xf]
  %v45 = vld [vmem:[%s4 + $0x48] sm:$0xf]
  %v46 = vld [vmem:[%s4 + $0x4c] sm:$0xf]
  %v47 = vld [vmem:[%s4 + $0x50] sm:$0xf]
  %v48 = vld [vmem:[%s4 + $0x54] sm:$0xf]
  %v49 = vld [vmem:[%s4 + $0x58] sm:$0xf]
  %v50 = vld [vmem:[%s4 + $0x5c] sm:$0xf]
  %v51 = vld [vmem:[%s4 + $0x60] sm:$0xf]
  %v52 = vld [vmem:[%s4 + $0x64] sm:$0xf]
  %v53 = vld [vmem:[%s4 + $0x68] sm:$0xf]
  %v54 = vld [vmem:[%s4 + $0x6c] sm:$0xf]
  %v55 = vld [vmem:[%s4 + $0x70] sm:$0xf]
  %v56 = vld [vmem:[%s4 + $0x74] sm:$0xf]
  %v57 = vld [vmem:[%s4 + $0x78] sm:$0xf]
  %v58 = vld [vmem:[%s4 + $0x7c] sm:$0xf]
  %v59 = vld [vmem:[%s4 + $0x80] sm:$0xf]
  %v60 = vld [vmem:[%s4 + $0x84] sm:$0xf]
  %v61 = vld [vmem:[%s4 + $0x88] sm:$0xf]
  %v62 = vld [vmem:[%s4 + $0x8c] sm:$0xf]
  %v63 = vld [vmem:[%s4 + $0x90] sm:$0xf]
  %v64 = vld [vmem:[%s4 + $0x94] sm:$0xf]
  %v65 = vld [vmem:[%s4 + $0x98] sm:$0xf]
  %v66 = vld [vmem:[%s4 + $0x9c] sm:$0xf]
  %v67 = vld [vmem:[%s4 + $0xa0] sm:$0xf]
  %v68 = vld [vmem:[%s4 + $0xa4] sm:$0xf]
  %v69 = vld [vmem:[%s4 + $0xa8] sm:$0xf]
  %v70 = vld [vmem:[%s4 + $0xac] sm:$0xf]
  %v71 = vld [vmem:[%s4 + $0xb0] sm:$0xf]
  %v72 = vld [vmem:[%s4 + $0xb4] sm:$0xf]
  %v73 = vld [vmem:[%s4 + $0xb8] sm:$0xf]
  %v74 = vld [vmem:[%s4 + $0xbc] sm:$0xf]
  %v75 = vld [vmem:[%s4 + $0xc0] sm:$0xf]
  %v76 = vld [vmem:[%s4 + $0xc4] sm:$0xf]
  %v77 = vld [vmem:[%s4 + $0xc8] sm:$0xf]
  %v78 = vld [vmem:[%s4 + $0xcc] sm:$0xf]
  %v79 = vld [vmem:[%s4 + $0xd0] sm:$0xf]
  %v80 = vld [vmem:[%s4 + $0xd4] sm:$0xf]
  %v81 = vld [vmem:[%s4 + $0xd8] sm:$0xf]
  %v82 = vld [vmem:[%s4 + $0xdc] sm:$0xf]
  %v83 = vld [vmem:[%s4 + $0xe0] sm:$0xf]
  %v84 = vld [vmem:[%s4 + $0xe4] sm:$0xf]
  %v85 = vld [vmem:[%s4 + $0xe8] sm:$0xf]
  %v86 = vld [vmem:[%s4 + $0xec] sm:$0xf]
  %v87 = vld [vmem:[%s4 + $0xf0] sm:$0xf]
  %v88 = vld [vmem:[%s4 + $0xf4] sm:$0xf]
  %v89 = vld [vmem:[%s4 + $0xf8] sm:$0xf]
  %v90 = vld [vmem:[%s4 + $0xfc] sm:$0xf]
  %v91 = vld [vmem:[%s4 + $0x100] sm:$0xf]
  %v92 = vld [vmem:[%s4 + $0x104] sm:$0xf]
  %v93 = vld [vmem:[%s4 + $0x108] sm:$0xf]
  %v94 = vld [vmem:[%s4 + $0x10c] sm:$0xf]
  %v95 = vld [vmem:[%s4 + $0x110] sm:$0xf]
  %v96 = vld [vmem:[%s4 + $0x114] sm:$0xf]
  %v97 = vld [vmem:[%s4 + $0x118] sm:$0xf]
  %v98 = vld [vmem:[%s4 + $0x11c] sm:$0xf]
  %v99 = vld [vmem:[%s4 + $0x120] sm:$0xf]
  %v100 = vld [vmem:[%s4 + $0x124] sm:$0xf]
  %v101 = vld [vmem:[%s4 + $0x128] sm:$0xf]
  %v102 = vld [vmem:[%s4 + $0x12c] sm:$0xf]
  %v103 = vld [vmem:[%s4 + $0x130] sm:$0xf]
  %v104 = vld [vmem:[%s4 + $0x134] sm:$0xf]
  %v105 = vld [vmem:[%s4 + $0x138] sm:$0xf]
  %v106 = vld [vmem:[%s4 + $0x13c] sm:$0xf]
  %v107 = vld [vmem:[%s4 + $0x140] sm:$0xf]
  %v108 = vld [vmem:[%s4 + $0x144] sm:$0xf]
  %v109 = vld [vmem:[%s4 + $0x148] sm:$0xf]
  %v110 = vld [vmem:[%s4 + $0x14c] sm:$0xf]
  %v111 = vld [vmem:[%s4 + $0x150] sm:$0xf]
  %v112 = vld [vmem:[%s4 + $0x154] sm:$0xf]
  %v113 = vld [vmem:[%s4 + $0x158] sm:$0xf]
  %v114 = vld [vmem:[%s4 + $0x15c] sm:$0xf]
  %v115 = vld [vmem:[%s4 + $0x160] sm:$0xf]
  %v116 = vld [vmem:[%s4 + $0x164] sm:$0xf]
  %v117 = vld [vmem:[%s4 + $0x168] sm:$0xf]
  %v118 = vld [vmem:[%s4 + $0x16c] sm:$0xf]
  %v119 = vld [vmem:[%s4 + $0x170] sm:$0xf]
  %v120 = vld [vmem:[%s4 + $0x174] sm:$0xf]
  %v121 = vld [vmem:[%s4 + $0x178] sm:$0xf]
  %v122 = vld [vmem:[%s4 + $0x17c] sm:$0xf]
  %v123 = vld [vmem:[%s4 + $0x180] sm:$0xf]
  %v124 = vld [vmem:[%s4 + $0x184] sm:$0xf]
  %v125 = vld [vmem:[%s4 + $0x188] sm:$0xf]
  %v126 = vld [vmem:[%s4 + $0x18c] sm:$0xf]
  %v127 = vld [vmem:[%s4 + $0x190] sm:$0xf]
  %v128 = vld [vmem:[%s4 + $0x194] sm:$0xf]
  %v129 = vld [vmem:[%s4 + $0x198] sm:$0xf]
  %v130 = vld [vmem:[%s4 + $0x19c] sm:$0xf]
  %v131 = vld [vmem:[%s4 + $0x1a0] sm:$0xf]
  %v132 = vld [vmem:[%s4 + $0x1a4] sm:$0xf]
  %v133 = vld [vmem:[%s4 + $0x1a8] sm:$0xf]
  %v134 = vld [vmem:[%s4 + $0x1ac] sm:$0xf]
  %v135 = vld [vmem:[%s4 + $0x1b0] sm:$0xf]
  %v136 = vld [vmem:[%s4 + $0x1b4] sm:$0xf]
  %v137 = vld [vmem:[%s4 + $0x1b8] sm:$0xf]
  %v138 = vld [vmem:[%s4 + $0x1bc] sm:$0xf]
  %v139 = vld [vmem:[%s4 + $0x1c0] sm:$0xf]
  %v140 = vld [vmem:[%s4 + $0x1c4] sm:$0xf]
  %v141 = vld [vmem:[%s4 + $0x1c8] sm:$0xf]
  %v142 = vld [vmem:[%s4 + $0x1cc] sm:$0xf]
  %v143 = vld [vmem:[%s4 + $0x1d0] sm:$0xf]
  %v144 = vld [vmem:[%s4 + $0x1d4] sm:$0xf]
  %v145 = vld [vmem:[%s4 + $0x1d8] sm:$0xf]
  %v146 = vld [vmem:[%s4 + $0x1dc] sm:$0xf]
  %v147 = vld [vmem:[%s4 + $0x1e0] sm:$0xf]
  %v148 = vld [vmem:[%s4 + $0x1e4] sm:$0xf]
  %v149 = vld [vmem:[%s4 + $0x1e8] sm:$0xf]
  %v150 = vld [vmem:[%s4 + $0x1ec] sm:$0xf]
  %v151 = vld [vmem:[%s4 + $0x1f0] sm:$0xf]
  %v152 = vld [vmem:[%s4 + $0x1f4] sm:$0xf]
  %v153 = vld [vmem:[%s4 + $0x1f8] sm:$0xf]
  %v154 = vld [vmem:[%s4 + $0x1fc] sm:$0xf]
  %v155 = vld [vmem:[%s4 + $0x200] sm:$0xf]
  %v156 = vld [vmem:[%s4 + $0x204] sm:$0xf]
  %v157 = vld [vmem:[%s4 + $0x208] sm:$0xf]
  %v158 = vld [vmem:[%s4 + $0x20c] sm:$0xf]
  %v159 = vld [vmem:[%s4 + $0x210] sm:$0xf]
  %v160 = vld [vmem:[%s4 + $0x214] sm:$0xf]
  %v161 = vld [vmem:[%s4 + $0x218] sm:$0xf]
  %v162 = vld [vmem:[%s4 + $0x21c] sm:$0xf]
  %v163 = vld [vmem:[%s4 + $0x220] sm:$0xf]
  %v164 = vld [vmem:[%s4 + $0x224] sm:$0xf]
  %v165 = vld [vmem:[%s4 + $0x228] sm:$0xf]
  %v166 = vld [vmem:[%s4 + $0x22c] sm:$0xf]
  %v167 = vld [vmem:[%s4 + $0x230] sm:$0xf]
  %v168 = vld [vmem:[%s4 + $0x234] sm:$0xf]
  %v169 = vld [vmem:[%s4 + $0x238] sm:$0xf]
  %v170 = vld [vmem:[%s4 + $0x23c] sm:$0xf]
  %v171 = vld [vmem:[%s5] sm:$0x1]
  %v172 = vld [vmem:[%s6] sm:$0x1]
  %s173 = smul.u32 0, 9
  %s174 = smul.addr %s173, 4
  %s175 = scalar_lea.vmem %s0, %s174
  %v176 = vld [vmem:[%s175] sm:$0xff]
  %v177 = vld [vmem:[%s175 + $0x8] sm:$0xff]
  %v178 = vld [vmem:[%s175 + $0x10] sm:$0xff]
  %v179 = vld [vmem:[%s175 + $0x18] sm:$0xff]
  %v180 = vld [vmem:[%s175 + $0x20] sm:$0xf]
  %v181 = vld [vmem:[%s175 + $0x24] sm:$0xff]
  %v182 = vld [vmem:[%s175 + $0x2c] sm:$0xff]
  %v183 = vld [vmem:[%s175 + $0x34] sm:$0xff]
  %v184 = vld [vmem:[%s175 + $0x3c] sm:$0xff]
  %v185 = vld [vmem:[%s175 + $0x44] sm:$0xf]
  %v186 = vld [vmem:[%s175 + $0x48] sm:$0xff]
  %v187 = vld [vmem:[%s175 + $0x50] sm:$0xff]
  %v188 = vld [vmem:[%s175 + $0x58] sm:$0xff]
  %v189 = vld [vmem:[%s175 + $0x60] sm:$0xff]
  %v190 = vld [vmem:[%s175 + $0x68] sm:$0xf]
  %v191 = vld [vmem:[%s175 + $0x6c] sm:$0xff]
  %v192 = vld [vmem:[%s175 + $0x74] sm:$0xff]
  %v193 = vld [vmem:[%s175 + $0x7c] sm:$0xff]
  %v194 = vld [vmem:[%s175 + $0x84] sm:$0xff]
  %v195 = vld [vmem:[%s175 + $0x8c] sm:$0xf]
  %v196 = vld [vmem:[%s175 + $0x90] sm:$0xff]
  %v197 = vld [vmem:[%s175 + $0x98] sm:$0xff]
  %v198 = vld [vmem:[%s175 + $0xa0] sm:$0xff]
  %v199 = vld [vmem:[%s175 + $0xa8] sm:$0xff]
  %v200 = vld [vmem:[%s175 + $0xb0] sm:$0xf]
  %v201 = vld [vmem:[%s175 + $0xb4] sm:$0xff]
  %v202 = vld [vmem:[%s175 + $0xbc] sm:$0xff]
  %v203 = vld [vmem:[%s175 + $0xc4] sm:$0xff]
  %v204 = vld [vmem:[%s175 + $0xcc] sm:$0xff]
  %v205 = vld [vmem:[%s175 + $0xd4] sm:$0xf]
  %v206 = vld [vmem:[%s175 + $0xd8] sm:$0xff]
  %v207 = vld [vmem:[%s175 + $0xe0] sm:$0xff]
  %v208 = vld [vmem:[%s175 + $0xe8] sm:$0xff]
  %v209 = vld [vmem:[%s175 + $0xf0] sm:$0xff]
  %v210 = vld [vmem:[%s175 + $0xf8] sm:$0xf]
  %v211 = vld [vmem:[%s175 + $0xfc] sm:$0xff]
  %v212 = vld [vmem:[%s175 + $0x104] sm:$0xff]
  %v213 = vld [vmem:[%s175 + $0x10c] sm:$0xff]
  %v214 = vld [vmem:[%s175 + $0x114] sm:$0xff]
  %v215 = vld [vmem:[%s175 + $0x11c] sm:$0xf]
  %v216 = vld [vmem:[%s175 + $0x120] sm:$0xff]
  %v217 = vld [vmem:[%s175 + $0x128] sm:$0xff]
  %v218 = vld [vmem:[%s175 + $0x130] sm:$0xff]
  %v219 = vld [vmem:[%s175 + $0x138] sm:$0xff]
  %v220 = vld [vmem:[%s175 + $0x140] sm:$0xf]
  %v221 = vld [vmem:[%s175 + $0x144] sm:$0xff]
  %v222 = vld [vmem:[%s175 + $0x14c] sm:$0xff]
  %v223 = vld [vmem:[%s175 + $0x154] sm:$0xff]
  %v224 = vld [vmem:[%s175 + $0x15c] sm:$0xff]
  %v225 = vld [vmem:[%s175 + $0x164] sm:$0xf]
  %v226 = vld [vmem:[%s175 + $0x168] sm:$0xff]
  %v227 = vld [vmem:[%s175 + $0x170] sm:$0xff]
  %v228 = vld [vmem:[%s175 + $0x178] sm:$0xff]
  %v229 = vld [vmem:[%s175 + $0x180] sm:$0xff]
  %v230 = vld [vmem:[%s175 + $0x188] sm:$0xf]
  %v231 = vld [vmem:[%s175 + $0x18c] sm:$0xff]
  %v232 = vld [vmem:[%s175 + $0x194] sm:$0xff]
  %v233 = vld [vmem:[%s175 + $0x19c] sm:$0xff]
  %v234 = vld [vmem:[%s175 + $0x1a4] sm:$0xff]
  %v235 = vld [vmem:[%s175 + $0x1ac] sm:$0xf]
  %v236 = vld [vmem:[%s175 + $0x1b0] sm:$0xff]
  %v237 = vld [vmem:[%s175 + $0x1b8] sm:$0xff]
  %v238 = vld [vmem:[%s175 + $0x1c0] sm:$0xff]
  %v239 = vld [vmem:[%s175 + $0x1c8] sm:$0xff]
  %v240 = vld [vmem:[%s175 + $0x1d0] sm:$0xf]
  %v241 = vld [vmem:[%s175 + $0x1d4] sm:$0xff]
  %v242 = vld [vmem:[%s175 + $0x1dc] sm:$0xff]
  %v243 = vld [vmem:[%s175 + $0x1e4] sm:$0xff]
  %v244 = vld [vmem:[%s175 + $0x1ec] sm:$0xff]
  %v245 = vld [vmem:[%s175 + $0x1f4] sm:$0xf]
  %v246 = vld [vmem:[%s175 + $0x1f8] sm:$0xff]
  %v247 = vld [vmem:[%s175 + $0x200] sm:$0xff]
  %v248 = vld [vmem:[%s175 + $0x208] sm:$0xff]
  %v249 = vld [vmem:[%s175 + $0x210] sm:$0xff]
  %v250 = vld [vmem:[%s175 + $0x218] sm:$0xf]
  %v251 = vld [vmem:[%s175 + $0x21c] sm:$0xff]
  %v252 = vld [vmem:[%s175 + $0x224] sm:$0xff]
  %v253 = vld [vmem:[%s175 + $0x22c] sm:$0xff]
  %v254 = vld [vmem:[%s175 + $0x234] sm:$0xff]
  %v255 = vld [vmem:[%s175 + $0x23c] sm:$0xf]
  %v336 = vunpack.c.l.b16 %v176
  %v337 = vunpack.c.h.b16 %v176
  %v338 = vunpack.c.l.b16 %v177
  %v339 = vunpack.c.h.b16 %v177
  %v340 = vunpack.c.l.b16 %v178
  %v341 = vunpack.c.h.b16 %v178
  %v342 = vunpack.c.l.b16 %v179
  %v343 = vunpack.c.h.b16 %v179
  %v344 = vunpack.c.l.b16 %v180
  %v345 = vunpack.c.l.b16 %v181
  %v346 = vunpack.c.h.b16 %v181
  %v347 = vunpack.c.l.b16 %v182
  %v348 = vunpack.c.h.b16 %v182
  %v349 = vunpack.c.l.b16 %v183
  %v350 = vunpack.c.h.b16 %v183
  %v351 = vunpack.c.l.b16 %v184
  %v352 = vunpack.c.h.b16 %v184
  %v353 = vunpack.c.l.b16 %v185
  %v354 = vunpack.c.l.b16 %v186
  %v355 = vunpack.c.h.b16 %v186
  %v356 = vunpack.c.l.b16 %v187
  %v357 = vunpack.c.h.b16 %v187
  %v358 = vunpack.c.l.b16 %v188
  %v359 = vunpack.c.h.b16 %v188
  %v360 = vunpack.c.l.b16 %v189
  %v361 = vunpack.c.h.b16 %v189
  %v362 = vunpack.c.l.b16 %v190
  %v363 = vunpack.c.l.b16 %v191
  %v364 = vunpack.c.h.b16 %v191
  %v365 = vunpack.c.l.b16 %v192
  %v366 = vunpack.c.h.b16 %v192
  %v367 = vunpack.c.l.b16 %v193
  %v368 = vunpack.c.h.b16 %v193
  %v369 = vunpack.c.l.b16 %v194
  %v370 = vunpack.c.h.b16 %v194
  %v371 = vunpack.c.l.b16 %v195
  %v372 = vunpack.c.l.b16 %v196
  %v373 = vunpack.c.h.b16 %v196
  %v374 = vunpack.c.l.b16 %v197
  %v375 = vunpack.c.h.b16 %v197
  %v376 = vunpack.c.l.b16 %v198
  %v377 = vunpack.c.h.b16 %v198
  %v378 = vunpack.c.l.b16 %v199
  %v379 = vunpack.c.h.b16 %v199
  %v380 = vunpack.c.l.b16 %v200
  %v381 = vunpack.c.l.b16 %v201
  %v382 = vunpack.c.h.b16 %v201
  %v383 = vunpack.c.l.b16 %v202
  %v384 = vunpack.c.h.b16 %v202
  %v385 = vunpack.c.l.b16 %v203
  %v386 = vunpack.c.h.b16 %v203
  %v387 = vunpack.c.l.b16 %v204
  %v388 = vunpack.c.h.b16 %v204
  %v389 = vunpack.c.l.b16 %v205
  %v390 = vunpack.c.l.b16 %v206
  %v391 = vunpack.c.h.b16 %v206
  %v392 = vunpack.c.l.b16 %v207
  %v393 = vunpack.c.h.b16 %v207
  %v394 = vunpack.c.l.b16 %v208
  %v395 = vunpack.c.h.b16 %v208
  %v396 = vunpack.c.l.b16 %v209
  %v397 = vunpack.c.h.b16 %v209
  %v398 = vunpack.c.l.b16 %v210
  %v399 = vunpack.c.l.b16 %v211
  %v400 = vunpack.c.h.b16 %v211
  %v401 = vunpack.c.l.b16 %v212
  %v402 = vunpack.c.h.b16 %v212
  %v403 = vunpack.c.l.b16 %v213
  %v404 = vunpack.c.h.b16 %v213
  %v405 = vunpack.c.l.b16 %v214
  %v406 = vunpack.c.h.b16 %v214
  %v407 = vunpack.c.l.b16 %v215
  %v408 = vunpack.c.l.b16 %v216
  %v409 = vunpack.c.h.b16 %v216
  %v410 = vunpack.c.l.b16 %v217
  %v411 = vunpack.c.h.b16 %v217
  %v412 = vunpack.c.l.b16 %v218
  %v413 = vunpack.c.h.b16 %v218
  %v414 = vunpack.c.l.b16 %v219
  %v415 = vunpack.c.h.b16 %v219
  %v416 = vunpack.c.l.b16 %v220
  %v417 = vunpack.c.l.b16 %v221
  %v418 = vunpack.c.h.b16 %v221
  %v419 = vunpack.c.l.b16 %v222
  %v420 = vunpack.c.h.b16 %v222
  %v421 = vunpack.c.l.b16 %v223
  %v422 = vunpack.c.h.b16 %v223
  %v423 = vunpack.c.l.b16 %v224
  %v424 = vunpack.c.h.b16 %v224
  %v425 = vunpack.c.l.b16 %v225
  %v426 = vunpack.c.l.b16 %v226
  %v427 = vunpack.c.h.b16 %v226
  %v428 = vunpack.c.l.b16 %v227
  %v429 = vunpack.c.h.b16 %v227
  %v430 = vunpack.c.l.b16 %v228
  %v431 = vunpack.c.h.b16 %v228
  %v432 = vunpack.c.l.b16 %v229
  %v433 = vunpack.c.h.b16 %v229
  %v434 = vunpack.c.l.b16 %v230
  %v435 = vunpack.c.l.b16 %v231
  %v436 = vunpack.c.h.b16 %v231
  %v437 = vunpack.c.l.b16 %v232
  %v438 = vunpack.c.h.b16 %v232
  %v439 = vunpack.c.l.b16 %v233
  %v440 = vunpack.c.h.b16 %v233
  %v441 = vunpack.c.l.b16 %v234
  %v442 = vunpack.c.h.b16 %v234
  %v443 = vunpack.c.l.b16 %v235
  %v444 = vunpack.c.l.b16 %v236
  %v445 = vunpack.c.h.b16 %v236
  %v446 = vunpack.c.l.b16 %v237
  %v447 = vunpack.c.h.b16 %v237
  %v448 = vunpack.c.l.b16 %v238
  %v449 = vunpack.c.h.b16 %v238
  %v450 = vunpack.c.l.b16 %v239
  %v451 = vunpack.c.h.b16 %v239
  %v452 = vunpack.c.l.b16 %v240
  %v453 = vunpack.c.l.b16 %v241
  %v454 = vunpack.c.h.b16 %v241
  %v455 = vunpack.c.l.b16 %v242
  %v456 = vunpack.c.h.b16 %v242
  %v457 = vunpack.c.l.b16 %v243
  %v458 = vunpack.c.h.b16 %v243
  %v459 = vunpack.c.l.b16 %v244
  %v460 = vunpack.c.h.b16 %v244
  %v461 = vunpack.c.l.b16 %v245
  %v462 = vunpack.c.l.b16 %v246
  %v463 = vunpack.c.h.b16 %v246
  %v464 = vunpack.c.l.b16 %v247
  %v465 = vunpack.c.h.b16 %v247
  %v466 = vunpack.c.l.b16 %v248
  %v467 = vunpack.c.h.b16 %v248
  %v468 = vunpack.c.l.b16 %v249
  %v469 = vunpack.c.h.b16 %v249
  %v470 = vunpack.c.l.b16 %v250
  %v471 = vunpack.c.l.b16 %v251
  %v472 = vunpack.c.h.b16 %v251
  %v473 = vunpack.c.l.b16 %v252
  %v474 = vunpack.c.h.b16 %v252
  %v475 = vunpack.c.l.b16 %v253
  %v476 = vunpack.c.h.b16 %v253
  %v477 = vunpack.c.l.b16 %v254
  %v478 = vunpack.c.h.b16 %v254
  %v479 = vunpack.c.l.b16 %v255
  %v480 = vpack.c.b16 %v345, %v336
  %v481 = vpack.c.b16 %v346, %v337
  %v482 = vpack.c.b16 %v347, %v338
  %v483 = vpack.c.b16 %v348, %v339
  %v484 = vpack.c.b16 %v349, %v340
  %v485 = vpack.c.b16 %v350, %v341
  %v486 = vpack.c.b16 %v351, %v342
  %v487 = vpack.c.b16 %v352, %v343
  %v488 = vpack.c.b16 %v353, %v344
  %v489 = vpack.c.b16 %v363, %v354
  %v490 = vpack.c.b16 %v364, %v355
  %v491 = vpack.c.b16 %v365, %v356
  %v492 = vpack.c.b16 %v366, %v357
  %v493 = vpack.c.b16 %v367, %v358
  %v494 = vpack.c.b16 %v368, %v359
  %v495 = vpack.c.b16 %v369, %v360
  %v496 = vpack.c.b16 %v370, %v361
  %v497 = vpack.c.b16 %v371, %v362
  %v498 = vpack.c.b16 %v381, %v372
  %v499 = vpack.c.b16 %v382, %v373
  %v500 = vpack.c.b16 %v383, %v374
  %v501 = vpack.c.b16 %v384, %v375
  %v502 = vpack.c.b16 %v385, %v376
  %v503 = vpack.c.b16 %v386, %v377
  %v504 = vpack.c.b16 %v387, %v378
  %v505 = vpack.c.b16 %v388, %v379
  %v506 = vpack.c.b16 %v389, %v380
  %v507 = vpack.c.b16 %v399, %v390
  %v508 = vpack.c.b16 %v400, %v391
  %v509 = vpack.c.b16 %v401, %v392
  %v510 = vpack.c.b16 %v402, %v393
  %v511 = vpack.c.b16 %v403, %v394
  %v512 = vpack.c.b16 %v404, %v395
  %v513 = vpack.c.b16 %v405, %v396
  %v514 = vpack.c.b16 %v406, %v397
  %v515 = vpack.c.b16 %v407, %v398
  %v516 = vpack.c.b16 %v417, %v408
  %v517 = vpack.c.b16 %v418, %v409
  %v518 = vpack.c.b16 %v419, %v410
  %v519 = vpack.c.b16 %v420, %v411
  %v520 = vpack.c.b16 %v421, %v412
  %v521 = vpack.c.b16 %v422, %v413
  %v522 = vpack.c.b16 %v423, %v414
  %v523 = vpack.c.b16 %v424, %v415
  %v524 = vpack.c.b16 %v425, %v416
  %v525 = vpack.c.b16 %v435, %v426
  %v526 = vpack.c.b16 %v436, %v427
  %v527 = vpack.c.b16 %v437, %v428
  %v528 = vpack.c.b16 %v438, %v429
  %v529 = vpack.c.b16 %v439, %v430
  %v530 = vpack.c.b16 %v440, %v431
  %v531 = vpack.c.b16 %v441, %v432
  %v532 = vpack.c.b16 %v442, %v433
  %v533 = vpack.c.b16 %v443, %v434
  %v534 = vpack.c.b16 %v453, %v444
  %v535 = vpack.c.b16 %v454, %v445
  %v536 = vpack.c.b16 %v455, %v446
  %v537 = vpack.c.b16 %v456, %v447
  %v538 = vpack.c.b16 %v457, %v448
  %v539 = vpack.c.b16 %v458, %v449
  %v540 = vpack.c.b16 %v459, %v450
  %v541 = vpack.c.b16 %v460, %v451
  %v542 = vpack.c.b16 %v461, %v452
  %v543 = vpack.c.b16 %v471, %v462
  %v544 = vpack.c.b16 %v472, %v463
  %v545 = vpack.c.b16 %v473, %v464
  %v546 = vpack.c.b16 %v474, %v465
  %v547 = vpack.c.b16 %v475, %v466
  %v548 = vpack.c.b16 %v476, %v467
  %v549 = vpack.c.b16 %v477, %v468
  %v550 = vpack.c.b16 %v478, %v469
  %v551 = vpack.c.b16 %v479, %v470
  %v768 = vunpack.c.l.b16 %v27
  %v769 = vunpack.c.l.b16 %v28
  %v770 = vunpack.c.l.b16 %v29
  %v771 = vunpack.c.l.b16 %v30
  %v772 = vunpack.c.l.b16 %v31
  %v773 = vunpack.c.l.b16 %v32
  %v774 = vunpack.c.l.b16 %v33
  %v775 = vunpack.c.l.b16 %v34
  %v776 = vunpack.c.l.b16 %v35
  %v777 = vunpack.c.l.b16 %v36
  %v778 = vunpack.c.l.b16 %v37
  %v779 = vunpack.c.l.b16 %v38
  %v780 = vunpack.c.l.b16 %v39
  %v781 = vunpack.c.l.b16 %v40
  %v782 = vunpack.c.l.b16 %v41
  %v783 = vunpack.c.l.b16 %v42
  %v784 = vunpack.c.l.b16 %v43
  %v785 = vunpack.c.l.b16 %v44
  %v786 = vunpack.c.l.b16 %v45
  %v787 = vunpack.c.l.b16 %v46
  %v788 = vunpack.c.l.b16 %v47
  %v789 = vunpack.c.l.b16 %v48
  %v790 = vunpack.c.l.b16 %v49
  %v791 = vunpack.c.l.b16 %v50
  %v792 = vunpack.c.l.b16 %v51
  %v793 = vunpack.c.l.b16 %v52
  %v794 = vunpack.c.l.b16 %v53
  %v795 = vunpack.c.l.b16 %v54
  %v796 = vunpack.c.l.b16 %v55
  %v797 = vunpack.c.l.b16 %v56
  %v798 = vunpack.c.l.b16 %v57
  %v799 = vunpack.c.l.b16 %v58
  %v800 = vunpack.c.l.b16 %v59
  %v801 = vunpack.c.l.b16 %v60
  %v802 = vunpack.c.l.b16 %v61
  %v803 = vunpack.c.l.b16 %v62
  %v804 = vunpack.c.l.b16 %v63
  %v805 = vunpack.c.l.b16 %v64
  %v806 = vunpack.c.l.b16 %v65
  %v807 = vunpack.c.l.b16 %v66
  %v808 = vunpack.c.l.b16 %v67
  %v809 = vunpack.c.l.b16 %v68
  %v810 = vunpack.c.l.b16 %v69
  %v811 = vunpack.c.l.b16 %v70
  %v812 = vunpack.c.l.b16 %v71
  %v813 = vunpack.c.l.b16 %v72
  %v814 = vunpack.c.l.b16 %v73
  %v815 = vunpack.c.l.b16 %v74
  %v816 = vunpack.c.l.b16 %v75
  %v817 = vunpack.c.l.b16 %v76
  %v818 = vunpack.c.l.b16 %v77
  %v819 = vunpack.c.l.b16 %v78
  %v820 = vunpack.c.l.b16 %v79
  %v821 = vunpack.c.l.b16 %v80
  %v822 = vunpack.c.l.b16 %v81
  %v823 = vunpack.c.l.b16 %v82
  %v824 = vunpack.c.l.b16 %v83
  %v825 = vunpack.c.l.b16 %v84
  %v826 = vunpack.c.l.b16 %v85
  %v827 = vunpack.c.l.b16 %v86
  %v828 = vunpack.c.l.b16 %v87
  %v829 = vunpack.c.l.b16 %v88
  %v830 = vunpack.c.l.b16 %v89
  %v831 = vunpack.c.l.b16 %v90
  %v832 = vunpack.c.l.b16 %v91
  %v833 = vunpack.c.l.b16 %v92
  %v834 = vunpack.c.l.b16 %v93
  %v835 = vunpack.c.l.b16 %v94
  %v836 = vunpack.c.l.b16 %v95
  %v837 = vunpack.c.l.b16 %v96
  %v838 = vunpack.c.l.b16 %v97
  %v839 = vunpack.c.l.b16 %v98
  %v840 = vunpack.c.l.b16 %v99
  %v841 = vunpack.c.l.b16 %v100
  %v842 = vunpack.c.l.b16 %v101
  %v843 = vunpack.c.l.b16 %v102
  %v844 = vunpack.c.l.b16 %v103
  %v845 = vunpack.c.l.b16 %v104
  %v846 = vunpack.c.l.b16 %v105
  %v847 = vunpack.c.l.b16 %v106
  %v848 = vunpack.c.l.b16 %v107
  %v849 = vunpack.c.l.b16 %v108
  %v850 = vunpack.c.l.b16 %v109
  %v851 = vunpack.c.l.b16 %v110
  %v852 = vunpack.c.l.b16 %v111
  %v853 = vunpack.c.l.b16 %v112
  %v854 = vunpack.c.l.b16 %v113
  %v855 = vunpack.c.l.b16 %v114
  %v856 = vunpack.c.l.b16 %v115
  %v857 = vunpack.c.l.b16 %v116
  %v858 = vunpack.c.l.b16 %v117
  %v859 = vunpack.c.l.b16 %v118
  %v860 = vunpack.c.l.b16 %v119
  %v861 = vunpack.c.l.b16 %v120
  %v862 = vunpack.c.l.b16 %v121
  %v863 = vunpack.c.l.b16 %v122
  %v864 = vunpack.c.l.b16 %v123
  %v865 = vunpack.c.l.b16 %v124
  %v866 = vunpack.c.l.b16 %v125
  %v867 = vunpack.c.l.b16 %v126
  %v868 = vunpack.c.l.b16 %v127
  %v869 = vunpack.c.l.b16 %v128
  %v870 = vunpack.c.l.b16 %v129
  %v871 = vunpack.c.l.b16 %v130
  %v872 = vunpack.c.l.b16 %v131
  %v873 = vunpack.c.l.b16 %v132
  %v874 = vunpack.c.l.b16 %v133
  %v875 = vunpack.c.l.b16 %v134
  %v876 = vunpack.c.l.b16 %v135
  %v877 = vunpack.c.l.b16 %v136
  %v878 = vunpack.c.l.b16 %v137
  %v879 = vunpack.c.l.b16 %v138
  %v880 = vunpack.c.l.b16 %v139
  %v881 = vunpack.c.l.b16 %v140
  %v882 = vunpack.c.l.b16 %v141
  %v883 = vunpack.c.l.b16 %v142
  %v884 = vunpack.c.l.b16 %v143
  %v885 = vunpack.c.l.b16 %v144
  %v886 = vunpack.c.l.b16 %v145
  %v887 = vunpack.c.l.b16 %v146
  %v888 = vunpack.c.l.b16 %v147
  %v889 = vunpack.c.l.b16 %v148
  %v890 = vunpack.c.l.b16 %v149
  %v891 = vunpack.c.l.b16 %v150
  %v892 = vunpack.c.l.b16 %v151
  %v893 = vunpack.c.l.b16 %v152
  %v894 = vunpack.c.l.b16 %v153
  %v895 = vunpack.c.l.b16 %v154
  %v896 = vunpack.c.l.b16 %v155
  %v897 = vunpack.c.l.b16 %v156
  %v898 = vunpack.c.l.b16 %v157
  %v899 = vunpack.c.l.b16 %v158
  %v900 = vunpack.c.l.b16 %v159
  %v901 = vunpack.c.l.b16 %v160
  %v902 = vunpack.c.l.b16 %v161
  %v903 = vunpack.c.l.b16 %v162
  %v904 = vunpack.c.l.b16 %v163
  %v905 = vunpack.c.l.b16 %v164
  %v906 = vunpack.c.l.b16 %v165
  %v907 = vunpack.c.l.b16 %v166
  %v908 = vunpack.c.l.b16 %v167
  %v909 = vunpack.c.l.b16 %v168
  %v910 = vunpack.c.l.b16 %v169
  %v911 = vunpack.c.l.b16 %v170
  %v912 = vpack.c.b16 %v769, %v768
  %v913 = vpack.c.b16 %v771, %v770
  %v914 = vpack.c.b16 %v773, %v772
  %v915 = vpack.c.b16 %v775, %v774
  %v916 = vpack.c.b16 %v777, %v776
  %v917 = vpack.c.b16 %v779, %v778
  %v918 = vpack.c.b16 %v781, %v780
  %v919 = vpack.c.b16 %v783, %v782
  %v920 = vpack.c.b16 %v785, %v784
  %v921 = vpack.c.b16 %v787, %v786
  %v922 = vpack.c.b16 %v789, %v788
  %v923 = vpack.c.b16 %v791, %v790
  %v924 = vpack.c.b16 %v793, %v792
  %v925 = vpack.c.b16 %v795, %v794
  %v926 = vpack.c.b16 %v797, %v796
  %v927 = vpack.c.b16 %v799, %v798
  %v928 = vpack.c.b16 %v801, %v800
  %v929 = vpack.c.b16 %v803, %v802
  %v930 = vpack.c.b16 %v805, %v804
  %v931 = vpack.c.b16 %v807, %v806
  %v932 = vpack.c.b16 %v809, %v808
  %v933 = vpack.c.b16 %v811, %v810
  %v934 = vpack.c.b16 %v813, %v812
  %v935 = vpack.c.b16 %v815, %v814
  %v936 = vpack.c.b16 %v817, %v816
  %v937 = vpack.c.b16 %v819, %v818
  %v938 = vpack.c.b16 %v821, %v820
  %v939 = vpack.c.b16 %v823, %v822
  %v940 = vpack.c.b16 %v825, %v824
  %v941 = vpack.c.b16 %v827, %v826
  %v942 = vpack.c.b16 %v829, %v828
  %v943 = vpack.c.b16 %v831, %v830
  %v944 = vpack.c.b16 %v833, %v832
  %v945 = vpack.c.b16 %v835, %v834
  %v946 = vpack.c.b16 %v837, %v836
  %v947 = vpack.c.b16 %v839, %v838
  %v948 = vpack.c.b16 %v841, %v840
  %v949 = vpack.c.b16 %v843, %v842
  %v950 = vpack.c.b16 %v845, %v844
  %v951 = vpack.c.b16 %v847, %v846
  %v952 = vpack.c.b16 %v849, %v848
  %v953 = vpack.c.b16 %v851, %v850
  %v954 = vpack.c.b16 %v853, %v852
  %v955 = vpack.c.b16 %v855, %v854
  %v956 = vpack.c.b16 %v857, %v856
  %v957 = vpack.c.b16 %v859, %v858
  %v958 = vpack.c.b16 %v861, %v860
  %v959 = vpack.c.b16 %v863, %v862
  %v960 = vpack.c.b16 %v865, %v864
  %v961 = vpack.c.b16 %v867, %v866
  %v962 = vpack.c.b16 %v869, %v868
  %v963 = vpack.c.b16 %v871, %v870
  %v964 = vpack.c.b16 %v873, %v872
  %v965 = vpack.c.b16 %v875, %v874
  %v966 = vpack.c.b16 %v877, %v876
  %v967 = vpack.c.b16 %v879, %v878
  %v968 = vpack.c.b16 %v881, %v880
  %v969 = vpack.c.b16 %v883, %v882
  %v970 = vpack.c.b16 %v885, %v884
  %v971 = vpack.c.b16 %v887, %v886
  %v972 = vpack.c.b16 %v889, %v888
  %v973 = vpack.c.b16 %v891, %v890
  %v974 = vpack.c.b16 %v893, %v892
  %v975 = vpack.c.b16 %v895, %v894
  %v976 = vpack.c.b16 %v897, %v896
  %v977 = vpack.c.b16 %v899, %v898
  %v978 = vpack.c.b16 %v901, %v900
  %v979 = vpack.c.b16 %v903, %v902
  %v980 = vpack.c.b16 %v905, %v904
  %v981 = vpack.c.b16 %v907, %v906
  %v982 = vpack.c.b16 %v909, %v908
  %v983 = vpack.c.b16 %v911, %v910
  %1056 = vmatprep.subr.bf16.mxu0 0
  %1057 = vmatpush1.bf16.msra.mxu0 %v912
  %1058 = vmatprep.subr.bf16.mxu0 0
  %1059 = vmatpush1.bf16.msra.mxu0 %v913
  %1060 = vmatprep.subr.bf16.mxu0 0
  %1061 = vmatpush1.bf16.msra.mxu0 %v914
  %1062 = vmatprep.subr.bf16.mxu0 0
  %1063 = vmatpush1.bf16.msra.mxu0 %v915
  %1064 = vmatprep.subr.bf16.mxu0 0
  %1065 = vmatpush1.bf16.msra.mxu0 %v916
  %1066 = vmatprep.subr.bf16.mxu0 0
  %1067 = vmatpush1.bf16.msra.mxu0 %v917
  %1068 = vmatprep.subr.bf16.mxu0 0
  %1069 = vmatpush1.bf16.msra.mxu0 %v918
  %1070 = vmatprep.subr.bf16.mxu0 0
  %1071 = vmatpush1.bf16.msra.mxu0 %v919
  %1072 = vmatprep.subr.bf16.mxu0 0
  %1073 = vmatpush1.bf16.msra.mxu0 %v920
  %1074 = vmatprep.subr.bf16.mxu0 0
  %1075 = vmatpush1.bf16.msra.mxu0 %v921
  %1076 = vmatprep.subr.bf16.mxu0 0
  %1077 = vmatpush1.bf16.msra.mxu0 %v922
  %1078 = vmatprep.subr.bf16.mxu0 0
  %1079 = vmatpush1.bf16.msra.mxu0 %v923
  %1080 = vmatprep.subr.bf16.mxu0 0
  %1081 = vmatpush1.bf16.msra.mxu0 %v924
  %1082 = vmatprep.subr.bf16.mxu0 0
  %1083 = vmatpush1.bf16.msra.mxu0 %v925
  %1084 = vmatprep.subr.bf16.mxu0 0
  %1085 = vmatpush1.bf16.msra.mxu0 %v926
  %1086 = vmatprep.subr.bf16.mxu0 0
  %1087 = vmatpush1.bf16.msra.mxu0 %v927
  %1088 = vmatprep.mubr.bf16.mxu0 %v481
  %1089 = vmatmul.mubr.bf16.gmra.mrb[0].mxu0 %v480
  %v1090 = vpop.f32.mrb[0].mxu0
  %v1091 = vadd.f32 0.0, %v1090
  %v1092 = vpop.f32.mrb[0].mxu0
  %v1093 = vpop.f32.mrb[0].mxu0
  %v1094 = vadd.f32 0.0, %v1093
  %v1095 = vpop.f32.mrb[0].mxu0
  %1096 = vmatprep.mubr.bf16.mxu0 %v490
  %1097 = vmatmul.mubr.bf16.gmra.mrb[0].mxu0 %v489
  %v1098 = vpop.f32.mrb[0].mxu0
  %v1099 = vadd.f32 0.0, %v1098
  %v1100 = vpop.f32.mrb[0].mxu0
  %v1101 = vpop.f32.mrb[0].mxu0
  %v1102 = vadd.f32 0.0, %v1101
  %v1103 = vpop.f32.mrb[0].mxu0
  %1104 = vmatprep.mubr.bf16.mxu0 %v499
  %1105 = vmatmul.mubr.bf16.gmra.mrb[0].mxu0 %v498
  %v1106 = vpop.f32.mrb[0].mxu0
  %v1107 = vadd.f32 0.0, %v1106
  %v1108 = vpop.f32.mrb[0].mxu0
  %v1109 = vpop.f32.mrb[0].mxu0
  %v1110 = vadd.f32 0.0, %v1109
  %v1111 = vpop.f32.mrb[0].mxu0
  %1112 = vmatprep.mubr.bf16.mxu0 %v508
  %1113 = vmatmul.mubr.bf16.gmra.mrb[0].mxu0 %v507
  %v1114 = vpop.f32.mrb[0].mxu0
  %v1115 = vadd.f32 0.0, %v1114
  %v1116 = vpop.f32.mrb[0].mxu0
  %v1117 = vpop.f32.mrb[0].mxu0
  %v1118 = vadd.f32 0.0, %v1117
  %v1119 = vpop.f32.mrb[0].mxu0
  %1120 = vmatprep.mubr.bf16.mxu0 %v517
  %1121 = vmatmul.mubr.bf16.gmra.mrb[0].mxu0 %v516
  %v1122 = vpop.f32.mrb[0].mxu0
  %v1123 = vadd.f32 0.0, %v1122
  %v1124 = vpop.f32.mrb[0].mxu0
  %v1125 = vpop.f32.mrb[0].mxu0
  %v1126 = vadd.f32 0.0, %v1125
  %v1127 = vpop.f32.mrb[0].mxu0
  %1128 = vmatprep.mubr.bf16.mxu0 %v526
  %1129 = vmatmul.mubr.bf16.gmra.mrb[0].mxu0 %v525
  %v1130 = vpop.f32.mrb[0].mxu0
  %v1131 = vadd.f32 0.0, %v1130
  %v1132 = vpop.f32.mrb[0].mxu0
  %v1133 = vpop.f32.mrb[0].mxu0
  %v1134 = vadd.f32 0.0, %v1133
  %v1135 = vpop.f32.mrb[0].mxu0
  %1136 = vmatprep.mubr.bf16.mxu0 %v535
  %1137 = vmatmul.mubr.bf16.gmra.mrb[0].mxu0 %v534
  %v1138 = vpop.f32.mrb[0].mxu0
  %v1139 = vadd.f32 0.0, %v1138
  %v1140 = vpop.f32.mrb[0].mxu0
  %v1141 = vpop.f32.mrb[0].mxu0
  %v1142 = vadd.f32 0.0, %v1141
  %v1143 = vpop.f32.mrb[0].mxu0
  %1144 = vmatprep.mubr.bf16.mxu0 %v544
  %1145 = vmatmul.mubr.bf16.gmra.mrb[0].mxu0 %v543
  %v1146 = vpop.f32.mrb[0].mxu0
  %v1147 = vadd.f32 0.0, %v1146
  %v1148 = vpop.f32.mrb[0].mxu0
  %v1149 = vpop.f32.mrb[0].mxu0
  %v1150 = vadd.f32 0.0, %v1149
  %v1151 = vpop.f32.mrb[0].mxu0
  %1152 = vdwg.mxu0
  %1153 = vmatprep.subr.bf16.mxu0 0
  %1154 = vmatpush1.bf16.msra.mxu0 %v928
  %1155 = vmatprep.subr.bf16.mxu0 0
  %1156 = vmatpush1.bf16.msra.mxu0 %v929
  %1157 = vmatprep.subr.bf16.mxu0 0
  %1158 = vmatpush1.bf16.msra.mxu0 %v930
  %1159 = vmatprep.subr.bf16.mxu0 0
  %1160 = vmatpush1.bf16.msra.mxu0 %v931
  %1161 = vmatprep.subr.bf16.mxu0 0
  %1162 = vmatpush1.bf16.msra.mxu0 %v932
  %1163 = vmatprep.subr.bf16.mxu0 0
  %1164 = vmatpush1.bf16.msra.mxu0 %v933
  %1165 = vmatprep.subr.bf16.mxu0 0
  %1166 = vmatpush1.bf16.msra.mxu0 %v934
  %1167 = vmatprep.subr.bf16.mxu0 0
  %1168 = vmatpush1.bf16.msra.mxu0 %v935
  %1169 = vmatprep.subr.bf16.mxu0 0
  %1170 = vmatpush1.bf16.msra.mxu0 %v936
  %1171 = vmatprep.subr.bf16.mxu0 0
  %1172 = vmatpush1.bf16.msra.mxu0 %v937
  %1173 = vmatprep.subr.bf16.mxu0 0
  %1174 = vmatpush1.bf16.msra.mxu0 %v938
  %1175 = vmatprep.subr.bf16.mxu0 0
  %1176 = vmatpush1.bf16.msra.mxu0 %v939
  %1177 = vmatprep.subr.bf16.mxu0 0
  %1178 = vmatpush1.bf16.msra.mxu0 %v940
  %1179 = vmatprep.subr.bf16.mxu0 0
  %1180 = vmatpush1.bf16.msra.mxu0 %v941
  %1181 = vmatprep.subr.bf16.mxu0 0
  %1182 = vmatpush1.bf16.msra.mxu0 %v942
  %1183 = vmatprep.subr.bf16.mxu0 0
  %1184 = vmatpush1.bf16.msra.mxu0 %v943
  %1185 = vmatprep.mubr.bf16.mxu0 %v483
  %1186 = vmatmul.mubr.bf16.gmra.mrb[0].mxu0 %v482
  %v1187 = vpop.f32.mrb[0].mxu0
  %v1188 = vadd.f32 %v1091, %v1187
  %v1189 = vpop.f32.mrb[0].mxu0
  %v1190 = vpop.f32.mrb[0].mxu0
  %v1191 = vadd.f32 %v1094, %v1190
  %v1192 = vpop.f32.mrb[0].mxu0
  %1193 = vmatprep.mubr.bf16.mxu0 %v492
  %1194 = vmatmul.mubr.bf16.gmra.mrb[0].mxu0 %v491
  %v1195 = vpop.f32.mrb[0].mxu0
  %v1196 = vadd.f32 %v1099, %v1195
  %v1197 = vpop.f32.mrb[0].mxu0
  %v1198 = vpop.f32.mrb[0].mxu0
  %v1199 = vadd.f32 %v1102, %v1198
  %v1200 = vpop.f32.mrb[0].mxu0
  %1201 = vmatprep.mubr.bf16.mxu0 %v501
  %1202 = vmatmul.mubr.bf16.gmra.mrb[0].mxu0 %v500
  %v1203 = vpop.f32.mrb[0].mxu0
  %v1204 = vadd.f32 %v1107, %v1203
  %v1205 = vpop.f32.mrb[0].mxu0
  %v1206 = vpop.f32.mrb[0].mxu0
  %v1207 = vadd.f32 %v1110, %v1206
  %v1208 = vpop.f32.mrb[0].mxu0
  %1209 = vmatprep.mubr.bf16.mxu0 %v510
  %1210 = vmatmul.mubr.bf16.gmra.mrb[0].mxu0 %v509
  %v1211 = vpop.f32.mrb[0].mxu0
  %v1212 = vadd.f32 %v1115, %v1211
  %v1213 = vpop.f32.mrb[0].mxu0
  %v1214 = vpop.f32.mrb[0].mxu0
  %v1215 = vadd.f32 %v1118, %v1214
  %v1216 = vpop.f32.mrb[0].mxu0
  %1217 = vmatprep.mubr.bf16.mxu0 %v519
  %1218 = vmatmul.mubr.bf16.gmra.mrb[0].mxu0 %v518
  %v1219 = vpop.f32.mrb[0].mxu0
  %v1220 = vadd.f32 %v1123, %v1219
  %v1221 = vpop.f32.mrb[0].mxu0
  %v1222 = vpop.f32.mrb[0].mxu0
  %v1223 = vadd.f32 %v1126, %v1222
  %v1224 = vpop.f32.mrb[0].mxu0
  %1225 = vmatprep.mubr.bf16.mxu0 %v528
  %1226 = vmatmul.mubr.bf16.gmra.mrb[0].mxu0 %v527
  %v1227 = vpop.f32.mrb[0].mxu0
  %v1228 = vadd.f32 %v1131, %v1227
  %v1229 = vpop.f32.mrb[0].mxu0
  %v1230 = vpop.f32.mrb[0].mxu0
  %v1231 = vadd.f32 %v1134, %v1230
  %v1232 = vpop.f32.mrb[0].mxu0
  %1233 = vmatprep.mubr.bf16.mxu0 %v537
  %1234 = vmatmul.mubr.bf16.gmra.mrb[0].mxu0 %v536
  %v1235 = vpop.f32.mrb[0].mxu0
  %v1236 = vadd.f32 %v1139, %v1235
  %v1237 = vpop.f32.mrb[0].mxu0
  %v1238 = vpop.f32.mrb[0].mxu0
  %v1239 = vadd.f32 %v1142, %v1238
  %v1240 = vpop.f32.mrb[0].mxu0
  %1241 = vmatprep.mubr.bf16.mxu0 %v546
  %1242 = vmatmul.mubr.bf16.gmra.mrb[0].mxu0 %v545
  %v1243 = vpop.f32.mrb[0].mxu0
  %v1244 = vadd.f32 %v1147, %v1243
  %v1245 = vpop.f32.mrb[0].mxu0
  %v1246 = vpop.f32.mrb[0].mxu0
  %v1247 = vadd.f32 %v1150, %v1246
  %v1248 = vpop.f32.mrb[0].mxu0
  %1249 = vdwg.mxu0
  %1250 = vmatprep.subr.bf16.mxu0 0
  %1251 = vmatpush1.bf16.msra.mxu0 %v944
  %1252 = vmatprep.subr.bf16.mxu0 0
  %1253 = vmatpush1.bf16.msra.mxu0 %v945
  %1254 = vmatprep.subr.bf16.mxu0 0
  %1255 = vmatpush1.bf16.msra.mxu0 %v946
  %1256 = vmatprep.subr.bf16.mxu0 0
  %1257 = vmatpush1.bf16.msra.mxu0 %v947
  %1258 = vmatprep.subr.bf16.mxu0 0
  %1259 = vmatpush1.bf16.msra.mxu0 %v948
  %1260 = vmatprep.subr.bf16.mxu0 0
  %1261 = vmatpush1.bf16.msra.mxu0 %v949
  %1262 = vmatprep.subr.bf16.mxu0 0
  %1263 = vmatpush1.bf16.msra.mxu0 %v950
  %1264 = vmatprep.subr.bf16.mxu0 0
  %1265 = vmatpush1.bf16.msra.mxu0 %v951
  %1266 = vmatprep.subr.bf16.mxu0 0
  %1267 = vmatpush1.bf16.msra.mxu0 %v952
  %1268 = vmatprep.subr.bf16.mxu0 0
  %1269 = vmatpush1.bf16.msra.mxu0 %v953
  %1270 = vmatprep.subr.bf16.mxu0 0
  %1271 = vmatpush1.bf16.msra.mxu0 %v954
  %1272 = vmatprep.subr.bf16.mxu0 0
  %1273 = vmatpush1.bf16.msra.mxu0 %v955
  %1274 = vmatprep.subr.bf16.mxu0 0
  %1275 = vmatpush1.bf16.msra.mxu0 %v956
  %1276 = vmatprep.subr.bf16.mxu0 0
  %1277 = vmatpush1.bf16.msra.mxu0 %v957
  %1278 = vmatprep.subr.bf16.mxu0 0
  %1279 = vmatpush1.bf16.msra.mxu0 %v958
  %1280 = vmatprep.subr.bf16.mxu0 0
  %1281 = vmatpush1.bf16.msra.mxu0 %v959
  %1282 = vmatprep.mubr.bf16.mxu0 %v485
  %1283 = vmatmul.mubr.bf16.gmra.mrb[0].mxu0 %v484
  %v1284 = vpop.f32.mrb[0].mxu0
  %v1285 = vadd.f32 %v1188, %v1284
  %v1286 = vpop.f32.mrb[0].mxu0
  %v1287 = vpop.f32.mrb[0].mxu0
  %v1288 = vadd.f32 %v1191, %v1287
  %v1289 = vpop.f32.mrb[0].mxu0
  %1290 = vmatprep.mubr.bf16.mxu0 %v494
  %1291 = vmatmul.mubr.bf16.gmra.mrb[0].mxu0 %v493
  %v1292 = vpop.f32.mrb[0].mxu0
  %v1293 = vadd.f32 %v1196, %v1292
  %v1294 = vpop.f32.mrb[0].mxu0
  %v1295 = vpop.f32.mrb[0].mxu0
  %v1296 = vadd.f32 %v1199, %v1295
  %v1297 = vpop.f32.mrb[0].mxu0
  %1298 = vmatprep.mubr.bf16.mxu0 %v503
  %1299 = vmatmul.mubr.bf16.gmra.mrb[0].mxu0 %v502
  %v1300 = vpop.f32.mrb[0].mxu0
  %v1301 = vadd.f32 %v1204, %v1300
  %v1302 = vpop.f32.mrb[0].mxu0
  %v1303 = vpop.f32.mrb[0].mxu0
  %v1304 = vadd.f32 %v1207, %v1303
  %v1305 = vpop.f32.mrb[0].mxu0
  %1306 = vmatprep.mubr.bf16.mxu0 %v512
  %1307 = vmatmul.mubr.bf16.gmra.mrb[0].mxu0 %v511
  %v1308 = vpop.f32.mrb[0].mxu0
  %v1309 = vadd.f32 %v1212, %v1308
  %v1310 = vpop.f32.mrb[0].mxu0
  %v1311 = vpop.f32.mrb[0].mxu0
  %v1312 = vadd.f32 %v1215, %v1311
  %v1313 = vpop.f32.mrb[0].mxu0
  %1314 = vmatprep.mubr.bf16.mxu0 %v521
  %1315 = vmatmul.mubr.bf16.gmra.mrb[0].mxu0 %v520
  %v1316 = vpop.f32.mrb[0].mxu0
  %v1317 = vadd.f32 %v1220, %v1316
  %v1318 = vpop.f32.mrb[0].mxu0
  %v1319 = vpop.f32.mrb[0].mxu0
  %v1320 = vadd.f32 %v1223, %v1319
  %v1321 = vpop.f32.mrb[0].mxu0
  %1322 = vmatprep.mubr.bf16.mxu0 %v530
  %1323 = vmatmul.mubr.bf16.gmra.mrb[0].mxu0 %v529
  %v1324 = vpop.f32.mrb[0].mxu0
  %v1325 = vadd.f32 %v1228, %v1324
  %v1326 = vpop.f32.mrb[0].mxu0
  %v1327 = vpop.f32.mrb[0].mxu0
  %v1328 = vadd.f32 %v1231, %v1327
  %v1329 = vpop.f32.mrb[0].mxu0
  %1330 = vmatprep.mubr.bf16.mxu0 %v539
  %1331 = vmatmul.mubr.bf16.gmra.mrb[0].mxu0 %v538
  %v1332 = vpop.f32.mrb[0].mxu0
  %v1333 = vadd.f32 %v1236, %v1332
  %v1334 = vpop.f32.mrb[0].mxu0
  %v1335 = vpop.f32.mrb[0].mxu0
  %v1336 = vadd.f32 %v1239, %v1335
  %v1337 = vpop.f32.mrb[0].mxu0
  %1338 = vmatprep.mubr.bf16.mxu0 %v548
  %1339 = vmatmul.mubr.bf16.gmra.mrb[0].mxu0 %v547
  %v1340 = vpop.f32.mrb[0].mxu0
  %v1341 = vadd.f32 %v1244, %v1340
  %v1342 = vpop.f32.mrb[0].mxu0
  %v1343 = vpop.f32.mrb[0].mxu0
  %v1344 = vadd.f32 %v1247, %v1343
  %v1345 = vpop.f32.mrb[0].mxu0
  %1346 = vdwg.mxu0
  %1347 = vmatprep.subr.bf16.mxu0 0
  %1348 = vmatpush1.bf16.msra.mxu0 %v960
  %1349 = vmatprep.subr.bf16.mxu0 0
  %1350 = vmatpush1.bf16.msra.mxu0 %v961
  %1351 = vmatprep.subr.bf16.mxu0 0
  %1352 = vmatpush1.bf16.msra.mxu0 %v962
  %1353 = vmatprep.subr.bf16.mxu0 0
  %1354 = vmatpush1.bf16.msra.mxu0 %v963
  %1355 = vmatprep.subr.bf16.mxu0 0
  %1356 = vmatpush1.bf16.msra.mxu0 %v964
  %1357 = vmatprep.subr.bf16.mxu0 0
  %1358 = vmatpush1.bf16.msra.mxu0 %v965
  %1359 = vmatprep.subr.bf16.mxu0 0
  %1360 = vmatpush1.bf16.msra.mxu0 %v966
  %1361 = vmatprep.subr.bf16.mxu0 0
  %1362 = vmatpush1.bf16.msra.mxu0 %v967
  %1363 = vmatprep.subr.bf16.mxu0 0
  %1364 = vmatpush1.bf16.msra.mxu0 %v968
  %1365 = vmatprep.subr.bf16.mxu0 0
  %1366 = vmatpush1.bf16.msra.mxu0 %v969
  %1367 = vmatprep.subr.bf16.mxu0 0
  %1368 = vmatpush1.bf16.msra.mxu0 %v970
  %1369 = vmatprep.subr.bf16.mxu0 0
  %1370 = vmatpush1.bf16.msra.mxu0 %v971
  %1371 = vmatprep.subr.bf16.mxu0 0
  %1372 = vmatpush1.bf16.msra.mxu0 %v972
  %1373 = vmatprep.subr.bf16.mxu0 0
  %1374 = vmatpush1.bf16.msra.mxu0 %v973
  %1375 = vmatprep.subr.bf16.mxu0 0
  %1376 = vmatpush1.bf16.msra.mxu0 %v974
  %1377 = vmatprep.subr.bf16.mxu0 0
  %1378 = vmatpush1.bf16.msra.mxu0 %v975
  %1379 = vmatprep.mubr.bf16.mxu0 %v487
  %1380 = vmatmul.mubr.bf16.gmra.mrb[0].mxu0 %v486
  %v1381 = vpop.f32.mrb[0].mxu0
  %v1382 = vadd.f32 %v1285, %v1381
  %v1383 = vpop.f32.mrb[0].mxu0
  %v1384 = vpop.f32.mrb[0].mxu0
  %v1385 = vadd.f32 %v1288, %v1384
  %v1386 = vpop.f32.mrb[0].mxu0
  %1387 = vmatprep.mubr.bf16.mxu0 %v496
  %1388 = vmatmul.mubr.bf16.gmra.mrb[0].mxu0 %v495
  %v1389 = vpop.f32.mrb[0].mxu0
  %v1390 = vadd.f32 %v1293, %v1389
  %v1391 = vpop.f32.mrb[0].mxu0
  %v1392 = vpop.f32.mrb[0].mxu0
  %v1393 = vadd.f32 %v1296, %v1392
  %v1394 = vpop.f32.mrb[0].mxu0
  %1395 = vmatprep.mubr.bf16.mxu0 %v505
  %1396 = vmatmul.mubr.bf16.gmra.mrb[0].mxu0 %v504
  %v1397 = vpop.f32.mrb[0].mxu0
  %v1398 = vadd.f32 %v1301, %v1397
  %v1399 = vpop.f32.mrb[0].mxu0
  %v1400 = vpop.f32.mrb[0].mxu0
  %v1401 = vadd.f32 %v1304, %v1400
  %v1402 = vpop.f32.mrb[0].mxu0
  %1403 = vmatprep.mubr.bf16.mxu0 %v514
  %1404 = vmatmul.mubr.bf16.gmra.mrb[0].mxu0 %v513
  %v1405 = vpop.f32.mrb[0].mxu0
  %v1406 = vadd.f32 %v1309, %v1405
  %v1407 = vpop.f32.mrb[0].mxu0
  %v1408 = vpop.f32.mrb[0].mxu0
  %v1409 = vadd.f32 %v1312, %v1408
  %v1410 = vpop.f32.mrb[0].mxu0
  %1411 = vmatprep.mubr.bf16.mxu0 %v523
  %1412 = vmatmul.mubr.bf16.gmra.mrb[0].mxu0 %v522
  %v1413 = vpop.f32.mrb[0].mxu0
  %v1414 = vadd.f32 %v1317, %v1413
  %v1415 = vpop.f32.mrb[0].mxu0
  %v1416 = vpop.f32.mrb[0].mxu0
  %v1417 = vadd.f32 %v1320, %v1416
  %v1418 = vpop.f32.mrb[0].mxu0
  %1419 = vmatprep.mubr.bf16.mxu0 %v532
  %1420 = vmatmul.mubr.bf16.gmra.mrb[0].mxu0 %v531
  %v1421 = vpop.f32.mrb[0].mxu0
  %v1422 = vadd.f32 %v1325, %v1421
  %v1423 = vpop.f32.mrb[0].mxu0
  %v1424 = vpop.f32.mrb[0].mxu0
  %v1425 = vadd.f32 %v1328, %v1424
  %v1426 = vpop.f32.mrb[0].mxu0
  %1427 = vmatprep.mubr.bf16.mxu0 %v541
  %1428 = vmatmul.mubr.bf16.gmra.mrb[0].mxu0 %v540
  %v1429 = vpop.f32.mrb[0].mxu0
  %v1430 = vadd.f32 %v1333, %v1429
  %v1431 = vpop.f32.mrb[0].mxu0
  %v1432 = vpop.f32.mrb[0].mxu0
  %v1433 = vadd.f32 %v1336, %v1432
  %v1434 = vpop.f32.mrb[0].mxu0
  %1435 = vmatprep.mubr.bf16.mxu0 %v550
  %1436 = vmatmul.mubr.bf16.gmra.mrb[0].mxu0 %v549
  %v1437 = vpop.f32.mrb[0].mxu0
  %v1438 = vadd.f32 %v1341, %v1437
  %v1439 = vpop.f32.mrb[0].mxu0
  %v1440 = vpop.f32.mrb[0].mxu0
  %v1441 = vadd.f32 %v1344, %v1440
  %v1442 = vpop.f32.mrb[0].mxu0
  %1443 = vdwg.mxu0
  %1444 = vmatprep.subr.bf16.mxu0 0
  %1445 = vmatpush1.bf16.msra.mxu0 %v976
  %1446 = vmatprep.subr.bf16.mxu0 0
  %1447 = vmatpush1.bf16.msra.mxu0 %v977
  %1448 = vmatprep.subr.bf16.mxu0 0
  %1449 = vmatpush1.bf16.msra.mxu0 %v978
  %1450 = vmatprep.subr.bf16.mxu0 0
  %1451 = vmatpush1.bf16.msra.mxu0 %v979
  %1452 = vmatprep.subr.bf16.mxu0 0
  %1453 = vmatpush1.bf16.msra.mxu0 %v980
  %1454 = vmatprep.subr.bf16.mxu0 0
  %1455 = vmatpush1.bf16.msra.mxu0 %v981
  %1456 = vmatprep.subr.bf16.mxu0 0
  %1457 = vmatpush1.bf16.msra.mxu0 %v982
  %1458 = vmatprep.subr.bf16.mxu0 0
  %1459 = vmatpush1.bf16.msra.mxu0 %v983
  %1460 = vmatprep.subr.bf16.mxu0 0
  %1461 = vmatpush1.bf16.msra.mxu0 0
  %1462 = vmatprep.subr.bf16.mxu0 0
  %1463 = vmatpush1.bf16.msra.mxu0 0
  %1464 = vmatprep.subr.bf16.mxu0 0
  %1465 = vmatpush1.bf16.msra.mxu0 0
  %1466 = vmatprep.subr.bf16.mxu0 0
  %1467 = vmatpush1.bf16.msra.mxu0 0
  %1468 = vmatprep.subr.bf16.mxu0 0
  %1469 = vmatpush1.bf16.msra.mxu0 0
  %1470 = vmatprep.subr.bf16.mxu0 0
  %1471 = vmatpush1.bf16.msra.mxu0 0
  %1472 = vmatprep.subr.bf16.mxu0 0
  %1473 = vmatpush1.bf16.msra.mxu0 0
  %1474 = vmatprep.subr.bf16.mxu0 0
  %1475 = vmatpush1.bf16.msra.mxu0 0
  %1476 = vmatprep.mubr.bf16.mxu0 0
  %1477 = vmatmul.mubr.bf16.gmra.mrb[0].mxu0 %v488
  %v1478 = vpop.f32.mrb[0].mxu0
  %v1479 = vadd.f32 %v1382, %v1478
  %v1480 = vpop.f32.mrb[0].mxu0
  %v1481 = vpop.f32.mrb[0].mxu0
  %v1482 = vadd.f32 %v1385, %v1481
  %v1483 = vpop.f32.mrb[0].mxu0
  %1484 = vmatprep.mubr.bf16.mxu0 0
  %1485 = vmatmul.mubr.bf16.gmra.mrb[0].mxu0 %v497
  %v1486 = vpop.f32.mrb[0].mxu0
  %v1487 = vadd.f32 %v1390, %v1486
  %v1488 = vpop.f32.mrb[0].mxu0
  %v1489 = vpop.f32.mrb[0].mxu0
  %v1490 = vadd.f32 %v1393, %v1489
  %v1491 = vpop.f32.mrb[0].mxu0
  %1492 = vmatprep.mubr.bf16.mxu0 0
  %1493 = vmatmul.mubr.bf16.gmra.mrb[0].mxu0 %v506
  %v1494 = vpop.f32.mrb[0].mxu0
  %v1495 = vadd.f32 %v1398, %v1494
  %v1496 = vpop.f32.mrb[0].mxu0
  %v1497 = vpop.f32.mrb[0].mxu0
  %v1498 = vadd.f32 %v1401, %v1497
  %v1499 = vpop.f32.mrb[0].mxu0
  %1500 = vmatprep.mubr.bf16.mxu0 0
  %1501 = vmatmul.mubr.bf16.gmra.mrb[0].mxu0 %v515
  %v1502 = vpop.f32.mrb[0].mxu0
  %v1503 = vadd.f32 %v1406, %v1502
  %v1504 = vpop.f32.mrb[0].mxu0
  %v1505 = vpop.f32.mrb[0].mxu0
  %v1506 = vadd.f32 %v1409, %v1505
  %v1507 = vpop.f32.mrb[0].mxu0
  %1508 = vmatprep.mubr.bf16.mxu0 0
  %1509 = vmatmul.mubr.bf16.gmra.mrb[0].mxu0 %v524
  %v1510 = vpop.f32.mrb[0].mxu0
  %v1511 = vadd.f32 %v1414, %v1510
  %v1512 = vpop.f32.mrb[0].mxu0
  %v1513 = vpop.f32.mrb[0].mxu0
  %v1514 = vadd.f32 %v1417, %v1513
  %v1515 = vpop.f32.mrb[0].mxu0
  %1516 = vmatprep.mubr.bf16.mxu0 0
  %1517 = vmatmul.mubr.bf16.gmra.mrb[0].mxu0 %v533
  %v1518 = vpop.f32.mrb[0].mxu0
  %v1519 = vadd.f32 %v1422, %v1518
  %v1520 = vpop.f32.mrb[0].mxu0
  %v1521 = vpop.f32.mrb[0].mxu0
  %v1522 = vadd.f32 %v1425, %v1521
  %v1523 = vpop.f32.mrb[0].mxu0
  %1524 = vmatprep.mubr.bf16.mxu0 0
  %1525 = vmatmul.mubr.bf16.gmra.mrb[0].mxu0 %v542
  %v1526 = vpop.f32.mrb[0].mxu0
  %v1527 = vadd.f32 %v1430, %v1526
  %v1528 = vpop.f32.mrb[0].mxu0
  %v1529 = vpop.f32.mrb[0].mxu0
  %v1530 = vadd.f32 %v1433, %v1529
  %v1531 = vpop.f32.mrb[0].mxu0
  %1532 = vmatprep.mubr.bf16.mxu0 0
  %1533 = vmatmul.mubr.bf16.gmra.mrb[0].mxu0 %v551
  %v1534 = vpop.f32.mrb[0].mxu0
  %v1535 = vadd.f32 %v1438, %v1534
  %v1536 = vpop.f32.mrb[0].mxu0
  %v1537 = vpop.f32.mrb[0].mxu0
  %v1538 = vadd.f32 %v1441, %v1537
  %v1539 = vpop.f32.mrb[0].mxu0
  %1540 = vdwg.mxu0
  %v1542 = vlaneseq
  %v1543 = vshrl.u32 %v1542, 7
  %v1544 = vsub.s32 0, %v1543
  %v1545 = vrot.slane %v171, %v1544
  %v1547 = vmul.f32 %v1479, %v1545
  %v1548 = vmul.f32 %v1482, %v1545
  %v1549 = vmul.f32 %v1487, %v1545
  %v1550 = vmul.f32 %v1490, %v1545
  %v1551 = vmul.f32 %v1495, %v1545
  %v1552 = vmul.f32 %v1498, %v1545
  %v1553 = vmul.f32 %v1503, %v1545
  %v1554 = vmul.f32 %v1506, %v1545
  %v1555 = vmul.f32 %v1511, %v1545
  %v1556 = vmul.f32 %v1514, %v1545
  %v1557 = vmul.f32 %v1519, %v1545
  %v1558 = vmul.f32 %v1522, %v1545
  %v1559 = vmul.f32 %v1527, %v1545
  %v1560 = vmul.f32 %v1530, %v1545
  %v1561 = vmul.f32 %v1535, %v1545
  %v1562 = vmul.f32 %v1538, %v1545
  %v1564 = vlaneseq
  %v1565 = vshrl.u32 %v1564, 7
  %v1566 = vsub.s32 0, %v1565
  %v1567 = vrot.slane %v172, %v1566
  %v1569 = vadd.f32 %v1547, %v1567
  %v1570 = vadd.f32 %v1548, %v1567
  %v1571 = vadd.f32 %v1549, %v1567
  %v1572 = vadd.f32 %v1550, %v1567
  %v1573 = vadd.f32 %v1551, %v1567
  %v1574 = vadd.f32 %v1552, %v1567
  %v1575 = vadd.f32 %v1553, %v1567
  %v1576 = vadd.f32 %v1554, %v1567
  %v1577 = vadd.f32 %v1555, %v1567
  %v1578 = vadd.f32 %v1556, %v1567
  %v1579 = vadd.f32 %v1557, %v1567
  %v1580 = vadd.f32 %v1558, %v1567
  %v1581 = vadd.f32 %v1559, %v1567
  %v1582 = vadd.f32 %v1560, %v1567
  %v1583 = vadd.f32 %v1561, %v1567
  %v1584 = vadd.f32 %v1562, %v1567
  %s1585 = smul.addr %s173, 4
  %s1586 = scalar_lea.vmem %s1, %s1585
  %v1587 = vld [vmem:[%s1586] sm:$0xff]
  %v1588 = vld [vmem:[%s1586 + $0x8] sm:$0xff]
  %v1589 = vld [vmem:[%s1586 + $0x10] sm:$0xff]
  %v1590 = vld [vmem:[%s1586 + $0x18] sm:$0xff]
  %v1591 = vld [vmem:[%s1586 + $0x20] sm:$0xf]
  %v1592 = vld [vmem:[%s1586 + $0x24] sm:$0xff]
  %v1593 = vld [vmem:[%s1586 + $0x2c] sm:$0xff]
  %v1594 = vld [vmem:[%s1586 + $0x34] sm:$0xff]
  %v1595 = vld [vmem:[%s1586 + $0x3c] sm:$0xff]
  %v1596 = vld [vmem:[%s1586 + $0x44] sm:$0xf]
  %v1597 = vld [vmem:[%s1586 + $0x48] sm:$0xff]
  %v1598 = vld [vmem:[%s1586 + $0x50] sm:$0xff]
  %v1599 = vld [vmem:[%s1586 + $0x58] sm:$0xff]
  %v1600 = vld [vmem:[%s1586 + $0x60] sm:$0xff]
  %v1601 = vld [vmem:[%s1586 + $0x68] sm:$0xf]
  %v1602 = vld [vmem:[%s1586 + $0x6c] sm:$0xff]
  %v1603 = vld [vmem:[%s1586 + $0x74] sm:$0xff]
  %v1604 = vld [vmem:[%s1586 + $0x7c] sm:$0xff]
  %v1605 = vld [vmem:[%s1586 + $0x84] sm:$0xff]
  %v1606 = vld [vmem:[%s1586 + $0x8c] sm:$0xf]
  %v1607 = vld [vmem:[%s1586 + $0x90] sm:$0xff]
  %v1608 = vld [vmem:[%s1586 + $0x98] sm:$0xff]
  %v1609 = vld [vmem:[%s1586 + $0xa0] sm:$0xff]
  %v1610 = vld [vmem:[%s1586 + $0xa8] sm:$0xff]
  %v1611 = vld [vmem:[%s1586 + $0xb0] sm:$0xf]
  %v1612 = vld [vmem:[%s1586 + $0xb4] sm:$0xff]
  %v1613 = vld [vmem:[%s1586 + $0xbc] sm:$0xff]
  %v1614 = vld [vmem:[%s1586 + $0xc4] sm:$0xff]
  %v1615 = vld [vmem:[%s1586 + $0xcc] sm:$0xff]
  %v1616 = vld [vmem:[%s1586 + $0xd4] sm:$0xf]
  %v1617 = vld [vmem:[%s1586 + $0xd8] sm:$0xff]
  %v1618 = vld [vmem:[%s1586 + $0xe0] sm:$0xff]
  %v1619 = vld [vmem:[%s1586 + $0xe8] sm:$0xff]
  %v1620 = vld [vmem:[%s1586 + $0xf0] sm:$0xff]
  %v1621 = vld [vmem:[%s1586 + $0xf8] sm:$0xf]
  %v1622 = vld [vmem:[%s1586 + $0xfc] sm:$0xff]
  %v1623 = vld [vmem:[%s1586 + $0x104] sm:$0xff]
  %v1624 = vld [vmem:[%s1586 + $0x10c] sm:$0xff]
  %v1625 = vld [vmem:[%s1586 + $0x114] sm:$0xff]
  %v1626 = vld [vmem:[%s1586 + $0x11c] sm:$0xf]
  %v1627 = vld [vmem:[%s1586 + $0x120] sm:$0xff]
  %v1628 = vld [vmem:[%s1586 + $0x128] sm:$0xff]
  %v1629 = vld [vmem:[%s1586 + $0x130] sm:$0xff]
  %v1630 = vld [vmem:[%s1586 + $0x138] sm:$0xff]
  %v1631 = vld [vmem:[%s1586 + $0x140] sm:$0xf]
  %v1632 = vld [vmem:[%s1586 + $0x144] sm:$0xff]
  %v1633 = vld [vmem:[%s1586 + $0x14c] sm:$0xff]
  %v1634 = vld [vmem:[%s1586 + $0x154] sm:$0xff]
  %v1635 = vld [vmem:[%s1586 + $0x15c] sm:$0xff]
  %v1636 = vld [vmem:[%s1586 + $0x164] sm:$0xf]
  %v1637 = vld [vmem:[%s1586 + $0x168] sm:$0xff]
  %v1638 = vld [vmem:[%s1586 + $0x170] sm:$0xff]
  %v1639 = vld [vmem:[%s1586 + $0x178] sm:$0xff]
  %v1640 = vld [vmem:[%s1586 + $0x180] sm:$0xff]
  %v1641 = vld [vmem:[%s1586 + $0x188] sm:$0xf]
  %v1642 = vld [vmem:[%s1586 + $0x18c] sm:$0xff]
  %v1643 = vld [vmem:[%s1586 + $0x194] sm:$0xff]
  %v1644 = vld [vmem:[%s1586 + $0x19c] sm:$0xff]
  %v1645 = vld [vmem:[%s1586 + $0x1a4] sm:$0xff]
  %v1646 = vld [vmem:[%s1586 + $0x1ac] sm:$0xf]
  %v1647 = vld [vmem:[%s1586 + $0x1b0] sm:$0xff]
  %v1648 = vld [vmem:[%s1586 + $0x1b8] sm:$0xff]
  %v1649 = vld [vmem:[%s1586 + $0x1c0] sm:$0xff]
  %v1650 = vld [vmem:[%s1586 + $0x1c8] sm:$0xff]
  %v1651 = vld [vmem:[%s1586 + $0x1d0] sm:$0xf]
  %v1652 = vld [vmem:[%s1586 + $0x1d4] sm:$0xff]
  %v1653 = vld [vmem:[%s1586 + $0x1dc] sm:$0xff]
  %v1654 = vld [vmem:[%s1586 + $0x1e4] sm:$0xff]
  %v1655 = vld [vmem:[%s1586 + $0x1ec] sm:$0xff]
  %v1656 = vld [vmem:[%s1586 + $0x1f4] sm:$0xf]
  %v1657 = vld [vmem:[%s1586 + $0x1f8] sm:$0xff]
  %v1658 = vld [vmem:[%s1586 + $0x200] sm:$0xff]
  %v1659 = vld [vmem:[%s1586 + $0x208] sm:$0xff]
  %v1660 = vld [vmem:[%s1586 + $0x210] sm:$0xff]
  %v1661 = vld [vmem:[%s1586 + $0x218] sm:$0xf]
  %v1662 = vld [vmem:[%s1586 + $0x21c] sm:$0xff]
  %v1663 = vld [vmem:[%s1586 + $0x224] sm:$0xff]
  %v1664 = vld [vmem:[%s1586 + $0x22c] sm:$0xff]
  %v1665 = vld [vmem:[%s1586 + $0x234] sm:$0xff]
  %v1666 = vld [vmem:[%s1586 + $0x23c] sm:$0xf]
  %v1747 = vunpack.c.l.b16 %v1587
  %v1748 = vunpack.c.h.b16 %v1587
  %v1749 = vunpack.c.l.b16 %v1588
  %v1750 = vunpack.c.h.b16 %v1588
  %v1751 = vunpack.c.l.b16 %v1589
  %v1752 = vunpack.c.h.b16 %v1589
  %v1753 = vunpack.c.l.b16 %v1590
  %v1754 = vunpack.c.h.b16 %v1590
  %v1755 = vunpack.c.l.b16 %v1591
  %v1756 = vunpack.c.l.b16 %v1592
  %v1757 = vunpack.c.h.b16 %v1592
  %v1758 = vunpack.c.l.b16 %v1593
  %v1759 = vunpack.c.h.b16 %v1593
  %v1760 = vunpack.c.l.b16 %v1594
  %v1761 = vunpack.c.h.b16 %v1594
  %v1762 = vunpack.c.l.b16 %v1595
  %v1763 = vunpack.c.h.b16 %v1595
  %v1764 = vunpack.c.l.b16 %v1596
  %v1765 = vunpack.c.l.b16 %v1597
  %v1766 = vunpack.c.h.b16 %v1597
  %v1767 = vunpack.c.l.b16 %v1598
  %v1768 = vunpack.c.h.b16 %v1598
  %v1769 = vunpack.c.l.b16 %v1599
  %v1770 = vunpack.c.h.b16 %v1599
  %v1771 = vunpack.c.l.b16 %v1600
  %v1772 = vunpack.c.h.b16 %v1600
  %v1773 = vunpack.c.l.b16 %v1601
  %v1774 = vunpack.c.l.b16 %v1602
  %v1775 = vunpack.c.h.b16 %v1602
  %v1776 = vunpack.c.l.b16 %v1603
  %v1777 = vunpack.c.h.b16 %v1603
  %v1778 = vunpack.c.l.b16 %v1604
  %v1779 = vunpack.c.h.b16 %v1604
  %v1780 = vunpack.c.l.b16 %v1605
  %v1781 = vunpack.c.h.b16 %v1605
  %v1782 = vunpack.c.l.b16 %v1606
  %v1783 = vunpack.c.l.b16 %v1607
  %v1784 = vunpack.c.h.b16 %v1607
  %v1785 = vunpack.c.l.b16 %v1608
  %v1786 = vunpack.c.h.b16 %v1608
  %v1787 = vunpack.c.l.b16 %v1609
  %v1788 = vunpack.c.h.b16 %v1609
  %v1789 = vunpack.c.l.b16 %v1610
  %v1790 = vunpack.c.h.b16 %v1610
  %v1791 = vunpack.c.l.b16 %v1611
  %v1792 = vunpack.c.l.b16 %v1612
  %v1793 = vunpack.c.h.b16 %v1612
  %v1794 = vunpack.c.l.b16 %v1613
  %v1795 = vunpack.c.h.b16 %v1613
  %v1796 = vunpack.c.l.b16 %v1614
  %v1797 = vunpack.c.h.b16 %v1614
  %v1798 = vunpack.c.l.b16 %v1615
  %v1799 = vunpack.c.h.b16 %v1615
  %v1800 = vunpack.c.l.b16 %v1616
  %v1801 = vunpack.c.l.b16 %v1617
  %v1802 = vunpack.c.h.b16 %v1617
  %v1803 = vunpack.c.l.b16 %v1618
  %v1804 = vunpack.c.h.b16 %v1618
  %v1805 = vunpack.c.l.b16 %v1619
  %v1806 = vunpack.c.h.b16 %v1619
  %v1807 = vunpack.c.l.b16 %v1620
  %v1808 = vunpack.c.h.b16 %v1620
  %v1809 = vunpack.c.l.b16 %v1621
  %v1810 = vunpack.c.l.b16 %v1622
  %v1811 = vunpack.c.h.b16 %v1622
  %v1812 = vunpack.c.l.b16 %v1623
  %v1813 = vunpack.c.h.b16 %v1623
  %v1814 = vunpack.c.l.b16 %v1624
  %v1815 = vunpack.c.h.b16 %v1624
  %v1816 = vunpack.c.l.b16 %v1625
  %v1817 = vunpack.c.h.b16 %v1625
  %v1818 = vunpack.c.l.b16 %v1626
  %v1819 = vunpack.c.l.b16 %v1627
  %v1820 = vunpack.c.h.b16 %v1627
  %v1821 = vunpack.c.l.b16 %v1628
  %v1822 = vunpack.c.h.b16 %v1628
  %v1823 = vunpack.c.l.b16 %v1629
  %v1824 = vunpack.c.h.b16 %v1629
  %v1825 = vunpack.c.l.b16 %v1630
  %v1826 = vunpack.c.h.b16 %v1630
  %v1827 = vunpack.c.l.b16 %v1631
  %v1828 = vunpack.c.l.b16 %v1632
  %v1829 = vunpack.c.h.b16 %v1632
  %v1830 = vunpack.c.l.b16 %v1633
  %v1831 = vunpack.c.h.b16 %v1633
  %v1832 = vunpack.c.l.b16 %v1634
  %v1833 = vunpack.c.h.b16 %v1634
  %v1834 = vunpack.c.l.b16 %v1635
  %v1835 = vunpack.c.h.b16 %v1635
  %v1836 = vunpack.c.l.b16 %v1636
  %v1837 = vunpack.c.l.b16 %v1637
  %v1838 = vunpack.c.h.b16 %v1637
  %v1839 = vunpack.c.l.b16 %v1638
  %v1840 = vunpack.c.h.b16 %v1638
  %v1841 = vunpack.c.l.b16 %v1639
  %v1842 = vunpack.c.h.b16 %v1639
  %v1843 = vunpack.c.l.b16 %v1640
  %v1844 = vunpack.c.h.b16 %v1640
  %v1845 = vunpack.c.l.b16 %v1641
  %v1846 = vunpack.c.l.b16 %v1642
  %v1847 = vunpack.c.h.b16 %v1642
  %v1848 = vunpack.c.l.b16 %v1643
  %v1849 = vunpack.c.h.b16 %v1643
  %v1850 = vunpack.c.l.b16 %v1644
  %v1851 = vunpack.c.h.b16 %v1644
  %v1852 = vunpack.c.l.b16 %v1645
  %v1853 = vunpack.c.h.b16 %v1645
  %v1854 = vunpack.c.l.b16 %v1646
  %v1855 = vunpack.c.l.b16 %v1647
  %v1856 = vunpack.c.h.b16 %v1647
  %v1857 = vunpack.c.l.b16 %v1648
  %v1858 = vunpack.c.h.b16 %v1648
  %v1859 = vunpack.c.l.b16 %v1649
  %v1860 = vunpack.c.h.b16 %v1649
  %v1861 = vunpack.c.l.b16 %v1650
  %v1862 = vunpack.c.h.b16 %v1650
  %v1863 = vunpack.c.l.b16 %v1651
  %v1864 = vunpack.c.l.b16 %v1652
  %v1865 = vunpack.c.h.b16 %v1652
  %v1866 = vunpack.c.l.b16 %v1653
  %v1867 = vunpack.c.h.b16 %v1653
  %v1868 = vunpack.c.l.b16 %v1654
  %v1869 = vunpack.c.h.b16 %v1654
  %v1870 = vunpack.c.l.b16 %v1655
  %v1871 = vunpack.c.h.b16 %v1655
  %v1872 = vunpack.c.l.b16 %v1656
  %v1873 = vunpack.c.l.b16 %v1657
  %v1874 = vunpack.c.h.b16 %v1657
  %v1875 = vunpack.c.l.b16 %v1658
  %v1876 = vunpack.c.h.b16 %v1658
  %v1877 = vunpack.c.l.b16 %v1659
  %v1878 = vunpack.c.h.b16 %v1659
  %v1879 = vunpack.c.l.b16 %v1660
  %v1880 = vunpack.c.h.b16 %v1660
  %v1881 = vunpack.c.l.b16 %v1661
  %v1882 = vunpack.c.l.b16 %v1662
  %v1883 = vunpack.c.h.b16 %v1662
  %v1884 = vunpack.c.l.b16 %v1663
  %v1885 = vunpack.c.h.b16 %v1663
  %v1886 = vunpack.c.l.b16 %v1664
  %v1887 = vunpack.c.h.b16 %v1664
  %v1888 = vunpack.c.l.b16 %v1665
  %v1889 = vunpack.c.h.b16 %v1665
  %v1890 = vunpack.c.l.b16 %v1666
  %v1891 = vpack.c.b16 %v1756, %v1747
  %v1892 = vpack.c.b16 %v1757, %v1748
  %v1893 = vpack.c.b16 %v1758, %v1749
  %v1894 = vpack.c.b16 %v1759, %v1750
  %v1895 = vpack.c.b16 %v1760, %v1751
  %v1896 = vpack.c.b16 %v1761, %v1752
  %v1897 = vpack.c.b16 %v1762, %v1753
  %v1898 = vpack.c.b16 %v1763, %v1754
  %v1899 = vpack.c.b16 %v1764, %v1755
  %v1900 = vpack.c.b16 %v1774, %v1765
  %v1901 = vpack.c.b16 %v1775, %v1766
  %v1902 = vpack.c.b16 %v1776, %v1767
  %v1903 = vpack.c.b16 %v1777, %v1768
  %v1904 = vpack.c.b16 %v1778, %v1769
  %v1905 = vpack.c.b16 %v1779, %v1770
  %v1906 = vpack.c.b16 %v1780, %v1771
  %v1907 = vpack.c.b16 %v1781, %v1772
  %v1908 = vpack.c.b16 %v1782, %v1773
  %v1909 = vpack.c.b16 %v1792, %v1783
  %v1910 = vpack.c.b16 %v1793, %v1784
  %v1911 = vpack.c.b16 %v1794, %v1785
  %v1912 = vpack.c.b16 %v1795, %v1786
  %v1913 = vpack.c.b16 %v1796, %v1787
  %v1914 = vpack.c.b16 %v1797, %v1788
  %v1915 = vpack.c.b16 %v1798, %v1789
  %v1916 = vpack.c.b16 %v1799, %v1790
  %v1917 = vpack.c.b16 %v1800, %v1791
  %v1918 = vpack.c.b16 %v1810, %v1801
  %v1919 = vpack.c.b16 %v1811, %v1802
  %v1920 = vpack.c.b16 %v1812, %v1803
  %v1921 = vpack.c.b16 %v1813, %v1804
  %v1922 = vpack.c.b16 %v1814, %v1805
  %v1923 = vpack.c.b16 %v1815, %v1806
  %v1924 = vpack.c.b16 %v1816, %v1807
  %v1925 = vpack.c.b16 %v1817, %v1808
  %v1926 = vpack.c.b16 %v1818, %v1809
  %v1927 = vpack.c.b16 %v1828, %v1819
  %v1928 = vpack.c.b16 %v1829, %v1820
  %v1929 = vpack.c.b16 %v1830, %v1821
  %v1930 = vpack.c.b16 %v1831, %v1822
  %v1931 = vpack.c.b16 %v1832, %v1823
  %v1932 = vpack.c.b16 %v1833, %v1824
  %v1933 = vpack.c.b16 %v1834, %v1825
  %v1934 = vpack.c.b16 %v1835, %v1826
  %v1935 = vpack.c.b16 %v1836, %v1827
  %v1936 = vpack.c.b16 %v1846, %v1837
  %v1937 = vpack.c.b16 %v1847, %v1838
  %v1938 = vpack.c.b16 %v1848, %v1839
  %v1939 = vpack.c.b16 %v1849, %v1840
  %v1940 = vpack.c.b16 %v1850, %v1841
  %v1941 = vpack.c.b16 %v1851, %v1842
  %v1942 = vpack.c.b16 %v1852, %v1843
  %v1943 = vpack.c.b16 %v1853, %v1844
  %v1944 = vpack.c.b16 %v1854, %v1845
  %v1945 = vpack.c.b16 %v1864, %v1855
  %v1946 = vpack.c.b16 %v1865, %v1856
  %v1947 = vpack.c.b16 %v1866, %v1857
  %v1948 = vpack.c.b16 %v1867, %v1858
  %v1949 = vpack.c.b16 %v1868, %v1859
  %v1950 = vpack.c.b16 %v1869, %v1860
  %v1951 = vpack.c.b16 %v1870, %v1861
  %v1952 = vpack.c.b16 %v1871, %v1862
  %v1953 = vpack.c.b16 %v1872, %v1863
  %v1954 = vpack.c.b16 %v1882, %v1873
  %v1955 = vpack.c.b16 %v1883, %v1874
  %v1956 = vpack.c.b16 %v1884, %v1875
  %v1957 = vpack.c.b16 %v1885, %v1876
  %v1958 = vpack.c.b16 %v1886, %v1877
  %v1959 = vpack.c.b16 %v1887, %v1878
  %v1960 = vpack.c.b16 %v1888, %v1879
  %v1961 = vpack.c.b16 %v1889, %v1880
  %v1962 = vpack.c.b16 %v1890, %v1881
  %2035 = vmatprep.subr.bf16.mxu0 0
  %2036 = vmatpush1.bf16.msra.mxu0 %v912
  %2037 = vmatprep.subr.bf16.mxu0 0
  %2038 = vmatpush1.bf16.msra.mxu0 %v913
  %2039 = vmatprep.subr.bf16.mxu0 0
  %2040 = vmatpush1.bf16.msra.mxu0 %v914
  %2041 = vmatprep.subr.bf16.mxu0 0
  %2042 = vmatpush1.bf16.msra.mxu0 %v915
  %2043 = vmatprep.subr.bf16.mxu0 0
  %2044 = vmatpush1.bf16.msra.mxu0 %v916
  %2045 = vmatprep.subr.bf16.mxu0 0
  %2046 = vmatpush1.bf16.msra.mxu0 %v917
  %2047 = vmatprep.subr.bf16.mxu0 0
  %2048 = vmatpush1.bf16.msra.mxu0 %v918
  %2049 = vmatprep.subr.bf16.mxu0 0
  %2050 = vmatpush1.bf16.msra.mxu0 %v919
  %2051 = vmatprep.subr.bf16.mxu0 0
  %2052 = vmatpush1.bf16.msra.mxu0 %v920
  %2053 = vmatprep.subr.bf16.mxu0 0
  %2054 = vmatpush1.bf16.msra.mxu0 %v921
  %2055 = vmatprep.subr.bf16.mxu0 0
  %2056 = vmatpush1.bf16.msra.mxu0 %v922
  %2057 = vmatprep.subr.bf16.mxu0 0
  %2058 = vmatpush1.bf16.msra.mxu0 %v923
  %2059 = vmatprep.subr.bf16.mxu0 0
  %2060 = vmatpush1.bf16.msra.mxu0 %v924
  %2061 = vmatprep.subr.bf16.mxu0 0
  %2062 = vmatpush1.bf16.msra.mxu0 %v925
  %2063 = vmatprep.subr.bf16.mxu0 0
  %2064 = vmatpush1.bf16.msra.mxu0 %v926
  %2065 = vmatprep.subr.bf16.mxu0 0
  %2066 = vmatpush1.bf16.msra.mxu0 %v927
  %2067 = vmatprep.mubr.bf16.mxu0 %v1892
  %2068 = vmatmul.mubr.bf16.gmra.mrb[0].mxu0 %v1891
  %v2069 = vpop.f32.mrb[0].mxu0
  %v2070 = vadd.f32 0.0, %v2069
  %v2071 = vpop.f32.mrb[0].mxu0
  %v2072 = vpop.f32.mrb[0].mxu0
  %v2073 = vadd.f32 0.0, %v2072
  %v2074 = vpop.f32.mrb[0].mxu0
  %2075 = vmatprep.mubr.bf16.mxu0 %v1901
  %2076 = vmatmul.mubr.bf16.gmra.mrb[0].mxu0 %v1900
  %v2077 = vpop.f32.mrb[0].mxu0
  %v2078 = vadd.f32 0.0, %v2077
  %v2079 = vpop.f32.mrb[0].mxu0
  %v2080 = vpop.f32.mrb[0].mxu0
  %v2081 = vadd.f32 0.0, %v2080
  %v2082 = vpop.f32.mrb[0].mxu0
  %2083 = vmatprep.mubr.bf16.mxu0 %v1910
  %2084 = vmatmul.mubr.bf16.gmra.mrb[0].mxu0 %v1909
  %v2085 = vpop.f32.mrb[0].mxu0
  %v2086 = vadd.f32 0.0, %v2085
  %v2087 = vpop.f32.mrb[0].mxu0
  %v2088 = vpop.f32.mrb[0].mxu0
  %v2089 = vadd.f32 0.0, %v2088
  %v2090 = vpop.f32.mrb[0].mxu0
  %2091 = vmatprep.mubr.bf16.mxu0 %v1919
  %2092 = vmatmul.mubr.bf16.gmra.mrb[0].mxu0 %v1918
  %v2093 = vpop.f32.mrb[0].mxu0
  %v2094 = vadd.f32 0.0, %v2093
  %v2095 = vpop.f32.mrb[0].mxu0
  %v2096 = vpop.f32.mrb[0].mxu0
  %v2097 = vadd.f32 0.0, %v2096
  %v2098 = vpop.f32.mrb[0].mxu0
  %2099 = vmatprep.mubr.bf16.mxu0 %v1928
  %2100 = vmatmul.mubr.bf16.gmra.mrb[0].mxu0 %v1927
  %v2101 = vpop.f32.mrb[0].mxu0
  %v2102 = vadd.f32 0.0, %v2101
  %v2103 = vpop.f32.mrb[0].mxu0
  %v2104 = vpop.f32.mrb[0].mxu0
  %v2105 = vadd.f32 0.0, %v2104
  %v2106 = vpop.f32.mrb[0].mxu0
  %2107 = vmatprep.mubr.bf16.mxu0 %v1937
  %2108 = vmatmul.mubr.bf16.gmra.mrb[0].mxu0 %v1936
  %v2109 = vpop.f32.mrb[0].mxu0
  %v2110 = vadd.f32 0.0, %v2109
  %v2111 = vpop.f32.mrb[0].mxu0
  %v2112 = vpop.f32.mrb[0].mxu0
  %v2113 = vadd.f32 0.0, %v2112
  %v2114 = vpop.f32.mrb[0].mxu0
  %2115 = vmatprep.mubr.bf16.mxu0 %v1946
  %2116 = vmatmul.mubr.bf16.gmra.mrb[0].mxu0 %v1945
  %v2117 = vpop.f32.mrb[0].mxu0
  %v2118 = vadd.f32 0.0, %v2117
  %v2119 = vpop.f32.mrb[0].mxu0
  %v2120 = vpop.f32.mrb[0].mxu0
  %v2121 = vadd.f32 0.0, %v2120
  %v2122 = vpop.f32.mrb[0].mxu0
  %2123 = vmatprep.mubr.bf16.mxu0 %v1955
  %2124 = vmatmul.mubr.bf16.gmra.mrb[0].mxu0 %v1954
  %v2125 = vpop.f32.mrb[0].mxu0
  %v2126 = vadd.f32 0.0, %v2125
  %v2127 = vpop.f32.mrb[0].mxu0
  %v2128 = vpop.f32.mrb[0].mxu0
  %v2129 = vadd.f32 0.0, %v2128
  %v2130 = vpop.f32.mrb[0].mxu0
  %2131 = vdwg.mxu0
  %2132 = vmatprep.subr.bf16.mxu0 0
  %2133 = vmatpush1.bf16.msra.mxu0 %v928
  %2134 = vmatprep.subr.bf16.mxu0 0
  %2135 = vmatpush1.bf16.msra.mxu0 %v929
  %2136 = vmatprep.subr.bf16.mxu0 0
  %2137 = vmatpush1.bf16.msra.mxu0 %v930
  %2138 = vmatprep.subr.bf16.mxu0 0
  %2139 = vmatpush1.bf16.msra.mxu0 %v931
  %2140 = vmatprep.subr.bf16.mxu0 0
  %2141 = vmatpush1.bf16.msra.mxu0 %v932
  %2142 = vmatprep.subr.bf16.mxu0 0
  %2143 = vmatpush1.bf16.msra.mxu0 %v933
  %2144 = vmatprep.subr.bf16.mxu0 0
  %2145 = vmatpush1.bf16.msra.mxu0 %v934
  %2146 = vmatprep.subr.bf16.mxu0 0
  %2147 = vmatpush1.bf16.msra.mxu0 %v935
  %2148 = vmatprep.subr.bf16.mxu0 0
  %2149 = vmatpush1.bf16.msra.mxu0 %v936
  %2150 = vmatprep.subr.bf16.mxu0 0
  %2151 = vmatpush1.bf16.msra.mxu0 %v937
  %2152 = vmatprep.subr.bf16.mxu0 0
  %2153 = vmatpush1.bf16.msra.mxu0 %v938
  %2154 = vmatprep.subr.bf16.mxu0 0
  %2155 = vmatpush1.bf16.msra.mxu0 %v939
  %2156 = vmatprep.subr.bf16.mxu0 0
  %2157 = vmatpush1.bf16.msra.mxu0 %v940
  %2158 = vmatprep.subr.bf16.mxu0 0
  %2159 = vmatpush1.bf16.msra.mxu0 %v941
  %2160 = vmatprep.subr.bf16.mxu0 0
  %2161 = vmatpush1.bf16.msra.mxu0 %v942
  %2162 = vmatprep.subr.bf16.mxu0 0
  %2163 = vmatpush1.bf16.msra.mxu0 %v943
  %2164 = vmatprep.mubr.bf16.mxu0 %v1894
  %2165 = vmatmul.mubr.bf16.gmra.mrb[0].mxu0 %v1893
  %v2166 = vpop.f32.mrb[0].mxu0
  %v2167 = vadd.f32 %v2070, %v2166
  %v2168 = vpop.f32.mrb[0].mxu0
  %v2169 = vpop.f32.mrb[0].mxu0
  %v2170 = vadd.f32 %v2073, %v2169
  %v2171 = vpop.f32.mrb[0].mxu0
  %2172 = vmatprep.mubr.bf16.mxu0 %v1903
  %2173 = vmatmul.mubr.bf16.gmra.mrb[0].mxu0 %v1902
  %v2174 = vpop.f32.mrb[0].mxu0
  %v2175 = vadd.f32 %v2078, %v2174
  %v2176 = vpop.f32.mrb[0].mxu0
  %v2177 = vpop.f32.mrb[0].mxu0
  %v2178 = vadd.f32 %v2081, %v2177
  %v2179 = vpop.f32.mrb[0].mxu0
  %2180 = vmatprep.mubr.bf16.mxu0 %v1912
  %2181 = vmatmul.mubr.bf16.gmra.mrb[0].mxu0 %v1911
  %v2182 = vpop.f32.mrb[0].mxu0
  %v2183 = vadd.f32 %v2086, %v2182
  %v2184 = vpop.f32.mrb[0].mxu0
  %v2185 = vpop.f32.mrb[0].mxu0
  %v2186 = vadd.f32 %v2089, %v2185
  %v2187 = vpop.f32.mrb[0].mxu0
  %2188 = vmatprep.mubr.bf16.mxu0 %v1921
  %2189 = vmatmul.mubr.bf16.gmra.mrb[0].mxu0 %v1920
  %v2190 = vpop.f32.mrb[0].mxu0
  %v2191 = vadd.f32 %v2094, %v2190
  %v2192 = vpop.f32.mrb[0].mxu0
  %v2193 = vpop.f32.mrb[0].mxu0
  %v2194 = vadd.f32 %v2097, %v2193
  %v2195 = vpop.f32.mrb[0].mxu0
  %2196 = vmatprep.mubr.bf16.mxu0 %v1930
  %2197 = vmatmul.mubr.bf16.gmra.mrb[0].mxu0 %v1929
  %v2198 = vpop.f32.mrb[0].mxu0
  %v2199 = vadd.f32 %v2102, %v2198
  %v2200 = vpop.f32.mrb[0].mxu0
  %v2201 = vpop.f32.mrb[0].mxu0
  %v2202 = vadd.f32 %v2105, %v2201
  %v2203 = vpop.f32.mrb[0].mxu0
  %2204 = vmatprep.mubr.bf16.mxu0 %v1939
  %2205 = vmatmul.mubr.bf16.gmra.mrb[0].mxu0 %v1938
  %v2206 = vpop.f32.mrb[0].mxu0
  %v2207 = vadd.f32 %v2110, %v2206
  %v2208 = vpop.f32.mrb[0].mxu0
  %v2209 = vpop.f32.mrb[0].mxu0
  %v2210 = vadd.f32 %v2113, %v2209
  %v2211 = vpop.f32.mrb[0].mxu0
  %2212 = vmatprep.mubr.bf16.mxu0 %v1948
  %2213 = vmatmul.mubr.bf16.gmra.mrb[0].mxu0 %v1947
  %v2214 = vpop.f32.mrb[0].mxu0
  %v2215 = vadd.f32 %v2118, %v2214
  %v2216 = vpop.f32.mrb[0].mxu0
  %v2217 = vpop.f32.mrb[0].mxu0
  %v2218 = vadd.f32 %v2121, %v2217
  %v2219 = vpop.f32.mrb[0].mxu0
  %2220 = vmatprep.mubr.bf16.mxu0 %v1957
  %2221 = vmatmul.mubr.bf16.gmra.mrb[0].mxu0 %v1956
  %v2222 = vpop.f32.mrb[0].mxu0
  %v2223 = vadd.f32 %v2126, %v2222
  %v2224 = vpop.f32.mrb[0].mxu0
  %v2225 = vpop.f32.mrb[0].mxu0
  %v2226 = vadd.f32 %v2129, %v2225
  %v2227 = vpop.f32.mrb[0].mxu0
  %2228 = vdwg.mxu0
  %2229 = vmatprep.subr.bf16.mxu0 0
  %2230 = vmatpush1.bf16.msra.mxu0 %v944
  %2231 = vmatprep.subr.bf16.mxu0 0
  %2232 = vmatpush1.bf16.msra.mxu0 %v945
  %2233 = vmatprep.subr.bf16.mxu0 0
  %2234 = vmatpush1.bf16.msra.mxu0 %v946
  %2235 = vmatprep.subr.bf16.mxu0 0
  %2236 = vmatpush1.bf16.msra.mxu0 %v947
  %2237 = vmatprep.subr.bf16.mxu0 0
  %2238 = vmatpush1.bf16.msra.mxu0 %v948
  %2239 = vmatprep.subr.bf16.mxu0 0
  %2240 = vmatpush1.bf16.msra.mxu0 %v949
  %2241 = vmatprep.subr.bf16.mxu0 0
  %2242 = vmatpush1.bf16.msra.mxu0 %v950
  %2243 = vmatprep.subr.bf16.mxu0 0
  %2244 = vmatpush1.bf16.msra.mxu0 %v951
  %2245 = vmatprep.subr.bf16.mxu0 0
  %2246 = vmatpush1.bf16.msra.mxu0 %v952
  %2247 = vmatprep.subr.bf16.mxu0 0
  %2248 = vmatpush1.bf16.msra.mxu0 %v953
  %2249 = vmatprep.subr.bf16.mxu0 0
  %2250 = vmatpush1.bf16.msra.mxu0 %v954
  %2251 = vmatprep.subr.bf16.mxu0 0
  %2252 = vmatpush1.bf16.msra.mxu0 %v955
  %2253 = vmatprep.subr.bf16.mxu0 0
  %2254 = vmatpush1.bf16.msra.mxu0 %v956
  %2255 = vmatprep.subr.bf16.mxu0 0
  %2256 = vmatpush1.bf16.msra.mxu0 %v957
  %2257 = vmatprep.subr.bf16.mxu0 0
  %2258 = vmatpush1.bf16.msra.mxu0 %v958
  %2259 = vmatprep.subr.bf16.mxu0 0
  %2260 = vmatpush1.bf16.msra.mxu0 %v959
  %2261 = vmatprep.mubr.bf16.mxu0 %v1896
  %2262 = vmatmul.mubr.bf16.gmra.mrb[0].mxu0 %v1895
  %v2263 = vpop.f32.mrb[0].mxu0
  %v2264 = vadd.f32 %v2167, %v2263
  %v2265 = vpop.f32.mrb[0].mxu0
  %v2266 = vpop.f32.mrb[0].mxu0
  %v2267 = vadd.f32 %v2170, %v2266
  %v2268 = vpop.f32.mrb[0].mxu0
  %2269 = vmatprep.mubr.bf16.mxu0 %v1905
  %2270 = vmatmul.mubr.bf16.gmra.mrb[0].mxu0 %v1904
  %v2271 = vpop.f32.mrb[0].mxu0
  %v2272 = vadd.f32 %v2175, %v2271
  %v2273 = vpop.f32.mrb[0].mxu0
  %v2274 = vpop.f32.mrb[0].mxu0
  %v2275 = vadd.f32 %v2178, %v2274
  %v2276 = vpop.f32.mrb[0].mxu0
  %2277 = vmatprep.mubr.bf16.mxu0 %v1914
  %2278 = vmatmul.mubr.bf16.gmra.mrb[0].mxu0 %v1913
  %v2279 = vpop.f32.mrb[0].mxu0
  %v2280 = vadd.f32 %v2183, %v2279
  %v2281 = vpop.f32.mrb[0].mxu0
  %v2282 = vpop.f32.mrb[0].mxu0
  %v2283 = vadd.f32 %v2186, %v2282
  %v2284 = vpop.f32.mrb[0].mxu0
  %2285 = vmatprep.mubr.bf16.mxu0 %v1923
  %2286 = vmatmul.mubr.bf16.gmra.mrb[0].mxu0 %v1922
  %v2287 = vpop.f32.mrb[0].mxu0
  %v2288 = vadd.f32 %v2191, %v2287
  %v2289 = vpop.f32.mrb[0].mxu0
  %v2290 = vpop.f32.mrb[0].mxu0
  %v2291 = vadd.f32 %v2194, %v2290
  %v2292 = vpop.f32.mrb[0].mxu0
  %2293 = vmatprep.mubr.bf16.mxu0 %v1932
  %2294 = vmatmul.mubr.bf16.gmra.mrb[0].mxu0 %v1931
  %v2295 = vpop.f32.mrb[0].mxu0
  %v2296 = vadd.f32 %v2199, %v2295
  %v2297 = vpop.f32.mrb[0].mxu0
  %v2298 = vpop.f32.mrb[0].mxu0
  %v2299 = vadd.f32 %v2202, %v2298
  %v2300 = vpop.f32.mrb[0].mxu0
  %2301 = vmatprep.mubr.bf16.mxu0 %v1941
  %2302 = vmatmul.mubr.bf16.gmra.mrb[0].mxu0 %v1940
  %v2303 = vpop.f32.mrb[0].mxu0
  %v2304 = vadd.f32 %v2207, %v2303
  %v2305 = vpop.f32.mrb[0].mxu0
  %v2306 = vpop.f32.mrb[0].mxu0
  %v2307 = vadd.f32 %v2210, %v2306
  %v2308 = vpop.f32.mrb[0].mxu0
  %2309 = vmatprep.mubr.bf16.mxu0 %v1950
  %2310 = vmatmul.mubr.bf16.gmra.mrb[0].mxu0 %v1949
  %v2311 = vpop.f32.mrb[0].mxu0
  %v2312 = vadd.f32 %v2215, %v2311
  %v2313 = vpop.f32.mrb[0].mxu0
  %v2314 = vpop.f32.mrb[0].mxu0
  %v2315 = vadd.f32 %v2218, %v2314
  %v2316 = vpop.f32.mrb[0].mxu0
  %2317 = vmatprep.mubr.bf16.mxu0 %v1959
  %2318 = vmatmul.mubr.bf16.gmra.mrb[0].mxu0 %v1958
  %v2319 = vpop.f32.mrb[0].mxu0
  %v2320 = vadd.f32 %v2223, %v2319
  %v2321 = vpop.f32.mrb[0].mxu0
  %v2322 = vpop.f32.mrb[0].mxu0
  %v2323 = vadd.f32 %v2226, %v2322
  %v2324 = vpop.f32.mrb[0].mxu0
  %2325 = vdwg.mxu0
  %2326 = vmatprep.subr.bf16.mxu0 0
  %2327 = vmatpush1.bf16.msra.mxu0 %v960
  %2328 = vmatprep.subr.bf16.mxu0 0
  %2329 = vmatpush1.bf16.msra.mxu0 %v961
  %2330 = vmatprep.subr.bf16.mxu0 0
  %2331 = vmatpush1.bf16.msra.mxu0 %v962
  %2332 = vmatprep.subr.bf16.mxu0 0
  %2333 = vmatpush1.bf16.msra.mxu0 %v963
  %2334 = vmatprep.subr.bf16.mxu0 0
  %2335 = vmatpush1.bf16.msra.mxu0 %v964
  %2336 = vmatprep.subr.bf16.mxu0 0
  %2337 = vmatpush1.bf16.msra.mxu0 %v965
  %2338 = vmatprep.subr.bf16.mxu0 0
  %2339 = vmatpush1.bf16.msra.mxu0 %v966
  %2340 = vmatprep.subr.bf16.mxu0 0
  %2341 = vmatpush1.bf16.msra.mxu0 %v967
  %2342 = vmatprep.subr.bf16.mxu0 0
  %2343 = vmatpush1.bf16.msra.mxu0 %v968
  %2344 = vmatprep.subr.bf16.mxu0 0
  %2345 = vmatpush1.bf16.msra.mxu0 %v969
  %2346 = vmatprep.subr.bf16.mxu0 0
  %2347 = vmatpush1.bf16.msra.mxu0 %v970
  %2348 = vmatprep.subr.bf16.mxu0 0
  %2349 = vmatpush1.bf16.msra.mxu0 %v971
  %2350 = vmatprep.subr.bf16.mxu0 0
  %2351 = vmatpush1.bf16.msra.mxu0 %v972
  %2352 = vmatprep.subr.bf16.mxu0 0
  %2353 = vmatpush1.bf16.msra.mxu0 %v973
  %2354 = vmatprep.subr.bf16.mxu0 0
  %2355 = vmatpush1.bf16.msra.mxu0 %v974
  %2356 = vmatprep.subr.bf16.mxu0 0
  %2357 = vmatpush1.bf16.msra.mxu0 %v975
  %2358 = vmatprep.mubr.bf16.mxu0 %v1898
  %2359 = vmatmul.mubr.bf16.gmra.mrb[0].mxu0 %v1897
  %v2360 = vpop.f32.mrb[0].mxu0
  %v2361 = vadd.f32 %v2264, %v2360
  %v2362 = vpop.f32.mrb[0].mxu0
  %v2363 = vpop.f32.mrb[0].mxu0
  %v2364 = vadd.f32 %v2267, %v2363
  %v2365 = vpop.f32.mrb[0].mxu0
  %2366 = vmatprep.mubr.bf16.mxu0 %v1907
  %2367 = vmatmul.mubr.bf16.gmra.mrb[0].mxu0 %v1906
  %v2368 = vpop.f32.mrb[0].mxu0
  %v2369 = vadd.f32 %v2272, %v2368
  %v2370 = vpop.f32.mrb[0].mxu0
  %v2371 = vpop.f32.mrb[0].mxu0
  %v2372 = vadd.f32 %v2275, %v2371
  %v2373 = vpop.f32.mrb[0].mxu0
  %2374 = vmatprep.mubr.bf16.mxu0 %v1916
  %2375 = vmatmul.mubr.bf16.gmra.mrb[0].mxu0 %v1915
  %v2376 = vpop.f32.mrb[0].mxu0
  %v2377 = vadd.f32 %v2280, %v2376
  %v2378 = vpop.f32.mrb[0].mxu0
  %v2379 = vpop.f32.mrb[0].mxu0
  %v2380 = vadd.f32 %v2283, %v2379
  %v2381 = vpop.f32.mrb[0].mxu0
  %2382 = vmatprep.mubr.bf16.mxu0 %v1925
  %2383 = vmatmul.mubr.bf16.gmra.mrb[0].mxu0 %v1924
  %v2384 = vpop.f32.mrb[0].mxu0
  %v2385 = vadd.f32 %v2288, %v2384
  %v2386 = vpop.f32.mrb[0].mxu0
  %v2387 = vpop.f32.mrb[0].mxu0
  %v2388 = vadd.f32 %v2291, %v2387
  %v2389 = vpop.f32.mrb[0].mxu0
  %2390 = vmatprep.mubr.bf16.mxu0 %v1934
  %2391 = vmatmul.mubr.bf16.gmra.mrb[0].mxu0 %v1933
  %v2392 = vpop.f32.mrb[0].mxu0
  %v2393 = vadd.f32 %v2296, %v2392
  %v2394 = vpop.f32.mrb[0].mxu0
  %v2395 = vpop.f32.mrb[0].mxu0
  %v2396 = vadd.f32 %v2299, %v2395
  %v2397 = vpop.f32.mrb[0].mxu0
  %2398 = vmatprep.mubr.bf16.mxu0 %v1943
  %2399 = vmatmul.mubr.bf16.gmra.mrb[0].mxu0 %v1942
  %v2400 = vpop.f32.mrb[0].mxu0
  %v2401 = vadd.f32 %v2304, %v2400
  %v2402 = vpop.f32.mrb[0].mxu0
  %v2403 = vpop.f32.mrb[0].mxu0
  %v2404 = vadd.f32 %v2307, %v2403
  %v2405 = vpop.f32.mrb[0].mxu0
  %2406 = vmatprep.mubr.bf16.mxu0 %v1952
  %2407 = vmatmul.mubr.bf16.gmra.mrb[0].mxu0 %v1951
  %v2408 = vpop.f32.mrb[0].mxu0
  %v2409 = vadd.f32 %v2312, %v2408
  %v2410 = vpop.f32.mrb[0].mxu0
  %v2411 = vpop.f32.mrb[0].mxu0
  %v2412 = vadd.f32 %v2315, %v2411
  %v2413 = vpop.f32.mrb[0].mxu0
  %2414 = vmatprep.mubr.bf16.mxu0 %v1961
  %2415 = vmatmul.mubr.bf16.gmra.mrb[0].mxu0 %v1960
  %v2416 = vpop.f32.mrb[0].mxu0
  %v2417 = vadd.f32 %v2320, %v2416
  %v2418 = vpop.f32.mrb[0].mxu0
  %v2419 = vpop.f32.mrb[0].mxu0
  %v2420 = vadd.f32 %v2323, %v2419
  %v2421 = vpop.f32.mrb[0].mxu0
  %2422 = vdwg.mxu0
  %2423 = vmatprep.subr.bf16.mxu0 0
  %2424 = vmatpush1.bf16.msra.mxu0 %v976
  %2425 = vmatprep.subr.bf16.mxu0 0
  %2426 = vmatpush1.bf16.msra.mxu0 %v977
  %2427 = vmatprep.subr.bf16.mxu0 0
  %2428 = vmatpush1.bf16.msra.mxu0 %v978
  %2429 = vmatprep.subr.bf16.mxu0 0
  %2430 = vmatpush1.bf16.msra.mxu0 %v979
  %2431 = vmatprep.subr.bf16.mxu0 0
  %2432 = vmatpush1.bf16.msra.mxu0 %v980
  %2433 = vmatprep.subr.bf16.mxu0 0
  %2434 = vmatpush1.bf16.msra.mxu0 %v981
  %2435 = vmatprep.subr.bf16.mxu0 0
  %2436 = vmatpush1.bf16.msra.mxu0 %v982
  %2437 = vmatprep.subr.bf16.mxu0 0
  %2438 = vmatpush1.bf16.msra.mxu0 %v983
  %2439 = vmatprep.subr.bf16.mxu0 0
  %2440 = vmatpush1.bf16.msra.mxu0 0
  %2441 = vmatprep.subr.bf16.mxu0 0
  %2442 = vmatpush1.bf16.msra.mxu0 0
  %2443 = vmatprep.subr.bf16.mxu0 0
  %2444 = vmatpush1.bf16.msra.mxu0 0
  %2445 = vmatprep.subr.bf16.mxu0 0
  %2446 = vmatpush1.bf16.msra.mxu0 0
  %2447 = vmatprep.subr.bf16.mxu0 0
  %2448 = vmatpush1.bf16.msra.mxu0 0
  %2449 = vmatprep.subr.bf16.mxu0 0
  %2450 = vmatpush1.bf16.msra.mxu0 0
  %2451 = vmatprep.subr.bf16.mxu0 0
  %2452 = vmatpush1.bf16.msra.mxu0 0
  %2453 = vmatprep.subr.bf16.mxu0 0
  %2454 = vmatpush1.bf16.msra.mxu0 0
  %2455 = vmatprep.mubr.bf16.mxu0 0
  %2456 = vmatmul.mubr.bf16.gmra.mrb[0].mxu0 %v1899
  %v2457 = vpop.f32.mrb[0].mxu0
  %v2458 = vadd.f32 %v2361, %v2457
  %v2459 = vpop.f32.mrb[0].mxu0
  %v2460 = vpop.f32.mrb[0].mxu0
  %v2461 = vadd.f32 %v2364, %v2460
  %v2462 = vpop.f32.mrb[0].mxu0
  %2463 = vmatprep.mubr.bf16.mxu0 0
  %2464 = vmatmul.mubr.bf16.gmra.mrb[0].mxu0 %v1908
  %v2465 = vpop.f32.mrb[0].mxu0
  %v2466 = vadd.f32 %v2369, %v2465
  %v2467 = vpop.f32.mrb[0].mxu0
  %v2468 = vpop.f32.mrb[0].mxu0
  %v2469 = vadd.f32 %v2372, %v2468
  %v2470 = vpop.f32.mrb[0].mxu0
  %2471 = vmatprep.mubr.bf16.mxu0 0
  %2472 = vmatmul.mubr.bf16.gmra.mrb[0].mxu0 %v1917
  %v2473 = vpop.f32.mrb[0].mxu0
  %v2474 = vadd.f32 %v2377, %v2473
  %v2475 = vpop.f32.mrb[0].mxu0
  %v2476 = vpop.f32.mrb[0].mxu0
  %v2477 = vadd.f32 %v2380, %v2476
  %v2478 = vpop.f32.mrb[0].mxu0
  %2479 = vmatprep.mubr.bf16.mxu0 0
  %2480 = vmatmul.mubr.bf16.gmra.mrb[0].mxu0 %v1926
  %v2481 = vpop.f32.mrb[0].mxu0
  %v2482 = vadd.f32 %v2385, %v2481
  %v2483 = vpop.f32.mrb[0].mxu0
  %v2484 = vpop.f32.mrb[0].mxu0
  %v2485 = vadd.f32 %v2388, %v2484
  %v2486 = vpop.f32.mrb[0].mxu0
  %2487 = vmatprep.mubr.bf16.mxu0 0
  %2488 = vmatmul.mubr.bf16.gmra.mrb[0].mxu0 %v1935
  %v2489 = vpop.f32.mrb[0].mxu0
  %v2490 = vadd.f32 %v2393, %v2489
  %v2491 = vpop.f32.mrb[0].mxu0
  %v2492 = vpop.f32.mrb[0].mxu0
  %v2493 = vadd.f32 %v2396, %v2492
  %v2494 = vpop.f32.mrb[0].mxu0
  %2495 = vmatprep.mubr.bf16.mxu0 0
  %2496 = vmatmul.mubr.bf16.gmra.mrb[0].mxu0 %v1944
  %v2497 = vpop.f32.mrb[0].mxu0
  %v2498 = vadd.f32 %v2401, %v2497
  %v2499 = vpop.f32.mrb[0].mxu0
  %v2500 = vpop.f32.mrb[0].mxu0
  %v2501 = vadd.f32 %v2404, %v2500
  %v2502 = vpop.f32.mrb[0].mxu0
  %2503 = vmatprep.mubr.bf16.mxu0 0
  %2504 = vmatmul.mubr.bf16.gmra.mrb[0].mxu0 %v1953
  %v2505 = vpop.f32.mrb[0].mxu0
  %v2506 = vadd.f32 %v2409, %v2505
  %v2507 = vpop.f32.mrb[0].mxu0
  %v2508 = vpop.f32.mrb[0].mxu0
  %v2509 = vadd.f32 %v2412, %v2508
  %v2510 = vpop.f32.mrb[0].mxu0
  %2511 = vmatprep.mubr.bf16.mxu0 0
  %2512 = vmatmul.mubr.bf16.gmra.mrb[0].mxu0 %v1962
  %v2513 = vpop.f32.mrb[0].mxu0
  %v2514 = vadd.f32 %v2417, %v2513
  %v2515 = vpop.f32.mrb[0].mxu0
  %v2516 = vpop.f32.mrb[0].mxu0
  %v2517 = vadd.f32 %v2420, %v2516
  %v2518 = vpop.f32.mrb[0].mxu0
  %2519 = vdwg.mxu0
  %v2520 = vmul.f32 %v2458, %v1545
  %v2521 = vmul.f32 %v2461, %v1545
  %v2522 = vmul.f32 %v2466, %v1545
  %v2523 = vmul.f32 %v2469, %v1545
  %v2524 = vmul.f32 %v2474, %v1545
  %v2525 = vmul.f32 %v2477, %v1545
  %v2526 = vmul.f32 %v2482, %v1545
  %v2527 = vmul.f32 %v2485, %v1545
  %v2528 = vmul.f32 %v2490, %v1545
  %v2529 = vmul.f32 %v2493, %v1545
  %v2530 = vmul.f32 %v2498, %v1545
  %v2531 = vmul.f32 %v2501, %v1545
  %v2532 = vmul.f32 %v2506, %v1545
  %v2533 = vmul.f32 %v2509, %v1545
  %v2534 = vmul.f32 %v2514, %v1545
  %v2535 = vmul.f32 %v2517, %v1545
  %v2536 = vadd.f32 %v2520, %v1567
  %v2537 = vadd.f32 %v2521, %v1567
  %v2538 = vadd.f32 %v2522, %v1567
  %v2539 = vadd.f32 %v2523, %v1567
  %v2540 = vadd.f32 %v2524, %v1567
  %v2541 = vadd.f32 %v2525, %v1567
  %v2542 = vadd.f32 %v2526, %v1567
  %v2543 = vadd.f32 %v2527, %v1567
  %v2544 = vadd.f32 %v2528, %v1567
  %v2545 = vadd.f32 %v2529, %v1567
  %v2546 = vadd.f32 %v2530, %v1567
  %v2547 = vadd.f32 %v2531, %v1567
  %v2548 = vadd.f32 %v2532, %v1567
  %v2549 = vadd.f32 %v2533, %v1567
  %v2550 = vadd.f32 %v2534, %v1567
  %v2551 = vadd.f32 %v2535, %v1567
  %v2552 = vmax.f32 %v1569, %v2536
  %v2553 = vmax.f32 %v1570, %v2537
  %v2554 = vmax.f32 %v1571, %v2538
  %v2555 = vmax.f32 %v1572, %v2539
  %v2556 = vmax.f32 %v1573, %v2540
  %v2557 = vmax.f32 %v1574, %v2541
  %v2558 = vmax.f32 %v1575, %v2542
  %v2559 = vmax.f32 %v1576, %v2543
  %v2560 = vmax.f32 %v1577, %v2544
  %v2561 = vmax.f32 %v1578, %v2545
  %v2562 = vmax.f32 %v1579, %v2546
  %v2563 = vmax.f32 %v1580, %v2547
  %v2564 = vmax.f32 %v1581, %v2548
  %v2565 = vmax.f32 %v1582, %v2549
  %v2566 = vmax.f32 %v1583, %v2550
  %v2567 = vmax.f32 %v1584, %v2551
  %s2568 = smul.addr %s173, 4
  %s2569 = scalar_lea.vmem %s2, %s2568
  %v2570 = vld [vmem:[%s2569] sm:$0xff]
  %v2571 = vld [vmem:[%s2569 + $0x8] sm:$0xff]
  %v2572 = vld [vmem:[%s2569 + $0x10] sm:$0xff]
  %v2573 = vld [vmem:[%s2569 + $0x18] sm:$0xff]
  %v2574 = vld [vmem:[%s2569 + $0x20] sm:$0xf]
  %v2575 = vld [vmem:[%s2569 + $0x24] sm:$0xff]
  %v2576 = vld [vmem:[%s2569 + $0x2c] sm:$0xff]
  %v2577 = vld [vmem:[%s2569 + $0x34] sm:$0xff]
  %v2578 = vld [vmem:[%s2569 + $0x3c] sm:$0xff]
  %v2579 = vld [vmem:[%s2569 + $0x44] sm:$0xf]
  %v2580 = vld [vmem:[%s2569 + $0x48] sm:$0xff]
  %v2581 = vld [vmem:[%s2569 + $0x50] sm:$0xff]
  %v2582 = vld [vmem:[%s2569 + $0x58] sm:$0xff]
  %v2583 = vld [vmem:[%s2569 + $0x60] sm:$0xff]
  %v2584 = vld [vmem:[%s2569 + $0x68] sm:$0xf]
  %v2585 = vld [vmem:[%s2569 + $0x6c] sm:$0xff]
  %v2586 = vld [vmem:[%s2569 + $0x74] sm:$0xff]
  %v2587 = vld [vmem:[%s2569 + $0x7c] sm:$0xff]
  %v2588 = vld [vmem:[%s2569 + $0x84] sm:$0xff]
  %v2589 = vld [vmem:[%s2569 + $0x8c] sm:$0xf]
  %v2590 = vld [vmem:[%s2569 + $0x90] sm:$0xff]
  %v2591 = vld [vmem:[%s2569 + $0x98] sm:$0xff]
  %v2592 = vld [vmem:[%s2569 + $0xa0] sm:$0xff]
  %v2593 = vld [vmem:[%s2569 + $0xa8] sm:$0xff]
  %v2594 = vld [vmem:[%s2569 + $0xb0] sm:$0xf]
  %v2595 = vld [vmem:[%s2569 + $0xb4] sm:$0xff]
  %v2596 = vld [vmem:[%s2569 + $0xbc] sm:$0xff]
  %v2597 = vld [vmem:[%s2569 + $0xc4] sm:$0xff]
  %v2598 = vld [vmem:[%s2569 + $0xcc] sm:$0xff]
  %v2599 = vld [vmem:[%s2569 + $0xd4] sm:$0xf]
  %v2600 = vld [vmem:[%s2569 + $0xd8] sm:$0xff]
  %v2601 = vld [vmem:[%s2569 + $0xe0] sm:$0xff]
  %v2602 = vld [vmem:[%s2569 + $0xe8] sm:$0xff]
  %v2603 = vld [vmem:[%s2569 + $0xf0] sm:$0xff]
  %v2604 = vld [vmem:[%s2569 + $0xf8] sm:$0xf]
  %v2605 = vld [vmem:[%s2569 + $0xfc] sm:$0xff]
  %v2606 = vld [vmem:[%s2569 + $0x104] sm:$0xff]
  %v2607 = vld [vmem:[%s2569 + $0x10c] sm:$0xff]
  %v2608 = vld [vmem:[%s2569 + $0x114] sm:$0xff]
  %v2609 = vld [vmem:[%s2569 + $0x11c] sm:$0xf]
  %v2610 = vld [vmem:[%s2569 + $0x120] sm:$0xff]
  %v2611 = vld [vmem:[%s2569 + $0x128] sm:$0xff]
  %v2612 = vld [vmem:[%s2569 + $0x130] sm:$0xff]
  %v2613 = vld [vmem:[%s2569 + $0x138] sm:$0xff]
  %v2614 = vld [vmem:[%s2569 + $0x140] sm:$0xf]
  %v2615 = vld [vmem:[%s2569 + $0x144] sm:$0xff]
  %v2616 = vld [vmem:[%s2569 + $0x14c] sm:$0xff]
  %v2617 = vld [vmem:[%s2569 + $0x154] sm:$0xff]
  %v2618 = vld [vmem:[%s2569 + $0x15c] sm:$0xff]
  %v2619 = vld [vmem:[%s2569 + $0x164] sm:$0xf]
  %v2620 = vld [vmem:[%s2569 + $0x168] sm:$0xff]
  %v2621 = vld [vmem:[%s2569 + $0x170] sm:$0xff]
  %v2622 = vld [vmem:[%s2569 + $0x178] sm:$0xff]
  %v2623 = vld [vmem:[%s2569 + $0x180] sm:$0xff]
  %v2624 = vld [vmem:[%s2569 + $0x188] sm:$0xf]
  %v2625 = vld [vmem:[%s2569 + $0x18c] sm:$0xff]
  %v2626 = vld [vmem:[%s2569 + $0x194] sm:$0xff]
  %v2627 = vld [vmem:[%s2569 + $0x19c] sm:$0xff]
  %v2628 = vld [vmem:[%s2569 + $0x1a4] sm:$0xff]
  %v2629 = vld [vmem:[%s2569 + $0x1ac] sm:$0xf]
  %v2630 = vld [vmem:[%s2569 + $0x1b0] sm:$0xff]
  %v2631 = vld [vmem:[%s2569 + $0x1b8] sm:$0xff]
  %v2632 = vld [vmem:[%s2569 + $0x1c0] sm:$0xff]
  %v2633 = vld [vmem:[%s2569 + $0x1c8] sm:$0xff]
  %v2634 = vld [vmem:[%s2569 + $0x1d0] sm:$0xf]
  %v2635 = vld [vmem:[%s2569 + $0x1d4] sm:$0xff]
  %v2636 = vld [vmem:[%s2569 + $0x1dc] sm:$0xff]
  %v2637 = vld [vmem:[%s2569 + $0x1e4] sm:$0xff]
  %v2638 = vld [vmem:[%s2569 + $0x1ec] sm:$0xff]
  %v2639 = vld [vmem:[%s2569 + $0x1f4] sm:$0xf]
  %v2640 = vld [vmem:[%s2569 + $0x1f8] sm:$0xff]
  %v2641 = vld [vmem:[%s2569 + $0x200] sm:$0xff]
  %v2642 = vld [vmem:[%s2569 + $0x208] sm:$0xff]
  %v2643 = vld [vmem:[%s2569 + $0x210] sm:$0xff]
  %v2644 = vld [vmem:[%s2569 + $0x218] sm:$0xf]
  %v2645 = vld [vmem:[%s2569 + $0x21c] sm:$0xff]
  %v2646 = vld [vmem:[%s2569 + $0x224] sm:$0xff]
  %v2647 = vld [vmem:[%s2569 + $0x22c] sm:$0xff]
  %v2648 = vld [vmem:[%s2569 + $0x234] sm:$0xff]
  %v2649 = vld [vmem:[%s2569 + $0x23c] sm:$0xf]
  %v2730 = vunpack.c.l.b16 %v2570
  %v2731 = vunpack.c.h.b16 %v2570
  %v2732 = vunpack.c.l.b16 %v2571
  %v2733 = vunpack.c.h.b16 %v2571
  %v2734 = vunpack.c.l.b16 %v2572
  %v2735 = vunpack.c.h.b16 %v2572
  %v2736 = vunpack.c.l.b16 %v2573
  %v2737 = vunpack.c.h.b16 %v2573
  %v2738 = vunpack.c.l.b16 %v2574
  %v2739 = vunpack.c.l.b16 %v2575
  %v2740 = vunpack.c.h.b16 %v2575
  %v2741 = vunpack.c.l.b16 %v2576
  %v2742 = vunpack.c.h.b16 %v2576
  %v2743 = vunpack.c.l.b16 %v2577
  %v2744 = vunpack.c.h.b16 %v2577
  %v2745 = vunpack.c.l.b16 %v2578
  %v2746 = vunpack.c.h.b16 %v2578
  %v2747 = vunpack.c.l.b16 %v2579
  %v2748 = vunpack.c.l.b16 %v2580
  %v2749 = vunpack.c.h.b16 %v2580
  %v2750 = vunpack.c.l.b16 %v2581
  %v2751 = vunpack.c.h.b16 %v2581
  %v2752 = vunpack.c.l.b16 %v2582
  %v2753 = vunpack.c.h.b16 %v2582
  %v2754 = vunpack.c.l.b16 %v2583
  %v2755 = vunpack.c.h.b16 %v2583
  %v2756 = vunpack.c.l.b16 %v2584
  %v2757 = vunpack.c.l.b16 %v2585
  %v2758 = vunpack.c.h.b16 %v2585
  %v2759 = vunpack.c.l.b16 %v2586
  %v2760 = vunpack.c.h.b16 %v2586
  %v2761 = vunpack.c.l.b16 %v2587
  %v2762 = vunpack.c.h.b16 %v2587
  %v2763 = vunpack.c.l.b16 %v2588
  %v2764 = vunpack.c.h.b16 %v2588
  %v2765 = vunpack.c.l.b16 %v2589
  %v2766 = vunpack.c.l.b16 %v2590
  %v2767 = vunpack.c.h.b16 %v2590
  %v2768 = vunpack.c.l.b16 %v2591
  %v2769 = vunpack.c.h.b16 %v2591
  %v2770 = vunpack.c.l.b16 %v2592
  %v2771 = vunpack.c.h.b16 %v2592
  %v2772 = vunpack.c.l.b16 %v2593
  %v2773 = vunpack.c.h.b16 %v2593
  %v2774 = vunpack.c.l.b16 %v2594
  %v2775 = vunpack.c.l.b16 %v2595
  %v2776 = vunpack.c.h.b16 %v2595
  %v2777 = vunpack.c.l.b16 %v2596
  %v2778 = vunpack.c.h.b16 %v2596
  %v2779 = vunpack.c.l.b16 %v2597
  %v2780 = vunpack.c.h.b16 %v2597
  %v2781 = vunpack.c.l.b16 %v2598
  %v2782 = vunpack.c.h.b16 %v2598
  %v2783 = vunpack.c.l.b16 %v2599
  %v2784 = vunpack.c.l.b16 %v2600
  %v2785 = vunpack.c.h.b16 %v2600
  %v2786 = vunpack.c.l.b16 %v2601
  %v2787 = vunpack.c.h.b16 %v2601
  %v2788 = vunpack.c.l.b16 %v2602
  %v2789 = vunpack.c.h.b16 %v2602
  %v2790 = vunpack.c.l.b16 %v2603
  %v2791 = vunpack.c.h.b16 %v2603
  %v2792 = vunpack.c.l.b16 %v2604
  %v2793 = vunpack.c.l.b16 %v2605
  %v2794 = vunpack.c.h.b16 %v2605
  %v2795 = vunpack.c.l.b16 %v2606
  %v2796 = vunpack.c.h.b16 %v2606
  %v2797 = vunpack.c.l.b16 %v2607
  %v2798 = vunpack.c.h.b16 %v2607
  %v2799 = vunpack.c.l.b16 %v2608
  %v2800 = vunpack.c.h.b16 %v2608
  %v2801 = vunpack.c.l.b16 %v2609
  %v2802 = vunpack.c.l.b16 %v2610
  %v2803 = vunpack.c.h.b16 %v2610
  %v2804 = vunpack.c.l.b16 %v2611
  %v2805 = vunpack.c.h.b16 %v2611
  %v2806 = vunpack.c.l.b16 %v2612
  %v2807 = vunpack.c.h.b16 %v2612
  %v2808 = vunpack.c.l.b16 %v2613
  %v2809 = vunpack.c.h.b16 %v2613
  %v2810 = vunpack.c.l.b16 %v2614
  %v2811 = vunpack.c.l.b16 %v2615
  %v2812 = vunpack.c.h.b16 %v2615
  %v2813 = vunpack.c.l.b16 %v2616
  %v2814 = vunpack.c.h.b16 %v2616
  %v2815 = vunpack.c.l.b16 %v2617
  %v2816 = vunpack.c.h.b16 %v2617
  %v2817 = vunpack.c.l.b16 %v2618
  %v2818 = vunpack.c.h.b16 %v2618
  %v2819 = vunpack.c.l.b16 %v2619
  %v2820 = vunpack.c.l.b16 %v2620
  %v2821 = vunpack.c.h.b16 %v2620
  %v2822 = vunpack.c.l.b16 %v2621
  %v2823 = vunpack.c.h.b16 %v2621
  %v2824 = vunpack.c.l.b16 %v2622
  %v2825 = vunpack.c.h.b16 %v2622
  %v2826 = vunpack.c.l.b16 %v2623
  %v2827 = vunpack.c.h.b16 %v2623
  %v2828 = vunpack.c.l.b16 %v2624
  %v2829 = vunpack.c.l.b16 %v2625
  %v2830 = vunpack.c.h.b16 %v2625
  %v2831 = vunpack.c.l.b16 %v2626
  %v2832 = vunpack.c.h.b16 %v2626
  %v2833 = vunpack.c.l.b16 %v2627
  %v2834 = vunpack.c.h.b16 %v2627
  %v2835 = vunpack.c.l.b16 %v2628
  %v2836 = vunpack.c.h.b16 %v2628
  %v2837 = vunpack.c.l.b16 %v2629
  %v2838 = vunpack.c.l.b16 %v2630
  %v2839 = vunpack.c.h.b16 %v2630
  %v2840 = vunpack.c.l.b16 %v2631
  %v2841 = vunpack.c.h.b16 %v2631
  %v2842 = vunpack.c.l.b16 %v2632
  %v2843 = vunpack.c.h.b16 %v2632
  %v2844 = vunpack.c.l.b16 %v2633
  %v2845 = vunpack.c.h.b16 %v2633
  %v2846 = vunpack.c.l.b16 %v2634
  %v2847 = vunpack.c.l.b16 %v2635
  %v2848 = vunpack.c.h.b16 %v2635
  %v2849 = vunpack.c.l.b16 %v2636
  %v2850 = vunpack.c.h.b16 %v2636
  %v2851 = vunpack.c.l.b16 %v2637
  %v2852 = vunpack.c.h.b16 %v2637
  %v2853 = vunpack.c.l.b16 %v2638
  %v2854 = vunpack.c.h.b16 %v2638
  %v2855 = vunpack.c.l.b16 %v2639
  %v2856 = vunpack.c.l.b16 %v2640
  %v2857 = vunpack.c.h.b16 %v2640
  %v2858 = vunpack.c.l.b16 %v2641
  %v2859 = vunpack.c.h.b16 %v2641
  %v2860 = vunpack.c.l.b16 %v2642
  %v2861 = vunpack.c.h.b16 %v2642
  %v2862 = vunpack.c.l.b16 %v2643
  %v2863 = vunpack.c.h.b16 %v2643
  %v2864 = vunpack.c.l.b16 %v2644
  %v2865 = vunpack.c.l.b16 %v2645
  %v2866 = vunpack.c.h.b16 %v2645
  %v2867 = vunpack.c.l.b16 %v2646
  %v2868 = vunpack.c.h.b16 %v2646
  %v2869 = vunpack.c.l.b16 %v2647
  %v2870 = vunpack.c.h.b16 %v2647
  %v2871 = vunpack.c.l.b16 %v2648
  %v2872 = vunpack.c.h.b16 %v2648
  %v2873 = vunpack.c.l.b16 %v2649
  %v2874 = vpack.c.b16 %v2739, %v2730
  %v2875 = vpack.c.b16 %v2740, %v2731
  %v2876 = vpack.c.b16 %v2741, %v2732
  %v2877 = vpack.c.b16 %v2742, %v2733
  %v2878 = vpack.c.b16 %v2743, %v2734
  %v2879 = vpack.c.b16 %v2744, %v2735
  %v2880 = vpack.c.b16 %v2745, %v2736
  %v2881 = vpack.c.b16 %v2746, %v2737
  %v2882 = vpack.c.b16 %v2747, %v2738
  %v2883 = vpack.c.b16 %v2757, %v2748
  %v2884 = vpack.c.b16 %v2758, %v2749
  %v2885 = vpack.c.b16 %v2759, %v2750
  %v2886 = vpack.c.b16 %v2760, %v2751
  %v2887 = vpack.c.b16 %v2761, %v2752
  %v2888 = vpack.c.b16 %v2762, %v2753
  %v2889 = vpack.c.b16 %v2763, %v2754
  %v2890 = vpack.c.b16 %v2764, %v2755
  %v2891 = vpack.c.b16 %v2765, %v2756
  %v2892 = vpack.c.b16 %v2775, %v2766
  %v2893 = vpack.c.b16 %v2776, %v2767
  %v2894 = vpack.c.b16 %v2777, %v2768
  %v2895 = vpack.c.b16 %v2778, %v2769
  %v2896 = vpack.c.b16 %v2779, %v2770
  %v2897 = vpack.c.b16 %v2780, %v2771
  %v2898 = vpack.c.b16 %v2781, %v2772
  %v2899 = vpack.c.b16 %v2782, %v2773
  %v2900 = vpack.c.b16 %v2783, %v2774
  %v2901 = vpack.c.b16 %v2793, %v2784
  %v2902 = vpack.c.b16 %v2794, %v2785
  %v2903 = vpack.c.b16 %v2795, %v2786
  %v2904 = vpack.c.b16 %v2796, %v2787
  %v2905 = vpack.c.b16 %v2797, %v2788
  %v2906 = vpack.c.b16 %v2798, %v2789
  %v2907 = vpack.c.b16 %v2799, %v2790
  %v2908 = vpack.c.b16 %v2800, %v2791
  %v2909 = vpack.c.b16 %v2801, %v2792
  %v2910 = vpack.c.b16 %v2811, %v2802
  %v2911 = vpack.c.b16 %v2812, %v2803
  %v2912 = vpack.c.b16 %v2813, %v2804
  %v2913 = vpack.c.b16 %v2814, %v2805
  %v2914 = vpack.c.b16 %v2815, %v2806
  %v2915 = vpack.c.b16 %v2816, %v2807
  %v2916 = vpack.c.b16 %v2817, %v2808
  %v2917 = vpack.c.b16 %v2818, %v2809
  %v2918 = vpack.c.b16 %v2819, %v2810
  %v2919 = vpack.c.b16 %v2829, %v2820
  %v2920 = vpack.c.b16 %v2830, %v2821
  %v2921 = vpack.c.b16 %v2831, %v2822
  %v2922 = vpack.c.b16 %v2832, %v2823
  %v2923 = vpack.c.b16 %v2833, %v2824
  %v2924 = vpack.c.b16 %v2834, %v2825
  %v2925 = vpack.c.b16 %v2835, %v2826
  %v2926 = vpack.c.b16 %v2836, %v2827
  %v2927 = vpack.c.b16 %v2837, %v2828
  %v2928 = vpack.c.b16 %v2847, %v2838
  %v2929 = vpack.c.b16 %v2848, %v2839
  %v2930 = vpack.c.b16 %v2849, %v2840
  %v2931 = vpack.c.b16 %v2850, %v2841
  %v2932 = vpack.c.b16 %v2851, %v2842
  %v2933 = vpack.c.b16 %v2852, %v2843
  %v2934 = vpack.c.b16 %v2853, %v2844
  %v2935 = vpack.c.b16 %v2854, %v2845
  %v2936 = vpack.c.b16 %v2855, %v2846
  %v2937 = vpack.c.b16 %v2865, %v2856
  %v2938 = vpack.c.b16 %v2866, %v2857
  %v2939 = vpack.c.b16 %v2867, %v2858
  %v2940 = vpack.c.b16 %v2868, %v2859
  %v2941 = vpack.c.b16 %v2869, %v2860
  %v2942 = vpack.c.b16 %v2870, %v2861
  %v2943 = vpack.c.b16 %v2871, %v2862
  %v2944 = vpack.c.b16 %v2872, %v2863
  %v2945 = vpack.c.b16 %v2873, %v2864
  %3018 = vmatprep.subr.bf16.mxu0 0
  %3019 = vmatpush1.bf16.msra.mxu0 %v912
  %3020 = vmatprep.subr.bf16.mxu0 0
  %3021 = vmatpush1.bf16.msra.mxu0 %v913
  %3022 = vmatprep.subr.bf16.mxu0 0
  %3023 = vmatpush1.bf16.msra.mxu0 %v914
  %3024 = vmatprep.subr.bf16.mxu0 0
  %3025 = vmatpush1.bf16.msra.mxu0 %v915
  %3026 = vmatprep.subr.bf16.mxu0 0
  %3027 = vmatpush1.bf16.msra.mxu0 %v916
  %3028 = vmatprep.subr.bf16.mxu0 0
  %3029 = vmatpush1.bf16.msra.mxu0 %v917
  %3030 = vmatprep.subr.bf16.mxu0 0
  %3031 = vmatpush1.bf16.msra.mxu0 %v918
  %3032 = vmatprep.subr.bf16.mxu0 0
  %3033 = vmatpush1.bf16.msra.mxu0 %v919
  %3034 = vmatprep.subr.bf16.mxu0 0
  %3035 = vmatpush1.bf16.msra.mxu0 %v920
  %3036 = vmatprep.subr.bf16.mxu0 0
  %3037 = vmatpush1.bf16.msra.mxu0 %v921
  %3038 = vmatprep.subr.bf16.mxu0 0
  %3039 = vmatpush1.bf16.msra.mxu0 %v922
  %3040 = vmatprep.subr.bf16.mxu0 0
  %3041 = vmatpush1.bf16.msra.mxu0 %v923
  %3042 = vmatprep.subr.bf16.mxu0 0
  %3043 = vmatpush1.bf16.msra.mxu0 %v924
  %3044 = vmatprep.subr.bf16.mxu0 0
  %3045 = vmatpush1.bf16.msra.mxu0 %v925
  %3046 = vmatprep.subr.bf16.mxu0 0
  %3047 = vmatpush1.bf16.msra.mxu0 %v926
  %3048 = vmatprep.subr.bf16.mxu0 0
  %3049 = vmatpush1.bf16.msra.mxu0 %v927
  %3050 = vmatprep.mubr.bf16.mxu0 %v2875
  %3051 = vmatmul.mubr.bf16.gmra.mrb[0].mxu0 %v2874
  %v3052 = vpop.f32.mrb[0].mxu0
  %v3053 = vadd.f32 0.0, %v3052
  %v3054 = vpop.f32.mrb[0].mxu0
  %v3055 = vpop.f32.mrb[0].mxu0
  %v3056 = vadd.f32 0.0, %v3055
  %v3057 = vpop.f32.mrb[0].mxu0
  %3058 = vmatprep.mubr.bf16.mxu0 %v2884
  %3059 = vmatmul.mubr.bf16.gmra.mrb[0].mxu0 %v2883
  %v3060 = vpop.f32.mrb[0].mxu0
  %v3061 = vadd.f32 0.0, %v3060
  %v3062 = vpop.f32.mrb[0].mxu0
  %v3063 = vpop.f32.mrb[0].mxu0
  %v3064 = vadd.f32 0.0, %v3063
  %v3065 = vpop.f32.mrb[0].mxu0
  %3066 = vmatprep.mubr.bf16.mxu0 %v2893
  %3067 = vmatmul.mubr.bf16.gmra.mrb[0].mxu0 %v2892
  %v3068 = vpop.f32.mrb[0].mxu0
  %v3069 = vadd.f32 0.0, %v3068
  %v3070 = vpop.f32.mrb[0].mxu0
  %v3071 = vpop.f32.mrb[0].mxu0
  %v3072 = vadd.f32 0.0, %v3071
  %v3073 = vpop.f32.mrb[0].mxu0
  %3074 = vmatprep.mubr.bf16.mxu0 %v2902
  %3075 = vmatmul.mubr.bf16.gmra.mrb[0].mxu0 %v2901
  %v3076 = vpop.f32.mrb[0].mxu0
  %v3077 = vadd.f32 0.0, %v3076
  %v3078 = vpop.f32.mrb[0].mxu0
  %v3079 = vpop.f32.mrb[0].mxu0
  %v3080 = vadd.f32 0.0, %v3079
  %v3081 = vpop.f32.mrb[0].mxu0
  %3082 = vmatprep.mubr.bf16.mxu0 %v2911
  %3083 = vmatmul.mubr.bf16.gmra.mrb[0].mxu0 %v2910
  %v3084 = vpop.f32.mrb[0].mxu0
  %v3085 = vadd.f32 0.0, %v3084
  %v3086 = vpop.f32.mrb[0].mxu0
  %v3087 = vpop.f32.mrb[0].mxu0
  %v3088 = vadd.f32 0.0, %v3087
  %v3089 = vpop.f32.mrb[0].mxu0
  %3090 = vmatprep.mubr.bf16.mxu0 %v2920
  %3091 = vmatmul.mubr.bf16.gmra.mrb[0].mxu0 %v2919
  %v3092 = vpop.f32.mrb[0].mxu0
  %v3093 = vadd.f32 0.0, %v3092
  %v3094 = vpop.f32.mrb[0].mxu0
  %v3095 = vpop.f32.mrb[0].mxu0
  %v3096 = vadd.f32 0.0, %v3095
  %v3097 = vpop.f32.mrb[0].mxu0
  %3098 = vmatprep.mubr.bf16.mxu0 %v2929
  %3099 = vmatmul.mubr.bf16.gmra.mrb[0].mxu0 %v2928
  %v3100 = vpop.f32.mrb[0].mxu0
  %v3101 = vadd.f32 0.0, %v3100
  %v3102 = vpop.f32.mrb[0].mxu0
  %v3103 = vpop.f32.mrb[0].mxu0
  %v3104 = vadd.f32 0.0, %v3103
  %v3105 = vpop.f32.mrb[0].mxu0
  %3106 = vmatprep.mubr.bf16.mxu0 %v2938
  %3107 = vmatmul.mubr.bf16.gmra.mrb[0].mxu0 %v2937
  %v3108 = vpop.f32.mrb[0].mxu0
  %v3109 = vadd.f32 0.0, %v3108
  %v3110 = vpop.f32.mrb[0].mxu0
  %v3111 = vpop.f32.mrb[0].mxu0
  %v3112 = vadd.f32 0.0, %v3111
  %v3113 = vpop.f32.mrb[0].mxu0
  %3114 = vdwg.mxu0
  %3115 = vmatprep.subr.bf16.mxu0 0
  %3116 = vmatpush1.bf16.msra.mxu0 %v928
  %3117 = vmatprep.subr.bf16.mxu0 0
  %3118 = vmatpush1.bf16.msra.mxu0 %v929
  %3119 = vmatprep.subr.bf16.mxu0 0
  %3120 = vmatpush1.bf16.msra.mxu0 %v930
  %3121 = vmatprep.subr.bf16.mxu0 0
  %3122 = vmatpush1.bf16.msra.mxu0 %v931
  %3123 = vmatprep.subr.bf16.mxu0 0
  %3124 = vmatpush1.bf16.msra.mxu0 %v932
  %3125 = vmatprep.subr.bf16.mxu0 0
  %3126 = vmatpush1.bf16.msra.mxu0 %v933
  %3127 = vmatprep.subr.bf16.mxu0 0
  %3128 = vmatpush1.bf16.msra.mxu0 %v934
  %3129 = vmatprep.subr.bf16.mxu0 0
  %3130 = vmatpush1.bf16.msra.mxu0 %v935
  %3131 = vmatprep.subr.bf16.mxu0 0
  %3132 = vmatpush1.bf16.msra.mxu0 %v936
  %3133 = vmatprep.subr.bf16.mxu0 0
  %3134 = vmatpush1.bf16.msra.mxu0 %v937
  %3135 = vmatprep.subr.bf16.mxu0 0
  %3136 = vmatpush1.bf16.msra.mxu0 %v938
  %3137 = vmatprep.subr.bf16.mxu0 0
  %3138 = vmatpush1.bf16.msra.mxu0 %v939
  %3139 = vmatprep.subr.bf16.mxu0 0
  %3140 = vmatpush1.bf16.msra.mxu0 %v940
  %3141 = vmatprep.subr.bf16.mxu0 0
  %3142 = vmatpush1.bf16.msra.mxu0 %v941
  %3143 = vmatprep.subr.bf16.mxu0 0
  %3144 = vmatpush1.bf16.msra.mxu0 %v942
  %3145 = vmatprep.subr.bf16.mxu0 0
  %3146 = vmatpush1.bf16.msra.mxu0 %v943
  %3147 = vmatprep.mubr.bf16.mxu0 %v2877
  %3148 = vmatmul.mubr.bf16.gmra.mrb[0].mxu0 %v2876
  %v3149 = vpop.f32.mrb[0].mxu0
  %v3150 = vadd.f32 %v3053, %v3149
  %v3151 = vpop.f32.mrb[0].mxu0
  %v3152 = vpop.f32.mrb[0].mxu0
  %v3153 = vadd.f32 %v3056, %v3152
  %v3154 = vpop.f32.mrb[0].mxu0
  %3155 = vmatprep.mubr.bf16.mxu0 %v2886
  %3156 = vmatmul.mubr.bf16.gmra.mrb[0].mxu0 %v2885
  %v3157 = vpop.f32.mrb[0].mxu0
  %v3158 = vadd.f32 %v3061, %v3157
  %v3159 = vpop.f32.mrb[0].mxu0
  %v3160 = vpop.f32.mrb[0].mxu0
  %v3161 = vadd.f32 %v3064, %v3160
  %v3162 = vpop.f32.mrb[0].mxu0
  %3163 = vmatprep.mubr.bf16.mxu0 %v2895
  %3164 = vmatmul.mubr.bf16.gmra.mrb[0].mxu0 %v2894
  %v3165 = vpop.f32.mrb[0].mxu0
  %v3166 = vadd.f32 %v3069, %v3165
  %v3167 = vpop.f32.mrb[0].mxu0
  %v3168 = vpop.f32.mrb[0].mxu0
  %v3169 = vadd.f32 %v3072, %v3168
  %v3170 = vpop.f32.mrb[0].mxu0
  %3171 = vmatprep.mubr.bf16.mxu0 %v2904
  %3172 = vmatmul.mubr.bf16.gmra.mrb[0].mxu0 %v2903
  %v3173 = vpop.f32.mrb[0].mxu0
  %v3174 = vadd.f32 %v3077, %v3173
  %v3175 = vpop.f32.mrb[0].mxu0
  %v3176 = vpop.f32.mrb[0].mxu0
  %v3177 = vadd.f32 %v3080, %v3176
  %v3178 = vpop.f32.mrb[0].mxu0
  %3179 = vmatprep.mubr.bf16.mxu0 %v2913
  %3180 = vmatmul.mubr.bf16.gmra.mrb[0].mxu0 %v2912
  %v3181 = vpop.f32.mrb[0].mxu0
  %v3182 = vadd.f32 %v3085, %v3181
  %v3183 = vpop.f32.mrb[0].mxu0
  %v3184 = vpop.f32.mrb[0].mxu0
  %v3185 = vadd.f32 %v3088, %v3184
  %v3186 = vpop.f32.mrb[0].mxu0
  %3187 = vmatprep.mubr.bf16.mxu0 %v2922
  %3188 = vmatmul.mubr.bf16.gmra.mrb[0].mxu0 %v2921
  %v3189 = vpop.f32.mrb[0].mxu0
  %v3190 = vadd.f32 %v3093, %v3189
  %v3191 = vpop.f32.mrb[0].mxu0
  %v3192 = vpop.f32.mrb[0].mxu0
  %v3193 = vadd.f32 %v3096, %v3192
  %v3194 = vpop.f32.mrb[0].mxu0
  %3195 = vmatprep.mubr.bf16.mxu0 %v2931
  %3196 = vmatmul.mubr.bf16.gmra.mrb[0].mxu0 %v2930
  %v3197 = vpop.f32.mrb[0].mxu0
  %v3198 = vadd.f32 %v3101, %v3197
  %v3199 = vpop.f32.mrb[0].mxu0
  %v3200 = vpop.f32.mrb[0].mxu0
  %v3201 = vadd.f32 %v3104, %v3200
  %v3202 = vpop.f32.mrb[0].mxu0
  %3203 = vmatprep.mubr.bf16.mxu0 %v2940
  %3204 = vmatmul.mubr.bf16.gmra.mrb[0].mxu0 %v2939
  %v3205 = vpop.f32.mrb[0].mxu0
  %v3206 = vadd.f32 %v3109, %v3205
  %v3207 = vpop.f32.mrb[0].mxu0
  %v3208 = vpop.f32.mrb[0].mxu0
  %v3209 = vadd.f32 %v3112, %v3208
  %v3210 = vpop.f32.mrb[0].mxu0
  %3211 = vdwg.mxu0
  %3212 = vmatprep.subr.bf16.mxu0 0
  %3213 = vmatpush1.bf16.msra.mxu0 %v944
  %3214 = vmatprep.subr.bf16.mxu0 0
  %3215 = vmatpush1.bf16.msra.mxu0 %v945
  %3216 = vmatprep.subr.bf16.mxu0 0
  %3217 = vmatpush1.bf16.msra.mxu0 %v946
  %3218 = vmatprep.subr.bf16.mxu0 0
  %3219 = vmatpush1.bf16.msra.mxu0 %v947
  %3220 = vmatprep.subr.bf16.mxu0 0
  %3221 = vmatpush1.bf16.msra.mxu0 %v948
  %3222 = vmatprep.subr.bf16.mxu0 0
  %3223 = vmatpush1.bf16.msra.mxu0 %v949
  %3224 = vmatprep.subr.bf16.mxu0 0
  %3225 = vmatpush1.bf16.msra.mxu0 %v950
  %3226 = vmatprep.subr.bf16.mxu0 0
  %3227 = vmatpush1.bf16.msra.mxu0 %v951
  %3228 = vmatprep.subr.bf16.mxu0 0
  %3229 = vmatpush1.bf16.msra.mxu0 %v952
  %3230 = vmatprep.subr.bf16.mxu0 0
  %3231 = vmatpush1.bf16.msra.mxu0 %v953
  %3232 = vmatprep.subr.bf16.mxu0 0
  %3233 = vmatpush1.bf16.msra.mxu0 %v954
  %3234 = vmatprep.subr.bf16.mxu0 0
  %3235 = vmatpush1.bf16.msra.mxu0 %v955
  %3236 = vmatprep.subr.bf16.mxu0 0
  %3237 = vmatpush1.bf16.msra.mxu0 %v956
  %3238 = vmatprep.subr.bf16.mxu0 0
  %3239 = vmatpush1.bf16.msra.mxu0 %v957
  %3240 = vmatprep.subr.bf16.mxu0 0
  %3241 = vmatpush1.bf16.msra.mxu0 %v958
  %3242 = vmatprep.subr.bf16.mxu0 0
  %3243 = vmatpush1.bf16.msra.mxu0 %v959
  %3244 = vmatprep.mubr.bf16.mxu0 %v2879
  %3245 = vmatmul.mubr.bf16.gmra.mrb[0].mxu0 %v2878
  %v3246 = vpop.f32.mrb[0].mxu0
  %v3247 = vadd.f32 %v3150, %v3246
  %v3248 = vpop.f32.mrb[0].mxu0
  %v3249 = vpop.f32.mrb[0].mxu0
  %v3250 = vadd.f32 %v3153, %v3249
  %v3251 = vpop.f32.mrb[0].mxu0
  %3252 = vmatprep.mubr.bf16.mxu0 %v2888
  %3253 = vmatmul.mubr.bf16.gmra.mrb[0].mxu0 %v2887
  %v3254 = vpop.f32.mrb[0].mxu0
  %v3255 = vadd.f32 %v3158, %v3254
  %v3256 = vpop.f32.mrb[0].mxu0
  %v3257 = vpop.f32.mrb[0].mxu0
  %v3258 = vadd.f32 %v3161, %v3257
  %v3259 = vpop.f32.mrb[0].mxu0
  %3260 = vmatprep.mubr.bf16.mxu0 %v2897
  %3261 = vmatmul.mubr.bf16.gmra.mrb[0].mxu0 %v2896
  %v3262 = vpop.f32.mrb[0].mxu0
  %v3263 = vadd.f32 %v3166, %v3262
  %v3264 = vpop.f32.mrb[0].mxu0
  %v3265 = vpop.f32.mrb[0].mxu0
  %v3266 = vadd.f32 %v3169, %v3265
  %v3267 = vpop.f32.mrb[0].mxu0
  %3268 = vmatprep.mubr.bf16.mxu0 %v2906
  %3269 = vmatmul.mubr.bf16.gmra.mrb[0].mxu0 %v2905
  %v3270 = vpop.f32.mrb[0].mxu0
  %v3271 = vadd.f32 %v3174, %v3270
  %v3272 = vpop.f32.mrb[0].mxu0
  %v3273 = vpop.f32.mrb[0].mxu0
  %v3274 = vadd.f32 %v3177, %v3273
  %v3275 = vpop.f32.mrb[0].mxu0
  %3276 = vmatprep.mubr.bf16.mxu0 %v2915
  %3277 = vmatmul.mubr.bf16.gmra.mrb[0].mxu0 %v2914
  %v3278 = vpop.f32.mrb[0].mxu0
  %v3279 = vadd.f32 %v3182, %v3278
  %v3280 = vpop.f32.mrb[0].mxu0
  %v3281 = vpop.f32.mrb[0].mxu0
  %v3282 = vadd.f32 %v3185, %v3281
  %v3283 = vpop.f32.mrb[0].mxu0
  %3284 = vmatprep.mubr.bf16.mxu0 %v2924
  %3285 = vmatmul.mubr.bf16.gmra.mrb[0].mxu0 %v2923
  %v3286 = vpop.f32.mrb[0].mxu0
  %v3287 = vadd.f32 %v3190, %v3286
  %v3288 = vpop.f32.mrb[0].mxu0
  %v3289 = vpop.f32.mrb[0].mxu0
  %v3290 = vadd.f32 %v3193, %v3289
  %v3291 = vpop.f32.mrb[0].mxu0
  %3292 = vmatprep.mubr.bf16.mxu0 %v2933
  %3293 = vmatmul.mubr.bf16.gmra.mrb[0].mxu0 %v2932
  %v3294 = vpop.f32.mrb[0].mxu0
  %v3295 = vadd.f32 %v3198, %v3294
  %v3296 = vpop.f32.mrb[0].mxu0
  %v3297 = vpop.f32.mrb[0].mxu0
  %v3298 = vadd.f32 %v3201, %v3297
  %v3299 = vpop.f32.mrb[0].mxu0
  %3300 = vmatprep.mubr.bf16.mxu0 %v2942
  %3301 = vmatmul.mubr.bf16.gmra.mrb[0].mxu0 %v2941
  %v3302 = vpop.f32.mrb[0].mxu0
  %v3303 = vadd.f32 %v3206, %v3302
  %v3304 = vpop.f32.mrb[0].mxu0
  %v3305 = vpop.f32.mrb[0].mxu0
  %v3306 = vadd.f32 %v3209, %v3305
  %v3307 = vpop.f32.mrb[0].mxu0
  %3308 = vdwg.mxu0
  %3309 = vmatprep.subr.bf16.mxu0 0
  %3310 = vmatpush1.bf16.msra.mxu0 %v960
  %3311 = vmatprep.subr.bf16.mxu0 0
  %3312 = vmatpush1.bf16.msra.mxu0 %v961
  %3313 = vmatprep.subr.bf16.mxu0 0
  %3314 = vmatpush1.bf16.msra.mxu0 %v962
  %3315 = vmatprep.subr.bf16.mxu0 0
  %3316 = vmatpush1.bf16.msra.mxu0 %v963
  %3317 = vmatprep.subr.bf16.mxu0 0
  %3318 = vmatpush1.bf16.msra.mxu0 %v964
  %3319 = vmatprep.subr.bf16.mxu0 0
  %3320 = vmatpush1.bf16.msra.mxu0 %v965
  %3321 = vmatprep.subr.bf16.mxu0 0
  %3322 = vmatpush1.bf16.msra.mxu0 %v966
  %3323 = vmatprep.subr.bf16.mxu0 0
  %3324 = vmatpush1.bf16.msra.mxu0 %v967
  %3325 = vmatprep.subr.bf16.mxu0 0
  %3326 = vmatpush1.bf16.msra.mxu0 %v968
  %3327 = vmatprep.subr.bf16.mxu0 0
  %3328 = vmatpush1.bf16.msra.mxu0 %v969
  %3329 = vmatprep.subr.bf16.mxu0 0
  %3330 = vmatpush1.bf16.msra.mxu0 %v970
  %3331 = vmatprep.subr.bf16.mxu0 0
  %3332 = vmatpush1.bf16.msra.mxu0 %v971
  %3333 = vmatprep.subr.bf16.mxu0 0
  %3334 = vmatpush1.bf16.msra.mxu0 %v972
  %3335 = vmatprep.subr.bf16.mxu0 0
  %3336 = vmatpush1.bf16.msra.mxu0 %v973
  %3337 = vmatprep.subr.bf16.mxu0 0
  %3338 = vmatpush1.bf16.msra.mxu0 %v974
  %3339 = vmatprep.subr.bf16.mxu0 0
  %3340 = vmatpush1.bf16.msra.mxu0 %v975
  %3341 = vmatprep.mubr.bf16.mxu0 %v2881
  %3342 = vmatmul.mubr.bf16.gmra.mrb[0].mxu0 %v2880
  %v3343 = vpop.f32.mrb[0].mxu0
  %v3344 = vadd.f32 %v3247, %v3343
  %v3345 = vpop.f32.mrb[0].mxu0
  %v3346 = vpop.f32.mrb[0].mxu0
  %v3347 = vadd.f32 %v3250, %v3346
  %v3348 = vpop.f32.mrb[0].mxu0
  %3349 = vmatprep.mubr.bf16.mxu0 %v2890
  %3350 = vmatmul.mubr.bf16.gmra.mrb[0].mxu0 %v2889
  %v3351 = vpop.f32.mrb[0].mxu0
  %v3352 = vadd.f32 %v3255, %v3351
  %v3353 = vpop.f32.mrb[0].mxu0
  %v3354 = vpop.f32.mrb[0].mxu0
  %v3355 = vadd.f32 %v3258, %v3354
  %v3356 = vpop.f32.mrb[0].mxu0
  %3357 = vmatprep.mubr.bf16.mxu0 %v2899
  %3358 = vmatmul.mubr.bf16.gmra.mrb[0].mxu0 %v2898
  %v3359 = vpop.f32.mrb[0].mxu0
  %v3360 = vadd.f32 %v3263, %v3359
  %v3361 = vpop.f32.mrb[0].mxu0
  %v3362 = vpop.f32.mrb[0].mxu0
  %v3363 = vadd.f32 %v3266, %v3362
  %v3364 = vpop.f32.mrb[0].mxu0
  %3365 = vmatprep.mubr.bf16.mxu0 %v2908
  %3366 = vmatmul.mubr.bf16.gmra.mrb[0].mxu0 %v2907
  %v3367 = vpop.f32.mrb[0].mxu0
  %v3368 = vadd.f32 %v3271, %v3367
  %v3369 = vpop.f32.mrb[0].mxu0
  %v3370 = vpop.f32.mrb[0].mxu0
  %v3371 = vadd.f32 %v3274, %v3370
  %v3372 = vpop.f32.mrb[0].mxu0
  %3373 = vmatprep.mubr.bf16.mxu0 %v2917
  %3374 = vmatmul.mubr.bf16.gmra.mrb[0].mxu0 %v2916
  %v3375 = vpop.f32.mrb[0].mxu0
  %v3376 = vadd.f32 %v3279, %v3375
  %v3377 = vpop.f32.mrb[0].mxu0
  %v3378 = vpop.f32.mrb[0].mxu0
  %v3379 = vadd.f32 %v3282, %v3378
  %v3380 = vpop.f32.mrb[0].mxu0
  %3381 = vmatprep.mubr.bf16.mxu0 %v2926
  %3382 = vmatmul.mubr.bf16.gmra.mrb[0].mxu0 %v2925
  %v3383 = vpop.f32.mrb[0].mxu0
  %v3384 = vadd.f32 %v3287, %v3383
  %v3385 = vpop.f32.mrb[0].mxu0
  %v3386 = vpop.f32.mrb[0].mxu0
  %v3387 = vadd.f32 %v3290, %v3386
  %v3388 = vpop.f32.mrb[0].mxu0
  %3389 = vmatprep.mubr.bf16.mxu0 %v2935
  %3390 = vmatmul.mubr.bf16.gmra.mrb[0].mxu0 %v2934
  %v3391 = vpop.f32.mrb[0].mxu0
  %v3392 = vadd.f32 %v3295, %v3391
  %v3393 = vpop.f32.mrb[0].mxu0
  %v3394 = vpop.f32.mrb[0].mxu0
  %v3395 = vadd.f32 %v3298, %v3394
  %v3396 = vpop.f32.mrb[0].mxu0
  %3397 = vmatprep.mubr.bf16.mxu0 %v2944
  %3398 = vmatmul.mubr.bf16.gmra.mrb[0].mxu0 %v2943
  %v3399 = vpop.f32.mrb[0].mxu0
  %v3400 = vadd.f32 %v3303, %v3399
  %v3401 = vpop.f32.mrb[0].mxu0
  %v3402 = vpop.f32.mrb[0].mxu0
  %v3403 = vadd.f32 %v3306, %v3402
  %v3404 = vpop.f32.mrb[0].mxu0
  %3405 = vdwg.mxu0
  %3406 = vmatprep.subr.bf16.mxu0 0
  %3407 = vmatpush1.bf16.msra.mxu0 %v976
  %3408 = vmatprep.subr.bf16.mxu0 0
  %3409 = vmatpush1.bf16.msra.mxu0 %v977
  %3410 = vmatprep.subr.bf16.mxu0 0
  %3411 = vmatpush1.bf16.msra.mxu0 %v978
  %3412 = vmatprep.subr.bf16.mxu0 0
  %3413 = vmatpush1.bf16.msra.mxu0 %v979
  %3414 = vmatprep.subr.bf16.mxu0 0
  %3415 = vmatpush1.bf16.msra.mxu0 %v980
  %3416 = vmatprep.subr.bf16.mxu0 0
  %3417 = vmatpush1.bf16.msra.mxu0 %v981
  %3418 = vmatprep.subr.bf16.mxu0 0
  %3419 = vmatpush1.bf16.msra.mxu0 %v982
  %3420 = vmatprep.subr.bf16.mxu0 0
  %3421 = vmatpush1.bf16.msra.mxu0 %v983
  %3422 = vmatprep.subr.bf16.mxu0 0
  %3423 = vmatpush1.bf16.msra.mxu0 0
  %3424 = vmatprep.subr.bf16.mxu0 0
  %3425 = vmatpush1.bf16.msra.mxu0 0
  %3426 = vmatprep.subr.bf16.mxu0 0
  %3427 = vmatpush1.bf16.msra.mxu0 0
  %3428 = vmatprep.subr.bf16.mxu0 0
  %3429 = vmatpush1.bf16.msra.mxu0 0
  %3430 = vmatprep.subr.bf16.mxu0 0
  %3431 = vmatpush1.bf16.msra.mxu0 0
  %3432 = vmatprep.subr.bf16.mxu0 0
  %3433 = vmatpush1.bf16.msra.mxu0 0
  %3434 = vmatprep.subr.bf16.mxu0 0
  %3435 = vmatpush1.bf16.msra.mxu0 0
  %3436 = vmatprep.subr.bf16.mxu0 0
  %3437 = vmatpush1.bf16.msra.mxu0 0
  %3438 = vmatprep.mubr.bf16.mxu0 0
  %3439 = vmatmul.mubr.bf16.gmra.mrb[0].mxu0 %v2882
  %v3440 = vpop.f32.mrb[0].mxu0
  %v3441 = vadd.f32 %v3344, %v3440
  %v3442 = vpop.f32.mrb[0].mxu0
  %v3443 = vpop.f32.mrb[0].mxu0
  %v3444 = vadd.f32 %v3347, %v3443
  %v3445 = vpop.f32.mrb[0].mxu0
  %3446 = vmatprep.mubr.bf16.mxu0 0
  %3447 = vmatmul.mubr.bf16.gmra.mrb[0].mxu0 %v2891
  %v3448 = vpop.f32.mrb[0].mxu0
  %v3449 = vadd.f32 %v3352, %v3448
  %v3450 = vpop.f32.mrb[0].mxu0
  %v3451 = vpop.f32.mrb[0].mxu0
  %v3452 = vadd.f32 %v3355, %v3451
  %v3453 = vpop.f32.mrb[0].mxu0
  %3454 = vmatprep.mubr.bf16.mxu0 0
  %3455 = vmatmul.mubr.bf16.gmra.mrb[0].mxu0 %v2900
  %v3456 = vpop.f32.mrb[0].mxu0
  %v3457 = vadd.f32 %v3360, %v3456
  %v3458 = vpop.f32.mrb[0].mxu0
  %v3459 = vpop.f32.mrb[0].mxu0
  %v3460 = vadd.f32 %v3363, %v3459
  %v3461 = vpop.f32.mrb[0].mxu0
  %3462 = vmatprep.mubr.bf16.mxu0 0
  %3463 = vmatmul.mubr.bf16.gmra.mrb[0].mxu0 %v2909
  %v3464 = vpop.f32.mrb[0].mxu0
  %v3465 = vadd.f32 %v3368, %v3464
  %v3466 = vpop.f32.mrb[0].mxu0
  %v3467 = vpop.f32.mrb[0].mxu0
  %v3468 = vadd.f32 %v3371, %v3467
  %v3469 = vpop.f32.mrb[0].mxu0
  %3470 = vmatprep.mubr.bf16.mxu0 0
  %3471 = vmatmul.mubr.bf16.gmra.mrb[0].mxu0 %v2918
  %v3472 = vpop.f32.mrb[0].mxu0
  %v3473 = vadd.f32 %v3376, %v3472
  %v3474 = vpop.f32.mrb[0].mxu0
  %v3475 = vpop.f32.mrb[0].mxu0
  %v3476 = vadd.f32 %v3379, %v3475
  %v3477 = vpop.f32.mrb[0].mxu0
  %3478 = vmatprep.mubr.bf16.mxu0 0
  %3479 = vmatmul.mubr.bf16.gmra.mrb[0].mxu0 %v2927
  %v3480 = vpop.f32.mrb[0].mxu0
  %v3481 = vadd.f32 %v3384, %v3480
  %v3482 = vpop.f32.mrb[0].mxu0
  %v3483 = vpop.f32.mrb[0].mxu0
  %v3484 = vadd.f32 %v3387, %v3483
  %v3485 = vpop.f32.mrb[0].mxu0
  %3486 = vmatprep.mubr.bf16.mxu0 0
  %3487 = vmatmul.mubr.bf16.gmra.mrb[0].mxu0 %v2936
  %v3488 = vpop.f32.mrb[0].mxu0
  %v3489 = vadd.f32 %v3392, %v3488
  %v3490 = vpop.f32.mrb[0].mxu0
  %v3491 = vpop.f32.mrb[0].mxu0
  %v3492 = vadd.f32 %v3395, %v3491
  %v3493 = vpop.f32.mrb[0].mxu0
  %3494 = vmatprep.mubr.bf16.mxu0 0
  %3495 = vmatmul.mubr.bf16.gmra.mrb[0].mxu0 %v2945
  %v3496 = vpop.f32.mrb[0].mxu0
  %v3497 = vadd.f32 %v3400, %v3496
  %v3498 = vpop.f32.mrb[0].mxu0
  %v3499 = vpop.f32.mrb[0].mxu0
  %v3500 = vadd.f32 %v3403, %v3499
  %v3501 = vpop.f32.mrb[0].mxu0
  %3502 = vdwg.mxu0
  %v3503 = vmul.f32 %v3441, %v1545
  %v3504 = vmul.f32 %v3444, %v1545
  %v3505 = vmul.f32 %v3449, %v1545
  %v3506 = vmul.f32 %v3452, %v1545
  %v3507 = vmul.f32 %v3457, %v1545
  %v3508 = vmul.f32 %v3460, %v1545
  %v3509 = vmul.f32 %v3465, %v1545
  %v3510 = vmul.f32 %v3468, %v1545
  %v3511 = vmul.f32 %v3473, %v1545
  %v3512 = vmul.f32 %v3476, %v1545
  %v3513 = vmul.f32 %v3481, %v1545
  %v3514 = vmul.f32 %v3484, %v1545
  %v3515 = vmul.f32 %v3489, %v1545
  %v3516 = vmul.f32 %v3492, %v1545
  %v3517 = vmul.f32 %v3497, %v1545
  %v3518 = vmul.f32 %v3500, %v1545
  %v3519 = vadd.f32 %v3503, %v1567
  %v3520 = vadd.f32 %v3504, %v1567
  %v3521 = vadd.f32 %v3505, %v1567
  %v3522 = vadd.f32 %v3506, %v1567
  %v3523 = vadd.f32 %v3507, %v1567
  %v3524 = vadd.f32 %v3508, %v1567
  %v3525 = vadd.f32 %v3509, %v1567
  %v3526 = vadd.f32 %v3510, %v1567
  %v3527 = vadd.f32 %v3511, %v1567
  %v3528 = vadd.f32 %v3512, %v1567
  %v3529 = vadd.f32 %v3513, %v1567
  %v3530 = vadd.f32 %v3514, %v1567
  %v3531 = vadd.f32 %v3515, %v1567
  %v3532 = vadd.f32 %v3516, %v1567
  %v3533 = vadd.f32 %v3517, %v1567
  %v3534 = vadd.f32 %v3518, %v1567
  %v3535 = vmax.f32 %v2552, %v3519
  %v3536 = vmax.f32 %v2553, %v3520
  %v3537 = vmax.f32 %v2554, %v3521
  %v3538 = vmax.f32 %v2555, %v3522
  %v3539 = vmax.f32 %v2556, %v3523
  %v3540 = vmax.f32 %v2557, %v3524
  %v3541 = vmax.f32 %v2558, %v3525
  %v3542 = vmax.f32 %v2559, %v3526
  %v3543 = vmax.f32 %v2560, %v3527
  %v3544 = vmax.f32 %v2561, %v3528
  %v3545 = vmax.f32 %v2562, %v3529
  %v3546 = vmax.f32 %v2563, %v3530
  %v3547 = vmax.f32 %v2564, %v3531
  %v3548 = vmax.f32 %v2565, %v3532
  %v3549 = vmax.f32 %v2566, %v3533
  %v3550 = vmax.f32 %v2567, %v3534
  %s3551 = smul.addr %s173, 4
  %s3552 = scalar_lea.vmem %s3, %s3551
  %v3553 = vld [vmem:[%s3552] sm:$0xff]
  %v3554 = vld [vmem:[%s3552 + $0x8] sm:$0xff]
  %v3555 = vld [vmem:[%s3552 + $0x10] sm:$0xff]
  %v3556 = vld [vmem:[%s3552 + $0x18] sm:$0xff]
  %v3557 = vld [vmem:[%s3552 + $0x20] sm:$0xf]
  %v3558 = vld [vmem:[%s3552 + $0x24] sm:$0xff]
  %v3559 = vld [vmem:[%s3552 + $0x2c] sm:$0xff]
  %v3560 = vld [vmem:[%s3552 + $0x34] sm:$0xff]
  %v3561 = vld [vmem:[%s3552 + $0x3c] sm:$0xff]
  %v3562 = vld [vmem:[%s3552 + $0x44] sm:$0xf]
  %v3563 = vld [vmem:[%s3552 + $0x48] sm:$0xff]
  %v3564 = vld [vmem:[%s3552 + $0x50] sm:$0xff]
  %v3565 = vld [vmem:[%s3552 + $0x58] sm:$0xff]
  %v3566 = vld [vmem:[%s3552 + $0x60] sm:$0xff]
  %v3567 = vld [vmem:[%s3552 + $0x68] sm:$0xf]
  %v3568 = vld [vmem:[%s3552 + $0x6c] sm:$0xff]
  %v3569 = vld [vmem:[%s3552 + $0x74] sm:$0xff]
  %v3570 = vld [vmem:[%s3552 + $0x7c] sm:$0xff]
  %v3571 = vld [vmem:[%s3552 + $0x84] sm:$0xff]
  %v3572 = vld [vmem:[%s3552 + $0x8c] sm:$0xf]
  %v3573 = vld [vmem:[%s3552 + $0x90] sm:$0xff]
  %v3574 = vld [vmem:[%s3552 + $0x98] sm:$0xff]
  %v3575 = vld [vmem:[%s3552 + $0xa0] sm:$0xff]
  %v3576 = vld [vmem:[%s3552 + $0xa8] sm:$0xff]
  %v3577 = vld [vmem:[%s3552 + $0xb0] sm:$0xf]
  %v3578 = vld [vmem:[%s3552 + $0xb4] sm:$0xff]
  %v3579 = vld [vmem:[%s3552 + $0xbc] sm:$0xff]
  %v3580 = vld [vmem:[%s3552 + $0xc4] sm:$0xff]
  %v3581 = vld [vmem:[%s3552 + $0xcc] sm:$0xff]
  %v3582 = vld [vmem:[%s3552 + $0xd4] sm:$0xf]
  %v3583 = vld [vmem:[%s3552 + $0xd8] sm:$0xff]
  %v3584 = vld [vmem:[%s3552 + $0xe0] sm:$0xff]
  %v3585 = vld [vmem:[%s3552 + $0xe8] sm:$0xff]
  %v3586 = vld [vmem:[%s3552 + $0xf0] sm:$0xff]
  %v3587 = vld [vmem:[%s3552 + $0xf8] sm:$0xf]
  %v3588 = vld [vmem:[%s3552 + $0xfc] sm:$0xff]
  %v3589 = vld [vmem:[%s3552 + $0x104] sm:$0xff]
  %v3590 = vld [vmem:[%s3552 + $0x10c] sm:$0xff]
  %v3591 = vld [vmem:[%s3552 + $0x114] sm:$0xff]
  %v3592 = vld [vmem:[%s3552 + $0x11c] sm:$0xf]
  %v3593 = vld [vmem:[%s3552 + $0x120] sm:$0xff]
  %v3594 = vld [vmem:[%s3552 + $0x128] sm:$0xff]
  %v3595 = vld [vmem:[%s3552 + $0x130] sm:$0xff]
  %v3596 = vld [vmem:[%s3552 + $0x138] sm:$0xff]
  %v3597 = vld [vmem:[%s3552 + $0x140] sm:$0xf]
  %v3598 = vld [vmem:[%s3552 + $0x144] sm:$0xff]
  %v3599 = vld [vmem:[%s3552 + $0x14c] sm:$0xff]
  %v3600 = vld [vmem:[%s3552 + $0x154] sm:$0xff]
  %v3601 = vld [vmem:[%s3552 + $0x15c] sm:$0xff]
  %v3602 = vld [vmem:[%s3552 + $0x164] sm:$0xf]
  %v3603 = vld [vmem:[%s3552 + $0x168] sm:$0xff]
  %v3604 = vld [vmem:[%s3552 + $0x170] sm:$0xff]
  %v3605 = vld [vmem:[%s3552 + $0x178] sm:$0xff]
  %v3606 = vld [vmem:[%s3552 + $0x180] sm:$0xff]
  %v3607 = vld [vmem:[%s3552 + $0x188] sm:$0xf]
  %v3608 = vld [vmem:[%s3552 + $0x18c] sm:$0xff]
  %v3609 = vld [vmem:[%s3552 + $0x194] sm:$0xff]
  %v3610 = vld [vmem:[%s3552 + $0x19c] sm:$0xff]
  %v3611 = vld [vmem:[%s3552 + $0x1a4] sm:$0xff]
  %v3612 = vld [vmem:[%s3552 + $0x1ac] sm:$0xf]
  %v3613 = vld [vmem:[%s3552 + $0x1b0] sm:$0xff]
  %v3614 = vld [vmem:[%s3552 + $0x1b8] sm:$0xff]
  %v3615 = vld [vmem:[%s3552 + $0x1c0] sm:$0xff]
  %v3616 = vld [vmem:[%s3552 + $0x1c8] sm:$0xff]
  %v3617 = vld [vmem:[%s3552 + $0x1d0] sm:$0xf]
  %v3618 = vld [vmem:[%s3552 + $0x1d4] sm:$0xff]
  %v3619 = vld [vmem:[%s3552 + $0x1dc] sm:$0xff]
  %v3620 = vld [vmem:[%s3552 + $0x1e4] sm:$0xff]
  %v3621 = vld [vmem:[%s3552 + $0x1ec] sm:$0xff]
  %v3622 = vld [vmem:[%s3552 + $0x1f4] sm:$0xf]
  %v3623 = vld [vmem:[%s3552 + $0x1f8] sm:$0xff]
  %v3624 = vld [vmem:[%s3552 + $0x200] sm:$0xff]
  %v3625 = vld [vmem:[%s3552 + $0x208] sm:$0xff]
  %v3626 = vld [vmem:[%s3552 + $0x210] sm:$0xff]
  %v3627 = vld [vmem:[%s3552 + $0x218] sm:$0xf]
  %v3628 = vld [vmem:[%s3552 + $0x21c] sm:$0xff]
  %v3629 = vld [vmem:[%s3552 + $0x224] sm:$0xff]
  %v3630 = vld [vmem:[%s3552 + $0x22c] sm:$0xff]
  %v3631 = vld [vmem:[%s3552 + $0x234] sm:$0xff]
  %v3632 = vld [vmem:[%s3552 + $0x23c] sm:$0xf]
  %v3713 = vunpack.c.l.b16 %v3553
  %v3714 = vunpack.c.h.b16 %v3553
  %v3715 = vunpack.c.l.b16 %v3554
  %v3716 = vunpack.c.h.b16 %v3554
  %v3717 = vunpack.c.l.b16 %v3555
  %v3718 = vunpack.c.h.b16 %v3555
  %v3719 = vunpack.c.l.b16 %v3556
  %v3720 = vunpack.c.h.b16 %v3556
  %v3721 = vunpack.c.l.b16 %v3557
  %v3722 = vunpack.c.l.b16 %v3558
  %v3723 = vunpack.c.h.b16 %v3558
  %v3724 = vunpack.c.l.b16 %v3559
  %v3725 = vunpack.c.h.b16 %v3559
  %v3726 = vunpack.c.l.b16 %v3560
  %v3727 = vunpack.c.h.b16 %v3560
  %v3728 = vunpack.c.l.b16 %v3561
  %v3729 = vunpack.c.h.b16 %v3561
  %v3730 = vunpack.c.l.b16 %v3562
  %v3731 = vunpack.c.l.b16 %v3563
  %v3732 = vunpack.c.h.b16 %v3563
  %v3733 = vunpack.c.l.b16 %v3564
  %v3734 = vunpack.c.h.b16 %v3564
  %v3735 = vunpack.c.l.b16 %v3565
  %v3736 = vunpack.c.h.b16 %v3565
  %v3737 = vunpack.c.l.b16 %v3566
  %v3738 = vunpack.c.h.b16 %v3566
  %v3739 = vunpack.c.l.b16 %v3567
  %v3740 = vunpack.c.l.b16 %v3568
  %v3741 = vunpack.c.h.b16 %v3568
  %v3742 = vunpack.c.l.b16 %v3569
  %v3743 = vunpack.c.h.b16 %v3569
  %v3744 = vunpack.c.l.b16 %v3570
  %v3745 = vunpack.c.h.b16 %v3570
  %v3746 = vunpack.c.l.b16 %v3571
  %v3747 = vunpack.c.h.b16 %v3571
  %v3748 = vunpack.c.l.b16 %v3572
  %v3749 = vunpack.c.l.b16 %v3573
  %v3750 = vunpack.c.h.b16 %v3573
  %v3751 = vunpack.c.l.b16 %v3574
  %v3752 = vunpack.c.h.b16 %v3574
  %v3753 = vunpack.c.l.b16 %v3575
  %v3754 = vunpack.c.h.b16 %v3575
  %v3755 = vunpack.c.l.b16 %v3576
  %v3756 = vunpack.c.h.b16 %v3576
  %v3757 = vunpack.c.l.b16 %v3577
  %v3758 = vunpack.c.l.b16 %v3578
  %v3759 = vunpack.c.h.b16 %v3578
  %v3760 = vunpack.c.l.b16 %v3579
  %v3761 = vunpack.c.h.b16 %v3579
  %v3762 = vunpack.c.l.b16 %v3580
  %v3763 = vunpack.c.h.b16 %v3580
  %v3764 = vunpack.c.l.b16 %v3581
  %v3765 = vunpack.c.h.b16 %v3581
  %v3766 = vunpack.c.l.b16 %v3582
  %v3767 = vunpack.c.l.b16 %v3583
  %v3768 = vunpack.c.h.b16 %v3583
  %v3769 = vunpack.c.l.b16 %v3584
  %v3770 = vunpack.c.h.b16 %v3584
  %v3771 = vunpack.c.l.b16 %v3585
  %v3772 = vunpack.c.h.b16 %v3585
  %v3773 = vunpack.c.l.b16 %v3586
  %v3774 = vunpack.c.h.b16 %v3586
  %v3775 = vunpack.c.l.b16 %v3587
  %v3776 = vunpack.c.l.b16 %v3588
  %v3777 = vunpack.c.h.b16 %v3588
  %v3778 = vunpack.c.l.b16 %v3589
  %v3779 = vunpack.c.h.b16 %v3589
  %v3780 = vunpack.c.l.b16 %v3590
  %v3781 = vunpack.c.h.b16 %v3590
  %v3782 = vunpack.c.l.b16 %v3591
  %v3783 = vunpack.c.h.b16 %v3591
  %v3784 = vunpack.c.l.b16 %v3592
  %v3785 = vunpack.c.l.b16 %v3593
  %v3786 = vunpack.c.h.b16 %v3593
  %v3787 = vunpack.c.l.b16 %v3594
  %v3788 = vunpack.c.h.b16 %v3594
  %v3789 = vunpack.c.l.b16 %v3595
  %v3790 = vunpack.c.h.b16 %v3595
  %v3791 = vunpack.c.l.b16 %v3596
  %v3792 = vunpack.c.h.b16 %v3596
  %v3793 = vunpack.c.l.b16 %v3597
  %v3794 = vunpack.c.l.b16 %v3598
  %v3795 = vunpack.c.h.b16 %v3598
  %v3796 = vunpack.c.l.b16 %v3599
  %v3797 = vunpack.c.h.b16 %v3599
  %v3798 = vunpack.c.l.b16 %v3600
  %v3799 = vunpack.c.h.b16 %v3600
  %v3800 = vunpack.c.l.b16 %v3601
  %v3801 = vunpack.c.h.b16 %v3601
  %v3802 = vunpack.c.l.b16 %v3602
  %v3803 = vunpack.c.l.b16 %v3603
  %v3804 = vunpack.c.h.b16 %v3603
  %v3805 = vunpack.c.l.b16 %v3604
  %v3806 = vunpack.c.h.b16 %v3604
  %v3807 = vunpack.c.l.b16 %v3605
  %v3808 = vunpack.c.h.b16 %v3605
  %v3809 = vunpack.c.l.b16 %v3606
  %v3810 = vunpack.c.h.b16 %v3606
  %v3811 = vunpack.c.l.b16 %v3607
  %v3812 = vunpack.c.l.b16 %v3608
  %v3813 = vunpack.c.h.b16 %v3608
  %v3814 = vunpack.c.l.b16 %v3609
  %v3815 = vunpack.c.h.b16 %v3609
  %v3816 = vunpack.c.l.b16 %v3610
  %v3817 = vunpack.c.h.b16 %v3610
  %v3818 = vunpack.c.l.b16 %v3611
  %v3819 = vunpack.c.h.b16 %v3611
  %v3820 = vunpack.c.l.b16 %v3612
  %v3821 = vunpack.c.l.b16 %v3613
  %v3822 = vunpack.c.h.b16 %v3613
  %v3823 = vunpack.c.l.b16 %v3614
  %v3824 = vunpack.c.h.b16 %v3614
  %v3825 = vunpack.c.l.b16 %v3615
  %v3826 = vunpack.c.h.b16 %v3615
  %v3827 = vunpack.c.l.b16 %v3616
  %v3828 = vunpack.c.h.b16 %v3616
  %v3829 = vunpack.c.l.b16 %v3617
  %v3830 = vunpack.c.l.b16 %v3618
  %v3831 = vunpack.c.h.b16 %v3618
  %v3832 = vunpack.c.l.b16 %v3619
  %v3833 = vunpack.c.h.b16 %v3619
  %v3834 = vunpack.c.l.b16 %v3620
  %v3835 = vunpack.c.h.b16 %v3620
  %v3836 = vunpack.c.l.b16 %v3621
  %v3837 = vunpack.c.h.b16 %v3621
  %v3838 = vunpack.c.l.b16 %v3622
  %v3839 = vunpack.c.l.b16 %v3623
  %v3840 = vunpack.c.h.b16 %v3623
  %v3841 = vunpack.c.l.b16 %v3624
  %v3842 = vunpack.c.h.b16 %v3624
  %v3843 = vunpack.c.l.b16 %v3625
  %v3844 = vunpack.c.h.b16 %v3625
  %v3845 = vunpack.c.l.b16 %v3626
  %v3846 = vunpack.c.h.b16 %v3626
  %v3847 = vunpack.c.l.b16 %v3627
  %v3848 = vunpack.c.l.b16 %v3628
  %v3849 = vunpack.c.h.b16 %v3628
  %v3850 = vunpack.c.l.b16 %v3629
  %v3851 = vunpack.c.h.b16 %v3629
  %v3852 = vunpack.c.l.b16 %v3630
  %v3853 = vunpack.c.h.b16 %v3630
  %v3854 = vunpack.c.l.b16 %v3631
  %v3855 = vunpack.c.h.b16 %v3631
  %v3856 = vunpack.c.l.b16 %v3632
  %v3857 = vpack.c.b16 %v3722, %v3713
  %v3858 = vpack.c.b16 %v3723, %v3714
  %v3859 = vpack.c.b16 %v3724, %v3715
  %v3860 = vpack.c.b16 %v3725, %v3716
  %v3861 = vpack.c.b16 %v3726, %v3717
  %v3862 = vpack.c.b16 %v3727, %v3718
  %v3863 = vpack.c.b16 %v3728, %v3719
  %v3864 = vpack.c.b16 %v3729, %v3720
  %v3865 = vpack.c.b16 %v3730, %v3721
  %v3866 = vpack.c.b16 %v3740, %v3731
  %v3867 = vpack.c.b16 %v3741, %v3732
  %v3868 = vpack.c.b16 %v3742, %v3733
  %v3869 = vpack.c.b16 %v3743, %v3734
  %v3870 = vpack.c.b16 %v3744, %v3735
  %v3871 = vpack.c.b16 %v3745, %v3736
  %v3872 = vpack.c.b16 %v3746, %v3737
  %v3873 = vpack.c.b16 %v3747, %v3738
  %v3874 = vpack.c.b16 %v3748, %v3739
  %v3875 = vpack.c.b16 %v3758, %v3749
  %v3876 = vpack.c.b16 %v3759, %v3750
  %v3877 = vpack.c.b16 %v3760, %v3751
  %v3878 = vpack.c.b16 %v3761, %v3752
  %v3879 = vpack.c.b16 %v3762, %v3753
  %v3880 = vpack.c.b16 %v3763, %v3754
  %v3881 = vpack.c.b16 %v3764, %v3755
  %v3882 = vpack.c.b16 %v3765, %v3756
  %v3883 = vpack.c.b16 %v3766, %v3757
  %v3884 = vpack.c.b16 %v3776, %v3767
  %v3885 = vpack.c.b16 %v3777, %v3768
  %v3886 = vpack.c.b16 %v3778, %v3769
  %v3887 = vpack.c.b16 %v3779, %v3770
  %v3888 = vpack.c.b16 %v3780, %v3771
  %v3889 = vpack.c.b16 %v3781, %v3772
  %v3890 = vpack.c.b16 %v3782, %v3773
  %v3891 = vpack.c.b16 %v3783, %v3774
  %v3892 = vpack.c.b16 %v3784, %v3775
  %v3893 = vpack.c.b16 %v3794, %v3785
  %v3894 = vpack.c.b16 %v3795, %v3786
  %v3895 = vpack.c.b16 %v3796, %v3787
  %v3896 = vpack.c.b16 %v3797, %v3788
  %v3897 = vpack.c.b16 %v3798, %v3789
  %v3898 = vpack.c.b16 %v3799, %v3790
  %v3899 = vpack.c.b16 %v3800, %v3791
  %v3900 = vpack.c.b16 %v3801, %v3792
  %v3901 = vpack.c.b16 %v3802, %v3793
  %v3902 = vpack.c.b16 %v3812, %v3803
  %v3903 = vpack.c.b16 %v3813, %v3804
  %v3904 = vpack.c.b16 %v3814, %v3805
  %v3905 = vpack.c.b16 %v3815, %v3806
  %v3906 = vpack.c.b16 %v3816, %v3807
  %v3907 = vpack.c.b16 %v3817, %v3808
  %v3908 = vpack.c.b16 %v3818, %v3809
  %v3909 = vpack.c.b16 %v3819, %v3810
  %v3910 = vpack.c.b16 %v3820, %v3811
  %v3911 = vpack.c.b16 %v3830, %v3821
  %v3912 = vpack.c.b16 %v3831, %v3822
  %v3913 = vpack.c.b16 %v3832, %v3823
  %v3914 = vpack.c.b16 %v3833, %v3824
  %v3915 = vpack.c.b16 %v3834, %v3825
  %v3916 = vpack.c.b16 %v3835, %v3826
  %v3917 = vpack.c.b16 %v3836, %v3827
  %v3918 = vpack.c.b16 %v3837, %v3828
  %v3919 = vpack.c.b16 %v3838, %v3829
  %v3920 = vpack.c.b16 %v3848, %v3839
  %v3921 = vpack.c.b16 %v3849, %v3840
  %v3922 = vpack.c.b16 %v3850, %v3841
  %v3923 = vpack.c.b16 %v3851, %v3842
  %v3924 = vpack.c.b16 %v3852, %v3843
  %v3925 = vpack.c.b16 %v3853, %v3844
  %v3926 = vpack.c.b16 %v3854, %v3845
  %v3927 = vpack.c.b16 %v3855, %v3846
  %v3928 = vpack.c.b16 %v3856, %v3847
  %4001 = vmatprep.subr.bf16.mxu0 0
  %4002 = vmatpush1.bf16.msra.mxu0 %v912
  %4003 = vmatprep.subr.bf16.mxu0 0
  %4004 = vmatpush1.bf16.msra.mxu0 %v913
  %4005 = vmatprep.subr.bf16.mxu0 0
  %4006 = vmatpush1.bf16.msra.mxu0 %v914
  %4007 = vmatprep.subr.bf16.mxu0 0
  %4008 = vmatpush1.bf16.msra.mxu0 %v915
  %4009 = vmatprep.subr.bf16.mxu0 0
  %4010 = vmatpush1.bf16.msra.mxu0 %v916
  %4011 = vmatprep.subr.bf16.mxu0 0
  %4012 = vmatpush1.bf16.msra.mxu0 %v917
  %4013 = vmatprep.subr.bf16.mxu0 0
  %4014 = vmatpush1.bf16.msra.mxu0 %v918
  %4015 = vmatprep.subr.bf16.mxu0 0
  %4016 = vmatpush1.bf16.msra.mxu0 %v919
  %4017 = vmatprep.subr.bf16.mxu0 0
  %4018 = vmatpush1.bf16.msra.mxu0 %v920
  %4019 = vmatprep.subr.bf16.mxu0 0
  %4020 = vmatpush1.bf16.msra.mxu0 %v921
  %4021 = vmatprep.subr.bf16.mxu0 0
  %4022 = vmatpush1.bf16.msra.mxu0 %v922
  %4023 = vmatprep.subr.bf16.mxu0 0
  %4024 = vmatpush1.bf16.msra.mxu0 %v923
  %4025 = vmatprep.subr.bf16.mxu0 0
  %4026 = vmatpush1.bf16.msra.mxu0 %v924
  %4027 = vmatprep.subr.bf16.mxu0 0
  %4028 = vmatpush1.bf16.msra.mxu0 %v925
  %4029 = vmatprep.subr.bf16.mxu0 0
  %4030 = vmatpush1.bf16.msra.mxu0 %v926
  %4031 = vmatprep.subr.bf16.mxu0 0
  %4032 = vmatpush1.bf16.msra.mxu0 %v927
  %4033 = vmatprep.mubr.bf16.mxu0 %v3858
  %4034 = vmatmul.mubr.bf16.gmra.mrb[0].mxu0 %v3857
  %v4035 = vpop.f32.mrb[0].mxu0
  %v4036 = vadd.f32 0.0, %v4035
  %v4037 = vpop.f32.mrb[0].mxu0
  %v4038 = vpop.f32.mrb[0].mxu0
  %v4039 = vadd.f32 0.0, %v4038
  %v4040 = vpop.f32.mrb[0].mxu0
  %4041 = vmatprep.mubr.bf16.mxu0 %v3867
  %4042 = vmatmul.mubr.bf16.gmra.mrb[0].mxu0 %v3866
  %v4043 = vpop.f32.mrb[0].mxu0
  %v4044 = vadd.f32 0.0, %v4043
  %v4045 = vpop.f32.mrb[0].mxu0
  %v4046 = vpop.f32.mrb[0].mxu0
  %v4047 = vadd.f32 0.0, %v4046
  %v4048 = vpop.f32.mrb[0].mxu0
  %4049 = vmatprep.mubr.bf16.mxu0 %v3876
  %4050 = vmatmul.mubr.bf16.gmra.mrb[0].mxu0 %v3875
  %v4051 = vpop.f32.mrb[0].mxu0
  %v4052 = vadd.f32 0.0, %v4051
  %v4053 = vpop.f32.mrb[0].mxu0
  %v4054 = vpop.f32.mrb[0].mxu0
  %v4055 = vadd.f32 0.0, %v4054
  %v4056 = vpop.f32.mrb[0].mxu0
  %4057 = vmatprep.mubr.bf16.mxu0 %v3885
  %4058 = vmatmul.mubr.bf16.gmra.mrb[0].mxu0 %v3884
  %v4059 = vpop.f32.mrb[0].mxu0
  %v4060 = vadd.f32 0.0, %v4059
  %v4061 = vpop.f32.mrb[0].mxu0
  %v4062 = vpop.f32.mrb[0].mxu0
  %v4063 = vadd.f32 0.0, %v4062
  %v4064 = vpop.f32.mrb[0].mxu0
  %4065 = vmatprep.mubr.bf16.mxu0 %v3894
  %4066 = vmatmul.mubr.bf16.gmra.mrb[0].mxu0 %v3893
  %v4067 = vpop.f32.mrb[0].mxu0
  %v4068 = vadd.f32 0.0, %v4067
  %v4069 = vpop.f32.mrb[0].mxu0
  %v4070 = vpop.f32.mrb[0].mxu0
  %v4071 = vadd.f32 0.0, %v4070
  %v4072 = vpop.f32.mrb[0].mxu0
  %4073 = vmatprep.mubr.bf16.mxu0 %v3903
  %4074 = vmatmul.mubr.bf16.gmra.mrb[0].mxu0 %v3902
  %v4075 = vpop.f32.mrb[0].mxu0
  %v4076 = vadd.f32 0.0, %v4075
  %v4077 = vpop.f32.mrb[0].mxu0
  %v4078 = vpop.f32.mrb[0].mxu0
  %v4079 = vadd.f32 0.0, %v4078
  %v4080 = vpop.f32.mrb[0].mxu0
  %4081 = vmatprep.mubr.bf16.mxu0 %v3912
  %4082 = vmatmul.mubr.bf16.gmra.mrb[0].mxu0 %v3911
  %v4083 = vpop.f32.mrb[0].mxu0
  %v4084 = vadd.f32 0.0, %v4083
  %v4085 = vpop.f32.mrb[0].mxu0
  %v4086 = vpop.f32.mrb[0].mxu0
  %v4087 = vadd.f32 0.0, %v4086
  %v4088 = vpop.f32.mrb[0].mxu0
  %4089 = vmatprep.mubr.bf16.mxu0 %v3921
  %4090 = vmatmul.mubr.bf16.gmra.mrb[0].mxu0 %v3920
  %v4091 = vpop.f32.mrb[0].mxu0
  %v4092 = vadd.f32 0.0, %v4091
  %v4093 = vpop.f32.mrb[0].mxu0
  %v4094 = vpop.f32.mrb[0].mxu0
  %v4095 = vadd.f32 0.0, %v4094
  %v4096 = vpop.f32.mrb[0].mxu0
  %4097 = vdwg.mxu0
  %4098 = vmatprep.subr.bf16.mxu0 0
  %4099 = vmatpush1.bf16.msra.mxu0 %v928
  %4100 = vmatprep.subr.bf16.mxu0 0
  %4101 = vmatpush1.bf16.msra.mxu0 %v929
  %4102 = vmatprep.subr.bf16.mxu0 0
  %4103 = vmatpush1.bf16.msra.mxu0 %v930
  %4104 = vmatprep.subr.bf16.mxu0 0
  %4105 = vmatpush1.bf16.msra.mxu0 %v931
  %4106 = vmatprep.subr.bf16.mxu0 0
  %4107 = vmatpush1.bf16.msra.mxu0 %v932
  %4108 = vmatprep.subr.bf16.mxu0 0
  %4109 = vmatpush1.bf16.msra.mxu0 %v933
  %4110 = vmatprep.subr.bf16.mxu0 0
  %4111 = vmatpush1.bf16.msra.mxu0 %v934
  %4112 = vmatprep.subr.bf16.mxu0 0
  %4113 = vmatpush1.bf16.msra.mxu0 %v935
  %4114 = vmatprep.subr.bf16.mxu0 0
  %4115 = vmatpush1.bf16.msra.mxu0 %v936
  %4116 = vmatprep.subr.bf16.mxu0 0
  %4117 = vmatpush1.bf16.msra.mxu0 %v937
  %4118 = vmatprep.subr.bf16.mxu0 0
  %4119 = vmatpush1.bf16.msra.mxu0 %v938
  %4120 = vmatprep.subr.bf16.mxu0 0
  %4121 = vmatpush1.bf16.msra.mxu0 %v939
  %4122 = vmatprep.subr.bf16.mxu0 0
  %4123 = vmatpush1.bf16.msra.mxu0 %v940
  %4124 = vmatprep.subr.bf16.mxu0 0
  %4125 = vmatpush1.bf16.msra.mxu0 %v941
  %4126 = vmatprep.subr.bf16.mxu0 0
  %4127 = vmatpush1.bf16.msra.mxu0 %v942
  %4128 = vmatprep.subr.bf16.mxu0 0
  %4129 = vmatpush1.bf16.msra.mxu0 %v943
  %4130 = vmatprep.mubr.bf16.mxu0 %v3860
  %4131 = vmatmul.mubr.bf16.gmra.mrb[0].mxu0 %v3859
  %v4132 = vpop.f32.mrb[0].mxu0
  %v4133 = vadd.f32 %v4036, %v4132
  %v4134 = vpop.f32.mrb[0].mxu0
  %v4135 = vpop.f32.mrb[0].mxu0
  %v4136 = vadd.f32 %v4039, %v4135
  %v4137 = vpop.f32.mrb[0].mxu0
  %4138 = vmatprep.mubr.bf16.mxu0 %v3869
  %4139 = vmatmul.mubr.bf16.gmra.mrb[0].mxu0 %v3868
  %v4140 = vpop.f32.mrb[0].mxu0
  %v4141 = vadd.f32 %v4044, %v4140
  %v4142 = vpop.f32.mrb[0].mxu0
  %v4143 = vpop.f32.mrb[0].mxu0
  %v4144 = vadd.f32 %v4047, %v4143
  %v4145 = vpop.f32.mrb[0].mxu0
  %4146 = vmatprep.mubr.bf16.mxu0 %v3878
  %4147 = vmatmul.mubr.bf16.gmra.mrb[0].mxu0 %v3877
  %v4148 = vpop.f32.mrb[0].mxu0
  %v4149 = vadd.f32 %v4052, %v4148
  %v4150 = vpop.f32.mrb[0].mxu0
  %v4151 = vpop.f32.mrb[0].mxu0
  %v4152 = vadd.f32 %v4055, %v4151
  %v4153 = vpop.f32.mrb[0].mxu0
  %4154 = vmatprep.mubr.bf16.mxu0 %v3887
  %4155 = vmatmul.mubr.bf16.gmra.mrb[0].mxu0 %v3886
  %v4156 = vpop.f32.mrb[0].mxu0
  %v4157 = vadd.f32 %v4060, %v4156
  %v4158 = vpop.f32.mrb[0].mxu0
  %v4159 = vpop.f32.mrb[0].mxu0
  %v4160 = vadd.f32 %v4063, %v4159
  %v4161 = vpop.f32.mrb[0].mxu0
  %4162 = vmatprep.mubr.bf16.mxu0 %v3896
  %4163 = vmatmul.mubr.bf16.gmra.mrb[0].mxu0 %v3895
  %v4164 = vpop.f32.mrb[0].mxu0
  %v4165 = vadd.f32 %v4068, %v4164
  %v4166 = vpop.f32.mrb[0].mxu0
  %v4167 = vpop.f32.mrb[0].mxu0
  %v4168 = vadd.f32 %v4071, %v4167
  %v4169 = vpop.f32.mrb[0].mxu0
  %4170 = vmatprep.mubr.bf16.mxu0 %v3905
  %4171 = vmatmul.mubr.bf16.gmra.mrb[0].mxu0 %v3904
  %v4172 = vpop.f32.mrb[0].mxu0
  %v4173 = vadd.f32 %v4076, %v4172
  %v4174 = vpop.f32.mrb[0].mxu0
  %v4175 = vpop.f32.mrb[0].mxu0
  %v4176 = vadd.f32 %v4079, %v4175
  %v4177 = vpop.f32.mrb[0].mxu0
  %4178 = vmatprep.mubr.bf16.mxu0 %v3914
  %4179 = vmatmul.mubr.bf16.gmra.mrb[0].mxu0 %v3913
  %v4180 = vpop.f32.mrb[0].mxu0
  %v4181 = vadd.f32 %v4084, %v4180
  %v4182 = vpop.f32.mrb[0].mxu0
  %v4183 = vpop.f32.mrb[0].mxu0
  %v4184 = vadd.f32 %v4087, %v4183
  %v4185 = vpop.f32.mrb[0].mxu0
  %4186 = vmatprep.mubr.bf16.mxu0 %v3923
  %4187 = vmatmul.mubr.bf16.gmra.mrb[0].mxu0 %v3922
  %v4188 = vpop.f32.mrb[0].mxu0
  %v4189 = vadd.f32 %v4092, %v4188
  %v4190 = vpop.f32.mrb[0].mxu0
  %v4191 = vpop.f32.mrb[0].mxu0
  %v4192 = vadd.f32 %v4095, %v4191
  %v4193 = vpop.f32.mrb[0].mxu0
  %4194 = vdwg.mxu0
  %4195 = vmatprep.subr.bf16.mxu0 0
  %4196 = vmatpush1.bf16.msra.mxu0 %v944
  %4197 = vmatprep.subr.bf16.mxu0 0
  %4198 = vmatpush1.bf16.msra.mxu0 %v945
  %4199 = vmatprep.subr.bf16.mxu0 0
  %4200 = vmatpush1.bf16.msra.mxu0 %v946
  %4201 = vmatprep.subr.bf16.mxu0 0
  %4202 = vmatpush1.bf16.msra.mxu0 %v947
  %4203 = vmatprep.subr.bf16.mxu0 0
  %4204 = vmatpush1.bf16.msra.mxu0 %v948
  %4205 = vmatprep.subr.bf16.mxu0 0
  %4206 = vmatpush1.bf16.msra.mxu0 %v949
  %4207 = vmatprep.subr.bf16.mxu0 0
  %4208 = vmatpush1.bf16.msra.mxu0 %v950
  %4209 = vmatprep.subr.bf16.mxu0 0
  %4210 = vmatpush1.bf16.msra.mxu0 %v951
  %4211 = vmatprep.subr.bf16.mxu0 0
  %4212 = vmatpush1.bf16.msra.mxu0 %v952
  %4213 = vmatprep.subr.bf16.mxu0 0
  %4214 = vmatpush1.bf16.msra.mxu0 %v953
  %4215 = vmatprep.subr.bf16.mxu0 0
  %4216 = vmatpush1.bf16.msra.mxu0 %v954
  %4217 = vmatprep.subr.bf16.mxu0 0
  %4218 = vmatpush1.bf16.msra.mxu0 %v955
  %4219 = vmatprep.subr.bf16.mxu0 0
  %4220 = vmatpush1.bf16.msra.mxu0 %v956
  %4221 = vmatprep.subr.bf16.mxu0 0
  %4222 = vmatpush1.bf16.msra.mxu0 %v957
  %4223 = vmatprep.subr.bf16.mxu0 0
  %4224 = vmatpush1.bf16.msra.mxu0 %v958
  %4225 = vmatprep.subr.bf16.mxu0 0
  %4226 = vmatpush1.bf16.msra.mxu0 %v959
  %4227 = vmatprep.mubr.bf16.mxu0 %v3862
  %4228 = vmatmul.mubr.bf16.gmra.mrb[0].mxu0 %v3861
  %v4229 = vpop.f32.mrb[0].mxu0
  %v4230 = vadd.f32 %v4133, %v4229
  %v4231 = vpop.f32.mrb[0].mxu0
  %v4232 = vpop.f32.mrb[0].mxu0
  %v4233 = vadd.f32 %v4136, %v4232
  %v4234 = vpop.f32.mrb[0].mxu0
  %4235 = vmatprep.mubr.bf16.mxu0 %v3871
  %4236 = vmatmul.mubr.bf16.gmra.mrb[0].mxu0 %v3870
  %v4237 = vpop.f32.mrb[0].mxu0
  %v4238 = vadd.f32 %v4141, %v4237
  %v4239 = vpop.f32.mrb[0].mxu0
  %v4240 = vpop.f32.mrb[0].mxu0
  %v4241 = vadd.f32 %v4144, %v4240
  %v4242 = vpop.f32.mrb[0].mxu0
  %4243 = vmatprep.mubr.bf16.mxu0 %v3880
  %4244 = vmatmul.mubr.bf16.gmra.mrb[0].mxu0 %v3879
  %v4245 = vpop.f32.mrb[0].mxu0
  %v4246 = vadd.f32 %v4149, %v4245
  %v4247 = vpop.f32.mrb[0].mxu0
  %v4248 = vpop.f32.mrb[0].mxu0
  %v4249 = vadd.f32 %v4152, %v4248
  %v4250 = vpop.f32.mrb[0].mxu0
  %4251 = vmatprep.mubr.bf16.mxu0 %v3889
  %4252 = vmatmul.mubr.bf16.gmra.mrb[0].mxu0 %v3888
  %v4253 = vpop.f32.mrb[0].mxu0
  %v4254 = vadd.f32 %v4157, %v4253
  %v4255 = vpop.f32.mrb[0].mxu0
  %v4256 = vpop.f32.mrb[0].mxu0
  %v4257 = vadd.f32 %v4160, %v4256
  %v4258 = vpop.f32.mrb[0].mxu0
  %4259 = vmatprep.mubr.bf16.mxu0 %v3898
  %4260 = vmatmul.mubr.bf16.gmra.mrb[0].mxu0 %v3897
  %v4261 = vpop.f32.mrb[0].mxu0
  %v4262 = vadd.f32 %v4165, %v4261
  %v4263 = vpop.f32.mrb[0].mxu0
  %v4264 = vpop.f32.mrb[0].mxu0
  %v4265 = vadd.f32 %v4168, %v4264
  %v4266 = vpop.f32.mrb[0].mxu0
  %4267 = vmatprep.mubr.bf16.mxu0 %v3907
  %4268 = vmatmul.mubr.bf16.gmra.mrb[0].mxu0 %v3906
  %v4269 = vpop.f32.mrb[0].mxu0
  %v4270 = vadd.f32 %v4173, %v4269
  %v4271 = vpop.f32.mrb[0].mxu0
  %v4272 = vpop.f32.mrb[0].mxu0
  %v4273 = vadd.f32 %v4176, %v4272
  %v4274 = vpop.f32.mrb[0].mxu0
  %4275 = vmatprep.mubr.bf16.mxu0 %v3916
  %4276 = vmatmul.mubr.bf16.gmra.mrb[0].mxu0 %v3915
  %v4277 = vpop.f32.mrb[0].mxu0
  %v4278 = vadd.f32 %v4181, %v4277
  %v4279 = vpop.f32.mrb[0].mxu0
  %v4280 = vpop.f32.mrb[0].mxu0
  %v4281 = vadd.f32 %v4184, %v4280
  %v4282 = vpop.f32.mrb[0].mxu0
  %4283 = vmatprep.mubr.bf16.mxu0 %v3925
  %4284 = vmatmul.mubr.bf16.gmra.mrb[0].mxu0 %v3924
  %v4285 = vpop.f32.mrb[0].mxu0
  %v4286 = vadd.f32 %v4189, %v4285
  %v4287 = vpop.f32.mrb[0].mxu0
  %v4288 = vpop.f32.mrb[0].mxu0
  %v4289 = vadd.f32 %v4192, %v4288
  %v4290 = vpop.f32.mrb[0].mxu0
  %4291 = vdwg.mxu0
  %4292 = vmatprep.subr.bf16.mxu0 0
  %4293 = vmatpush1.bf16.msra.mxu0 %v960
  %4294 = vmatprep.subr.bf16.mxu0 0
  %4295 = vmatpush1.bf16.msra.mxu0 %v961
  %4296 = vmatprep.subr.bf16.mxu0 0
  %4297 = vmatpush1.bf16.msra.mxu0 %v962
  %4298 = vmatprep.subr.bf16.mxu0 0
  %4299 = vmatpush1.bf16.msra.mxu0 %v963
  %4300 = vmatprep.subr.bf16.mxu0 0
  %4301 = vmatpush1.bf16.msra.mxu0 %v964
  %4302 = vmatprep.subr.bf16.mxu0 0
  %4303 = vmatpush1.bf16.msra.mxu0 %v965
  %4304 = vmatprep.subr.bf16.mxu0 0
  %4305 = vmatpush1.bf16.msra.mxu0 %v966
  %4306 = vmatprep.subr.bf16.mxu0 0
  %4307 = vmatpush1.bf16.msra.mxu0 %v967
  %4308 = vmatprep.subr.bf16.mxu0 0
  %4309 = vmatpush1.bf16.msra.mxu0 %v968
  %4310 = vmatprep.subr.bf16.mxu0 0
  %4311 = vmatpush1.bf16.msra.mxu0 %v969
  %4312 = vmatprep.subr.bf16.mxu0 0
  %4313 = vmatpush1.bf16.msra.mxu0 %v970
  %4314 = vmatprep.subr.bf16.mxu0 0
  %4315 = vmatpush1.bf16.msra.mxu0 %v971
  %4316 = vmatprep.subr.bf16.mxu0 0
  %4317 = vmatpush1.bf16.msra.mxu0 %v972
  %4318 = vmatprep.subr.bf16.mxu0 0
  %4319 = vmatpush1.bf16.msra.mxu0 %v973
  %4320 = vmatprep.subr.bf16.mxu0 0
  %4321 = vmatpush1.bf16.msra.mxu0 %v974
  %4322 = vmatprep.subr.bf16.mxu0 0
  %4323 = vmatpush1.bf16.msra.mxu0 %v975
  %4324 = vmatprep.mubr.bf16.mxu0 %v3864
  %4325 = vmatmul.mubr.bf16.gmra.mrb[0].mxu0 %v3863
  %v4326 = vpop.f32.mrb[0].mxu0
  %v4327 = vadd.f32 %v4230, %v4326
  %v4328 = vpop.f32.mrb[0].mxu0
  %v4329 = vpop.f32.mrb[0].mxu0
  %v4330 = vadd.f32 %v4233, %v4329
  %v4331 = vpop.f32.mrb[0].mxu0
  %4332 = vmatprep.mubr.bf16.mxu0 %v3873
  %4333 = vmatmul.mubr.bf16.gmra.mrb[0].mxu0 %v3872
  %v4334 = vpop.f32.mrb[0].mxu0
  %v4335 = vadd.f32 %v4238, %v4334
  %v4336 = vpop.f32.mrb[0].mxu0
  %v4337 = vpop.f32.mrb[0].mxu0
  %v4338 = vadd.f32 %v4241, %v4337
  %v4339 = vpop.f32.mrb[0].mxu0
  %4340 = vmatprep.mubr.bf16.mxu0 %v3882
  %4341 = vmatmul.mubr.bf16.gmra.mrb[0].mxu0 %v3881
  %v4342 = vpop.f32.mrb[0].mxu0
  %v4343 = vadd.f32 %v4246, %v4342
  %v4344 = vpop.f32.mrb[0].mxu0
  %v4345 = vpop.f32.mrb[0].mxu0
  %v4346 = vadd.f32 %v4249, %v4345
  %v4347 = vpop.f32.mrb[0].mxu0
  %4348 = vmatprep.mubr.bf16.mxu0 %v3891
  %4349 = vmatmul.mubr.bf16.gmra.mrb[0].mxu0 %v3890
  %v4350 = vpop.f32.mrb[0].mxu0
  %v4351 = vadd.f32 %v4254, %v4350
  %v4352 = vpop.f32.mrb[0].mxu0
  %v4353 = vpop.f32.mrb[0].mxu0
  %v4354 = vadd.f32 %v4257, %v4353
  %v4355 = vpop.f32.mrb[0].mxu0
  %4356 = vmatprep.mubr.bf16.mxu0 %v3900
  %4357 = vmatmul.mubr.bf16.gmra.mrb[0].mxu0 %v3899
  %v4358 = vpop.f32.mrb[0].mxu0
  %v4359 = vadd.f32 %v4262, %v4358
  %v4360 = vpop.f32.mrb[0].mxu0
  %v4361 = vpop.f32.mrb[0].mxu0
  %v4362 = vadd.f32 %v4265, %v4361
  %v4363 = vpop.f32.mrb[0].mxu0
  %4364 = vmatprep.mubr.bf16.mxu0 %v3909
  %4365 = vmatmul.mubr.bf16.gmra.mrb[0].mxu0 %v3908
  %v4366 = vpop.f32.mrb[0].mxu0
  %v4367 = vadd.f32 %v4270, %v4366
  %v4368 = vpop.f32.mrb[0].mxu0
  %v4369 = vpop.f32.mrb[0].mxu0
  %v4370 = vadd.f32 %v4273, %v4369
  %v4371 = vpop.f32.mrb[0].mxu0
  %4372 = vmatprep.mubr.bf16.mxu0 %v3918
  %4373 = vmatmul.mubr.bf16.gmra.mrb[0].mxu0 %v3917
  %v4374 = vpop.f32.mrb[0].mxu0
  %v4375 = vadd.f32 %v4278, %v4374
  %v4376 = vpop.f32.mrb[0].mxu0
  %v4377 = vpop.f32.mrb[0].mxu0
  %v4378 = vadd.f32 %v4281, %v4377
  %v4379 = vpop.f32.mrb[0].mxu0
  %4380 = vmatprep.mubr.bf16.mxu0 %v3927
  %4381 = vmatmul.mubr.bf16.gmra.mrb[0].mxu0 %v3926
  %v4382 = vpop.f32.mrb[0].mxu0
  %v4383 = vadd.f32 %v4286, %v4382
  %v4384 = vpop.f32.mrb[0].mxu0
  %v4385 = vpop.f32.mrb[0].mxu0
  %v4386 = vadd.f32 %v4289, %v4385
  %v4387 = vpop.f32.mrb[0].mxu0
  %4388 = vdwg.mxu0
  %4389 = vmatprep.subr.bf16.mxu0 0
  %4390 = vmatpush1.bf16.msra.mxu0 %v976
  %4391 = vmatprep.subr.bf16.mxu0 0
  %4392 = vmatpush1.bf16.msra.mxu0 %v977
  %4393 = vmatprep.subr.bf16.mxu0 0
  %4394 = vmatpush1.bf16.msra.mxu0 %v978
  %4395 = vmatprep.subr.bf16.mxu0 0
  %4396 = vmatpush1.bf16.msra.mxu0 %v979
  %4397 = vmatprep.subr.bf16.mxu0 0
  %4398 = vmatpush1.bf16.msra.mxu0 %v980
  %4399 = vmatprep.subr.bf16.mxu0 0
  %4400 = vmatpush1.bf16.msra.mxu0 %v981
  %4401 = vmatprep.subr.bf16.mxu0 0
  %4402 = vmatpush1.bf16.msra.mxu0 %v982
  %4403 = vmatprep.subr.bf16.mxu0 0
  %4404 = vmatpush1.bf16.msra.mxu0 %v983
  %4405 = vmatprep.subr.bf16.mxu0 0
  %4406 = vmatpush1.bf16.msra.mxu0 0
  %4407 = vmatprep.subr.bf16.mxu0 0
  %4408 = vmatpush1.bf16.msra.mxu0 0
  %4409 = vmatprep.subr.bf16.mxu0 0
  %4410 = vmatpush1.bf16.msra.mxu0 0
  %4411 = vmatprep.subr.bf16.mxu0 0
  %4412 = vmatpush1.bf16.msra.mxu0 0
  %4413 = vmatprep.subr.bf16.mxu0 0
  %4414 = vmatpush1.bf16.msra.mxu0 0
  %4415 = vmatprep.subr.bf16.mxu0 0
  %4416 = vmatpush1.bf16.msra.mxu0 0
  %4417 = vmatprep.subr.bf16.mxu0 0
  %4418 = vmatpush1.bf16.msra.mxu0 0
  %4419 = vmatprep.subr.bf16.mxu0 0
  %4420 = vmatpush1.bf16.msra.mxu0 0
  %4421 = vmatprep.mubr.bf16.mxu0 0
  %4422 = vmatmul.mubr.bf16.gmra.mrb[0].mxu0 %v3865
  %v4423 = vpop.f32.mrb[0].mxu0
  %v4424 = vadd.f32 %v4327, %v4423
  %v4425 = vpop.f32.mrb[0].mxu0
  %v4426 = vpop.f32.mrb[0].mxu0
  %v4427 = vadd.f32 %v4330, %v4426
  %v4428 = vpop.f32.mrb[0].mxu0
  %4429 = vmatprep.mubr.bf16.mxu0 0
  %4430 = vmatmul.mubr.bf16.gmra.mrb[0].mxu0 %v3874
  %v4431 = vpop.f32.mrb[0].mxu0
  %v4432 = vadd.f32 %v4335, %v4431
  %v4433 = vpop.f32.mrb[0].mxu0
  %v4434 = vpop.f32.mrb[0].mxu0
  %v4435 = vadd.f32 %v4338, %v4434
  %v4436 = vpop.f32.mrb[0].mxu0
  %4437 = vmatprep.mubr.bf16.mxu0 0
  %4438 = vmatmul.mubr.bf16.gmra.mrb[0].mxu0 %v3883
  %v4439 = vpop.f32.mrb[0].mxu0
  %v4440 = vadd.f32 %v4343, %v4439
  %v4441 = vpop.f32.mrb[0].mxu0
  %v4442 = vpop.f32.mrb[0].mxu0
  %v4443 = vadd.f32 %v4346, %v4442
  %v4444 = vpop.f32.mrb[0].mxu0
  %4445 = vmatprep.mubr.bf16.mxu0 0
  %4446 = vmatmul.mubr.bf16.gmra.mrb[0].mxu0 %v3892
  %v4447 = vpop.f32.mrb[0].mxu0
  %v4448 = vadd.f32 %v4351, %v4447
  %v4449 = vpop.f32.mrb[0].mxu0
  %v4450 = vpop.f32.mrb[0].mxu0
  %v4451 = vadd.f32 %v4354, %v4450
  %v4452 = vpop.f32.mrb[0].mxu0
  %4453 = vmatprep.mubr.bf16.mxu0 0
  %4454 = vmatmul.mubr.bf16.gmra.mrb[0].mxu0 %v3901
  %v4455 = vpop.f32.mrb[0].mxu0
  %v4456 = vadd.f32 %v4359, %v4455
  %v4457 = vpop.f32.mrb[0].mxu0
  %v4458 = vpop.f32.mrb[0].mxu0
  %v4459 = vadd.f32 %v4362, %v4458
  %v4460 = vpop.f32.mrb[0].mxu0
  %4461 = vmatprep.mubr.bf16.mxu0 0
  %4462 = vmatmul.mubr.bf16.gmra.mrb[0].mxu0 %v3910
  %v4463 = vpop.f32.mrb[0].mxu0
  %v4464 = vadd.f32 %v4367, %v4463
  %v4465 = vpop.f32.mrb[0].mxu0
  %v4466 = vpop.f32.mrb[0].mxu0
  %v4467 = vadd.f32 %v4370, %v4466
  %v4468 = vpop.f32.mrb[0].mxu0
  %4469 = vmatprep.mubr.bf16.mxu0 0
  %4470 = vmatmul.mubr.bf16.gmra.mrb[0].mxu0 %v3919
  %v4471 = vpop.f32.mrb[0].mxu0
  %v4472 = vadd.f32 %v4375, %v4471
  %v4473 = vpop.f32.mrb[0].mxu0
  %v4474 = vpop.f32.mrb[0].mxu0
  %v4475 = vadd.f32 %v4378, %v4474
  %v4476 = vpop.f32.mrb[0].mxu0
  %4477 = vmatprep.mubr.bf16.mxu0 0
  %4478 = vmatmul.mubr.bf16.gmra.mrb[0].mxu0 %v3928
  %v4479 = vpop.f32.mrb[0].mxu0
  %v4480 = vadd.f32 %v4383, %v4479
  %v4481 = vpop.f32.mrb[0].mxu0
  %v4482 = vpop.f32.mrb[0].mxu0
  %v4483 = vadd.f32 %v4386, %v4482
  %v4484 = vpop.f32.mrb[0].mxu0
  %4485 = vdwg.mxu0
  %v4486 = vmul.f32 %v4424, %v1545
  %v4487 = vmul.f32 %v4427, %v1545
  %v4488 = vmul.f32 %v4432, %v1545
  %v4489 = vmul.f32 %v4435, %v1545
  %v4490 = vmul.f32 %v4440, %v1545
  %v4491 = vmul.f32 %v4443, %v1545
  %v4492 = vmul.f32 %v4448, %v1545
  %v4493 = vmul.f32 %v4451, %v1545
  %v4494 = vmul.f32 %v4456, %v1545
  %v4495 = vmul.f32 %v4459, %v1545
  %v4496 = vmul.f32 %v4464, %v1545
  %v4497 = vmul.f32 %v4467, %v1545
  %v4498 = vmul.f32 %v4472, %v1545
  %v4499 = vmul.f32 %v4475, %v1545
  %v4500 = vmul.f32 %v4480, %v1545
  %v4501 = vmul.f32 %v4483, %v1545
  %v4502 = vadd.f32 %v4486, %v1567
  %v4503 = vadd.f32 %v4487, %v1567
  %v4504 = vadd.f32 %v4488, %v1567
  %v4505 = vadd.f32 %v4489, %v1567
  %v4506 = vadd.f32 %v4490, %v1567
  %v4507 = vadd.f32 %v4491, %v1567
  %v4508 = vadd.f32 %v4492, %v1567
  %v4509 = vadd.f32 %v4493, %v1567
  %v4510 = vadd.f32 %v4494, %v1567
  %v4511 = vadd.f32 %v4495, %v1567
  %v4512 = vadd.f32 %v4496, %v1567
  %v4513 = vadd.f32 %v4497, %v1567
  %v4514 = vadd.f32 %v4498, %v1567
  %v4515 = vadd.f32 %v4499, %v1567
  %v4516 = vadd.f32 %v4500, %v1567
  %v4517 = vadd.f32 %v4501, %v1567
  %v4518 = vmax.f32 %v3535, %v4502
  %v4519 = vmax.f32 %v3536, %v4503
  %v4520 = vmax.f32 %v3537, %v4504
  %v4521 = vmax.f32 %v3538, %v4505
  %v4522 = vmax.f32 %v3539, %v4506
  %v4523 = vmax.f32 %v3540, %v4507
  %v4524 = vmax.f32 %v3541, %v4508
  %v4525 = vmax.f32 %v3542, %v4509
  %v4526 = vmax.f32 %v3543, %v4510
  %v4527 = vmax.f32 %v3544, %v4511
  %v4528 = vmax.f32 %v3545, %v4512
  %v4529 = vmax.f32 %v3546, %v4513
  %v4530 = vmax.f32 %v3547, %v4514
  %v4531 = vmax.f32 %v3548, %v4515
  %v4532 = vmax.f32 %v3549, %v4516
  %v4533 = vmax.f32 %v3550, %v4517
  %v4534 = vmax.f32 %v4518, 0.0
  %v4535 = vmax.f32 %v4519, 0.0
  %v4536 = vmax.f32 %v4520, 0.0
  %v4537 = vmax.f32 %v4521, 0.0
  %v4538 = vmax.f32 %v4522, 0.0
  %v4539 = vmax.f32 %v4523, 0.0
  %v4540 = vmax.f32 %v4524, 0.0
  %v4541 = vmax.f32 %v4525, 0.0
  %v4542 = vmax.f32 %v4526, 0.0
  %v4543 = vmax.f32 %v4527, 0.0
  %v4544 = vmax.f32 %v4528, 0.0
  %v4545 = vmax.f32 %v4529, 0.0
  %v4546 = vmax.f32 %v4530, 0.0
  %v4547 = vmax.f32 %v4531, 0.0
  %v4548 = vmax.f32 %v4532, 0.0
  %v4549 = vmax.f32 %v4533, 0.0
  %v4550 = vpack.c.bf16 %v4535, %v4534
  %v4551 = vpack.c.bf16 %v4537, %v4536
  %v4552 = vpack.c.bf16 %v4539, %v4538
  %v4553 = vpack.c.bf16 %v4541, %v4540
  %v4554 = vpack.c.bf16 %v4543, %v4542
  %v4555 = vpack.c.bf16 %v4545, %v4544
  %v4556 = vpack.c.bf16 %v4547, %v4546
  %v4557 = vpack.c.bf16 %v4549, %v4548
  %v4566 = vunpack.c.l.b16 %v4550
  %v4567 = vunpack.c.h.b16 %v4550
  %v4568 = vunpack.c.l.b16 %v4551
  %v4569 = vunpack.c.h.b16 %v4551
  %v4570 = vunpack.c.l.b16 %v4552
  %v4571 = vunpack.c.h.b16 %v4552
  %v4572 = vunpack.c.l.b16 %v4553
  %v4573 = vunpack.c.h.b16 %v4553
  %v4574 = vunpack.c.l.b16 %v4554
  %v4575 = vunpack.c.h.b16 %v4554
  %v4576 = vunpack.c.l.b16 %v4555
  %v4577 = vunpack.c.h.b16 %v4555
  %v4578 = vunpack.c.l.b16 %v4556
  %v4579 = vunpack.c.h.b16 %v4556
  %v4580 = vunpack.c.l.b16 %v4557
  %v4581 = vunpack.c.h.b16 %v4557
  %v4582 = vpack.c.b16 %v4566, %v4566
  %v4583 = vpack.c.b16 %v4567, %v4567
  %v4584 = vpack.c.b16 %v4568, %v4568
  %v4585 = vpack.c.b16 %v4569, %v4569
  %v4586 = vpack.c.b16 %v4570, %v4570
  %v4587 = vpack.c.b16 %v4571, %v4571
  %v4588 = vpack.c.b16 %v4572, %v4572
  %v4589 = vpack.c.b16 %v4573, %v4573
  %v4590 = vpack.c.b16 %v4574, %v4574
  %v4591 = vpack.c.b16 %v4575, %v4575
  %v4592 = vpack.c.b16 %v4576, %v4576
  %v4593 = vpack.c.b16 %v4577, %v4577
  %v4594 = vpack.c.b16 %v4578, %v4578
  %v4595 = vpack.c.b16 %v4579, %v4579
  %v4596 = vpack.c.b16 %v4580, %v4580
  %v4597 = vpack.c.b16 %v4581, %v4581
  %vm4614 = vcmask 519168
  %4615 = vst.msk [vmem:[%s7] sm:$0xf] %vm4614, %v4582
  %4616 = vst.msk [vmem:[%s7 + $0x4] sm:$0xf] %vm4614, %v4583
  %4617 = vst.msk [vmem:[%s7 + $0x8] sm:$0xf] %vm4614, %v4584
  %4618 = vst.msk [vmem:[%s7 + $0xc] sm:$0xf] %vm4614, %v4585
  %4619 = vst.msk [vmem:[%s7 + $0x10] sm:$0xf] %vm4614, %v4586
  %4620 = vst.msk [vmem:[%s7 + $0x14] sm:$0xf] %vm4614, %v4587
  %4621 = vst.msk [vmem:[%s7 + $0x18] sm:$0xf] %vm4614, %v4588
  %4622 = vst.msk [vmem:[%s7 + $0x1c] sm:$0xf] %vm4614, %v4589
  %4623 = vst.msk [vmem:[%s7 + $0x20] sm:$0xf] %vm4614, %v4590
  %4624 = vst.msk [vmem:[%s7 + $0x24] sm:$0xf] %vm4614, %v4591
  %4625 = vst.msk [vmem:[%s7 + $0x28] sm:$0xf] %vm4614, %v4592
  %4626 = vst.msk [vmem:[%s7 + $0x2c] sm:$0xf] %vm4614, %v4593
  %4627 = vst.msk [vmem:[%s7 + $0x30] sm:$0xf] %vm4614, %v4594
  %4628 = vst.msk [vmem:[%s7 + $0x34] sm:$0xf] %vm4614, %v4595
  %4629 = vst.msk [vmem:[%s7 + $0x38] sm:$0xf] %vm4614, %v4596
  %4630 = vst.msk [vmem:[%s7 + $0x3c] sm:$0xf] %vm4614, %v4597
  // Predicated region
  $region30: #{custom_cnn_forward.4} parent=0 // pred_check
    _
  $region31: #{custom_cnn_forward.4} parent=0 // pred_check_branch
    %4632 = sbr.rel (0) target = $region33
  $region32: #{custom_cnn_forward.4} parent=0 // pred_region
    _
  $region33: #{custom_cnn_forward.4} parent=0 // pred_fallthru
    _
  // Predicated region
  $region34: #{custom_cnn_forward.4} parent=0 // pred_check
    _
  $region35: #{custom_cnn_forward.4} parent=0 // pred_check_branch
    %4634 = sbr.rel (0) target = $region37
  $region36: #{custom_cnn_forward.4} parent=0 // pred_region
    _
  $region37: #{custom_cnn_forward.4} parent=0 // pred_fallthru
    _

</llo_original>
